<compile_context>
chip_gen: v6e
topology: v6e:2x2x1
jax: 0.10.0
libtpu: 0.0.40
codegen_flags: <defaults>
</compile_context>

<pallas_src>
import math
import functools

import jax
import jax.numpy as jnp
from jax import lax
from jax.experimental import pallas as pl
from jax.experimental.pallas import tpu as pltpu


# MXU operand dtype (accumulation stays f32 via preferred_element_type).
# Set to jnp.float32 for strict f32 parity with the PyTorch reference.
_DOT_DT = jnp.bfloat16


# ----------------------------- in-kernel helpers ----------------------------

def _layernorm(y, g, b, eps):
    mu = jnp.mean(y, axis=-1, keepdims=True)
    var = jnp.mean((y - mu) ** 2, axis=-1, keepdims=True)
    return (y - mu) * jax.lax.rsqrt(var + eps) * g + b


def _mha(x_q, x_kv, keep3, wq, bq, wk, bk, wv, bv, wo, bo, n_heads):
    """Head-batched multi-head attention, fully inside the kernel.

    x_q: [Lq, D] f32, x_kv: [Lk, D] f32
    keep3: bool, broadcastable to [H, Lq, Lk] (True = keep)
    wq/wk/wv/wo: [D, D] (bf16), bq/bk/bv/bo: [1, D] (f32)
    """
    D = x_q.shape[-1]
    dk = D // n_heads
    scale = 1.0 / math.sqrt(dk)

    # Full-width dense projections (3 big MXU dots instead of 3*H tiny ones).
    q = jnp.dot(x_q.astype(wq.dtype), wq, preferred_element_type=jnp.float32) + bq
    k = jnp.dot(x_kv.astype(wk.dtype), wk, preferred_element_type=jnp.float32) + bk
    v = jnp.dot(x_kv.astype(wv.dtype), wv, preferred_element_type=jnp.float32) + bv

    # Split heads along the lane axis and stack on a new leading batch axis.
    qh = jnp.stack([q[:, h * dk:(h + 1) * dk] for h in range(n_heads)], axis=0)
    kh = jnp.stack([k[:, h * dk:(h + 1) * dk] for h in range(n_heads)], axis=0)
    vh = jnp.stack([v[:, h * dk:(h + 1) * dk] for h in range(n_heads)], axis=0)
    qh = qh.astype(_DOT_DT)
    kh = kh.astype(_DOT_DT)
    vh = vh.astype(_DOT_DT)

    # Batched score / context dots over all heads at once.
    s = jnp.einsum('hqd,hkd->hqk', qh, kh,
                   preferred_element_type=jnp.float32) * scale          # [H,Lq,Lk]
    s = jnp.where(keep3, s, -1e30)          # finite fill: no NaN hazard
    s = s - jnp.max(s, axis=-1, keepdims=True)
    p = jnp.exp(s)
    p = p * pl.reciprocal(jnp.sum(p, axis=-1, keepdims=True), approx=True)
    ctx = jnp.einsum('hqk,hkd->hqd', p.astype(_DOT_DT), vh,
                     preferred_element_type=jnp.float32)                # [H,Lq,dk]

    # Re-concatenate heads along lanes -> one dense output projection.
    ctx_cat = jnp.concatenate([ctx[h] for h in range(n_heads)], axis=-1)  # [Lq,D]
    out = jnp.dot(ctx_cat.astype(wo.dtype), wo,
                  preferred_element_type=jnp.float32) + bo
    return out


def _ffn(x, w1, b1, w2, b2):
    h = jnp.dot(x.astype(w1.dtype), w1, preferred_element_type=jnp.float32) + b1
    h = jnp.maximum(h, 0.0)
    return jnp.dot(h.astype(w2.dtype), w2, preferred_element_type=jnp.float32) + b2


# ------------------------------- Pallas kernels -----------------------------

def _encoder_stack_kernel(keep_ref, x_ref,
                          wq, bq, wk, bk, wv, bv, wo, bo,
                          ln1_g, ln1_b, w1, b1, w2, b2, ln2_g, ln2_b,
                          o_ref, x_scr, *, n_heads, eps):
    l = pl.program_id(1)

    @pl.when(l == 0)
    def _():
        x_scr[...] = x_ref[0]

    x = x_scr[...]                                  # [S, D]
    keep3 = (keep_ref[0] > 0.0)[None]               # [1, 1, S]  (key padding)

    a = _mha(x, x, keep3, wq[0], bq[0], wk[0], bk[0], wv[0], bv[0],
             wo[0], bo[0], n_heads)
    x = _layernorm(x + a, ln1_g[0], ln1_b[0], eps)
    f = _ffn(x, w1[0], b1[0], w2[0], b2[0])
    x = _layernorm(x + f, ln2_g[0], ln2_b[0], eps)
    x_scr[...] = x

    @pl.when(l == pl.num_programs(1) - 1)
    def _():
        o_ref[0] = x


def _decoder_stack_kernel(tkeep_ref, skeep_ref, x_ref, enc_ref,
                          s_wq, s_bq, s_wk, s_bk, s_wv, s_bv, s_wo, s_bo,
                          ln1_g, ln1_b,
                          c_wq, c_bq, c_wk, c_bk, c_wv, c_bv, c_wo, c_bo,
                          ln2_g, ln2_b,
                          w1, b1, w2, b2, ln3_g, ln3_b,
                          w_out, b_out,
                          o_ref, x_scr, *, n_heads, eps):
    l = pl.program_id(1)

    @pl.when(l == 0)
    def _():
        x_scr[...] = x_ref[0]

    x = x_scr[...]                                  # [Lt, D]
    enc = enc_ref[0]                                # [Ls, D]
    Lt = x.shape[0]

    # Self-attention keep map: causal AND target-pad keep (built in VMEM only).
    row = lax.broadcasted_iota(jnp.int32, (Lt, Lt), 0)
    col = lax.broadcasted_iota(jnp.int32, (Lt, Lt), 1)
    self_keep3 = jnp.logical_and(row >= col, tkeep_ref[0] > 0.0)[None]  # [1,Lt,Lt]
    cross_keep3 = (skeep_ref[0] > 0.0)[None]                            # [1,1,Ls]

    a = _mha(x, x, self_keep3, s_wq[0], s_bq[0], s_wk[0], s_bk[0],
             s_wv[0], s_bv[0], s_wo[0], s_bo[0], n_heads)
    x = _layernorm(x + a, ln1_g[0], ln1_b[0], eps)

    c = _mha(x, enc, cross_keep3, c_wq[0], c_bq[0], c_wk[0], c_bk[0],
             c_wv[0], c_bv[0], c_wo[0], c_bo[0], n_heads)
    x = _layernorm(x + c, ln2_g[0], ln2_b[0], eps)

    f = _ffn(x, w1[0], b1[0], w2[0], b2[0])
    x = _layernorm(x + f, ln3_g[0], ln3_b[0], eps)
    x_scr[...] = x

    # Fused (lane-dense, 128-padded) vocab projection at the last layer.
    @pl.when(l == pl.num_programs(1) - 1)
    def _():
        o_ref[0] = (jnp.dot(x.astype(w_out.dtype), w_out[...],
                            preferred_element_type=jnp.float32) + b_out[...])


# ------------------------------ wrappers ------------------------------------

def encoder_stack(x, src_keep, enc_w, n_heads, eps=1e-5):
    B, S, D = x.shape
    L = enc_w[0].shape[0]
    w_specs = [pl.BlockSpec((1,) + w.shape[1:], lambda b, l: (l, 0, 0))
               for w in enc_w]
    return pl.pallas_call(
        functools.partial(_encoder_stack_kernel, n_heads=n_heads, eps=eps),
        out_shape=jax.ShapeDtypeStruct((B, S, D), jnp.float32),
        grid=(B, L),
        in_specs=([pl.BlockSpec((1, 1, S), lambda b, l: (b, 0, 0)),
                   pl.BlockSpec((1, S, D), lambda b, l: (b, 0, 0))]
                  + w_specs),
        out_specs=pl.BlockSpec((1, S, D), lambda b, l: (b, 0, 0)),
        scratch_shapes=[pltpu.VMEM((S, D), jnp.float32)],
        compiler_params=pltpu.CompilerParams(
            dimension_semantics=("parallel", "arbitrary")),
    )(src_keep, x, *enc_w)


def decoder_stack(y, enc_out, tgt_keep, src_keep, dec_w, w_out_p, b_out_p,
                  n_heads, eps=1e-5):
    B, Lt, D = y.shape
    Ls = enc_out.shape[1]
    L = dec_w[0].shape[0]
    Vp = w_out_p.shape[1]
    w_specs = [pl.BlockSpec((1,) + w.shape[1:], lambda b, l: (l, 0, 0))
               for w in dec_w]
    return pl.pallas_call(
        functools.partial(_decoder_stack_kernel, n_heads=n_heads, eps=eps),
        out_shape=jax.ShapeDtypeStruct((B, Lt, Vp), jnp.float32),
        grid=(B, L),
        in_specs=([pl.BlockSpec((1, 1, Lt), lambda b, l: (b, 0, 0)),
                   pl.BlockSpec((1, 1, Ls), lambda b, l: (b, 0, 0)),
                   pl.BlockSpec((1, Lt, D), lambda b, l: (b, 0, 0)),
                   pl.BlockSpec((1, Ls, D), lambda b, l: (b, 0, 0))]
                  + w_specs
                  + [pl.BlockSpec(w_out_p.shape, lambda b, l: (0, 0)),
                     pl.BlockSpec(b_out_p.shape, lambda b, l: (0, 0))]),
        out_specs=pl.BlockSpec((1, Lt, Vp), lambda b, l: (b, 0, 0)),
        scratch_shapes=[pltpu.VMEM((Lt, D), jnp.float32)],
        compiler_params=pltpu.CompilerParams(
            dimension_semantics=("parallel", "arbitrary")),
    )(tgt_keep, src_keep, y, enc_out, *dec_w, w_out_p, b_out_p)


# ------------------------------ model glue ----------------------------------

def positional_encoding(max_len, d_model):
    position = jnp.arange(max_len, dtype=jnp.float32)[:, None]
    div_term = jnp.exp(jnp.arange(0, d_model, 2, dtype=jnp.float32)
                       * (-math.log(10000.0) / d_model))
    pe = jnp.zeros((max_len, d_model), jnp.float32)
    pe = pe.at[:, 0::2].set(jnp.sin(position * div_term))
    pe = pe.at[:, 1::2].set(jnp.cos(position * div_term))
    return pe


def transformer_forward(prepared, source, target, *, n_heads, pad_tok, vocab_size):
    B, Ls = source.shape
    Lt = target.shape[1]
    pe = prepared["pe"]

    # compact keep vectors only (causal / padding maps rebuilt in-kernel)
    src_keep = (source != pad_tok).astype(jnp.float32)[:, None, :]   # [B,1,Ls]
    tgt_keep = (target != pad_tok).astype(jnp.float32)[:, None, :]   # [B,1,Lt]

    # TODO(synk): embedding gather + positional add left to XLA (no clean tiled form).
    x = prepared["enc_emb"][source] + pe[None, :Ls, :]
    enc_out = encoder_stack(x, src_keep, prepared["enc_w"], n_heads)

    y = prepared["dec_emb"][target] + pe[None, :Lt, :]
    logits_p = decoder_stack(y, enc_out, tgt_keep, src_keep,
                             prepared["dec_w"], prepared["w_out_p"],
                             prepared["b_out_p"], n_heads)
    return logits_p[:, :, :vocab_size]


# ------------------------- parameter init & prep ----------------------------

def _init_linear(key, d_in, d_out, scale=0.02):
    k1, k2 = jax.random.split(key)
    w = jax.random.normal(k1, (d_in, d_out), jnp.float32) * scale
    b = jax.random.normal(k2, (1, d_out), jnp.float32) * scale
    return w, b


def _init_mha(key, d_model):
    ks = jax.random.split(key, 4)
    wq, bq = _init_linear(ks[0], d_model, d_model)
    wk, bk = _init_linear(ks[1], d_model, d_model)
    wv, bv = _init_linear(ks[2], d_model, d_model)
    wo, bo = _init_linear(ks[3], d_model, d_model)
    return dict(wq=wq, bq=bq, wk=wk, bk=bk, wv=wv, bv=bv, wo=wo, bo=bo)


def _init_ffn(key, d_model, d_ff):
    k1, k2 = jax.random.split(key)
    w1, b1 = _init_linear(k1, d_model, d_ff)
    w2, b2 = _init_linear(k2, d_ff, d_model)
    return dict(w1=w1, b1=b1, w2=w2, b2=b2)


def _init_enc_layer(key, d_model, d_ff):
    k1, k2 = jax.random.split(key)
    return dict(self_attn=_init_mha(k1, d_model),
                ffn=_init_ffn(k2, d_model, d_ff),
                ln1_g=jnp.ones((1, d_model), jnp.float32),
                ln1_b=jnp.zeros((1, d_model), jnp.float32),
                ln2_g=jnp.ones((1, d_model), jnp.float32),
                ln2_b=jnp.zeros((1, d_model), jnp.float32))


def _init_dec_layer(key, d_model, d_ff):
    k1, k2, k3 = jax.random.split(key, 3)
    return dict(self_attn=_init_mha(k1, d_model),
                cross_attn=_init_mha(k2, d_model),
                ffn=_init_ffn(k3, d_model, d_ff),
                ln1_g=jnp.ones((1, d_model), jnp.float32),
                ln1_b=jnp.zeros((1, d_model), jnp.float32),
                ln2_g=jnp.ones((1, d_model), jnp.float32),
                ln2_b=jnp.zeros((1, d_model), jnp.float32),
                ln3_g=jnp.ones((1, d_model), jnp.float32),
                ln3_b=jnp.zeros((1, d_model), jnp.float32))


def init_params(key, vocab_size, n_layers, d_model, d_ff, max_len):
    keys = jax.random.split(key, 3 + 2 * n_layers)
    enc_emb = jax.random.normal(keys[0], (vocab_size, d_model), jnp.float32) * 0.02
    dec_emb = jax.random.normal(keys[1], (vocab_size, d_model), jnp.float32) * 0.02
    w_out, b_out = _init_linear(keys[2], d_model, vocab_size)
    enc_layers = [_init_enc_layer(keys[3 + i], d_model, d_ff) for i in range(n_layers)]
    dec_layers = [_init_dec_layer(keys[3 + n_layers + i], d_model, d_ff)
                  for i in range(n_layers)]
    return dict(enc_emb=enc_emb, dec_emb=dec_emb,
                enc_layers=enc_layers, dec_layers=dec_layers,
                w_out=w_out, b_out=b_out,
                pe=positional_encoding(max_len, d_model))


def _stack_attn(attns):
    st = lambda k, dt: jnp.stack([a[k] for a in attns], axis=0).astype(dt)
    return (st("wq", _DOT_DT), st("bq", jnp.float32),
            st("wk", _DOT_DT), st("bk", jnp.float32),
            st("wv", _DOT_DT), st("bv", jnp.float32),
            st("wo", _DOT_DT), st("bo", jnp.float32))


def _stack_ffn(ffns):
    st = lambda k, dt: jnp.stack([f[k] for f in ffns], axis=0).astype(dt)
    return (st("w1", _DOT_DT), st("b1", jnp.float32),
            st("w2", _DOT_DT), st("b2", jnp.float32))


def _stack_ln(layers, g_key, b_key):
    return (jnp.stack([lp[g_key] for lp in layers], axis=0),
            jnp.stack([lp[b_key] for lp in layers], axis=0))


def prepare_params(p):
    """One-time weight prep (stacking / padding / bf16 cast), hoisted out of the
    jitted forward so no per-call HBM reshuffles happen."""
    enc, dec = p["enc_layers"], p["dec_layers"]
    enc_w = (*_stack_attn([lp["self_attn"] for lp in enc]),
             *_stack_ln(enc, "ln1_g", "ln1_b"),
             *_stack_ffn([lp["ffn"] for lp in enc]),
             *_stack_ln(enc, "ln2_g", "ln2_b"))
    dec_w = (*_stack_attn([lp["self_attn"] for lp in dec]),
             *_stack_ln(dec, "ln1_g", "ln1_b"),
             *_stack_attn([lp["cross_attn"] for lp in dec]),
             *_stack_ln(dec, "ln2_g", "ln2_b"),
             *_stack_ffn([lp["ffn"] for lp in dec]),
             *_stack_ln(dec, "ln3_g", "ln3_b"))
    V = p["w_out"].shape[1]
    Vp = ((V + 127) // 128) * 128              # lane-dense padded vocab width
    w_out_p = jnp.pad(p["w_out"], ((0, 0), (0, Vp - V))).astype(_DOT_DT)
    b_out_p = jnp.pad(p["b_out"], ((0, 0), (0, Vp - V)))
    return dict(enc_emb=p["enc_emb"], dec_emb=p["dec_emb"], pe=p["pe"],
                enc_w=enc_w, dec_w=dec_w, w_out_p=w_out_p, b_out_p=b_out_p)


# --------------------------------- main --------------------------------------

if __name__ == "__main__":
    vocab_size = 50
    n_heads = 4
    n_layers = 2
    d_model = 32
    d_ff = 64
    pad_tok = 0
    max_len = 64
    B, src_len, tgt_len = 2, 8, 8

    key = jax.random.PRNGKey(0)
    k_par, k_src, k_tgt = jax.random.split(key, 3)

    params = init_params(k_par, vocab_size, n_layers, d_model, d_ff, max_len)
    prepared = prepare_params(params)          # one-time stacking / padding / bf16

    # tokens: non-pad tokens, with padding only at the sequence tail
    source = jax.random.randint(k_src, (B, src_len), 1, vocab_size)
    target = jax.random.randint(k_tgt, (B, tgt_len), 1, vocab_size)
    source = source.at[0, -2:].set(pad_tok)    # some padding on row 0
    target = target.at[1, -1:].set(pad_tok)    # some padding on row 1

    fwd = jax.jit(functools.partial(transformer_forward, n_heads=n_heads,
                                    pad_tok=pad_tok, vocab_size=vocab_size))
    logits = jax.block_until_ready(fwd(prepared, source, target))

    assert logits.shape == (B, tgt_len, vocab_size)
    assert bool(jnp.all(jnp.isfinite(logits)))
    print("KERNEL_OK")
</pallas_src>

<mosaic_0001>
module attributes {stable_mosaic.version = 11 : i64} {
  func.func @_decoder_stack_kernel(%arg0: i32, %arg1: i32, %arg2: memref<1x1x8xf32, #tpu.memory_space<vmem>>, %arg3: memref<1x1x8xf32, #tpu.memory_space<vmem>>, %arg4: memref<1x8x32xf32, #tpu.memory_space<vmem>>, %arg5: memref<1x8x32xf32, #tpu.memory_space<vmem>>, %arg6: memref<1x32x32xbf16, #tpu.memory_space<vmem>>, %arg7: memref<1x1x32xf32, #tpu.memory_space<vmem>>, %arg8: memref<1x32x32xbf16, #tpu.memory_space<vmem>>, %arg9: memref<1x1x32xf32, #tpu.memory_space<vmem>>, %arg10: memref<1x32x32xbf16, #tpu.memory_space<vmem>>, %arg11: memref<1x1x32xf32, #tpu.memory_space<vmem>>, %arg12: memref<1x32x32xbf16, #tpu.memory_space<vmem>>, %arg13: memref<1x1x32xf32, #tpu.memory_space<vmem>>, %arg14: memref<1x1x32xf32, #tpu.memory_space<vmem>>, %arg15: memref<1x1x32xf32, #tpu.memory_space<vmem>>, %arg16: memref<1x32x32xbf16, #tpu.memory_space<vmem>>, %arg17: memref<1x1x32xf32, #tpu.memory_space<vmem>>, %arg18: memref<1x32x32xbf16, #tpu.memory_space<vmem>>, %arg19: memref<1x1x32xf32, #tpu.memory_space<vmem>>, %arg20: memref<1x32x32xbf16, #tpu.memory_space<vmem>>, %arg21: memref<1x1x32xf32, #tpu.memory_space<vmem>>, %arg22: memref<1x32x32xbf16, #tpu.memory_space<vmem>>, %arg23: memref<1x1x32xf32, #tpu.memory_space<vmem>>, %arg24: memref<1x1x32xf32, #tpu.memory_space<vmem>>, %arg25: memref<1x1x32xf32, #tpu.memory_space<vmem>>, %arg26: memref<1x32x64xbf16, #tpu.memory_space<vmem>>, %arg27: memref<1x1x64xf32, #tpu.memory_space<vmem>>, %arg28: memref<1x64x32xbf16, #tpu.memory_space<vmem>>, %arg29: memref<1x1x32xf32, #tpu.memory_space<vmem>>, %arg30: memref<1x1x32xf32, #tpu.memory_space<vmem>>, %arg31: memref<1x1x32xf32, #tpu.memory_space<vmem>>, %arg32: memref<32x128xbf16, #tpu.memory_space<vmem>>, %arg33: memref<1x128xf32, #tpu.memory_space<vmem>>, %arg34: memref<1x8x128xf32, #tpu.memory_space<vmem>>, %arg35: memref<8x32xf32, #tpu.memory_space<vmem>>) attributes {dimension_semantics = [#tpu.dimension_semantics<parallel>, #tpu.dimension_semantics<arbitrary>], iteration_bounds = array<i64: 2, 2>, scalar_prefetch = 0 : i64, scratch_operands = 1 : i64, tpu.core_type = #tpu.core_type<tc>, window_params = [{transform_indices = @transform_0, window_bounds = array<i64: 1, 1, 8>}, {transform_indices = @transform_1, window_bounds = array<i64: 1, 1, 8>}, {transform_indices = @transform_2, window_bounds = array<i64: 1, 8, 32>}, {transform_indices = @transform_3, window_bounds = array<i64: 1, 8, 32>}, {transform_indices = @transform_4, window_bounds = array<i64: 1, 32, 32>}, {transform_indices = @transform_5, window_bounds = array<i64: 1, 1, 32>}, {transform_indices = @transform_6, window_bounds = array<i64: 1, 32, 32>}, {transform_indices = @transform_7, window_bounds = array<i64: 1, 1, 32>}, {transform_indices = @transform_8, window_bounds = array<i64: 1, 32, 32>}, {transform_indices = @transform_9, window_bounds = array<i64: 1, 1, 32>}, {transform_indices = @transform_10, window_bounds = array<i64: 1, 32, 32>}, {transform_indices = @transform_11, window_bounds = array<i64: 1, 1, 32>}, {transform_indices = @transform_12, window_bounds = array<i64: 1, 1, 32>}, {transform_indices = @transform_13, window_bounds = array<i64: 1, 1, 32>}, {transform_indices = @transform_14, window_bounds = array<i64: 1, 32, 32>}, {transform_indices = @transform_15, window_bounds = array<i64: 1, 1, 32>}, {transform_indices = @transform_16, window_bounds = array<i64: 1, 32, 32>}, {transform_indices = @transform_17, window_bounds = array<i64: 1, 1, 32>}, {transform_indices = @transform_18, window_bounds = array<i64: 1, 32, 32>}, {transform_indices = @transform_19, window_bounds = array<i64: 1, 1, 32>}, {transform_indices = @transform_20, window_bounds = array<i64: 1, 32, 32>}, {transform_indices = @transform_21, window_bounds = array<i64: 1, 1, 32>}, {transform_indices = @transform_22, window_bounds = array<i64: 1, 1, 32>}, {transform_indices = @transform_23, window_bounds = array<i64: 1, 1, 32>}, {transform_indices = @transform_24, window_bounds = array<i64: 1, 32, 64>}, {transform_indices = @transform_25, window_bounds = array<i64: 1, 1, 64>}, {transform_indices = @transform_26, window_bounds = array<i64: 1, 64, 32>}, {transform_indices = @transform_27, window_bounds = array<i64: 1, 1, 32>}, {transform_indices = @transform_28, window_bounds = array<i64: 1, 1, 32>}, {transform_indices = @transform_29, window_bounds = array<i64: 1, 1, 32>}, {pipeline_mode = #tpu.pipeline_mode<synchronous>, transform_indices = @transform_30, window_bounds = array<i64: 32, 128>}, {pipeline_mode = #tpu.pipeline_mode<synchronous>, transform_indices = @transform_31, window_bounds = array<i64: 1, 128>}, {transform_indices = @transform_32, window_bounds = array<i64: 1, 8, 128>}]} {
    %c0_i32 = arith.constant 0 : i32
    %0 = arith.cmpi eq, %arg1, %c0_i32 : i32
    %1 = arith.extui %0 : i1 to i32
    %c0_i32_0 = arith.constant 0 : i32
    %2 = arith.cmpi ne, %1, %c0_i32_0 : i32
    scf.if %2 {
      %c0_131 = arith.constant 0 : index
      %c0_132 = arith.constant 0 : index
      %c0_133 = arith.constant 0 : index
      %304 = vector.load %arg4[%c0_131, %c0_132, %c0_133] : memref<1x8x32xf32, #tpu.memory_space<vmem>>, vector<1x8x32xf32>
      %305 = vector.shape_cast %304 : vector<1x8x32xf32> to vector<8x32xf32>
      %c0_134 = arith.constant 0 : index
      %c0_135 = arith.constant 0 : index
      %306 = vector.load %arg35[%c0_134, %c0_135] : memref<8x32xf32, #tpu.memory_space<vmem>>, vector<8x32xf32>
      tpu.vector_store %arg35[%c0_134, %c0_135], %305 {strides = array<i32>} : memref<8x32xf32, #tpu.memory_space<vmem>>, vector<8x32xf32>,
    } else {
    }
    %c0 = arith.constant 0 : index
    %c0_1 = arith.constant 0 : index
    %3 = vector.load %arg35[%c0, %c0_1] : memref<8x32xf32, #tpu.memory_space<vmem>>, vector<8x32xf32>
    %c0_2 = arith.constant 0 : index
    %c0_3 = arith.constant 0 : index
    %c0_4 = arith.constant 0 : index
    %4 = vector.load %arg5[%c0_2, %c0_3, %c0_4] : memref<1x8x32xf32, #tpu.memory_space<vmem>>, vector<1x8x32xf32>
    %5 = vector.shape_cast %4 : vector<1x8x32xf32> to vector<8x32xf32>
    %6 = tpu.iota {dimensions = array<i32: 0>} : vector<8x8xi32>
    %7 = tpu.iota {dimensions = array<i32: 1>} : vector<8x8xi32>
    %8 = arith.cmpi sge, %6, %7 : vector<8x8xi32>
    %c0_5 = arith.constant 0 : index
    %c0_6 = arith.constant 0 : index
    %c0_7 = arith.constant 0 : index
    %9 = vector.load %arg2[%c0_5, %c0_6, %c0_7] : memref<1x1x8xf32, #tpu.memory_space<vmem>>, vector<1x1x8xf32>
    %10 = vector.shape_cast %9 : vector<1x1x8xf32> to vector<1x8xf32>
    %cst = arith.constant 0.000000e+00 : f32
    %11 = vector.broadcast %cst : f32 to vector<1x8xf32>
    %12 = arith.cmpf ogt, %10, %11 : vector<1x8xf32>
    %13 = vector.broadcast %12 : vector<1x8xi1> to vector<8x8xi1>
    %14 = arith.andi %8, %13 : vector<8x8xi1>
    %15 = vector.shape_cast %14 : vector<8x8xi1> to vector<1x8x8xi1>
    %c0_8 = arith.constant 0 : index
    %c0_9 = arith.constant 0 : index
    %c0_10 = arith.constant 0 : index
    %16 = vector.load %arg3[%c0_8, %c0_9, %c0_10] : memref<1x1x8xf32, #tpu.memory_space<vmem>>, vector<1x1x8xf32>
    %17 = vector.shape_cast %16 : vector<1x1x8xf32> to vector<1x8xf32>
    %cst_11 = arith.constant 0.000000e+00 : f32
    %18 = vector.broadcast %cst_11 : f32 to vector<1x8xf32>
    %19 = arith.cmpf ogt, %17, %18 : vector<1x8xf32>
    %20 = vector.shape_cast %19 : vector<1x8xi1> to vector<1x1x8xi1>
    %c0_12 = arith.constant 0 : index
    %c0_13 = arith.constant 0 : index
    %c0_14 = arith.constant 0 : index
    %21 = vector.load %arg6[%c0_12, %c0_13, %c0_14] : memref<1x32x32xbf16, #tpu.memory_space<vmem>>, vector<1x32x32xbf16>
    %22 = vector.shape_cast %21 : vector<1x32x32xbf16> to vector<32x32xbf16>
    %c0_15 = arith.constant 0 : index
    %c0_16 = arith.constant 0 : index
    %c0_17 = arith.constant 0 : index
    %23 = vector.load %arg7[%c0_15, %c0_16, %c0_17] : memref<1x1x32xf32, #tpu.memory_space<vmem>>, vector<1x1x32xf32>
    %24 = vector.shape_cast %23 : vector<1x1x32xf32> to vector<1x32xf32>
    %c0_18 = arith.constant 0 : index
    %c0_19 = arith.constant 0 : index
    %c0_20 = arith.constant 0 : index
    %25 = vector.load %arg8[%c0_18, %c0_19, %c0_20] : memref<1x32x32xbf16, #tpu.memory_space<vmem>>, vector<1x32x32xbf16>
    %26 = vector.shape_cast %25 : vector<1x32x32xbf16> to vector<32x32xbf16>
    %c0_21 = arith.constant 0 : index
    %c0_22 = arith.constant 0 : index
    %c0_23 = arith.constant 0 : index
    %27 = vector.load %arg9[%c0_21, %c0_22, %c0_23] : memref<1x1x32xf32, #tpu.memory_space<vmem>>, vector<1x1x32xf32>
    %28 = vector.shape_cast %27 : vector<1x1x32xf32> to vector<1x32xf32>
    %c0_24 = arith.constant 0 : index
    %c0_25 = arith.constant 0 : index
    %c0_26 = arith.constant 0 : index
    %29 = vector.load %arg10[%c0_24, %c0_25, %c0_26] : memref<1x32x32xbf16, #tpu.memory_space<vmem>>, vector<1x32x32xbf16>
    %30 = vector.shape_cast %29 : vector<1x32x32xbf16> to vector<32x32xbf16>
    %c0_27 = arith.constant 0 : index
    %c0_28 = arith.constant 0 : index
    %c0_29 = arith.constant 0 : index
    %31 = vector.load %arg11[%c0_27, %c0_28, %c0_29] : memref<1x1x32xf32, #tpu.memory_space<vmem>>, vector<1x1x32xf32>
    %32 = vector.shape_cast %31 : vector<1x1x32xf32> to vector<1x32xf32>
    %c0_30 = arith.constant 0 : index
    %c0_31 = arith.constant 0 : index
    %c0_32 = arith.constant 0 : index
    %33 = vector.load %arg12[%c0_30, %c0_31, %c0_32] : memref<1x32x32xbf16, #tpu.memory_space<vmem>>, vector<1x32x32xbf16>
    %34 = vector.shape_cast %33 : vector<1x32x32xbf16> to vector<32x32xbf16>
    %c0_33 = arith.constant 0 : index
    %c0_34 = arith.constant 0 : index
    %c0_35 = arith.constant 0 : index
    %35 = vector.load %arg13[%c0_33, %c0_34, %c0_35] : memref<1x1x32xf32, #tpu.memory_space<vmem>>, vector<1x1x32xf32>
    %36 = vector.shape_cast %35 : vector<1x1x32xf32> to vector<1x32xf32>
    %37 = arith.truncf %3 : vector<8x32xf32> to vector<8x32xbf16>
    %cst_36 = arith.constant dense<0.000000e+00> : vector<8x32xf32>
    %38 = tpu.matmul %37, %22, %cst_36 {dimension_numbers = #tpu.dot_dimension_numbers<[1], [0], [0], [1], [0, 0, 1, 1], [], []>} : vector<8x32xbf16>, vector<32x32xbf16>, vector<8x32xf32> -> vector<8x32xf32>
    %39 = vector.broadcast %24 : vector<1x32xf32> to vector<8x32xf32>
    %40 = arith.addf %38, %39 : vector<8x32xf32>
    %41 = arith.truncf %3 : vector<8x32xf32> to vector<8x32xbf16>
    %cst_37 = arith.constant dense<0.000000e+00> : vector<8x32xf32>
    %42 = tpu.matmul %41, %26, %cst_37 {dimension_numbers = #tpu.dot_dimension_numbers<[1], [0], [0], [1], [0, 0, 1, 1], [], []>} : vector<8x32xbf16>, vector<32x32xbf16>, vector<8x32xf32> -> vector<8x32xf32>
    %43 = vector.broadcast %28 : vector<1x32xf32> to vector<8x32xf32>
    %44 = arith.addf %42, %43 : vector<8x32xf32>
    %45 = arith.truncf %3 : vector<8x32xf32> to vector<8x32xbf16>
    %cst_38 = arith.constant dense<0.000000e+00> : vector<8x32xf32>
    %46 = tpu.matmul %45, %30, %cst_38 {dimension_numbers = #tpu.dot_dimension_numbers<[1], [0], [0], [1], [0, 0, 1, 1], [], []>} : vector<8x32xbf16>, vector<32x32xbf16>, vector<8x32xf32> -> vector<8x32xf32>
    %47 = vector.broadcast %32 : vector<1x32xf32> to vector<8x32xf32>
    %48 = arith.addf %46, %47 : vector<8x32xf32>
    %49 = vector.extract_strided_slice %40 {offsets = [0, 0], sizes = [8, 8], strides = [1, 1]} : vector<8x32xf32> to vector<8x8xf32>
    %50 = vector.extract_strided_slice %40 {offsets = [0, 8], sizes = [8, 8], strides = [1, 1]} : vector<8x32xf32> to vector<8x8xf32>
    %51 = vector.extract_strided_slice %40 {offsets = [0, 16], sizes = [8, 8], strides = [1, 1]} : vector<8x32xf32> to vector<8x8xf32>
    %52 = vector.extract_strided_slice %40 {offsets = [0, 24], sizes = [8, 8], strides = [1, 1]} : vector<8x32xf32> to vector<8x8xf32>
    %53 = vector.shape_cast %49 : vector<8x8xf32> to vector<1x8x8xf32>
    %54 = vector.shape_cast %50 : vector<8x8xf32> to vector<1x8x8xf32>
    %55 = vector.shape_cast %51 : vector<8x8xf32> to vector<1x8x8xf32>
    %56 = vector.shape_cast %52 : vector<8x8xf32> to vector<1x8x8xf32>
    %57 = tpu.concatenate %53, %54, %55, %56 in 0 : vector<1x8x8xf32>, vector<1x8x8xf32>, vector<1x8x8xf32>, vector<1x8x8xf32> -> vector<4x8x8xf32>
    %58 = vector.extract_strided_slice %44 {offsets = [0, 0], sizes = [8, 8], strides = [1, 1]} : vector<8x32xf32> to vector<8x8xf32>
    %59 = vector.extract_strided_slice %44 {offsets = [0, 8], sizes = [8, 8], strides = [1, 1]} : vector<8x32xf32> to vector<8x8xf32>
    %60 = vector.extract_strided_slice %44 {offsets = [0, 16], sizes = [8, 8], strides = [1, 1]} : vector<8x32xf32> to vector<8x8xf32>
    %61 = vector.extract_strided_slice %44 {offsets = [0, 24], sizes = [8, 8], strides = [1, 1]} : vector<8x32xf32> to vector<8x8xf32>
    %62 = vector.shape_cast %58 : vector<8x8xf32> to vector<1x8x8xf32>
    %63 = vector.shape_cast %59 : vector<8x8xf32> to vector<1x8x8xf32>
    %64 = vector.shape_cast %60 : vector<8x8xf32> to vector<1x8x8xf32>
    %65 = vector.shape_cast %61 : vector<8x8xf32> to vector<1x8x8xf32>
    %66 = tpu.concatenate %62, %63, %64, %65 in 0 : vector<1x8x8xf32>, vector<1x8x8xf32>, vector<1x8x8xf32>, vector<1x8x8xf32> -> vector<4x8x8xf32>
    %67 = vector.extract_strided_slice %48 {offsets = [0, 0], sizes = [8, 8], strides = [1, 1]} : vector<8x32xf32> to vector<8x8xf32>
    %68 = vector.extract_strided_slice %48 {offsets = [0, 8], sizes = [8, 8], strides = [1, 1]} : vector<8x32xf32> to vector<8x8xf32>
    %69 = vector.extract_strided_slice %48 {offsets = [0, 16], sizes = [8, 8], strides = [1, 1]} : vector<8x32xf32> to vector<8x8xf32>
    %70 = vector.extract_strided_slice %48 {offsets = [0, 24], sizes = [8, 8], strides = [1, 1]} : vector<8x32xf32> to vector<8x8xf32>
    %71 = vector.shape_cast %67 : vector<8x8xf32> to vector<1x8x8xf32>
    %72 = vector.shape_cast %68 : vector<8x8xf32> to vector<1x8x8xf32>
    %73 = vector.shape_cast %69 : vector<8x8xf32> to vector<1x8x8xf32>
    %74 = vector.shape_cast %70 : vector<8x8xf32> to vector<1x8x8xf32>
    %75 = tpu.concatenate %71, %72, %73, %74 in 0 : vector<1x8x8xf32>, vector<1x8x8xf32>, vector<1x8x8xf32>, vector<1x8x8xf32> -> vector<4x8x8xf32>
    %76 = arith.truncf %57 : vector<4x8x8xf32> to vector<4x8x8xbf16>
    %77 = arith.truncf %66 : vector<4x8x8xf32> to vector<4x8x8xbf16>
    %78 = arith.truncf %75 : vector<4x8x8xf32> to vector<4x8x8xbf16>
    "tpu.trace_start"() <{level = 10 : i32, message = "hqd,hkd->hqk"}> : () -> ()
    %cst_39 = arith.constant dense<0.000000e+00> : vector<4x8x8xf32>
    %79 = tpu.matmul %76, %77, %cst_39 {dimension_numbers = #tpu.dot_dimension_numbers<[2], [2], [1], [1], [0, 0, 0, 1, 1, 1], [0], [0]>} : vector<4x8x8xbf16>, vector<4x8x8xbf16>, vector<4x8x8xf32> -> vector<4x8x8xf32>
    "tpu.trace_stop"() : () -> ()
    %cst_40 = arith.constant 0.353553385 : f32
    %80 = vector.broadcast %cst_40 : f32 to vector<4x8x8xf32>
    %81 = arith.mulf %79, %80 : vector<4x8x8xf32>
    %cst_41 = arith.constant -1.000000e+30 : f32
    %82 = vector.shape_cast %15 : vector<1x8x8xi1> to vector<1x8x8xi1>
    %83 = vector.broadcast %82 : vector<1x8x8xi1> to vector<4x8x8xi1>
    %84 = vector.broadcast %cst_41 : f32 to vector<4x8x8xf32>
    %85 = arith.select %83, %81, %84 : vector<4x8x8xi1>, vector<4x8x8xf32>
    %cst_42 = arith.constant dense<0xFF800000> : vector<4x8xf32>
    %86 = vector.multi_reduction <maximumf>, %85, %cst_42 [2] : vector<4x8x8xf32> to vector<4x8xf32>
    %87 = vector.shape_cast %86 : vector<4x8xf32> to vector<4x8x1xf32>
    %88 = vector.broadcast %87 : vector<4x8x1xf32> to vector<4x8x8xf32>
    %89 = arith.subf %85, %88 : vector<4x8x8xf32>
    %90 = math.exp %89 : vector<4x8x8xf32>
    %cst_43 = arith.constant dense<0.000000e+00> : vector<4x8xf32>
    %91 = vector.multi_reduction <add>, %90, %cst_43 [2] : vector<4x8x8xf32> to vector<4x8xf32>
    %92 = vector.shape_cast %91 : vector<4x8xf32> to vector<4x8x1xf32>
    %93 = tpu.reciprocal %92 {approx = true} : vector<4x8x1xf32> -> vector<4x8x1xf32>
    %94 = vector.broadcast %93 : vector<4x8x1xf32> to vector<4x8x8xf32>
    %95 = arith.mulf %90, %94 : vector<4x8x8xf32>
    %96 = arith.truncf %95 : vector<4x8x8xf32> to vector<4x8x8xbf16>
    "tpu.trace_start"() <{level = 10 : i32, message = "hqk,hkd->hqd"}> : () -> ()
    %cst_44 = arith.constant dense<0.000000e+00> : vector<4x8x8xf32>
    %97 = tpu.matmul %96, %78, %cst_44 {dimension_numbers = #tpu.dot_dimension_numbers<[2], [1], [1], [2], [0, 0, 0, 1, 1, 2], [0], [0]>} : vector<4x8x8xbf16>, vector<4x8x8xbf16>, vector<4x8x8xf32> -> vector<4x8x8xf32>
    "tpu.trace_stop"() : () -> ()
    %98 = vector.extract_strided_slice %97 {offsets = [0, 0, 0], sizes = [1, 8, 8], strides = [1, 1, 1]} : vector<4x8x8xf32> to vector<1x8x8xf32>
    %99 = vector.shape_cast %98 : vector<1x8x8xf32> to vector<8x8xf32>
    %100 = vector.extract_strided_slice %97 {offsets = [1, 0, 0], sizes = [1, 8, 8], strides = [1, 1, 1]} : vector<4x8x8xf32> to vector<1x8x8xf32>
    %101 = vector.shape_cast %100 : vector<1x8x8xf32> to vector<8x8xf32>
    %102 = vector.extract_strided_slice %97 {offsets = [2, 0, 0], sizes = [1, 8, 8], strides = [1, 1, 1]} : vector<4x8x8xf32> to vector<1x8x8xf32>
    %103 = vector.shape_cast %102 : vector<1x8x8xf32> to vector<8x8xf32>
    %104 = vector.extract_strided_slice %97 {offsets = [3, 0, 0], sizes = [1, 8, 8], strides = [1, 1, 1]} : vector<4x8x8xf32> to vector<1x8x8xf32>
    %105 = vector.shape_cast %104 : vector<1x8x8xf32> to vector<8x8xf32>
    %106 = tpu.concatenate %99, %101, %103, %105 in 1 : vector<8x8xf32>, vector<8x8xf32>, vector<8x8xf32>, vector<8x8xf32> -> vector<8x32xf32>
    %107 = arith.truncf %106 : vector<8x32xf32> to vector<8x32xbf16>
    %cst_45 = arith.constant dense<0.000000e+00> : vector<8x32xf32>
    %108 = tpu.matmul %107, %34, %cst_45 {dimension_numbers = #tpu.dot_dimension_numbers<[1], [0], [0], [1], [0, 0, 1, 1], [], []>} : vector<8x32xbf16>, vector<32x32xbf16>, vector<8x32xf32> -> vector<8x32xf32>
    %109 = vector.broadcast %36 : vector<1x32xf32> to vector<8x32xf32>
    %110 = arith.addf %108, %109 : vector<8x32xf32>
    %111 = arith.addf %3, %110 : vector<8x32xf32>
    %c0_46 = arith.constant 0 : index
    %c0_47 = arith.constant 0 : index
    %c0_48 = arith.constant 0 : index
    %112 = vector.load %arg14[%c0_46, %c0_47, %c0_48] : memref<1x1x32xf32, #tpu.memory_space<vmem>>, vector<1x1x32xf32>
    %113 = vector.shape_cast %112 : vector<1x1x32xf32> to vector<1x32xf32>
    %c0_49 = arith.constant 0 : index
    %c0_50 = arith.constant 0 : index
    %c0_51 = arith.constant 0 : index
    %114 = vector.load %arg15[%c0_49, %c0_50, %c0_51] : memref<1x1x32xf32, #tpu.memory_space<vmem>>, vector<1x1x32xf32>
    %115 = vector.shape_cast %114 : vector<1x1x32xf32> to vector<1x32xf32>
    %cst_52 = arith.constant dense<0.000000e+00> : vector<8xf32>
    %116 = vector.multi_reduction <add>, %111, %cst_52 [1] : vector<8x32xf32> to vector<8xf32>
    %117 = vector.shape_cast %116 : vector<8xf32> to vector<8x1xf32>
    %cst_53 = arith.constant 3.200000e+01 : f32
    %118 = vector.broadcast %cst_53 : f32 to vector<8x1xf32>
    %119 = arith.divf %117, %118 : vector<8x1xf32>
    %120 = vector.broadcast %119 : vector<8x1xf32> to vector<8x32xf32>
    %121 = arith.subf %111, %120 : vector<8x32xf32>
    %122 = arith.mulf %121, %121 : vector<8x32xf32>
    %cst_54 = arith.constant dense<0.000000e+00> : vector<8xf32>
    %123 = vector.multi_reduction <add>, %122, %cst_54 [1] : vector<8x32xf32> to vector<8xf32>
    %124 = vector.shape_cast %123 : vector<8xf32> to vector<8x1xf32>
    %cst_55 = arith.constant 3.200000e+01 : f32
    %125 = vector.broadcast %cst_55 : f32 to vector<8x1xf32>
    %126 = arith.divf %124, %125 : vector<8x1xf32>
    %127 = vector.broadcast %119 : vector<8x1xf32> to vector<8x32xf32>
    %128 = arith.subf %111, %127 : vector<8x32xf32>
    %cst_56 = arith.constant 9.99999974E-6 : f32
    %129 = vector.broadcast %cst_56 : f32 to vector<8x1xf32>
    %130 = arith.addf %126, %129 : vector<8x1xf32>
    %131 = math.rsqrt %130 : vector<8x1xf32>
    %132 = vector.broadcast %131 : vector<8x1xf32> to vector<8x32xf32>
    %133 = arith.mulf %128, %132 : vector<8x32xf32>
    %134 = vector.broadcast %113 : vector<1x32xf32> to vector<8x32xf32>
    %135 = arith.mulf %133, %134 : vector<8x32xf32>
    %136 = vector.broadcast %115 : vector<1x32xf32> to vector<8x32xf32>
    %137 = arith.addf %135, %136 : vector<8x32xf32>
    %c0_57 = arith.constant 0 : index
    %c0_58 = arith.constant 0 : index
    %c0_59 = arith.constant 0 : index
    %138 = vector.load %arg16[%c0_57, %c0_58, %c0_59] : memref<1x32x32xbf16, #tpu.memory_space<vmem>>, vector<1x32x32xbf16>
    %139 = vector.shape_cast %138 : vector<1x32x32xbf16> to vector<32x32xbf16>
    %c0_60 = arith.constant 0 : index
    %c0_61 = arith.constant 0 : index
    %c0_62 = arith.constant 0 : index
    %140 = vector.load %arg17[%c0_60, %c0_61, %c0_62] : memref<1x1x32xf32, #tpu.memory_space<vmem>>, vector<1x1x32xf32>
    %141 = vector.shape_cast %140 : vector<1x1x32xf32> to vector<1x32xf32>
    %c0_63 = arith.constant 0 : index
    %c0_64 = arith.constant 0 : index
    %c0_65 = arith.constant 0 : index
    %142 = vector.load %arg18[%c0_63, %c0_64, %c0_65] : memref<1x32x32xbf16, #tpu.memory_space<vmem>>, vector<1x32x32xbf16>
    %143 = vector.shape_cast %142 : vector<1x32x32xbf16> to vector<32x32xbf16>
    %c0_66 = arith.constant 0 : index
    %c0_67 = arith.constant 0 : index
    %c0_68 = arith.constant 0 : index
    %144 = vector.load %arg19[%c0_66, %c0_67, %c0_68] : memref<1x1x32xf32, #tpu.memory_space<vmem>>, vector<1x1x32xf32>
    %145 = vector.shape_cast %144 : vector<1x1x32xf32> to vector<1x32xf32>
    %c0_69 = arith.constant 0 : index
    %c0_70 = arith.constant 0 : index
    %c0_71 = arith.constant 0 : index
    %146 = vector.load %arg20[%c0_69, %c0_70, %c0_71] : memref<1x32x32xbf16, #tpu.memory_space<vmem>>, vector<1x32x32xbf16>
    %147 = vector.shape_cast %146 : vector<1x32x32xbf16> to vector<32x32xbf16>
    %c0_72 = arith.constant 0 : index
    %c0_73 = arith.constant 0 : index
    %c0_74 = arith.constant 0 : index
    %148 = vector.load %arg21[%c0_72, %c0_73, %c0_74] : memref<1x1x32xf32, #tpu.memory_space<vmem>>, vector<1x1x32xf32>
    %149 = vector.shape_cast %148 : vector<1x1x32xf32> to vector<1x32xf32>
    %c0_75 = arith.constant 0 : index
    %c0_76 = arith.constant 0 : index
    %c0_77 = arith.constant 0 : index
    %150 = vector.load %arg22[%c0_75, %c0_76, %c0_77] : memref<1x32x32xbf16, #tpu.memory_space<vmem>>, vector<1x32x32xbf16>
    %151 = vector.shape_cast %150 : vector<1x32x32xbf16> to vector<32x32xbf16>
    %c0_78 = arith.constant 0 : index
    %c0_79 = arith.constant 0 : index
    %c0_80 = arith.constant 0 : index
    %152 = vector.load %arg23[%c0_78, %c0_79, %c0_80] : memref<1x1x32xf32, #tpu.memory_space<vmem>>, vector<1x1x32xf32>
    %153 = vector.shape_cast %152 : vector<1x1x32xf32> to vector<1x32xf32>
    %154 = arith.truncf %137 : vector<8x32xf32> to vector<8x32xbf16>
    %cst_81 = arith.constant dense<0.000000e+00> : vector<8x32xf32>
    %155 = tpu.matmul %154, %139, %cst_81 {dimension_numbers = #tpu.dot_dimension_numbers<[1], [0], [0], [1], [0, 0, 1, 1], [], []>} : vector<8x32xbf16>, vector<32x32xbf16>, vector<8x32xf32> -> vector<8x32xf32>
    %156 = vector.broadcast %141 : vector<1x32xf32> to vector<8x32xf32>
    %157 = arith.addf %155, %156 : vector<8x32xf32>
    %158 = arith.truncf %5 : vector<8x32xf32> to vector<8x32xbf16>
    %cst_82 = arith.constant dense<0.000000e+00> : vector<8x32xf32>
    %159 = tpu.matmul %158, %143, %cst_82 {dimension_numbers = #tpu.dot_dimension_numbers<[1], [0], [0], [1], [0, 0, 1, 1], [], []>} : vector<8x32xbf16>, vector<32x32xbf16>, vector<8x32xf32> -> vector<8x32xf32>
    %160 = vector.broadcast %145 : vector<1x32xf32> to vector<8x32xf32>
    %161 = arith.addf %159, %160 : vector<8x32xf32>
    %162 = arith.truncf %5 : vector<8x32xf32> to vector<8x32xbf16>
    %cst_83 = arith.constant dense<0.000000e+00> : vector<8x32xf32>
    %163 = tpu.matmul %162, %147, %cst_83 {dimension_numbers = #tpu.dot_dimension_numbers<[1], [0], [0], [1], [0, 0, 1, 1], [], []>} : vector<8x32xbf16>, vector<32x32xbf16>, vector<8x32xf32> -> vector<8x32xf32>
    %164 = vector.broadcast %149 : vector<1x32xf32> to vector<8x32xf32>
    %165 = arith.addf %163, %164 : vector<8x32xf32>
    %166 = vector.extract_strided_slice %157 {offsets = [0, 0], sizes = [8, 8], strides = [1, 1]} : vector<8x32xf32> to vector<8x8xf32>
    %167 = vector.extract_strided_slice %157 {offsets = [0, 8], sizes = [8, 8], strides = [1, 1]} : vector<8x32xf32> to vector<8x8xf32>
    %168 = vector.extract_strided_slice %157 {offsets = [0, 16], sizes = [8, 8], strides = [1, 1]} : vector<8x32xf32> to vector<8x8xf32>
    %169 = vector.extract_strided_slice %157 {offsets = [0, 24], sizes = [8, 8], strides = [1, 1]} : vector<8x32xf32> to vector<8x8xf32>
    %170 = vector.shape_cast %166 : vector<8x8xf32> to vector<1x8x8xf32>
    %171 = vector.shape_cast %167 : vector<8x8xf32> to vector<1x8x8xf32>
    %172 = vector.shape_cast %168 : vector<8x8xf32> to vector<1x8x8xf32>
    %173 = vector.shape_cast %169 : vector<8x8xf32> to vector<1x8x8xf32>
    %174 = tpu.concatenate %170, %171, %172, %173 in 0 : vector<1x8x8xf32>, vector<1x8x8xf32>, vector<1x8x8xf32>, vector<1x8x8xf32> -> vector<4x8x8xf32>
    %175 = vector.extract_strided_slice %161 {offsets = [0, 0], sizes = [8, 8], strides = [1, 1]} : vector<8x32xf32> to vector<8x8xf32>
    %176 = vector.extract_strided_slice %161 {offsets = [0, 8], sizes = [8, 8], strides = [1, 1]} : vector<8x32xf32> to vector<8x8xf32>
    %177 = vector.extract_strided_slice %161 {offsets = [0, 16], sizes = [8, 8], strides = [1, 1]} : vector<8x32xf32> to vector<8x8xf32>
    %178 = vector.extract_strided_slice %161 {offsets = [0, 24], sizes = [8, 8], strides = [1, 1]} : vector<8x32xf32> to vector<8x8xf32>
    %179 = vector.shape_cast %175 : vector<8x8xf32> to vector<1x8x8xf32>
    %180 = vector.shape_cast %176 : vector<8x8xf32> to vector<1x8x8xf32>
    %181 = vector.shape_cast %177 : vector<8x8xf32> to vector<1x8x8xf32>
    %182 = vector.shape_cast %178 : vector<8x8xf32> to vector<1x8x8xf32>
    %183 = tpu.concatenate %179, %180, %181, %182 in 0 : vector<1x8x8xf32>, vector<1x8x8xf32>, vector<1x8x8xf32>, vector<1x8x8xf32> -> vector<4x8x8xf32>
    %184 = vector.extract_strided_slice %165 {offsets = [0, 0], sizes = [8, 8], strides = [1, 1]} : vector<8x32xf32> to vector<8x8xf32>
    %185 = vector.extract_strided_slice %165 {offsets = [0, 8], sizes = [8, 8], strides = [1, 1]} : vector<8x32xf32> to vector<8x8xf32>
    %186 = vector.extract_strided_slice %165 {offsets = [0, 16], sizes = [8, 8], strides = [1, 1]} : vector<8x32xf32> to vector<8x8xf32>
    %187 = vector.extract_strided_slice %165 {offsets = [0, 24], sizes = [8, 8], strides = [1, 1]} : vector<8x32xf32> to vector<8x8xf32>
    %188 = vector.shape_cast %184 : vector<8x8xf32> to vector<1x8x8xf32>
    %189 = vector.shape_cast %185 : vector<8x8xf32> to vector<1x8x8xf32>
    %190 = vector.shape_cast %186 : vector<8x8xf32> to vector<1x8x8xf32>
    %191 = vector.shape_cast %187 : vector<8x8xf32> to vector<1x8x8xf32>
    %192 = tpu.concatenate %188, %189, %190, %191 in 0 : vector<1x8x8xf32>, vector<1x8x8xf32>, vector<1x8x8xf32>, vector<1x8x8xf32> -> vector<4x8x8xf32>
    %193 = arith.truncf %174 : vector<4x8x8xf32> to vector<4x8x8xbf16>
    %194 = arith.truncf %183 : vector<4x8x8xf32> to vector<4x8x8xbf16>
    %195 = arith.truncf %192 : vector<4x8x8xf32> to vector<4x8x8xbf16>
    "tpu.trace_start"() <{level = 10 : i32, message = "hqd,hkd->hqk"}> : () -> ()
    %cst_84 = arith.constant dense<0.000000e+00> : vector<4x8x8xf32>
    %196 = tpu.matmul %193, %194, %cst_84 {dimension_numbers = #tpu.dot_dimension_numbers<[2], [2], [1], [1], [0, 0, 0, 1, 1, 1], [0], [0]>} : vector<4x8x8xbf16>, vector<4x8x8xbf16>, vector<4x8x8xf32> -> vector<4x8x8xf32>
    "tpu.trace_stop"() : () -> ()
    %cst_85 = arith.constant 0.353553385 : f32
    %197 = vector.broadcast %cst_85 : f32 to vector<4x8x8xf32>
    %198 = arith.mulf %196, %197 : vector<4x8x8xf32>
    %cst_86 = arith.constant -1.000000e+30 : f32
    %199 = vector.shape_cast %20 : vector<1x1x8xi1> to vector<1x1x8xi1>
    %200 = vector.broadcast %199 : vector<1x1x8xi1> to vector<4x8x8xi1>
    %201 = vector.broadcast %cst_86 : f32 to vector<4x8x8xf32>
    %202 = arith.select %200, %198, %201 : vector<4x8x8xi1>, vector<4x8x8xf32>
    %cst_87 = arith.constant dense<0xFF800000> : vector<4x8xf32>
    %203 = vector.multi_reduction <maximumf>, %202, %cst_87 [2] : vector<4x8x8xf32> to vector<4x8xf32>
    %204 = vector.shape_cast %203 : vector<4x8xf32> to vector<4x8x1xf32>
    %205 = vector.broadcast %204 : vector<4x8x1xf32> to vector<4x8x8xf32>
    %206 = arith.subf %202, %205 : vector<4x8x8xf32>
    %207 = math.exp %206 : vector<4x8x8xf32>
    %cst_88 = arith.constant dense<0.000000e+00> : vector<4x8xf32>
    %208 = vector.multi_reduction <add>, %207, %cst_88 [2] : vector<4x8x8xf32> to vector<4x8xf32>
    %209 = vector.shape_cast %208 : vector<4x8xf32> to vector<4x8x1xf32>
    %210 = tpu.reciprocal %209 {approx = true} : vector<4x8x1xf32> -> vector<4x8x1xf32>
    %211 = vector.broadcast %210 : vector<4x8x1xf32> to vector<4x8x8xf32>
    %212 = arith.mulf %207, %211 : vector<4x8x8xf32>
    %213 = arith.truncf %212 : vector<4x8x8xf32> to vector<4x8x8xbf16>
    "tpu.trace_start"() <{level = 10 : i32, message = "hqk,hkd->hqd"}> : () -> ()
    %cst_89 = arith.constant dense<0.000000e+00> : vector<4x8x8xf32>
    %214 = tpu.matmul %213, %195, %cst_89 {dimension_numbers = #tpu.dot_dimension_numbers<[2], [1], [1], [2], [0, 0, 0, 1, 1, 2], [0], [0]>} : vector<4x8x8xbf16>, vector<4x8x8xbf16>, vector<4x8x8xf32> -> vector<4x8x8xf32>
    "tpu.trace_stop"() : () -> ()
    %215 = vector.extract_strided_slice %214 {offsets = [0, 0, 0], sizes = [1, 8, 8], strides = [1, 1, 1]} : vector<4x8x8xf32> to vector<1x8x8xf32>
    %216 = vector.shape_cast %215 : vector<1x8x8xf32> to vector<8x8xf32>
    %217 = vector.extract_strided_slice %214 {offsets = [1, 0, 0], sizes = [1, 8, 8], strides = [1, 1, 1]} : vector<4x8x8xf32> to vector<1x8x8xf32>
    %218 = vector.shape_cast %217 : vector<1x8x8xf32> to vector<8x8xf32>
    %219 = vector.extract_strided_slice %214 {offsets = [2, 0, 0], sizes = [1, 8, 8], strides = [1, 1, 1]} : vector<4x8x8xf32> to vector<1x8x8xf32>
    %220 = vector.shape_cast %219 : vector<1x8x8xf32> to vector<8x8xf32>
    %221 = vector.extract_strided_slice %214 {offsets = [3, 0, 0], sizes = [1, 8, 8], strides = [1, 1, 1]} : vector<4x8x8xf32> to vector<1x8x8xf32>
    %222 = vector.shape_cast %221 : vector<1x8x8xf32> to vector<8x8xf32>
    %223 = tpu.concatenate %216, %218, %220, %222 in 1 : vector<8x8xf32>, vector<8x8xf32>, vector<8x8xf32>, vector<8x8xf32> -> vector<8x32xf32>
    %224 = arith.truncf %223 : vector<8x32xf32> to vector<8x32xbf16>
    %cst_90 = arith.constant dense<0.000000e+00> : vector<8x32xf32>
    %225 = tpu.matmul %224, %151, %cst_90 {dimension_numbers = #tpu.dot_dimension_numbers<[1], [0], [0], [1], [0, 0, 1, 1], [], []>} : vector<8x32xbf16>, vector<32x32xbf16>, vector<8x32xf32> -> vector<8x32xf32>
    %226 = vector.broadcast %153 : vector<1x32xf32> to vector<8x32xf32>
    %227 = arith.addf %225, %226 : vector<8x32xf32>
    %228 = arith.addf %137, %227 : vector<8x32xf32>
    %c0_91 = arith.constant 0 : index
    %c0_92 = arith.constant 0 : index
    %c0_93 = arith.constant 0 : index
    %229 = vector.load %arg24[%c0_91, %c0_92, %c0_93] : memref<1x1x32xf32, #tpu.memory_space<vmem>>, vector<1x1x32xf32>
    %230 = vector.shape_cast %229 : vector<1x1x32xf32> to vector<1x32xf32>
    %c0_94 = arith.constant 0 : index
    %c0_95 = arith.constant 0 : index
    %c0_96 = arith.constant 0 : index
    %231 = vector.load %arg25[%c0_94, %c0_95, %c0_96] : memref<1x1x32xf32, #tpu.memory_space<vmem>>, vector<1x1x32xf32>
    %232 = vector.shape_cast %231 : vector<1x1x32xf32> to vector<1x32xf32>
    %cst_97 = arith.constant dense<0.000000e+00> : vector<8xf32>
    %233 = vector.multi_reduction <add>, %228, %cst_97 [1] : vector<8x32xf32> to vector<8xf32>
    %234 = vector.shape_cast %233 : vector<8xf32> to vector<8x1xf32>
    %cst_98 = arith.constant 3.200000e+01 : f32
    %235 = vector.broadcast %cst_98 : f32 to vector<8x1xf32>
    %236 = arith.divf %234, %235 : vector<8x1xf32>
    %237 = vector.broadcast %236 : vector<8x1xf32> to vector<8x32xf32>
    %238 = arith.subf %228, %237 : vector<8x32xf32>
    %239 = arith.mulf %238, %238 : vector<8x32xf32>
    %cst_99 = arith.constant dense<0.000000e+00> : vector<8xf32>
    %240 = vector.multi_reduction <add>, %239, %cst_99 [1] : vector<8x32xf32> to vector<8xf32>
    %241 = vector.shape_cast %240 : vector<8xf32> to vector<8x1xf32>
    %cst_100 = arith.constant 3.200000e+01 : f32
    %242 = vector.broadcast %cst_100 : f32 to vector<8x1xf32>
    %243 = arith.divf %241, %242 : vector<8x1xf32>
    %244 = vector.broadcast %236 : vector<8x1xf32> to vector<8x32xf32>
    %245 = arith.subf %228, %244 : vector<8x32xf32>
    %cst_101 = arith.constant 9.99999974E-6 : f32
    %246 = vector.broadcast %cst_101 : f32 to vector<8x1xf32>
    %247 = arith.addf %243, %246 : vector<8x1xf32>
    %248 = math.rsqrt %247 : vector<8x1xf32>
    %249 = vector.broadcast %248 : vector<8x1xf32> to vector<8x32xf32>
    %250 = arith.mulf %245, %249 : vector<8x32xf32>
    %251 = vector.broadcast %230 : vector<1x32xf32> to vector<8x32xf32>
    %252 = arith.mulf %250, %251 : vector<8x32xf32>
    %253 = vector.broadcast %232 : vector<1x32xf32> to vector<8x32xf32>
    %254 = arith.addf %252, %253 : vector<8x32xf32>
    %c0_102 = arith.constant 0 : index
    %c0_103 = arith.constant 0 : index
    %c0_104 = arith.constant 0 : index
    %255 = vector.load %arg26[%c0_102, %c0_103, %c0_104] : memref<1x32x64xbf16, #tpu.memory_space<vmem>>, vector<1x32x64xbf16>
    %256 = vector.shape_cast %255 : vector<1x32x64xbf16> to vector<32x64xbf16>
    %c0_105 = arith.constant 0 : index
    %c0_106 = arith.constant 0 : index
    %c0_107 = arith.constant 0 : index
    %257 = vector.load %arg27[%c0_105, %c0_106, %c0_107] : memref<1x1x64xf32, #tpu.memory_space<vmem>>, vector<1x1x64xf32>
    %258 = vector.shape_cast %257 : vector<1x1x64xf32> to vector<1x64xf32>
    %c0_108 = arith.constant 0 : index
    %c0_109 = arith.constant 0 : index
    %c0_110 = arith.constant 0 : index
    %259 = vector.load %arg28[%c0_108, %c0_109, %c0_110] : memref<1x64x32xbf16, #tpu.memory_space<vmem>>, vector<1x64x32xbf16>
    %260 = vector.shape_cast %259 : vector<1x64x32xbf16> to vector<64x32xbf16>
    %c0_111 = arith.constant 0 : index
    %c0_112 = arith.constant 0 : index
    %c0_113 = arith.constant 0 : index
    %261 = vector.load %arg29[%c0_111, %c0_112, %c0_113] : memref<1x1x32xf32, #tpu.memory_space<vmem>>, vector<1x1x32xf32>
    %262 = vector.shape_cast %261 : vector<1x1x32xf32> to vector<1x32xf32>
    %263 = arith.truncf %254 : vector<8x32xf32> to vector<8x32xbf16>
    %cst_114 = arith.constant dense<0.000000e+00> : vector<8x64xf32>
    %264 = tpu.matmul %263, %256, %cst_114 {dimension_numbers = #tpu.dot_dimension_numbers<[1], [0], [0], [1], [0, 0, 1, 1], [], []>} : vector<8x32xbf16>, vector<32x64xbf16>, vector<8x64xf32> -> vector<8x64xf32>
    %265 = vector.broadcast %258 : vector<1x64xf32> to vector<8x64xf32>
    %266 = arith.addf %264, %265 : vector<8x64xf32>
    %cst_115 = arith.constant 0.000000e+00 : f32
    %267 = vector.broadcast %cst_115 : f32 to vector<8x64xf32>
    %268 = arith.maximumf %266, %267 : vector<8x64xf32>
    %269 = arith.truncf %268 : vector<8x64xf32> to vector<8x64xbf16>
    %cst_116 = arith.constant dense<0.000000e+00> : vector<8x32xf32>
    %270 = tpu.matmul %269, %260, %cst_116 {dimension_numbers = #tpu.dot_dimension_numbers<[1], [0], [0], [1], [0, 0, 1, 1], [], []>} : vector<8x64xbf16>, vector<64x32xbf16>, vector<8x32xf32> -> vector<8x32xf32>
    %271 = vector.broadcast %262 : vector<1x32xf32> to vector<8x32xf32>
    %272 = arith.addf %270, %271 : vector<8x32xf32>
    %273 = arith.addf %254, %272 : vector<8x32xf32>
    %c0_117 = arith.constant 0 : index
    %c0_118 = arith.constant 0 : index
    %c0_119 = arith.constant 0 : index
    %274 = vector.load %arg30[%c0_117, %c0_118, %c0_119] : memref<1x1x32xf32, #tpu.memory_space<vmem>>, vector<1x1x32xf32>
    %275 = vector.shape_cast %274 : vector<1x1x32xf32> to vector<1x32xf32>
    %c0_120 = arith.constant 0 : index
    %c0_121 = arith.constant 0 : index
    %c0_122 = arith.constant 0 : index
    %276 = vector.load %arg31[%c0_120, %c0_121, %c0_122] : memref<1x1x32xf32, #tpu.memory_space<vmem>>, vector<1x1x32xf32>
    %277 = vector.shape_cast %276 : vector<1x1x32xf32> to vector<1x32xf32>
    %cst_123 = arith.constant dense<0.000000e+00> : vector<8xf32>
    %278 = vector.multi_reduction <add>, %273, %cst_123 [1] : vector<8x32xf32> to vector<8xf32>
    %279 = vector.shape_cast %278 : vector<8xf32> to vector<8x1xf32>
    %cst_124 = arith.constant 3.200000e+01 : f32
    %280 = vector.broadcast %cst_124 : f32 to vector<8x1xf32>
    %281 = arith.divf %279, %280 : vector<8x1xf32>
    %282 = vector.broadcast %281 : vector<8x1xf32> to vector<8x32xf32>
    %283 = arith.subf %273, %282 : vector<8x32xf32>
    %284 = arith.mulf %283, %283 : vector<8x32xf32>
    %cst_125 = arith.constant dense<0.000000e+00> : vector<8xf32>
    %285 = vector.multi_reduction <add>, %284, %cst_125 [1] : vector<8x32xf32> to vector<8xf32>
    %286 = vector.shape_cast %285 : vector<8xf32> to vector<8x1xf32>
    %cst_126 = arith.constant 3.200000e+01 : f32
    %287 = vector.broadcast %cst_126 : f32 to vector<8x1xf32>
    %288 = arith.divf %286, %287 : vector<8x1xf32>
    %289 = vector.broadcast %281 : vector<8x1xf32> to vector<8x32xf32>
    %290 = arith.subf %273, %289 : vector<8x32xf32>
    %cst_127 = arith.constant 9.99999974E-6 : f32
    %291 = vector.broadcast %cst_127 : f32 to vector<8x1xf32>
    %292 = arith.addf %288, %291 : vector<8x1xf32>
    %293 = math.rsqrt %292 : vector<8x1xf32>
    %294 = vector.broadcast %293 : vector<8x1xf32> to vector<8x32xf32>
    %295 = arith.mulf %290, %294 : vector<8x32xf32>
    %296 = vector.broadcast %275 : vector<1x32xf32> to vector<8x32xf32>
    %297 = arith.mulf %295, %296 : vector<8x32xf32>
    %298 = vector.broadcast %277 : vector<1x32xf32> to vector<8x32xf32>
    %299 = arith.addf %297, %298 : vector<8x32xf32>
    %c0_128 = arith.constant 0 : index
    %c0_129 = arith.constant 0 : index
    %300 = vector.load %arg35[%c0_128, %c0_129] : memref<8x32xf32, #tpu.memory_space<vmem>>, vector<8x32xf32>
    tpu.vector_store %arg35[%c0_128, %c0_129], %299 {strides = array<i32>} : memref<8x32xf32, #tpu.memory_space<vmem>>, vector<8x32xf32>,
    %c1_i32 = arith.constant 1 : i32
    %301 = arith.cmpi eq, %arg1, %c1_i32 : i32
    %302 = arith.extui %301 : i1 to i32
    %c0_i32_130 = arith.constant 0 : i32
    %303 = arith.cmpi ne, %302, %c0_i32_130 : i32
    scf.if %303 {
      %304 = arith.truncf %299 : vector<8x32xf32> to vector<8x32xbf16>
      %c0_131 = arith.constant 0 : index
      %c0_132 = arith.constant 0 : index
      %305 = vector.load %arg32[%c0_131, %c0_132] : memref<32x128xbf16, #tpu.memory_space<vmem>>, vector<32x128xbf16>
      %cst_133 = arith.constant dense<0.000000e+00> : vector<8x128xf32>
      %306 = tpu.matmul %304, %305, %cst_133 {dimension_numbers = #tpu.dot_dimension_numbers<[1], [0], [0], [1], [0, 0, 1, 1], [], []>} : vector<8x32xbf16>, vector<32x128xbf16>, vector<8x128xf32> -> vector<8x128xf32>
      %c0_134 = arith.constant 0 : index
      %c0_135 = arith.constant 0 : index
      %307 = vector.load %arg33[%c0_134, %c0_135] : memref<1x128xf32, #tpu.memory_space<vmem>>, vector<1x128xf32>
      %308 = vector.broadcast %307 : vector<1x128xf32> to vector<8x128xf32>
      %309 = arith.addf %306, %308 : vector<8x128xf32>
      %c0_136 = arith.constant 0 : index
      %c0_137 = arith.constant 0 : index
      %c0_138 = arith.constant 0 : index
      %310 = vector.load %arg34[%c0_136, %c0_137, %c0_138] : memref<1x8x128xf32, #tpu.memory_space<vmem>>, vector<1x8x128xf32>
      %311 = vector.shape_cast %310 : vector<1x8x128xf32> to vector<8x128xf32>
      %312 = vector.shape_cast %309 : vector<8x128xf32> to vector<1x8x128xf32>
      tpu.vector_store %arg34[%c0_136, %c0_137, %c0_138], %312 {strides = array<i32>} : memref<1x8x128xf32, #tpu.memory_space<vmem>>, vector<1x8x128xf32>,
    } else {
    }
    return
  }
  func.func @transform_0(%arg0: i32, %arg1: i32) -> (i32, i32, i32) {
    %c0_i32 = arith.constant 0 : i32
    %c0_i32_0 = arith.constant 0 : i32
    %c0_i32_1 = arith.constant 0 : i32
    return %arg0, %c0_i32, %c0_i32_0 : i32, i32, i32
  }
  func.func @transform_1(%arg0: i32, %arg1: i32) -> (i32, i32, i32) {
    %c0_i32 = arith.constant 0 : i32
    %c0_i32_0 = arith.constant 0 : i32
    %c0_i32_1 = arith.constant 0 : i32
    return %arg0, %c0_i32, %c0_i32_0 : i32, i32, i32
  }
  func.func @transform_2(%arg0: i32, %arg1: i32) -> (i32, i32, i32) {
    %c0_i32 = arith.constant 0 : i32
    %c0_i32_0 = arith.constant 0 : i32
    %c0_i32_1 = arith.constant 0 : i32
    return %arg0, %c0_i32, %c0_i32_0 : i32, i32, i32
  }
  func.func @transform_3(%arg0: i32, %arg1: i32) -> (i32, i32, i32) {
    %c0_i32 = arith.constant 0 : i32
    %c0_i32_0 = arith.constant 0 : i32
    %c0_i32_1 = arith.constant 0 : i32
    return %arg0, %c0_i32, %c0_i32_0 : i32, i32, i32
  }
  func.func @transform_4(%arg0: i32, %arg1: i32) -> (i32, i32, i32) {
    %c0_i32 = arith.constant 0 : i32
    %c0_i32_0 = arith.constant 0 : i32
    %c0_i32_1 = arith.constant 0 : i32
    return %arg1, %c0_i32, %c0_i32_0 : i32, i32, i32
  }
  func.func @transform_5(%arg0: i32, %arg1: i32) -> (i32, i32, i32) {
    %c0_i32 = arith.constant 0 : i32
    %c0_i32_0 = arith.constant 0 : i32
    %c0_i32_1 = arith.constant 0 : i32
    return %arg1, %c0_i32, %c0_i32_0 : i32, i32, i32
  }
  func.func @transform_6(%arg0: i32, %arg1: i32) -> (i32, i32, i32) {
    %c0_i32 = arith.constant 0 : i32
    %c0_i32_0 = arith.constant 0 : i32
    %c0_i32_1 = arith.constant 0 : i32
    return %arg1, %c0_i32, %c0_i32_0 : i32, i32, i32
  }
  func.func @transform_7(%arg0: i32, %arg1: i32) -> (i32, i32, i32) {
    %c0_i32 = arith.constant 0 : i32
    %c0_i32_0 = arith.constant 0 : i32
    %c0_i32_1 = arith.constant 0 : i32
    return %arg1, %c0_i32, %c0_i32_0 : i32, i32, i32
  }
  func.func @transform_8(%arg0: i32, %arg1: i32) -> (i32, i32, i32) {
    %c0_i32 = arith.constant 0 : i32
    %c0_i32_0 = arith.constant 0 : i32
    %c0_i32_1 = arith.constant 0 : i32
    return %arg1, %c0_i32, %c0_i32_0 : i32, i32, i32
  }
  func.func @transform_9(%arg0: i32, %arg1: i32) -> (i32, i32, i32) {
    %c0_i32 = arith.constant 0 : i32
    %c0_i32_0 = arith.constant 0 : i32
    %c0_i32_1 = arith.constant 0 : i32
    return %arg1, %c0_i32, %c0_i32_0 : i32, i32, i32
  }
  func.func @transform_10(%arg0: i32, %arg1: i32) -> (i32, i32, i32) {
    %c0_i32 = arith.constant 0 : i32
    %c0_i32_0 = arith.constant 0 : i32
    %c0_i32_1 = arith.constant 0 : i32
    return %arg1, %c0_i32, %c0_i32_0 : i32, i32, i32
  }
  func.func @transform_11(%arg0: i32, %arg1: i32) -> (i32, i32, i32) {
    %c0_i32 = arith.constant 0 : i32
    %c0_i32_0 = arith.constant 0 : i32
    %c0_i32_1 = arith.constant 0 : i32
    return %arg1, %c0_i32, %c0_i32_0 : i32, i32, i32
  }
  func.func @transform_12(%arg0: i32, %arg1: i32) -> (i32, i32, i32) {
    %c0_i32 = arith.constant 0 : i32
    %c0_i32_0 = arith.constant 0 : i32
    %c0_i32_1 = arith.constant 0 : i32
    return %arg1, %c0_i32, %c0_i32_0 : i32, i32, i32
  }
  func.func @transform_13(%arg0: i32, %arg1: i32) -> (i32, i32, i32) {
    %c0_i32 = arith.constant 0 : i32
    %c0_i32_0 = arith.constant 0 : i32
    %c0_i32_1 = arith.constant 0 : i32
    return %arg1, %c0_i32, %c0_i32_0 : i32, i32, i32
  }
  func.func @transform_14(%arg0: i32, %arg1: i32) -> (i32, i32, i32) {
    %c0_i32 = arith.constant 0 : i32
    %c0_i32_0 = arith.constant 0 : i32
    %c0_i32_1 = arith.constant 0 : i32
    return %arg1, %c0_i32, %c0_i32_0 : i32, i32, i32
  }
  func.func @transform_15(%arg0: i32, %arg1: i32) -> (i32, i32, i32) {
    %c0_i32 = arith.constant 0 : i32
    %c0_i32_0 = arith.constant 0 : i32
    %c0_i32_1 = arith.constant 0 : i32
    return %arg1, %c0_i32, %c0_i32_0 : i32, i32, i32
  }
  func.func @transform_16(%arg0: i32, %arg1: i32) -> (i32, i32, i32) {
    %c0_i32 = arith.constant 0 : i32
    %c0_i32_0 = arith.constant 0 : i32
    %c0_i32_1 = arith.constant 0 : i32
    return %arg1, %c0_i32, %c0_i32_0 : i32, i32, i32
  }
  func.func @transform_17(%arg0: i32, %arg1: i32) -> (i32, i32, i32) {
    %c0_i32 = arith.constant 0 : i32
    %c0_i32_0 = arith.constant 0 : i32
    %c0_i32_1 = arith.constant 0 : i32
    return %arg1, %c0_i32, %c0_i32_0 : i32, i32, i32
  }
  func.func @transform_18(%arg0: i32, %arg1: i32) -> (i32, i32, i32) {
    %c0_i32 = arith.constant 0 : i32
    %c0_i32_0 = arith.constant 0 : i32
    %c0_i32_1 = arith.constant 0 : i32
    return %arg1, %c0_i32, %c0_i32_0 : i32, i32, i32
  }
  func.func @transform_19(%arg0: i32, %arg1: i32) -> (i32, i32, i32) {
    %c0_i32 = arith.constant 0 : i32
    %c0_i32_0 = arith.constant 0 : i32
    %c0_i32_1 = arith.constant 0 : i32
    return %arg1, %c0_i32, %c0_i32_0 : i32, i32, i32
  }
  func.func @transform_20(%arg0: i32, %arg1: i32) -> (i32, i32, i32) {
    %c0_i32 = arith.constant 0 : i32
    %c0_i32_0 = arith.constant 0 : i32
    %c0_i32_1 = arith.constant 0 : i32
    return %arg1, %c0_i32, %c0_i32_0 : i32, i32, i32
  }
  func.func @transform_21(%arg0: i32, %arg1: i32) -> (i32, i32, i32) {
    %c0_i32 = arith.constant 0 : i32
    %c0_i32_0 = arith.constant 0 : i32
    %c0_i32_1 = arith.constant 0 : i32
    return %arg1, %c0_i32, %c0_i32_0 : i32, i32, i32
  }
  func.func @transform_22(%arg0: i32, %arg1: i32) -> (i32, i32, i32) {
    %c0_i32 = arith.constant 0 : i32
    %c0_i32_0 = arith.constant 0 : i32
    %c0_i32_1 = arith.constant 0 : i32
    return %arg1, %c0_i32, %c0_i32_0 : i32, i32, i32
  }
  func.func @transform_23(%arg0: i32, %arg1: i32) -> (i32, i32, i32) {
    %c0_i32 = arith.constant 0 : i32
    %c0_i32_0 = arith.constant 0 : i32
    %c0_i32_1 = arith.constant 0 : i32
    return %arg1, %c0_i32, %c0_i32_0 : i32, i32, i32
  }
  func.func @transform_24(%arg0: i32, %arg1: i32) -> (i32, i32, i32) {
    %c0_i32 = arith.constant 0 : i32
    %c0_i32_0 = arith.constant 0 : i32
    %c0_i32_1 = arith.constant 0 : i32
    return %arg1, %c0_i32, %c0_i32_0 : i32, i32, i32
  }
  func.func @transform_25(%arg0: i32, %arg1: i32) -> (i32, i32, i32) {
    %c0_i32 = arith.constant 0 : i32
    %c0_i32_0 = arith.constant 0 : i32
    %c0_i32_1 = arith.constant 0 : i32
    return %arg1, %c0_i32, %c0_i32_0 : i32, i32, i32
  }
  func.func @transform_26(%arg0: i32, %arg1: i32) -> (i32, i32, i32) {
    %c0_i32 = arith.constant 0 : i32
    %c0_i32_0 = arith.constant 0 : i32
    %c0_i32_1 = arith.constant 0 : i32
    return %arg1, %c0_i32, %c0_i32_0 : i32, i32, i32
  }
  func.func @transform_27(%arg0: i32, %arg1: i32) -> (i32, i32, i32) {
    %c0_i32 = arith.constant 0 : i32
    %c0_i32_0 = arith.constant 0 : i32
    %c0_i32_1 = arith.constant 0 : i32
    return %arg1, %c0_i32, %c0_i32_0 : i32, i32, i32
  }
  func.func @transform_28(%arg0: i32, %arg1: i32) -> (i32, i32, i32) {
    %c0_i32 = arith.constant 0 : i32
    %c0_i32_0 = arith.constant 0 : i32
    %c0_i32_1 = arith.constant 0 : i32
    return %arg1, %c0_i32, %c0_i32_0 : i32, i32, i32
  }
  func.func @transform_29(%arg0: i32, %arg1: i32) -> (i32, i32, i32) {
    %c0_i32 = arith.constant 0 : i32
    %c0_i32_0 = arith.constant 0 : i32
    %c0_i32_1 = arith.constant 0 : i32
    return %arg1, %c0_i32, %c0_i32_0 : i32, i32, i32
  }
  func.func @transform_30(%arg0: i32, %arg1: i32) -> (i32, i32) {
    %c0_i32 = arith.constant 0 : i32
    %c0_i32_0 = arith.constant 0 : i32
    %c0_i32_1 = arith.constant 0 : i32
    return %c0_i32, %c0_i32_0 : i32, i32
  }
  func.func @transform_31(%arg0: i32, %arg1: i32) -> (i32, i32) {
    %c0_i32 = arith.constant 0 : i32
    %c0_i32_0 = arith.constant 0 : i32
    %c0_i32_1 = arith.constant 0 : i32
    return %c0_i32, %c0_i32_0 : i32, i32
  }
  func.func @transform_32(%arg0: i32, %arg1: i32) -> (i32, i32, i32) {
    %c0_i32 = arith.constant 0 : i32
    %c0_i32_0 = arith.constant 0 : i32
    %c0_i32_1 = arith.constant 0 : i32
    return %arg0, %c0_i32, %c0_i32_0 : i32, i32, i32
  }
}

module attributes {stable_mosaic.version = 11 : i64} {
  func.func @_encoder_stack_kernel(%arg0: i32, %arg1: i32, %arg2: memref<1x1x8xf32, #tpu.memory_space<vmem>>, %arg3: memref<1x8x32xf32, #tpu.memory_space<vmem>>, %arg4: memref<1x32x32xbf16, #tpu.memory_space<vmem>>, %arg5: memref<1x1x32xf32, #tpu.memory_space<vmem>>, %arg6: memref<1x32x32xbf16, #tpu.memory_space<vmem>>, %arg7: memref<1x1x32xf32, #tpu.memory_space<vmem>>, %arg8: memref<1x32x32xbf16, #tpu.memory_space<vmem>>, %arg9: memref<1x1x32xf32, #tpu.memory_space<vmem>>, %arg10: memref<1x32x32xbf16, #tpu.memory_space<vmem>>, %arg11: memref<1x1x32xf32, #tpu.memory_space<vmem>>, %arg12: memref<1x1x32xf32, #tpu.memory_space<vmem>>, %arg13: memref<1x1x32xf32, #tpu.memory_space<vmem>>, %arg14: memref<1x32x64xbf16, #tpu.memory_space<vmem>>, %arg15: memref<1x1x64xf32, #tpu.memory_space<vmem>>, %arg16: memref<1x64x32xbf16, #tpu.memory_space<vmem>>, %arg17: memref<1x1x32xf32, #tpu.memory_space<vmem>>, %arg18: memref<1x1x32xf32, #tpu.memory_space<vmem>>, %arg19: memref<1x1x32xf32, #tpu.memory_space<vmem>>, %arg20: memref<1x8x32xf32, #tpu.memory_space<vmem>>, %arg21: memref<8x32xf32, #tpu.memory_space<vmem>>) attributes {dimension_semantics = [#tpu.dimension_semantics<parallel>, #tpu.dimension_semantics<arbitrary>], iteration_bounds = array<i64: 2, 2>, scalar_prefetch = 0 : i64, scratch_operands = 1 : i64, tpu.core_type = #tpu.core_type<tc>, window_params = [{transform_indices = @transform_0, window_bounds = array<i64: 1, 1, 8>}, {transform_indices = @transform_1, window_bounds = array<i64: 1, 8, 32>}, {transform_indices = @transform_2, window_bounds = array<i64: 1, 32, 32>}, {transform_indices = @transform_3, window_bounds = array<i64: 1, 1, 32>}, {transform_indices = @transform_4, window_bounds = array<i64: 1, 32, 32>}, {transform_indices = @transform_5, window_bounds = array<i64: 1, 1, 32>}, {transform_indices = @transform_6, window_bounds = array<i64: 1, 32, 32>}, {transform_indices = @transform_7, window_bounds = array<i64: 1, 1, 32>}, {transform_indices = @transform_8, window_bounds = array<i64: 1, 32, 32>}, {transform_indices = @transform_9, window_bounds = array<i64: 1, 1, 32>}, {transform_indices = @transform_10, window_bounds = array<i64: 1, 1, 32>}, {transform_indices = @transform_11, window_bounds = array<i64: 1, 1, 32>}, {transform_indices = @transform_12, window_bounds = array<i64: 1, 32, 64>}, {transform_indices = @transform_13, window_bounds = array<i64: 1, 1, 64>}, {transform_indices = @transform_14, window_bounds = array<i64: 1, 64, 32>}, {transform_indices = @transform_15, window_bounds = array<i64: 1, 1, 32>}, {transform_indices = @transform_16, window_bounds = array<i64: 1, 1, 32>}, {transform_indices = @transform_17, window_bounds = array<i64: 1, 1, 32>}, {transform_indices = @transform_18, window_bounds = array<i64: 1, 8, 32>}]} {
    %c0_i32 = arith.constant 0 : i32
    %0 = arith.cmpi eq, %arg1, %c0_i32 : i32
    %1 = arith.extui %0 : i1 to i32
    %c0_i32_0 = arith.constant 0 : i32
    %2 = arith.cmpi ne, %1, %c0_i32_0 : i32
    scf.if %2 {
      %c0_79 = arith.constant 0 : index
      %c0_80 = arith.constant 0 : index
      %c0_81 = arith.constant 0 : index
      %175 = vector.load %arg3[%c0_79, %c0_80, %c0_81] : memref<1x8x32xf32, #tpu.memory_space<vmem>>, vector<1x8x32xf32>
      %176 = vector.shape_cast %175 : vector<1x8x32xf32> to vector<8x32xf32>
      %c0_82 = arith.constant 0 : index
      %c0_83 = arith.constant 0 : index
      %177 = vector.load %arg21[%c0_82, %c0_83] : memref<8x32xf32, #tpu.memory_space<vmem>>, vector<8x32xf32>
      tpu.vector_store %arg21[%c0_82, %c0_83], %176 {strides = array<i32>} : memref<8x32xf32, #tpu.memory_space<vmem>>, vector<8x32xf32>,
    } else {
    }
    %c0 = arith.constant 0 : index
    %c0_1 = arith.constant 0 : index
    %3 = vector.load %arg21[%c0, %c0_1] : memref<8x32xf32, #tpu.memory_space<vmem>>, vector<8x32xf32>
    %c0_2 = arith.constant 0 : index
    %c0_3 = arith.constant 0 : index
    %c0_4 = arith.constant 0 : index
    %4 = vector.load %arg2[%c0_2, %c0_3, %c0_4] : memref<1x1x8xf32, #tpu.memory_space<vmem>>, vector<1x1x8xf32>
    %5 = vector.shape_cast %4 : vector<1x1x8xf32> to vector<1x8xf32>
    %cst = arith.constant 0.000000e+00 : f32
    %6 = vector.broadcast %cst : f32 to vector<1x8xf32>
    %7 = arith.cmpf ogt, %5, %6 : vector<1x8xf32>
    %8 = vector.shape_cast %7 : vector<1x8xi1> to vector<1x1x8xi1>
    %c0_5 = arith.constant 0 : index
    %c0_6 = arith.constant 0 : index
    %c0_7 = arith.constant 0 : index
    %9 = vector.load %arg4[%c0_5, %c0_6, %c0_7] : memref<1x32x32xbf16, #tpu.memory_space<vmem>>, vector<1x32x32xbf16>
    %10 = vector.shape_cast %9 : vector<1x32x32xbf16> to vector<32x32xbf16>
    %c0_8 = arith.constant 0 : index
    %c0_9 = arith.constant 0 : index
    %c0_10 = arith.constant 0 : index
    %11 = vector.load %arg5[%c0_8, %c0_9, %c0_10] : memref<1x1x32xf32, #tpu.memory_space<vmem>>, vector<1x1x32xf32>
    %12 = vector.shape_cast %11 : vector<1x1x32xf32> to vector<1x32xf32>
    %c0_11 = arith.constant 0 : index
    %c0_12 = arith.constant 0 : index
    %c0_13 = arith.constant 0 : index
    %13 = vector.load %arg6[%c0_11, %c0_12, %c0_13] : memref<1x32x32xbf16, #tpu.memory_space<vmem>>, vector<1x32x32xbf16>
    %14 = vector.shape_cast %13 : vector<1x32x32xbf16> to vector<32x32xbf16>
    %c0_14 = arith.constant 0 : index
    %c0_15 = arith.constant 0 : index
    %c0_16 = arith.constant 0 : index
    %15 = vector.load %arg7[%c0_14, %c0_15, %c0_16] : memref<1x1x32xf32, #tpu.memory_space<vmem>>, vector<1x1x32xf32>
    %16 = vector.shape_cast %15 : vector<1x1x32xf32> to vector<1x32xf32>
    %c0_17 = arith.constant 0 : index
    %c0_18 = arith.constant 0 : index
    %c0_19 = arith.constant 0 : index
    %17 = vector.load %arg8[%c0_17, %c0_18, %c0_19] : memref<1x32x32xbf16, #tpu.memory_space<vmem>>, vector<1x32x32xbf16>
    %18 = vector.shape_cast %17 : vector<1x32x32xbf16> to vector<32x32xbf16>
    %c0_20 = arith.constant 0 : index
    %c0_21 = arith.constant 0 : index
    %c0_22 = arith.constant 0 : index
    %19 = vector.load %arg9[%c0_20, %c0_21, %c0_22] : memref<1x1x32xf32, #tpu.memory_space<vmem>>, vector<1x1x32xf32>
    %20 = vector.shape_cast %19 : vector<1x1x32xf32> to vector<1x32xf32>
    %c0_23 = arith.constant 0 : index
    %c0_24 = arith.constant 0 : index
    %c0_25 = arith.constant 0 : index
    %21 = vector.load %arg10[%c0_23, %c0_24, %c0_25] : memref<1x32x32xbf16, #tpu.memory_space<vmem>>, vector<1x32x32xbf16>
    %22 = vector.shape_cast %21 : vector<1x32x32xbf16> to vector<32x32xbf16>
    %c0_26 = arith.constant 0 : index
    %c0_27 = arith.constant 0 : index
    %c0_28 = arith.constant 0 : index
    %23 = vector.load %arg11[%c0_26, %c0_27, %c0_28] : memref<1x1x32xf32, #tpu.memory_space<vmem>>, vector<1x1x32xf32>
    %24 = vector.shape_cast %23 : vector<1x1x32xf32> to vector<1x32xf32>
    %25 = arith.truncf %3 : vector<8x32xf32> to vector<8x32xbf16>
    %cst_29 = arith.constant dense<0.000000e+00> : vector<8x32xf32>
    %26 = tpu.matmul %25, %10, %cst_29 {dimension_numbers = #tpu.dot_dimension_numbers<[1], [0], [0], [1], [0, 0, 1, 1], [], []>} : vector<8x32xbf16>, vector<32x32xbf16>, vector<8x32xf32> -> vector<8x32xf32>
    %27 = vector.broadcast %12 : vector<1x32xf32> to vector<8x32xf32>
    %28 = arith.addf %26, %27 : vector<8x32xf32>
    %29 = arith.truncf %3 : vector<8x32xf32> to vector<8x32xbf16>
    %cst_30 = arith.constant dense<0.000000e+00> : vector<8x32xf32>
    %30 = tpu.matmul %29, %14, %cst_30 {dimension_numbers = #tpu.dot_dimension_numbers<[1], [0], [0], [1], [0, 0, 1, 1], [], []>} : vector<8x32xbf16>, vector<32x32xbf16>, vector<8x32xf32> -> vector<8x32xf32>
    %31 = vector.broadcast %16 : vector<1x32xf32> to vector<8x32xf32>
    %32 = arith.addf %30, %31 : vector<8x32xf32>
    %33 = arith.truncf %3 : vector<8x32xf32> to vector<8x32xbf16>
    %cst_31 = arith.constant dense<0.000000e+00> : vector<8x32xf32>
    %34 = tpu.matmul %33, %18, %cst_31 {dimension_numbers = #tpu.dot_dimension_numbers<[1], [0], [0], [1], [0, 0, 1, 1], [], []>} : vector<8x32xbf16>, vector<32x32xbf16>, vector<8x32xf32> -> vector<8x32xf32>
    %35 = vector.broadcast %20 : vector<1x32xf32> to vector<8x32xf32>
    %36 = arith.addf %34, %35 : vector<8x32xf32>
    %37 = vector.extract_strided_slice %28 {offsets = [0, 0], sizes = [8, 8], strides = [1, 1]} : vector<8x32xf32> to vector<8x8xf32>
    %38 = vector.extract_strided_slice %28 {offsets = [0, 8], sizes = [8, 8], strides = [1, 1]} : vector<8x32xf32> to vector<8x8xf32>
    %39 = vector.extract_strided_slice %28 {offsets = [0, 16], sizes = [8, 8], strides = [1, 1]} : vector<8x32xf32> to vector<8x8xf32>
    %40 = vector.extract_strided_slice %28 {offsets = [0, 24], sizes = [8, 8], strides = [1, 1]} : vector<8x32xf32> to vector<8x8xf32>
    %41 = vector.shape_cast %37 : vector<8x8xf32> to vector<1x8x8xf32>
    %42 = vector.shape_cast %38 : vector<8x8xf32> to vector<1x8x8xf32>
    %43 = vector.shape_cast %39 : vector<8x8xf32> to vector<1x8x8xf32>
    %44 = vector.shape_cast %40 : vector<8x8xf32> to vector<1x8x8xf32>
    %45 = tpu.concatenate %41, %42, %43, %44 in 0 : vector<1x8x8xf32>, vector<1x8x8xf32>, vector<1x8x8xf32>, vector<1x8x8xf32> -> vector<4x8x8xf32>
    %46 = vector.extract_strided_slice %32 {offsets = [0, 0], sizes = [8, 8], strides = [1, 1]} : vector<8x32xf32> to vector<8x8xf32>
    %47 = vector.extract_strided_slice %32 {offsets = [0, 8], sizes = [8, 8], strides = [1, 1]} : vector<8x32xf32> to vector<8x8xf32>
    %48 = vector.extract_strided_slice %32 {offsets = [0, 16], sizes = [8, 8], strides = [1, 1]} : vector<8x32xf32> to vector<8x8xf32>
    %49 = vector.extract_strided_slice %32 {offsets = [0, 24], sizes = [8, 8], strides = [1, 1]} : vector<8x32xf32> to vector<8x8xf32>
    %50 = vector.shape_cast %46 : vector<8x8xf32> to vector<1x8x8xf32>
    %51 = vector.shape_cast %47 : vector<8x8xf32> to vector<1x8x8xf32>
    %52 = vector.shape_cast %48 : vector<8x8xf32> to vector<1x8x8xf32>
    %53 = vector.shape_cast %49 : vector<8x8xf32> to vector<1x8x8xf32>
    %54 = tpu.concatenate %50, %51, %52, %53 in 0 : vector<1x8x8xf32>, vector<1x8x8xf32>, vector<1x8x8xf32>, vector<1x8x8xf32> -> vector<4x8x8xf32>
    %55 = vector.extract_strided_slice %36 {offsets = [0, 0], sizes = [8, 8], strides = [1, 1]} : vector<8x32xf32> to vector<8x8xf32>
    %56 = vector.extract_strided_slice %36 {offsets = [0, 8], sizes = [8, 8], strides = [1, 1]} : vector<8x32xf32> to vector<8x8xf32>
    %57 = vector.extract_strided_slice %36 {offsets = [0, 16], sizes = [8, 8], strides = [1, 1]} : vector<8x32xf32> to vector<8x8xf32>
    %58 = vector.extract_strided_slice %36 {offsets = [0, 24], sizes = [8, 8], strides = [1, 1]} : vector<8x32xf32> to vector<8x8xf32>
    %59 = vector.shape_cast %55 : vector<8x8xf32> to vector<1x8x8xf32>
    %60 = vector.shape_cast %56 : vector<8x8xf32> to vector<1x8x8xf32>
    %61 = vector.shape_cast %57 : vector<8x8xf32> to vector<1x8x8xf32>
    %62 = vector.shape_cast %58 : vector<8x8xf32> to vector<1x8x8xf32>
    %63 = tpu.concatenate %59, %60, %61, %62 in 0 : vector<1x8x8xf32>, vector<1x8x8xf32>, vector<1x8x8xf32>, vector<1x8x8xf32> -> vector<4x8x8xf32>
    %64 = arith.truncf %45 : vector<4x8x8xf32> to vector<4x8x8xbf16>
    %65 = arith.truncf %54 : vector<4x8x8xf32> to vector<4x8x8xbf16>
    %66 = arith.truncf %63 : vector<4x8x8xf32> to vector<4x8x8xbf16>
    "tpu.trace_start"() <{level = 10 : i32, message = "hqd,hkd->hqk"}> : () -> ()
    %cst_32 = arith.constant dense<0.000000e+00> : vector<4x8x8xf32>
    %67 = tpu.matmul %64, %65, %cst_32 {dimension_numbers = #tpu.dot_dimension_numbers<[2], [2], [1], [1], [0, 0, 0, 1, 1, 1], [0], [0]>} : vector<4x8x8xbf16>, vector<4x8x8xbf16>, vector<4x8x8xf32> -> vector<4x8x8xf32>
    "tpu.trace_stop"() : () -> ()
    %cst_33 = arith.constant 0.353553385 : f32
    %68 = vector.broadcast %cst_33 : f32 to vector<4x8x8xf32>
    %69 = arith.mulf %67, %68 : vector<4x8x8xf32>
    %cst_34 = arith.constant -1.000000e+30 : f32
    %70 = vector.shape_cast %8 : vector<1x1x8xi1> to vector<1x1x8xi1>
    %71 = vector.broadcast %70 : vector<1x1x8xi1> to vector<4x8x8xi1>
    %72 = vector.broadcast %cst_34 : f32 to vector<4x8x8xf32>
    %73 = arith.select %71, %69, %72 : vector<4x8x8xi1>, vector<4x8x8xf32>
    %cst_35 = arith.constant dense<0xFF800000> : vector<4x8xf32>
    %74 = vector.multi_reduction <maximumf>, %73, %cst_35 [2] : vector<4x8x8xf32> to vector<4x8xf32>
    %75 = vector.shape_cast %74 : vector<4x8xf32> to vector<4x8x1xf32>
    %76 = vector.broadcast %75 : vector<4x8x1xf32> to vector<4x8x8xf32>
    %77 = arith.subf %73, %76 : vector<4x8x8xf32>
    %78 = math.exp %77 : vector<4x8x8xf32>
    %cst_36 = arith.constant dense<0.000000e+00> : vector<4x8xf32>
    %79 = vector.multi_reduction <add>, %78, %cst_36 [2] : vector<4x8x8xf32> to vector<4x8xf32>
    %80 = vector.shape_cast %79 : vector<4x8xf32> to vector<4x8x1xf32>
    %81 = tpu.reciprocal %80 {approx = true} : vector<4x8x1xf32> -> vector<4x8x1xf32>
    %82 = vector.broadcast %81 : vector<4x8x1xf32> to vector<4x8x8xf32>
    %83 = arith.mulf %78, %82 : vector<4x8x8xf32>
    %84 = arith.truncf %83 : vector<4x8x8xf32> to vector<4x8x8xbf16>
    "tpu.trace_start"() <{level = 10 : i32, message = "hqk,hkd->hqd"}> : () -> ()
    %cst_37 = arith.constant dense<0.000000e+00> : vector<4x8x8xf32>
    %85 = tpu.matmul %84, %66, %cst_37 {dimension_numbers = #tpu.dot_dimension_numbers<[2], [1], [1], [2], [0, 0, 0, 1, 1, 2], [0], [0]>} : vector<4x8x8xbf16>, vector<4x8x8xbf16>, vector<4x8x8xf32> -> vector<4x8x8xf32>
    "tpu.trace_stop"() : () -> ()
    %86 = vector.extract_strided_slice %85 {offsets = [0, 0, 0], sizes = [1, 8, 8], strides = [1, 1, 1]} : vector<4x8x8xf32> to vector<1x8x8xf32>
    %87 = vector.shape_cast %86 : vector<1x8x8xf32> to vector<8x8xf32>
    %88 = vector.extract_strided_slice %85 {offsets = [1, 0, 0], sizes = [1, 8, 8], strides = [1, 1, 1]} : vector<4x8x8xf32> to vector<1x8x8xf32>
    %89 = vector.shape_cast %88 : vector<1x8x8xf32> to vector<8x8xf32>
    %90 = vector.extract_strided_slice %85 {offsets = [2, 0, 0], sizes = [1, 8, 8], strides = [1, 1, 1]} : vector<4x8x8xf32> to vector<1x8x8xf32>
    %91 = vector.shape_cast %90 : vector<1x8x8xf32> to vector<8x8xf32>
    %92 = vector.extract_strided_slice %85 {offsets = [3, 0, 0], sizes = [1, 8, 8], strides = [1, 1, 1]} : vector<4x8x8xf32> to vector<1x8x8xf32>
    %93 = vector.shape_cast %92 : vector<1x8x8xf32> to vector<8x8xf32>
    %94 = tpu.concatenate %87, %89, %91, %93 in 1 : vector<8x8xf32>, vector<8x8xf32>, vector<8x8xf32>, vector<8x8xf32> -> vector<8x32xf32>
    %95 = arith.truncf %94 : vector<8x32xf32> to vector<8x32xbf16>
    %cst_38 = arith.constant dense<0.000000e+00> : vector<8x32xf32>
    %96 = tpu.matmul %95, %22, %cst_38 {dimension_numbers = #tpu.dot_dimension_numbers<[1], [0], [0], [1], [0, 0, 1, 1], [], []>} : vector<8x32xbf16>, vector<32x32xbf16>, vector<8x32xf32> -> vector<8x32xf32>
    %97 = vector.broadcast %24 : vector<1x32xf32> to vector<8x32xf32>
    %98 = arith.addf %96, %97 : vector<8x32xf32>
    %99 = arith.addf %3, %98 : vector<8x32xf32>
    %c0_39 = arith.constant 0 : index
    %c0_40 = arith.constant 0 : index
    %c0_41 = arith.constant 0 : index
    %100 = vector.load %arg12[%c0_39, %c0_40, %c0_41] : memref<1x1x32xf32, #tpu.memory_space<vmem>>, vector<1x1x32xf32>
    %101 = vector.shape_cast %100 : vector<1x1x32xf32> to vector<1x32xf32>
    %c0_42 = arith.constant 0 : index
    %c0_43 = arith.constant 0 : index
    %c0_44 = arith.constant 0 : index
    %102 = vector.load %arg13[%c0_42, %c0_43, %c0_44] : memref<1x1x32xf32, #tpu.memory_space<vmem>>, vector<1x1x32xf32>
    %103 = vector.shape_cast %102 : vector<1x1x32xf32> to vector<1x32xf32>
    %cst_45 = arith.constant dense<0.000000e+00> : vector<8xf32>
    %104 = vector.multi_reduction <add>, %99, %cst_45 [1] : vector<8x32xf32> to vector<8xf32>
    %105 = vector.shape_cast %104 : vector<8xf32> to vector<8x1xf32>
    %cst_46 = arith.constant 3.200000e+01 : f32
    %106 = vector.broadcast %cst_46 : f32 to vector<8x1xf32>
    %107 = arith.divf %105, %106 : vector<8x1xf32>
    %108 = vector.broadcast %107 : vector<8x1xf32> to vector<8x32xf32>
    %109 = arith.subf %99, %108 : vector<8x32xf32>
    %110 = arith.mulf %109, %109 : vector<8x32xf32>
    %cst_47 = arith.constant dense<0.000000e+00> : vector<8xf32>
    %111 = vector.multi_reduction <add>, %110, %cst_47 [1] : vector<8x32xf32> to vector<8xf32>
    %112 = vector.shape_cast %111 : vector<8xf32> to vector<8x1xf32>
    %cst_48 = arith.constant 3.200000e+01 : f32
    %113 = vector.broadcast %cst_48 : f32 to vector<8x1xf32>
    %114 = arith.divf %112, %113 : vector<8x1xf32>
    %115 = vector.broadcast %107 : vector<8x1xf32> to vector<8x32xf32>
    %116 = arith.subf %99, %115 : vector<8x32xf32>
    %cst_49 = arith.constant 9.99999974E-6 : f32
    %117 = vector.broadcast %cst_49 : f32 to vector<8x1xf32>
    %118 = arith.addf %114, %117 : vector<8x1xf32>
    %119 = math.rsqrt %118 : vector<8x1xf32>
    %120 = vector.broadcast %119 : vector<8x1xf32> to vector<8x32xf32>
    %121 = arith.mulf %116, %120 : vector<8x32xf32>
    %122 = vector.broadcast %101 : vector<1x32xf32> to vector<8x32xf32>
    %123 = arith.mulf %121, %122 : vector<8x32xf32>
    %124 = vector.broadcast %103 : vector<1x32xf32> to vector<8x32xf32>
    %125 = arith.addf %123, %124 : vector<8x32xf32>
    %c0_50 = arith.constant 0 : index
    %c0_51 = arith.constant 0 : index
    %c0_52 = arith.constant 0 : index
    %126 = vector.load %arg14[%c0_50, %c0_51, %c0_52] : memref<1x32x64xbf16, #tpu.memory_space<vmem>>, vector<1x32x64xbf16>
    %127 = vector.shape_cast %126 : vector<1x32x64xbf16> to vector<32x64xbf16>
    %c0_53 = arith.constant 0 : index
    %c0_54 = arith.constant 0 : index
    %c0_55 = arith.constant 0 : index
    %128 = vector.load %arg15[%c0_53, %c0_54, %c0_55] : memref<1x1x64xf32, #tpu.memory_space<vmem>>, vector<1x1x64xf32>
    %129 = vector.shape_cast %128 : vector<1x1x64xf32> to vector<1x64xf32>
    %c0_56 = arith.constant 0 : index
    %c0_57 = arith.constant 0 : index
    %c0_58 = arith.constant 0 : index
    %130 = vector.load %arg16[%c0_56, %c0_57, %c0_58] : memref<1x64x32xbf16, #tpu.memory_space<vmem>>, vector<1x64x32xbf16>
    %131 = vector.shape_cast %130 : vector<1x64x32xbf16> to vector<64x32xbf16>
    %c0_59 = arith.constant 0 : index
    %c0_60 = arith.constant 0 : index
    %c0_61 = arith.constant 0 : index
    %132 = vector.load %arg17[%c0_59, %c0_60, %c0_61] : memref<1x1x32xf32, #tpu.memory_space<vmem>>, vector<1x1x32xf32>
    %133 = vector.shape_cast %132 : vector<1x1x32xf32> to vector<1x32xf32>
    %134 = arith.truncf %125 : vector<8x32xf32> to vector<8x32xbf16>
    %cst_62 = arith.constant dense<0.000000e+00> : vector<8x64xf32>
    %135 = tpu.matmul %134, %127, %cst_62 {dimension_numbers = #tpu.dot_dimension_numbers<[1], [0], [0], [1], [0, 0, 1, 1], [], []>} : vector<8x32xbf16>, vector<32x64xbf16>, vector<8x64xf32> -> vector<8x64xf32>
    %136 = vector.broadcast %129 : vector<1x64xf32> to vector<8x64xf32>
    %137 = arith.addf %135, %136 : vector<8x64xf32>
    %cst_63 = arith.constant 0.000000e+00 : f32
    %138 = vector.broadcast %cst_63 : f32 to vector<8x64xf32>
    %139 = arith.maximumf %137, %138 : vector<8x64xf32>
    %140 = arith.truncf %139 : vector<8x64xf32> to vector<8x64xbf16>
    %cst_64 = arith.constant dense<0.000000e+00> : vector<8x32xf32>
    %141 = tpu.matmul %140, %131, %cst_64 {dimension_numbers = #tpu.dot_dimension_numbers<[1], [0], [0], [1], [0, 0, 1, 1], [], []>} : vector<8x64xbf16>, vector<64x32xbf16>, vector<8x32xf32> -> vector<8x32xf32>
    %142 = vector.broadcast %133 : vector<1x32xf32> to vector<8x32xf32>
    %143 = arith.addf %141, %142 : vector<8x32xf32>
    %144 = arith.addf %125, %143 : vector<8x32xf32>
    %c0_65 = arith.constant 0 : index
    %c0_66 = arith.constant 0 : index
    %c0_67 = arith.constant 0 : index
    %145 = vector.load %arg18[%c0_65, %c0_66, %c0_67] : memref<1x1x32xf32, #tpu.memory_space<vmem>>, vector<1x1x32xf32>
    %146 = vector.shape_cast %145 : vector<1x1x32xf32> to vector<1x32xf32>
    %c0_68 = arith.constant 0 : index
    %c0_69 = arith.constant 0 : index
    %c0_70 = arith.constant 0 : index
    %147 = vector.load %arg19[%c0_68, %c0_69, %c0_70] : memref<1x1x32xf32, #tpu.memory_space<vmem>>, vector<1x1x32xf32>
    %148 = vector.shape_cast %147 : vector<1x1x32xf32> to vector<1x32xf32>
    %cst_71 = arith.constant dense<0.000000e+00> : vector<8xf32>
    %149 = vector.multi_reduction <add>, %144, %cst_71 [1] : vector<8x32xf32> to vector<8xf32>
    %150 = vector.shape_cast %149 : vector<8xf32> to vector<8x1xf32>
    %cst_72 = arith.constant 3.200000e+01 : f32
    %151 = vector.broadcast %cst_72 : f32 to vector<8x1xf32>
    %152 = arith.divf %150, %151 : vector<8x1xf32>
    %153 = vector.broadcast %152 : vector<8x1xf32> to vector<8x32xf32>
    %154 = arith.subf %144, %153 : vector<8x32xf32>
    %155 = arith.mulf %154, %154 : vector<8x32xf32>
    %cst_73 = arith.constant dense<0.000000e+00> : vector<8xf32>
    %156 = vector.multi_reduction <add>, %155, %cst_73 [1] : vector<8x32xf32> to vector<8xf32>
    %157 = vector.shape_cast %156 : vector<8xf32> to vector<8x1xf32>
    %cst_74 = arith.constant 3.200000e+01 : f32
    %158 = vector.broadcast %cst_74 : f32 to vector<8x1xf32>
    %159 = arith.divf %157, %158 : vector<8x1xf32>
    %160 = vector.broadcast %152 : vector<8x1xf32> to vector<8x32xf32>
    %161 = arith.subf %144, %160 : vector<8x32xf32>
    %cst_75 = arith.constant 9.99999974E-6 : f32
    %162 = vector.broadcast %cst_75 : f32 to vector<8x1xf32>
    %163 = arith.addf %159, %162 : vector<8x1xf32>
    %164 = math.rsqrt %163 : vector<8x1xf32>
    %165 = vector.broadcast %164 : vector<8x1xf32> to vector<8x32xf32>
    %166 = arith.mulf %161, %165 : vector<8x32xf32>
    %167 = vector.broadcast %146 : vector<1x32xf32> to vector<8x32xf32>
    %168 = arith.mulf %166, %167 : vector<8x32xf32>
    %169 = vector.broadcast %148 : vector<1x32xf32> to vector<8x32xf32>
    %170 = arith.addf %168, %169 : vector<8x32xf32>
    %c0_76 = arith.constant 0 : index
    %c0_77 = arith.constant 0 : index
    %171 = vector.load %arg21[%c0_76, %c0_77] : memref<8x32xf32, #tpu.memory_space<vmem>>, vector<8x32xf32>
    tpu.vector_store %arg21[%c0_76, %c0_77], %170 {strides = array<i32>} : memref<8x32xf32, #tpu.memory_space<vmem>>, vector<8x32xf32>,
    %c1_i32 = arith.constant 1 : i32
    %172 = arith.cmpi eq, %arg1, %c1_i32 : i32
    %173 = arith.extui %172 : i1 to i32
    %c0_i32_78 = arith.constant 0 : i32
    %174 = arith.cmpi ne, %173, %c0_i32_78 : i32
    scf.if %174 {
      %c0_79 = arith.constant 0 : index
      %c0_80 = arith.constant 0 : index
      %c0_81 = arith.constant 0 : index
      %175 = vector.load %arg20[%c0_79, %c0_80, %c0_81] : memref<1x8x32xf32, #tpu.memory_space<vmem>>, vector<1x8x32xf32>
      %176 = vector.shape_cast %175 : vector<1x8x32xf32> to vector<8x32xf32>
      %177 = vector.shape_cast %170 : vector<8x32xf32> to vector<1x8x32xf32>
      tpu.vector_store %arg20[%c0_79, %c0_80, %c0_81], %177 {strides = array<i32>} : memref<1x8x32xf32, #tpu.memory_space<vmem>>, vector<1x8x32xf32>,
    } else {
    }
    return
  }
  func.func @transform_0(%arg0: i32, %arg1: i32) -> (i32, i32, i32) {
    %c0_i32 = arith.constant 0 : i32
    %c0_i32_0 = arith.constant 0 : i32
    %c0_i32_1 = arith.constant 0 : i32
    return %arg0, %c0_i32, %c0_i32_0 : i32, i32, i32
  }
  func.func @transform_1(%arg0: i32, %arg1: i32) -> (i32, i32, i32) {
    %c0_i32 = arith.constant 0 : i32
    %c0_i32_0 = arith.constant 0 : i32
    %c0_i32_1 = arith.constant 0 : i32
    return %arg0, %c0_i32, %c0_i32_0 : i32, i32, i32
  }
  func.func @transform_2(%arg0: i32, %arg1: i32) -> (i32, i32, i32) {
    %c0_i32 = arith.constant 0 : i32
    %c0_i32_0 = arith.constant 0 : i32
    %c0_i32_1 = arith.constant 0 : i32
    return %arg1, %c0_i32, %c0_i32_0 : i32, i32, i32
  }
  func.func @transform_3(%arg0: i32, %arg1: i32) -> (i32, i32, i32) {
    %c0_i32 = arith.constant 0 : i32
    %c0_i32_0 = arith.constant 0 : i32
    %c0_i32_1 = arith.constant 0 : i32
    return %arg1, %c0_i32, %c0_i32_0 : i32, i32, i32
  }
  func.func @transform_4(%arg0: i32, %arg1: i32) -> (i32, i32, i32) {
    %c0_i32 = arith.constant 0 : i32
    %c0_i32_0 = arith.constant 0 : i32
    %c0_i32_1 = arith.constant 0 : i32
    return %arg1, %c0_i32, %c0_i32_0 : i32, i32, i32
  }
  func.func @transform_5(%arg0: i32, %arg1: i32) -> (i32, i32, i32) {
    %c0_i32 = arith.constant 0 : i32
    %c0_i32_0 = arith.constant 0 : i32
    %c0_i32_1 = arith.constant 0 : i32
    return %arg1, %c0_i32, %c0_i32_0 : i32, i32, i32
  }
  func.func @transform_6(%arg0: i32, %arg1: i32) -> (i32, i32, i32) {
    %c0_i32 = arith.constant 0 : i32
    %c0_i32_0 = arith.constant 0 : i32
    %c0_i32_1 = arith.constant 0 : i32
    return %arg1, %c0_i32, %c0_i32_0 : i32, i32, i32
  }
  func.func @transform_7(%arg0: i32, %arg1: i32) -> (i32, i32, i32) {
    %c0_i32 = arith.constant 0 : i32
    %c0_i32_0 = arith.constant 0 : i32
    %c0_i32_1 = arith.constant 0 : i32
    return %arg1, %c0_i32, %c0_i32_0 : i32, i32, i32
  }
  func.func @transform_8(%arg0: i32, %arg1: i32) -> (i32, i32, i32) {
    %c0_i32 = arith.constant 0 : i32
    %c0_i32_0 = arith.constant 0 : i32
    %c0_i32_1 = arith.constant 0 : i32
    return %arg1, %c0_i32, %c0_i32_0 : i32, i32, i32
  }
  func.func @transform_9(%arg0: i32, %arg1: i32) -> (i32, i32, i32) {
    %c0_i32 = arith.constant 0 : i32
    %c0_i32_0 = arith.constant 0 : i32
    %c0_i32_1 = arith.constant 0 : i32
    return %arg1, %c0_i32, %c0_i32_0 : i32, i32, i32
  }
  func.func @transform_10(%arg0: i32, %arg1: i32) -> (i32, i32, i32) {
    %c0_i32 = arith.constant 0 : i32
    %c0_i32_0 = arith.constant 0 : i32
    %c0_i32_1 = arith.constant 0 : i32
    return %arg1, %c0_i32, %c0_i32_0 : i32, i32, i32
  }
  func.func @transform_11(%arg0: i32, %arg1: i32) -> (i32, i32, i32) {
    %c0_i32 = arith.constant 0 : i32
    %c0_i32_0 = arith.constant 0 : i32
    %c0_i32_1 = arith.constant 0 : i32
    return %arg1, %c0_i32, %c0_i32_0 : i32, i32, i32
  }
  func.func @transform_12(%arg0: i32, %arg1: i32) -> (i32, i32, i32) {
    %c0_i32 = arith.constant 0 : i32
    %c0_i32_0 = arith.constant 0 : i32
    %c0_i32_1 = arith.constant 0 : i32
    return %arg1, %c0_i32, %c0_i32_0 : i32, i32, i32
  }
  func.func @transform_13(%arg0: i32, %arg1: i32) -> (i32, i32, i32) {
    %c0_i32 = arith.constant 0 : i32
    %c0_i32_0 = arith.constant 0 : i32
    %c0_i32_1 = arith.constant 0 : i32
    return %arg1, %c0_i32, %c0_i32_0 : i32, i32, i32
  }
  func.func @transform_14(%arg0: i32, %arg1: i32) -> (i32, i32, i32) {
    %c0_i32 = arith.constant 0 : i32
    %c0_i32_0 = arith.constant 0 : i32
    %c0_i32_1 = arith.constant 0 : i32
    return %arg1, %c0_i32, %c0_i32_0 : i32, i32, i32
  }
  func.func @transform_15(%arg0: i32, %arg1: i32) -> (i32, i32, i32) {
    %c0_i32 = arith.constant 0 : i32
    %c0_i32_0 = arith.constant 0 : i32
    %c0_i32_1 = arith.constant 0 : i32
    return %arg1, %c0_i32, %c0_i32_0 : i32, i32, i32
  }
  func.func @transform_16(%arg0: i32, %arg1: i32) -> (i32, i32, i32) {
    %c0_i32 = arith.constant 0 : i32
    %c0_i32_0 = arith.constant 0 : i32
    %c0_i32_1 = arith.constant 0 : i32
    return %arg1, %c0_i32, %c0_i32_0 : i32, i32, i32
  }
  func.func @transform_17(%arg0: i32, %arg1: i32) -> (i32, i32, i32) {
    %c0_i32 = arith.constant 0 : i32
    %c0_i32_0 = arith.constant 0 : i32
    %c0_i32_1 = arith.constant 0 : i32
    return %arg1, %c0_i32, %c0_i32_0 : i32, i32, i32
  }
  func.func @transform_18(%arg0: i32, %arg1: i32) -> (i32, i32, i32) {
    %c0_i32 = arith.constant 0 : i32
    %c0_i32_0 = arith.constant 0 : i32
    %c0_i32_1 = arith.constant 0 : i32
    return %arg0, %c0_i32, %c0_i32_0 : i32, i32, i32
  }
}

</mosaic_0001>

<llo_original>
// kernel: transformer_forward.2
$region0: #{transformer_forward.2}
  #allocation0 [shape = 'u32[]', space=smem, size = 0x4, offset = 0x4, fixed_abs, tag = 'smem constant byte address 0x4 - core index']
  #allocation1 [shape = 'u32[144,128]{1,0:T(1,128)}', space=vmem, size = 0x12000, scoped, tag = 'internal scratch']
  #allocation2 [shape = 'f32[8,32]{1,0:T(8,128)}', space=vmem, size = 0x1000, scoped, tag = 'scratch operand']
  %s0 = inlined_call_operand.vmem [shape: f32[2,1,8], index: 0, kind: input, shape index: {}]
  %s1 = inlined_call_operand.vmem [shape: f32[2,8,32], index: 1, kind: input, shape index: {}]
  %s2 = inlined_call_operand.vmem [shape: bf16[2,32,32], index: 2, kind: input, shape index: {}]
  %s3 = inlined_call_operand.vmem [shape: f32[2,1,32], index: 3, kind: input, shape index: {}]
  %s4 = inlined_call_operand.vmem [shape: bf16[2,32,32], index: 4, kind: input, shape index: {}]
  %s5 = inlined_call_operand.vmem [shape: f32[2,1,32], index: 5, kind: input, shape index: {}]
  %s6 = inlined_call_operand.vmem [shape: bf16[2,32,32], index: 6, kind: input, shape index: {}]
  %s7 = inlined_call_operand.vmem [shape: f32[2,1,32], index: 7, kind: input, shape index: {}]
  %s8 = inlined_call_operand.vmem [shape: bf16[2,32,32], index: 8, kind: input, shape index: {}]
  %s9 = inlined_call_operand.vmem [shape: f32[2,1,32], index: 9, kind: input, shape index: {}]
  %s10 = inlined_call_operand.vmem [shape: f32[2,1,32], index: 10, kind: input, shape index: {}]
  %s11 = inlined_call_operand.vmem [shape: f32[2,1,32], index: 11, kind: input, shape index: {}]
  %s12 = inlined_call_operand.vmem [shape: bf16[2,32,64], index: 12, kind: input, shape index: {}]
  %s13 = inlined_call_operand.vmem [shape: f32[2,1,64], index: 13, kind: input, shape index: {}]
  %s14 = inlined_call_operand.vmem [shape: bf16[2,64,32], index: 14, kind: input, shape index: {}]
  %s15 = inlined_call_operand.vmem [shape: f32[2,1,32], index: 15, kind: input, shape index: {}]
  %s16 = inlined_call_operand.vmem [shape: f32[2,1,32], index: 16, kind: input, shape index: {}]
  %s17 = inlined_call_operand.vmem [shape: f32[2,1,32], index: 17, kind: input, shape index: {}]
  %s18 = inlined_call_operand.vmem [shape: f32[2,8,32], index: 18, kind: output, shape index: {}]
  %s19 = sld [smem:[#allocation0]]
  $region113: #{transformer_forward.2} parent=0
    _
  %s21 = ssub.s32 1, %s19
  %s22 = scalar_select 0, %s21, %s19
  loop: start=0, step=1, limit=6
  $region2: #{transformer_forward.2} parent=0 // loop_pre_header
    _
  $region3: #{transformer_forward.2} parent=0 // loop_header
    %s24 = sphi 0, %s28
    %p25 = scmp.ge.s32.totalorder %s24, 6
    %s31 = sphi 0, %s43
    %s32 = sphi 0, %s39
    %s33 = sphi 0, %s31
    %s34 = sphi 0, %s32
    %s35 = sphi 0, %s33
    %s36 = sphi 0, %s34
    %s46 = sphi 0, %s48
    %s49 = sphi 0, %s46
    %s50 = sphi 0, %s49
    %s66 = sphi 0, %s50
    %s72 = sphi 0, %s74
    %s75 = sphi 0, %s72
    %s76 = sphi 0, %s75
    %s92 = sphi 0, %s76
    %s98 = sphi 0, %s100
    %s101 = sphi 0, %s98
    %s102 = sphi 0, %s101
    %s118 = sphi 0, %s102
    %s124 = sphi 0, %s126
    %s127 = sphi 0, %s124
    %s128 = sphi 0, %s127
    %s144 = sphi 0, %s128
    %s150 = sphi 0, %s152
    %s153 = sphi 0, %s150
    %s154 = sphi 0, %s153
    %s170 = sphi 0, %s154
    %s176 = sphi 0, %s178
    %s179 = sphi 0, %s176
    %s180 = sphi 0, %s179
    %s196 = sphi 0, %s180
    %s202 = sphi 0, %s204
    %s205 = sphi 0, %s202
    %s206 = sphi 0, %s205
    %s222 = sphi 0, %s206
    %s228 = sphi 0, %s230
    %s231 = sphi 0, %s228
    %s232 = sphi 0, %s231
    %s248 = sphi 0, %s232
    %s254 = sphi 0, %s256
    %s257 = sphi 0, %s254
    %s258 = sphi 0, %s257
    %s274 = sphi 0, %s258
    %s280 = sphi 0, %s282
    %s283 = sphi 0, %s280
    %s284 = sphi 0, %s283
    %s300 = sphi 0, %s284
    %s306 = sphi 0, %s308
    %s309 = sphi 0, %s306
    %s310 = sphi 0, %s309
    %s326 = sphi 0, %s310
    %s332 = sphi 0, %s334
    %s335 = sphi 0, %s332
    %s336 = sphi 0, %s335
    %s352 = sphi 0, %s336
    %s358 = sphi 0, %s360
    %s361 = sphi 0, %s358
    %s362 = sphi 0, %s361
    %s378 = sphi 0, %s362
    %s384 = sphi 0, %s386
    %s387 = sphi 0, %s384
    %s388 = sphi 0, %s387
    %s404 = sphi 0, %s388
    %s410 = sphi 0, %s412
    %s413 = sphi 0, %s410
    %s414 = sphi 0, %s413
    %s430 = sphi 0, %s414
    %s436 = sphi 0, %s438
    %s439 = sphi 0, %s436
    %s440 = sphi 0, %s439
    %s456 = sphi 0, %s440
    %s462 = sphi 0, %s464
    %s465 = sphi 0, %s462
    %s466 = sphi 0, %s465
    %s482 = sphi 0, %s466
    %s488 = sphi 0, %s490
    %s491 = sphi 0, %s488
    %s492 = sphi 0, %s491
    %s508 = sphi 0, %s492
    %s514 = sphi 0, %s516
    %s517 = sphi 0, %s514
    %s518 = sphi 0, %s517
    %s534 = sphi 0, %s518
  $region4: #{transformer_forward.2} parent=0 // loop_header_branch
    %27 = sbr.rel (%p25) target = $region8
  $region5: #{transformer_forward.2} parent=0 // loop_body
    %s29 = ssub.s32 %s24, 1
    %s30 = ssub.s32 %s24, 2
    %s37 = sadd.s32 1, %s32
    %p38 = scmp.ge.s32.totalorder %s37, 2
    %s39 = scalar_select %p38, 0, %s37
    %s40 = sadd.s32 1, %s31
    %s41 = scalar_select %p38, %s40, %s31
    %p42 = scmp.ge.s32.totalorder %s41, 2
    %s43 = scalar_select %p42, 0, %s41
    %s44 = ssub.s32 %s31, %s43
    %p45 = scmp.eq.s32.totalorder %s44, 0
    %s47 = sadd.s32 %s46, 1
    %s48 = scalar_select %p45, %s46, %s47
    %p51 = pneg %p45
    %p52 = scmp.eq.s32.totalorder %s24, 3
    %p53 = por %p51, %p52
    %p54 = scmp.ne.s32.totalorder %s46, %s49
    %p55 = scmp.eq.s32.totalorder %s24, 0
    %p56 = por %p54, %p55
    %p57 = scmp.ne.s32.totalorder %s46, %s49
    %p58 = scmp.eq.s32.totalorder %s29, 3
    %p59 = por %p57, %p58
    %p60 = scmp.ne.s32.totalorder %s49, %s50
    %p61 = scmp.eq.s32.totalorder %s29, 0
    %p62 = por %p60, %p61
    %p63 = scmp.ne.s32.totalorder %s49, %s50
    %p64 = scmp.eq.s32.totalorder %s30, 3
    %p65 = por %p63, %p64
    %p67 = scmp.ne.s32.totalorder %s50, %s66
    %p68 = scmp.eq.s32.totalorder %s30, 0
    %p69 = por %p67, %p68
    %s70 = ssub.s32 %s31, %s43
    %p71 = scmp.eq.s32.totalorder %s70, 0
    %s73 = sadd.s32 %s72, 1
    %s74 = scalar_select %p71, %s72, %s73
    %p77 = pneg %p71
    %p78 = scmp.eq.s32.totalorder %s24, 3
    %p79 = por %p77, %p78
    %p80 = scmp.ne.s32.totalorder %s72, %s75
    %p81 = scmp.eq.s32.totalorder %s24, 0
    %p82 = por %p80, %p81
    %p83 = scmp.ne.s32.totalorder %s72, %s75
    %p84 = scmp.eq.s32.totalorder %s29, 3
    %p85 = por %p83, %p84
    %p86 = scmp.ne.s32.totalorder %s75, %s76
    %p87 = scmp.eq.s32.totalorder %s29, 0
    %p88 = por %p86, %p87
    %p89 = scmp.ne.s32.totalorder %s75, %s76
    %p90 = scmp.eq.s32.totalorder %s30, 3
    %p91 = por %p89, %p90
    %p93 = scmp.ne.s32.totalorder %s76, %s92
    %p94 = scmp.eq.s32.totalorder %s30, 0
    %p95 = por %p93, %p94
    %s96 = ssub.s32 %s32, %s39
    %p97 = scmp.eq.s32.totalorder %s96, 0
    %s99 = sadd.s32 %s98, 1
    %s100 = scalar_select %p97, %s98, %s99
    %p103 = pneg %p97
    %p104 = scmp.eq.s32.totalorder %s24, 3
    %p105 = por %p103, %p104
    %p106 = scmp.ne.s32.totalorder %s98, %s101
    %p107 = scmp.eq.s32.totalorder %s24, 0
    %p108 = por %p106, %p107
    %p109 = scmp.ne.s32.totalorder %s98, %s101
    %p110 = scmp.eq.s32.totalorder %s29, 3
    %p111 = por %p109, %p110
    %p112 = scmp.ne.s32.totalorder %s101, %s102
    %p113 = scmp.eq.s32.totalorder %s29, 0
    %p114 = por %p112, %p113
    %p115 = scmp.ne.s32.totalorder %s101, %s102
    %p116 = scmp.eq.s32.totalorder %s30, 3
    %p117 = por %p115, %p116
    %p119 = scmp.ne.s32.totalorder %s102, %s118
    %p120 = scmp.eq.s32.totalorder %s30, 0
    %p121 = por %p119, %p120
    %s122 = ssub.s32 %s32, %s39
    %p123 = scmp.eq.s32.totalorder %s122, 0
    %s125 = sadd.s32 %s124, 1
    %s126 = scalar_select %p123, %s124, %s125
    %p129 = pneg %p123
    %p130 = scmp.eq.s32.totalorder %s24, 3
    %p131 = por %p129, %p130
    %p132 = scmp.ne.s32.totalorder %s124, %s127
    %p133 = scmp.eq.s32.totalorder %s24, 0
    %p134 = por %p132, %p133
    %p135 = scmp.ne.s32.totalorder %s124, %s127
    %p136 = scmp.eq.s32.totalorder %s29, 3
    %p137 = por %p135, %p136
    %p138 = scmp.ne.s32.totalorder %s127, %s128
    %p139 = scmp.eq.s32.totalorder %s29, 0
    %p140 = por %p138, %p139
    %p141 = scmp.ne.s32.totalorder %s127, %s128
    %p142 = scmp.eq.s32.totalorder %s30, 3
    %p143 = por %p141, %p142
    %p145 = scmp.ne.s32.totalorder %s128, %s144
    %p146 = scmp.eq.s32.totalorder %s30, 0
    %p147 = por %p145, %p146
    %s148 = ssub.s32 %s32, %s39
    %p149 = scmp.eq.s32.totalorder %s148, 0
    %s151 = sadd.s32 %s150, 1
    %s152 = scalar_select %p149, %s150, %s151
    %p155 = pneg %p149
    %p156 = scmp.eq.s32.totalorder %s24, 3
    %p157 = por %p155, %p156
    %p158 = scmp.ne.s32.totalorder %s150, %s153
    %p159 = scmp.eq.s32.totalorder %s24, 0
    %p160 = por %p158, %p159
    %p161 = scmp.ne.s32.totalorder %s150, %s153
    %p162 = scmp.eq.s32.totalorder %s29, 3
    %p163 = por %p161, %p162
    %p164 = scmp.ne.s32.totalorder %s153, %s154
    %p165 = scmp.eq.s32.totalorder %s29, 0
    %p166 = por %p164, %p165
    %p167 = scmp.ne.s32.totalorder %s153, %s154
    %p168 = scmp.eq.s32.totalorder %s30, 3
    %p169 = por %p167, %p168
    %p171 = scmp.ne.s32.totalorder %s154, %s170
    %p172 = scmp.eq.s32.totalorder %s30, 0
    %p173 = por %p171, %p172
    %s174 = ssub.s32 %s32, %s39
    %p175 = scmp.eq.s32.totalorder %s174, 0
    %s177 = sadd.s32 %s176, 1
    %s178 = scalar_select %p175, %s176, %s177
    %p181 = pneg %p175
    %p182 = scmp.eq.s32.totalorder %s24, 3
    %p183 = por %p181, %p182
    %p184 = scmp.ne.s32.totalorder %s176, %s179
    %p185 = scmp.eq.s32.totalorder %s24, 0
    %p186 = por %p184, %p185
    %p187 = scmp.ne.s32.totalorder %s176, %s179
    %p188 = scmp.eq.s32.totalorder %s29, 3
    %p189 = por %p187, %p188
    %p190 = scmp.ne.s32.totalorder %s179, %s180
    %p191 = scmp.eq.s32.totalorder %s29, 0
    %p192 = por %p190, %p191
    %p193 = scmp.ne.s32.totalorder %s179, %s180
    %p194 = scmp.eq.s32.totalorder %s30, 3
    %p195 = por %p193, %p194
    %p197 = scmp.ne.s32.totalorder %s180, %s196
    %p198 = scmp.eq.s32.totalorder %s30, 0
    %p199 = por %p197, %p198
    %s200 = ssub.s32 %s32, %s39
    %p201 = scmp.eq.s32.totalorder %s200, 0
    %s203 = sadd.s32 %s202, 1
    %s204 = scalar_select %p201, %s202, %s203
    %p207 = pneg %p201
    %p208 = scmp.eq.s32.totalorder %s24, 3
    %p209 = por %p207, %p208
    %p210 = scmp.ne.s32.totalorder %s202, %s205
    %p211 = scmp.eq.s32.totalorder %s24, 0
    %p212 = por %p210, %p211
    %p213 = scmp.ne.s32.totalorder %s202, %s205
    %p214 = scmp.eq.s32.totalorder %s29, 3
    %p215 = por %p213, %p214
    %p216 = scmp.ne.s32.totalorder %s205, %s206
    %p217 = scmp.eq.s32.totalorder %s29, 0
    %p218 = por %p216, %p217
    %p219 = scmp.ne.s32.totalorder %s205, %s206
    %p220 = scmp.eq.s32.totalorder %s30, 3
    %p221 = por %p219, %p220
    %p223 = scmp.ne.s32.totalorder %s206, %s222
    %p224 = scmp.eq.s32.totalorder %s30, 0
    %p225 = por %p223, %p224
    %s226 = ssub.s32 %s32, %s39
    %p227 = scmp.eq.s32.totalorder %s226, 0
    %s229 = sadd.s32 %s228, 1
    %s230 = scalar_select %p227, %s228, %s229
    %p233 = pneg %p227
    %p234 = scmp.eq.s32.totalorder %s24, 3
    %p235 = por %p233, %p234
    %p236 = scmp.ne.s32.totalorder %s228, %s231
    %p237 = scmp.eq.s32.totalorder %s24, 0
    %p238 = por %p236, %p237
    %p239 = scmp.ne.s32.totalorder %s228, %s231
    %p240 = scmp.eq.s32.totalorder %s29, 3
    %p241 = por %p239, %p240
    %p242 = scmp.ne.s32.totalorder %s231, %s232
    %p243 = scmp.eq.s32.totalorder %s29, 0
    %p244 = por %p242, %p243
    %p245 = scmp.ne.s32.totalorder %s231, %s232
    %p246 = scmp.eq.s32.totalorder %s30, 3
    %p247 = por %p245, %p246
    %p249 = scmp.ne.s32.totalorder %s232, %s248
    %p250 = scmp.eq.s32.totalorder %s30, 0
    %p251 = por %p249, %p250
    %s252 = ssub.s32 %s32, %s39
    %p253 = scmp.eq.s32.totalorder %s252, 0
    %s255 = sadd.s32 %s254, 1
    %s256 = scalar_select %p253, %s254, %s255
    %p259 = pneg %p253
    %p260 = scmp.eq.s32.totalorder %s24, 3
    %p261 = por %p259, %p260
    %p262 = scmp.ne.s32.totalorder %s254, %s257
    %p263 = scmp.eq.s32.totalorder %s24, 0
    %p264 = por %p262, %p263
    %p265 = scmp.ne.s32.totalorder %s254, %s257
    %p266 = scmp.eq.s32.totalorder %s29, 3
    %p267 = por %p265, %p266
    %p268 = scmp.ne.s32.totalorder %s257, %s258
    %p269 = scmp.eq.s32.totalorder %s29, 0
    %p270 = por %p268, %p269
    %p271 = scmp.ne.s32.totalorder %s257, %s258
    %p272 = scmp.eq.s32.totalorder %s30, 3
    %p273 = por %p271, %p272
    %p275 = scmp.ne.s32.totalorder %s258, %s274
    %p276 = scmp.eq.s32.totalorder %s30, 0
    %p277 = por %p275, %p276
    %s278 = ssub.s32 %s32, %s39
    %p279 = scmp.eq.s32.totalorder %s278, 0
    %s281 = sadd.s32 %s280, 1
    %s282 = scalar_select %p279, %s280, %s281
    %p285 = pneg %p279
    %p286 = scmp.eq.s32.totalorder %s24, 3
    %p287 = por %p285, %p286
    %p288 = scmp.ne.s32.totalorder %s280, %s283
    %p289 = scmp.eq.s32.totalorder %s24, 0
    %p290 = por %p288, %p289
    %p291 = scmp.ne.s32.totalorder %s280, %s283
    %p292 = scmp.eq.s32.totalorder %s29, 3
    %p293 = por %p291, %p292
    %p294 = scmp.ne.s32.totalorder %s283, %s284
    %p295 = scmp.eq.s32.totalorder %s29, 0
    %p296 = por %p294, %p295
    %p297 = scmp.ne.s32.totalorder %s283, %s284
    %p298 = scmp.eq.s32.totalorder %s30, 3
    %p299 = por %p297, %p298
    %p301 = scmp.ne.s32.totalorder %s284, %s300
    %p302 = scmp.eq.s32.totalorder %s30, 0
    %p303 = por %p301, %p302
    %s304 = ssub.s32 %s32, %s39
    %p305 = scmp.eq.s32.totalorder %s304, 0
    %s307 = sadd.s32 %s306, 1
    %s308 = scalar_select %p305, %s306, %s307
    %p311 = pneg %p305
    %p312 = scmp.eq.s32.totalorder %s24, 3
    %p313 = por %p311, %p312
    %p314 = scmp.ne.s32.totalorder %s306, %s309
    %p315 = scmp.eq.s32.totalorder %s24, 0
    %p316 = por %p314, %p315
    %p317 = scmp.ne.s32.totalorder %s306, %s309
    %p318 = scmp.eq.s32.totalorder %s29, 3
    %p319 = por %p317, %p318
    %p320 = scmp.ne.s32.totalorder %s309, %s310
    %p321 = scmp.eq.s32.totalorder %s29, 0
    %p322 = por %p320, %p321
    %p323 = scmp.ne.s32.totalorder %s309, %s310
    %p324 = scmp.eq.s32.totalorder %s30, 3
    %p325 = por %p323, %p324
    %p327 = scmp.ne.s32.totalorder %s310, %s326
    %p328 = scmp.eq.s32.totalorder %s30, 0
    %p329 = por %p327, %p328
    %s330 = ssub.s32 %s32, %s39
    %p331 = scmp.eq.s32.totalorder %s330, 0
    %s333 = sadd.s32 %s332, 1
    %s334 = scalar_select %p331, %s332, %s333
    %p337 = pneg %p331
    %p338 = scmp.eq.s32.totalorder %s24, 3
    %p339 = por %p337, %p338
    %p340 = scmp.ne.s32.totalorder %s332, %s335
    %p341 = scmp.eq.s32.totalorder %s24, 0
    %p342 = por %p340, %p341
    %p343 = scmp.ne.s32.totalorder %s332, %s335
    %p344 = scmp.eq.s32.totalorder %s29, 3
    %p345 = por %p343, %p344
    %p346 = scmp.ne.s32.totalorder %s335, %s336
    %p347 = scmp.eq.s32.totalorder %s29, 0
    %p348 = por %p346, %p347
    %p349 = scmp.ne.s32.totalorder %s335, %s336
    %p350 = scmp.eq.s32.totalorder %s30, 3
    %p351 = por %p349, %p350
    %p353 = scmp.ne.s32.totalorder %s336, %s352
    %p354 = scmp.eq.s32.totalorder %s30, 0
    %p355 = por %p353, %p354
    %s356 = ssub.s32 %s32, %s39
    %p357 = scmp.eq.s32.totalorder %s356, 0
    %s359 = sadd.s32 %s358, 1
    %s360 = scalar_select %p357, %s358, %s359
    %p363 = pneg %p357
    %p364 = scmp.eq.s32.totalorder %s24, 3
    %p365 = por %p363, %p364
    %p366 = scmp.ne.s32.totalorder %s358, %s361
    %p367 = scmp.eq.s32.totalorder %s24, 0
    %p368 = por %p366, %p367
    %p369 = scmp.ne.s32.totalorder %s358, %s361
    %p370 = scmp.eq.s32.totalorder %s29, 3
    %p371 = por %p369, %p370
    %p372 = scmp.ne.s32.totalorder %s361, %s362
    %p373 = scmp.eq.s32.totalorder %s29, 0
    %p374 = por %p372, %p373
    %p375 = scmp.ne.s32.totalorder %s361, %s362
    %p376 = scmp.eq.s32.totalorder %s30, 3
    %p377 = por %p375, %p376
    %p379 = scmp.ne.s32.totalorder %s362, %s378
    %p380 = scmp.eq.s32.totalorder %s30, 0
    %p381 = por %p379, %p380
    %s382 = ssub.s32 %s32, %s39
    %p383 = scmp.eq.s32.totalorder %s382, 0
    %s385 = sadd.s32 %s384, 1
    %s386 = scalar_select %p383, %s384, %s385
    %p389 = pneg %p383
    %p390 = scmp.eq.s32.totalorder %s24, 3
    %p391 = por %p389, %p390
    %p392 = scmp.ne.s32.totalorder %s384, %s387
    %p393 = scmp.eq.s32.totalorder %s24, 0
    %p394 = por %p392, %p393
    %p395 = scmp.ne.s32.totalorder %s384, %s387
    %p396 = scmp.eq.s32.totalorder %s29, 3
    %p397 = por %p395, %p396
    %p398 = scmp.ne.s32.totalorder %s387, %s388
    %p399 = scmp.eq.s32.totalorder %s29, 0
    %p400 = por %p398, %p399
    %p401 = scmp.ne.s32.totalorder %s387, %s388
    %p402 = scmp.eq.s32.totalorder %s30, 3
    %p403 = por %p401, %p402
    %p405 = scmp.ne.s32.totalorder %s388, %s404
    %p406 = scmp.eq.s32.totalorder %s30, 0
    %p407 = por %p405, %p406
    %s408 = ssub.s32 %s32, %s39
    %p409 = scmp.eq.s32.totalorder %s408, 0
    %s411 = sadd.s32 %s410, 1
    %s412 = scalar_select %p409, %s410, %s411
    %p415 = pneg %p409
    %p416 = scmp.eq.s32.totalorder %s24, 3
    %p417 = por %p415, %p416
    %p418 = scmp.ne.s32.totalorder %s410, %s413
    %p419 = scmp.eq.s32.totalorder %s24, 0
    %p420 = por %p418, %p419
    %p421 = scmp.ne.s32.totalorder %s410, %s413
    %p422 = scmp.eq.s32.totalorder %s29, 3
    %p423 = por %p421, %p422
    %p424 = scmp.ne.s32.totalorder %s413, %s414
    %p425 = scmp.eq.s32.totalorder %s29, 0
    %p426 = por %p424, %p425
    %p427 = scmp.ne.s32.totalorder %s413, %s414
    %p428 = scmp.eq.s32.totalorder %s30, 3
    %p429 = por %p427, %p428
    %p431 = scmp.ne.s32.totalorder %s414, %s430
    %p432 = scmp.eq.s32.totalorder %s30, 0
    %p433 = por %p431, %p432
    %s434 = ssub.s32 %s32, %s39
    %p435 = scmp.eq.s32.totalorder %s434, 0
    %s437 = sadd.s32 %s436, 1
    %s438 = scalar_select %p435, %s436, %s437
    %p441 = pneg %p435
    %p442 = scmp.eq.s32.totalorder %s24, 3
    %p443 = por %p441, %p442
    %p444 = scmp.ne.s32.totalorder %s436, %s439
    %p445 = scmp.eq.s32.totalorder %s24, 0
    %p446 = por %p444, %p445
    %p447 = scmp.ne.s32.totalorder %s436, %s439
    %p448 = scmp.eq.s32.totalorder %s29, 3
    %p449 = por %p447, %p448
    %p450 = scmp.ne.s32.totalorder %s439, %s440
    %p451 = scmp.eq.s32.totalorder %s29, 0
    %p452 = por %p450, %p451
    %p453 = scmp.ne.s32.totalorder %s439, %s440
    %p454 = scmp.eq.s32.totalorder %s30, 3
    %p455 = por %p453, %p454
    %p457 = scmp.ne.s32.totalorder %s440, %s456
    %p458 = scmp.eq.s32.totalorder %s30, 0
    %p459 = por %p457, %p458
    %s460 = ssub.s32 %s32, %s39
    %p461 = scmp.eq.s32.totalorder %s460, 0
    %s463 = sadd.s32 %s462, 1
    %s464 = scalar_select %p461, %s462, %s463
    %p467 = pneg %p461
    %p468 = scmp.eq.s32.totalorder %s24, 3
    %p469 = por %p467, %p468
    %p470 = scmp.ne.s32.totalorder %s462, %s465
    %p471 = scmp.eq.s32.totalorder %s24, 0
    %p472 = por %p470, %p471
    %p473 = scmp.ne.s32.totalorder %s462, %s465
    %p474 = scmp.eq.s32.totalorder %s29, 3
    %p475 = por %p473, %p474
    %p476 = scmp.ne.s32.totalorder %s465, %s466
    %p477 = scmp.eq.s32.totalorder %s29, 0
    %p478 = por %p476, %p477
    %p479 = scmp.ne.s32.totalorder %s465, %s466
    %p480 = scmp.eq.s32.totalorder %s30, 3
    %p481 = por %p479, %p480
    %p483 = scmp.ne.s32.totalorder %s466, %s482
    %p484 = scmp.eq.s32.totalorder %s30, 0
    %p485 = por %p483, %p484
    %s486 = ssub.s32 %s32, %s39
    %p487 = scmp.eq.s32.totalorder %s486, 0
    %s489 = sadd.s32 %s488, 1
    %s490 = scalar_select %p487, %s488, %s489
    %p493 = pneg %p487
    %p494 = scmp.eq.s32.totalorder %s24, 3
    %p495 = por %p493, %p494
    %p496 = scmp.ne.s32.totalorder %s488, %s491
    %p497 = scmp.eq.s32.totalorder %s24, 0
    %p498 = por %p496, %p497
    %p499 = scmp.ne.s32.totalorder %s488, %s491
    %p500 = scmp.eq.s32.totalorder %s29, 3
    %p501 = por %p499, %p500
    %p502 = scmp.ne.s32.totalorder %s491, %s492
    %p503 = scmp.eq.s32.totalorder %s29, 0
    %p504 = por %p502, %p503
    %p505 = scmp.ne.s32.totalorder %s491, %s492
    %p506 = scmp.eq.s32.totalorder %s30, 3
    %p507 = por %p505, %p506
    %p509 = scmp.ne.s32.totalorder %s492, %s508
    %p510 = scmp.eq.s32.totalorder %s30, 0
    %p511 = por %p509, %p510
    %s512 = ssub.s32 %s31, %s43
    %p513 = scmp.eq.s32.totalorder %s512, 0
    %s515 = sadd.s32 %s514, 1
    %s516 = scalar_select %p513, %s514, %s515
    %p519 = pneg %p513
    %p520 = scmp.eq.s32.totalorder %s24, 3
    %p521 = por %p519, %p520
    %p522 = scmp.ne.s32.totalorder %s514, %s517
    %p523 = scmp.eq.s32.totalorder %s24, 0
    %p524 = por %p522, %p523
    %p525 = scmp.ne.s32.totalorder %s514, %s517
    %p526 = scmp.eq.s32.totalorder %s29, 3
    %p527 = por %p525, %p526
    %p528 = scmp.ne.s32.totalorder %s517, %s518
    %p529 = scmp.eq.s32.totalorder %s29, 0
    %p530 = por %p528, %p529
    %p531 = scmp.ne.s32.totalorder %s517, %s518
    %p532 = scmp.eq.s32.totalorder %s30, 3
    %p533 = por %p531, %p532
    %p535 = scmp.ne.s32.totalorder %s518, %s534
    %p536 = scmp.eq.s32.totalorder %s30, 0
    %p537 = por %p535, %p536
    %p538 = scmp.le.s32.totalorder 1, %s24
    %p539 = scmp.lt.s32.totalorder %s24, 5
    %p540 = pnand %p538, %p539
    %p541 = pneg %p540
    // Predicated region
    $region9: #{transformer_forward.2} parent=5 // pred_check
      _
    $region10: #{transformer_forward.2} parent=5 // pred_check_branch
      %543 = sbr.rel (%p540) target = $region12
    $region11: #{transformer_forward.2} parent=5 // pred_region
      %s544 = ssub.s32 %s24, 1
    $region12: #{transformer_forward.2} parent=5 // pred_fallthru
      _
    %p545 = scmp.lt.s32.totalorder %s24, 4
    // Predicated region
    $region13: #{transformer_forward.2} parent=5 // pred_check
      %p546 = pneg %p545
    $region14: #{transformer_forward.2} parent=5 // pred_check_branch
      %548 = sbr.rel (%p546) target = $region16
    $region15: #{transformer_forward.2} parent=5 // pred_region
      // Predicated region
      $region17: #{transformer_forward.2} parent=15 // pred_check
        %p549 = pneg %p56
      $region18: #{transformer_forward.2} parent=15 // pred_check_branch
        %551 = sbr.rel (%p549) target = $region20
      $region19: #{transformer_forward.2} parent=15 // pred_region
        %p552 = scmp.lt.s32.totalorder %s31, 1
        %s553 = scalar_select %p552, %s31, 1
        %s554 = scalar_lea.vmem %s0, %s553
      $region20: #{transformer_forward.2} parent=15 // pred_fallthru
        _
      // Predicated region
      $region21: #{transformer_forward.2} parent=15 // pred_check
        %p555 = pneg %p82
      $region22: #{transformer_forward.2} parent=15 // pred_check_branch
        %557 = sbr.rel (%p555) target = $region24
      $region23: #{transformer_forward.2} parent=15 // pred_region
        %p558 = scmp.lt.s32.totalorder %s31, 1
        %s559 = scalar_select %p558, %s31, 1
        %s560 = smul.addr %s559, 8
        %s561 = scalar_lea.vmem %s1, %s560
      $region24: #{transformer_forward.2} parent=15 // pred_fallthru
        _
      // Predicated region
      $region25: #{transformer_forward.2} parent=15 // pred_check
        %p562 = pneg %p108
      $region26: #{transformer_forward.2} parent=15 // pred_check_branch
        %564 = sbr.rel (%p562) target = $region28
      $region27: #{transformer_forward.2} parent=15 // pred_region
        %p565 = scmp.lt.s32.totalorder %s32, 1
        %s566 = scalar_select %p565, %s32, 1
        %s567 = smul.addr %s566, 4
        %s568 = smul.addr %s567, 4
        %s569 = scalar_lea.vmem %s2, %s568
      $region28: #{transformer_forward.2} parent=15 // pred_fallthru
        _
      // Predicated region
      $region29: #{transformer_forward.2} parent=15 // pred_check
        %p570 = pneg %p134
      $region30: #{transformer_forward.2} parent=15 // pred_check_branch
        %572 = sbr.rel (%p570) target = $region32
      $region31: #{transformer_forward.2} parent=15 // pred_region
        %p573 = scmp.lt.s32.totalorder %s32, 1
        %s574 = scalar_select %p573, %s32, 1
        %s575 = scalar_lea.vmem %s3, %s574
      $region32: #{transformer_forward.2} parent=15 // pred_fallthru
        _
      // Predicated region
      $region33: #{transformer_forward.2} parent=15 // pred_check
        %p576 = pneg %p160
      $region34: #{transformer_forward.2} parent=15 // pred_check_branch
        %578 = sbr.rel (%p576) target = $region36
      $region35: #{transformer_forward.2} parent=15 // pred_region
        %p579 = scmp.lt.s32.totalorder %s32, 1
        %s580 = scalar_select %p579, %s32, 1
        %s581 = smul.addr %s580, 4
        %s582 = smul.addr %s581, 4
        %s583 = scalar_lea.vmem %s4, %s582
      $region36: #{transformer_forward.2} parent=15 // pred_fallthru
        _
      // Predicated region
      $region37: #{transformer_forward.2} parent=15 // pred_check
        %p584 = pneg %p186
      $region38: #{transformer_forward.2} parent=15 // pred_check_branch
        %586 = sbr.rel (%p584) target = $region40
      $region39: #{transformer_forward.2} parent=15 // pred_region
        %p587 = scmp.lt.s32.totalorder %s32, 1
        %s588 = scalar_select %p587, %s32, 1
        %s589 = scalar_lea.vmem %s5, %s588
      $region40: #{transformer_forward.2} parent=15 // pred_fallthru
        _
      // Predicated region
      $region41: #{transformer_forward.2} parent=15 // pred_check
        %p590 = pneg %p212
      $region42: #{transformer_forward.2} parent=15 // pred_check_branch
        %592 = sbr.rel (%p590) target = $region44
      $region43: #{transformer_forward.2} parent=15 // pred_region
        %p593 = scmp.lt.s32.totalorder %s32, 1
        %s594 = scalar_select %p593, %s32, 1
        %s595 = smul.addr %s594, 4
        %s596 = smul.addr %s595, 4
        %s597 = scalar_lea.vmem %s6, %s596
      $region44: #{transformer_forward.2} parent=15 // pred_fallthru
        _
      // Predicated region
      $region45: #{transformer_forward.2} parent=15 // pred_check
        %p598 = pneg %p238
      $region46: #{transformer_forward.2} parent=15 // pred_check_branch
        %600 = sbr.rel (%p598) target = $region48
      $region47: #{transformer_forward.2} parent=15 // pred_region
        %p601 = scmp.lt.s32.totalorder %s32, 1
        %s602 = scalar_select %p601, %s32, 1
        %s603 = scalar_lea.vmem %s7, %s602
      $region48: #{transformer_forward.2} parent=15 // pred_fallthru
        _
      // Predicated region
      $region49: #{transformer_forward.2} parent=15 // pred_check
        %p604 = pneg %p264
      $region50: #{transformer_forward.2} parent=15 // pred_check_branch
        %606 = sbr.rel (%p604) target = $region52
      $region51: #{transformer_forward.2} parent=15 // pred_region
        %p607 = scmp.lt.s32.totalorder %s32, 1
        %s608 = scalar_select %p607, %s32, 1
        %s609 = smul.addr %s608, 4
        %s610 = smul.addr %s609, 4
        %s611 = scalar_lea.vmem %s8, %s610
      $region52: #{transformer_forward.2} parent=15 // pred_fallthru
        _
      // Predicated region
      $region53: #{transformer_forward.2} parent=15 // pred_check
        %p612 = pneg %p290
      $region54: #{transformer_forward.2} parent=15 // pred_check_branch
        %614 = sbr.rel (%p612) target = $region56
      $region55: #{transformer_forward.2} parent=15 // pred_region
        %p615 = scmp.lt.s32.totalorder %s32, 1
        %s616 = scalar_select %p615, %s32, 1
        %s617 = scalar_lea.vmem %s9, %s616
      $region56: #{transformer_forward.2} parent=15 // pred_fallthru
        _
      // Predicated region
      $region57: #{transformer_forward.2} parent=15 // pred_check
        %p618 = pneg %p316
      $region58: #{transformer_forward.2} parent=15 // pred_check_branch
        %620 = sbr.rel (%p618) target = $region60
      $region59: #{transformer_forward.2} parent=15 // pred_region
        %p621 = scmp.lt.s32.totalorder %s32, 1
        %s622 = scalar_select %p621, %s32, 1
        %s623 = scalar_lea.vmem %s10, %s622
      $region60: #{transformer_forward.2} parent=15 // pred_fallthru
        _
      // Predicated region
      $region61: #{transformer_forward.2} parent=15 // pred_check
        %p624 = pneg %p342
      $region62: #{transformer_forward.2} parent=15 // pred_check_branch
        %626 = sbr.rel (%p624) target = $region64
      $region63: #{transformer_forward.2} parent=15 // pred_region
        %p627 = scmp.lt.s32.totalorder %s32, 1
        %s628 = scalar_select %p627, %s32, 1
        %s629 = scalar_lea.vmem %s11, %s628
      $region64: #{transformer_forward.2} parent=15 // pred_fallthru
        _
      // Predicated region
      $region65: #{transformer_forward.2} parent=15 // pred_check
        %p630 = pneg %p368
      $region66: #{transformer_forward.2} parent=15 // pred_check_branch
        %632 = sbr.rel (%p630) target = $region68
      $region67: #{transformer_forward.2} parent=15 // pred_region
        %p633 = scmp.lt.s32.totalorder %s32, 1
        %s634 = scalar_select %p633, %s32, 1
        %s635 = smul.addr %s634, 4
        %s636 = smul.addr %s635, 4
        %s637 = scalar_lea.vmem %s12, %s636
      $region68: #{transformer_forward.2} parent=15 // pred_fallthru
        _
      // Predicated region
      $region69: #{transformer_forward.2} parent=15 // pred_check
        %p638 = pneg %p394
      $region70: #{transformer_forward.2} parent=15 // pred_check_branch
        %640 = sbr.rel (%p638) target = $region72
      $region71: #{transformer_forward.2} parent=15 // pred_region
        %p641 = scmp.lt.s32.totalorder %s32, 1
        %s642 = scalar_select %p641, %s32, 1
        %s643 = scalar_lea.vmem %s13, %s642
      $region72: #{transformer_forward.2} parent=15 // pred_fallthru
        _
      // Predicated region
      $region73: #{transformer_forward.2} parent=15 // pred_check
        %p644 = pneg %p420
      $region74: #{transformer_forward.2} parent=15 // pred_check_branch
        %646 = sbr.rel (%p644) target = $region76
      $region75: #{transformer_forward.2} parent=15 // pred_region
        %p647 = scmp.lt.s32.totalorder %s32, 1
        %s648 = scalar_select %p647, %s32, 1
        %s649 = smul.addr %s648, 8
        %s650 = smul.addr %s649, 4
        %s651 = scalar_lea.vmem %s14, %s650
      $region76: #{transformer_forward.2} parent=15 // pred_fallthru
        _
      // Predicated region
      $region77: #{transformer_forward.2} parent=15 // pred_check
        %p652 = pneg %p446
      $region78: #{transformer_forward.2} parent=15 // pred_check_branch
        %654 = sbr.rel (%p652) target = $region80
      $region79: #{transformer_forward.2} parent=15 // pred_region
        %p655 = scmp.lt.s32.totalorder %s32, 1
        %s656 = scalar_select %p655, %s32, 1
        %s657 = scalar_lea.vmem %s15, %s656
      $region80: #{transformer_forward.2} parent=15 // pred_fallthru
        _
      // Predicated region
      $region81: #{transformer_forward.2} parent=15 // pred_check
        %p658 = pneg %p472
      $region82: #{transformer_forward.2} parent=15 // pred_check_branch
        %660 = sbr.rel (%p658) target = $region84
      $region83: #{transformer_forward.2} parent=15 // pred_region
        %p661 = scmp.lt.s32.totalorder %s32, 1
        %s662 = scalar_select %p661, %s32, 1
        %s663 = scalar_lea.vmem %s16, %s662
      $region84: #{transformer_forward.2} parent=15 // pred_fallthru
        _
      // Predicated region
      $region85: #{transformer_forward.2} parent=15 // pred_check
        %p664 = pneg %p498
      $region86: #{transformer_forward.2} parent=15 // pred_check_branch
        %666 = sbr.rel (%p664) target = $region88
      $region87: #{transformer_forward.2} parent=15 // pred_region
        %p667 = scmp.lt.s32.totalorder %s32, 1
        %s668 = scalar_select %p667, %s32, 1
        %s669 = scalar_lea.vmem %s17, %s668
      $region88: #{transformer_forward.2} parent=15 // pred_fallthru
        _
    $region16: #{transformer_forward.2} parent=5 // pred_fallthru
      _
    %p670 = scmp.le.s32.totalorder 1, %s24
    %p671 = scmp.lt.s32.totalorder %s24, 5
    %p672 = pnand %p670, %p671
    %p673 = pneg %p672
    // Predicated region
    $region89: #{transformer_forward.2} parent=5 // pred_check
      _
    $region90: #{transformer_forward.2} parent=5 // pred_check_branch
      %675 = sbr.rel (%p672) target = $region92
    $region91: #{transformer_forward.2} parent=5 // pred_region
      %s676 = ssub.s32 %s24, 1
      %p677 = scmp.lt.s32.totalorder %s33, 1
      %s678 = scalar_select %p677, %s33, 1
      %s679 = scalar_lea.vmem %s0, %s678
      %p680 = pneg %p62
      %p681 = pneg %p59
      %p682 = scmp.lt.s32.totalorder %s33, 1
      %s683 = scalar_select %p682, %s33, 1
      %s684 = smul.addr %s683, 8
      %s685 = scalar_lea.vmem %s1, %s684
      %p686 = pneg %p88
      %p687 = pneg %p85
      %p688 = scmp.lt.s32.totalorder %s34, 1
      %s689 = scalar_select %p688, %s34, 1
      %s690 = smul.addr %s689, 4
      %s691 = smul.addr %s690, 4
      %s692 = scalar_lea.vmem %s2, %s691
      %p693 = pneg %p114
      %p694 = pneg %p111
      %p695 = scmp.lt.s32.totalorder %s34, 1
      %s696 = scalar_select %p695, %s34, 1
      %s697 = scalar_lea.vmem %s3, %s696
      %p698 = pneg %p140
      %p699 = pneg %p137
      %p700 = scmp.lt.s32.totalorder %s34, 1
      %s701 = scalar_select %p700, %s34, 1
      %s702 = smul.addr %s701, 4
      %s703 = smul.addr %s702, 4
      %s704 = scalar_lea.vmem %s4, %s703
      %p705 = pneg %p166
      %p706 = pneg %p163
      %p707 = scmp.lt.s32.totalorder %s34, 1
      %s708 = scalar_select %p707, %s34, 1
      %s709 = scalar_lea.vmem %s5, %s708
      %p710 = pneg %p192
      %p711 = pneg %p189
      %p712 = scmp.lt.s32.totalorder %s34, 1
      %s713 = scalar_select %p712, %s34, 1
      %s714 = smul.addr %s713, 4
      %s715 = smul.addr %s714, 4
      %s716 = scalar_lea.vmem %s6, %s715
      %p717 = pneg %p218
      %p718 = pneg %p215
      %p719 = scmp.lt.s32.totalorder %s34, 1
      %s720 = scalar_select %p719, %s34, 1
      %s721 = scalar_lea.vmem %s7, %s720
      %p722 = pneg %p244
      %p723 = pneg %p241
      %p724 = scmp.lt.s32.totalorder %s34, 1
      %s725 = scalar_select %p724, %s34, 1
      %s726 = smul.addr %s725, 4
      %s727 = smul.addr %s726, 4
      %s728 = scalar_lea.vmem %s8, %s727
      %p729 = pneg %p270
      %p730 = pneg %p267
      %p731 = scmp.lt.s32.totalorder %s34, 1
      %s732 = scalar_select %p731, %s34, 1
      %s733 = scalar_lea.vmem %s9, %s732
      %p734 = pneg %p296
      %p735 = pneg %p293
      %p736 = scmp.lt.s32.totalorder %s34, 1
      %s737 = scalar_select %p736, %s34, 1
      %s738 = scalar_lea.vmem %s10, %s737
      %p739 = pneg %p322
      %p740 = pneg %p319
      %p741 = scmp.lt.s32.totalorder %s34, 1
      %s742 = scalar_select %p741, %s34, 1
      %s743 = scalar_lea.vmem %s11, %s742
      %p744 = pneg %p348
      %p745 = pneg %p345
      %p746 = scmp.lt.s32.totalorder %s34, 1
      %s747 = scalar_select %p746, %s34, 1
      %s748 = smul.addr %s747, 4
      %s749 = smul.addr %s748, 4
      %s750 = scalar_lea.vmem %s12, %s749
      %p751 = pneg %p374
      %p752 = pneg %p371
      %p753 = scmp.lt.s32.totalorder %s34, 1
      %s754 = scalar_select %p753, %s34, 1
      %s755 = scalar_lea.vmem %s13, %s754
      %p756 = pneg %p400
      %p757 = pneg %p397
      %p758 = scmp.lt.s32.totalorder %s34, 1
      %s759 = scalar_select %p758, %s34, 1
      %s760 = smul.addr %s759, 8
      %s761 = smul.addr %s760, 4
      %s762 = scalar_lea.vmem %s14, %s761
      %p763 = pneg %p426
      %p764 = pneg %p423
      %p765 = scmp.lt.s32.totalorder %s34, 1
      %s766 = scalar_select %p765, %s34, 1
      %s767 = scalar_lea.vmem %s15, %s766
      %p768 = pneg %p452
      %p769 = pneg %p449
      %p770 = scmp.lt.s32.totalorder %s34, 1
      %s771 = scalar_select %p770, %s34, 1
      %s772 = scalar_lea.vmem %s16, %s771
      %p773 = pneg %p478
      %p774 = pneg %p475
      %p775 = scmp.lt.s32.totalorder %s34, 1
      %s776 = scalar_select %p775, %s34, 1
      %s777 = scalar_lea.vmem %s17, %s776
      %p778 = pneg %p504
      %p779 = pneg %p501
      %p780 = pneg %p530
      %p781 = pneg %p527
      %p782 = scmp.lt.s32.totalorder %s33, 1
      %s783 = scalar_select %p782, %s33, 1
      %s784 = smul.addr %s783, 8
      %s785 = scalar_lea.vmem %s18, %s784
      %p786 = scmp.lt.s32.totalorder %s33, 1
      %s787 = scalar_select %p786, %s33, 1
      %s788 = scalar_lea.vmem %s0, %s787
      %p789 = scmp.lt.s32.totalorder %s33, 1
      %s790 = scalar_select %p789, %s33, 1
      %s791 = smul.addr %s790, 8
      %s792 = scalar_lea.vmem %s1, %s791
      %p793 = scmp.lt.s32.totalorder %s34, 1
      %s794 = scalar_select %p793, %s34, 1
      %s795 = smul.addr %s794, 4
      %s796 = smul.addr %s795, 4
      %s797 = scalar_lea.vmem %s2, %s796
      %p798 = scmp.lt.s32.totalorder %s34, 1
      %s799 = scalar_select %p798, %s34, 1
      %s800 = scalar_lea.vmem %s3, %s799
      %p801 = scmp.lt.s32.totalorder %s34, 1
      %s802 = scalar_select %p801, %s34, 1
      %s803 = smul.addr %s802, 4
      %s804 = smul.addr %s803, 4
      %s805 = scalar_lea.vmem %s4, %s804
      %p806 = scmp.lt.s32.totalorder %s34, 1
      %s807 = scalar_select %p806, %s34, 1
      %s808 = scalar_lea.vmem %s5, %s807
      %p809 = scmp.lt.s32.totalorder %s34, 1
      %s810 = scalar_select %p809, %s34, 1
      %s811 = smul.addr %s810, 4
      %s812 = smul.addr %s811, 4
      %s813 = scalar_lea.vmem %s6, %s812
      %p814 = scmp.lt.s32.totalorder %s34, 1
      %s815 = scalar_select %p814, %s34, 1
      %s816 = scalar_lea.vmem %s7, %s815
      %p817 = scmp.lt.s32.totalorder %s34, 1
      %s818 = scalar_select %p817, %s34, 1
      %s819 = smul.addr %s818, 4
      %s820 = smul.addr %s819, 4
      %s821 = scalar_lea.vmem %s8, %s820
      %p822 = scmp.lt.s32.totalorder %s34, 1
      %s823 = scalar_select %p822, %s34, 1
      %s824 = scalar_lea.vmem %s9, %s823
      %p825 = scmp.lt.s32.totalorder %s34, 1
      %s826 = scalar_select %p825, %s34, 1
      %s827 = scalar_lea.vmem %s10, %s826
      %p828 = scmp.lt.s32.totalorder %s34, 1
      %s829 = scalar_select %p828, %s34, 1
      %s830 = scalar_lea.vmem %s11, %s829
      %p831 = scmp.lt.s32.totalorder %s34, 1
      %s832 = scalar_select %p831, %s34, 1
      %s833 = smul.addr %s832, 4
      %s834 = smul.addr %s833, 4
      %s835 = scalar_lea.vmem %s12, %s834
      %p836 = scmp.lt.s32.totalorder %s34, 1
      %s837 = scalar_select %p836, %s34, 1
      %s838 = scalar_lea.vmem %s13, %s837
      %p839 = scmp.lt.s32.totalorder %s34, 1
      %s840 = scalar_select %p839, %s34, 1
      %s841 = smul.addr %s840, 8
      %s842 = smul.addr %s841, 4
      %s843 = scalar_lea.vmem %s14, %s842
      %p844 = scmp.lt.s32.totalorder %s34, 1
      %s845 = scalar_select %p844, %s34, 1
      %s846 = scalar_lea.vmem %s15, %s845
      %p847 = scmp.lt.s32.totalorder %s34, 1
      %s848 = scalar_select %p847, %s34, 1
      %s849 = scalar_lea.vmem %s16, %s848
      %p850 = scmp.lt.s32.totalorder %s34, 1
      %s851 = scalar_select %p850, %s34, 1
      %s852 = scalar_lea.vmem %s17, %s851
      %p853 = scmp.lt.s32.totalorder %s33, 1
      %s854 = scalar_select %p853, %s33, 1
      %s855 = smul.addr %s854, 8
      %s856 = scalar_lea.vmem %s18, %s855
      %p858 = scmp.eq.s32.totalorder %s34, 0
      // Predicated region
      $region93: #{transformer_forward.2} parent=91 // pred_check
        %p859 = pneg %p858
      $region94: #{transformer_forward.2} parent=91 // pred_check_branch
        %861 = sbr.rel (%p859) target = $region96
      $region95: #{transformer_forward.2} parent=91 // pred_region
        %v862 = vld [vmem:[%s792] sm:$0xff]
        %vm863 = vcmask 261120
        %864 = vst.msk [vmem:[#allocation2] sm:$0xff] %vm863, %v862
      $region96: #{transformer_forward.2} parent=91 // pred_fallthru
        _
      %v865 = vld [vmem:[#allocation2] sm:$0xff]
      %v866 = vld [vmem:[%s788] sm:$0x1]
      %vm867 = vcmp.gt.f32.partialorder %v866, 0.0
      %v868 = vld [vmem:[%s797] sm:$0xf]
      %v869 = vld [vmem:[%s797 + $0x4] sm:$0xf]
      %v870 = vld [vmem:[%s797 + $0x8] sm:$0xf]
      %v871 = vld [vmem:[%s797 + $0xc] sm:$0xf]
      %v872 = vld [vmem:[%s800] sm:$0x1]
      %v873 = vld [vmem:[%s805] sm:$0xf]
      %v874 = vld [vmem:[%s805 + $0x4] sm:$0xf]
      %v875 = vld [vmem:[%s805 + $0x8] sm:$0xf]
      %v876 = vld [vmem:[%s805 + $0xc] sm:$0xf]
      %v877 = vld [vmem:[%s808] sm:$0x1]
      %v878 = vld [vmem:[%s813] sm:$0xf]
      %v879 = vld [vmem:[%s813 + $0x4] sm:$0xf]
      %v880 = vld [vmem:[%s813 + $0x8] sm:$0xf]
      %v881 = vld [vmem:[%s813 + $0xc] sm:$0xf]
      %v882 = vld [vmem:[%s816] sm:$0x1]
      %v883 = vld [vmem:[%s821] sm:$0xf]
      %v884 = vld [vmem:[%s821 + $0x4] sm:$0xf]
      %v885 = vld [vmem:[%s821 + $0x8] sm:$0xf]
      %v886 = vld [vmem:[%s821 + $0xc] sm:$0xf]
      %v887 = vld [vmem:[%s824] sm:$0x1]
      %v888 = vpack.c.bf16 %v865, %v865
      %v890 = vlaneseq
      %v891 = vshrl.u32 %v890, 7
      %v892 = vsub.s32 0, %v891
      %v893 = vrot.slane %v872, %v892
      %v899 = vunpack.c.l.b16 %v868
      %v900 = vunpack.c.l.b16 %v869
      %v901 = vunpack.c.l.b16 %v870
      %v902 = vunpack.c.l.b16 %v871
      %v903 = vpack.c.b16 %v900, %v899
      %v904 = vpack.c.b16 %v902, %v901
      %vm907 = vcmask 261120
      %v909 = vsel %vm907, %v888, 0
      %911 = vmatprep.subr.bf16.mxu0 0
      %912 = vmatpush1.bf16.msra.mxu0 0
      %913 = vmatprep.subr.bf16.mxu0 0
      %914 = vmatpush1.bf16.msra.mxu0 0
      %915 = vmatprep.subr.bf16.mxu0 0
      %916 = vmatpush1.bf16.msra.mxu0 0
      %917 = vmatprep.subr.bf16.mxu0 0
      %918 = vmatpush1.bf16.msra.mxu0 0
      %919 = vmatprep.subr.bf16.mxu0 0
      %920 = vmatpush1.bf16.msra.mxu0 0
      %921 = vmatprep.subr.bf16.mxu0 0
      %922 = vmatpush1.bf16.msra.mxu0 0
      %923 = vmatprep.subr.bf16.mxu0 0
      %924 = vmatpush1.bf16.msra.mxu0 %v904
      %925 = vmatprep.subr.bf16.mxu0 0
      %926 = vmatpush1.bf16.msra.mxu0 %v903
      %927 = vmatprep.subr.bf16.mxu0 0
      %928 = vmatpush2.bf16.msra.mxu0 0
      %929 = vmatprep.subr.bf16.mxu0 0
      %930 = vmatpush2.bf16.msra.mxu0 0
      %931 = vmatprep.subr.bf16.mxu0 0
      %932 = vmatpush2.bf16.msra.mxu0 0
      %933 = vmatprep.subr.bf16.mxu0 0
      %934 = vmatpush2.bf16.msra.mxu0 0
      %935 = vmatprep.subr.bf16.mxu0 0
      %936 = vmatpush2.bf16.msra.mxu0 0
      %937 = vmatprep.subr.bf16.mxu0 0
      %938 = vmatpush2.bf16.msra.mxu0 0
      %939 = vmatprep.subr.bf16.mxu0 0
      %940 = vmatpush2.bf16.msra.mxu0 0
      %941 = vmatprep.subr.bf16.mxu0 0
      %942 = vmatpush2.bf16.msra.mxu0 0
      %943 = vmatprep.mubr.bf16.mxu0 0
      %944 = vmatmul.mubr.bf16.gmra.mxu0 %v909
      %v945 = vpop.f32.mrf.mxu0
      %v946 = vadd.f32 %v893, %v945
      %v947 = vpop.f32.mrf.mxu0
      %v948 = vpop.f32.mrf.mxu0
      %v949 = vpop.f32.mrf.mxu0
      %950 = vdwg.mxu0
      %v952 = vlaneseq
      %v953 = vshrl.u32 %v952, 7
      %v954 = vsub.s32 0, %v953
      %v955 = vrot.slane %v877, %v954
      %v961 = vunpack.c.l.b16 %v873
      %v962 = vunpack.c.l.b16 %v874
      %v963 = vunpack.c.l.b16 %v875
      %v964 = vunpack.c.l.b16 %v876
      %v965 = vpack.c.b16 %v962, %v961
      %v966 = vpack.c.b16 %v964, %v963
      %969 = vmatprep.subr.bf16.mxu0 0
      %970 = vmatpush1.bf16.msra.mxu0 0
      %971 = vmatprep.subr.bf16.mxu0 0
      %972 = vmatpush1.bf16.msra.mxu0 0
      %973 = vmatprep.subr.bf16.mxu0 0
      %974 = vmatpush1.bf16.msra.mxu0 0
      %975 = vmatprep.subr.bf16.mxu0 0
      %976 = vmatpush1.bf16.msra.mxu0 0
      %977 = vmatprep.subr.bf16.mxu0 0
      %978 = vmatpush1.bf16.msra.mxu0 0
      %979 = vmatprep.subr.bf16.mxu0 0
      %980 = vmatpush1.bf16.msra.mxu0 0
      %981 = vmatprep.subr.bf16.mxu0 0
      %982 = vmatpush1.bf16.msra.mxu0 %v966
      %983 = vmatprep.subr.bf16.mxu0 0
      %984 = vmatpush1.bf16.msra.mxu0 %v965
      %985 = vmatprep.subr.bf16.mxu0 0
      %986 = vmatpush2.bf16.msra.mxu0 0
      %987 = vmatprep.subr.bf16.mxu0 0
      %988 = vmatpush2.bf16.msra.mxu0 0
      %989 = vmatprep.subr.bf16.mxu0 0
      %990 = vmatpush2.bf16.msra.mxu0 0
      %991 = vmatprep.subr.bf16.mxu0 0
      %992 = vmatpush2.bf16.msra.mxu0 0
      %993 = vmatprep.subr.bf16.mxu0 0
      %994 = vmatpush2.bf16.msra.mxu0 0
      %995 = vmatprep.subr.bf16.mxu0 0
      %996 = vmatpush2.bf16.msra.mxu0 0
      %997 = vmatprep.subr.bf16.mxu0 0
      %998 = vmatpush2.bf16.msra.mxu0 0
      %999 = vmatprep.subr.bf16.mxu0 0
      %1000 = vmatpush2.bf16.msra.mxu0 0
      %1001 = vmatprep.mubr.bf16.mxu0 0
      %1002 = vmatmul.mubr.bf16.gmra.mxu0 %v909
      %v1003 = vpop.f32.mrf.mxu0
      %v1004 = vadd.f32 %v955, %v1003
      %v1005 = vpop.f32.mrf.mxu0
      %v1006 = vpop.f32.mrf.mxu0
      %v1007 = vpop.f32.mrf.mxu0
      %1008 = vdwg.mxu0
      %v1010 = vlaneseq
      %v1011 = vshrl.u32 %v1010, 7
      %v1012 = vsub.s32 0, %v1011
      %v1013 = vrot.slane %v882, %v1012
      %v1019 = vunpack.c.l.b16 %v878
      %v1020 = vunpack.c.l.b16 %v879
      %v1021 = vunpack.c.l.b16 %v880
      %v1022 = vunpack.c.l.b16 %v881
      %v1023 = vpack.c.b16 %v1020, %v1019
      %v1024 = vpack.c.b16 %v1022, %v1021
      %1027 = vmatprep.subr.bf16.mxu0 0
      %1028 = vmatpush1.bf16.msra.mxu0 0
      %1029 = vmatprep.subr.bf16.mxu0 0
      %1030 = vmatpush1.bf16.msra.mxu0 0
      %1031 = vmatprep.subr.bf16.mxu0 0
      %1032 = vmatpush1.bf16.msra.mxu0 0
      %1033 = vmatprep.subr.bf16.mxu0 0
      %1034 = vmatpush1.bf16.msra.mxu0 0
      %1035 = vmatprep.subr.bf16.mxu0 0
      %1036 = vmatpush1.bf16.msra.mxu0 0
      %1037 = vmatprep.subr.bf16.mxu0 0
      %1038 = vmatpush1.bf16.msra.mxu0 0
      %1039 = vmatprep.subr.bf16.mxu0 0
      %1040 = vmatpush1.bf16.msra.mxu0 %v1024
      %1041 = vmatprep.subr.bf16.mxu0 0
      %1042 = vmatpush1.bf16.msra.mxu0 %v1023
      %1043 = vmatprep.subr.bf16.mxu0 0
      %1044 = vmatpush2.bf16.msra.mxu0 0
      %1045 = vmatprep.subr.bf16.mxu0 0
      %1046 = vmatpush2.bf16.msra.mxu0 0
      %1047 = vmatprep.subr.bf16.mxu0 0
      %1048 = vmatpush2.bf16.msra.mxu0 0
      %1049 = vmatprep.subr.bf16.mxu0 0
      %1050 = vmatpush2.bf16.msra.mxu0 0
      %1051 = vmatprep.subr.bf16.mxu0 0
      %1052 = vmatpush2.bf16.msra.mxu0 0
      %1053 = vmatprep.subr.bf16.mxu0 0
      %1054 = vmatpush2.bf16.msra.mxu0 0
      %1055 = vmatprep.subr.bf16.mxu0 0
      %1056 = vmatpush2.bf16.msra.mxu0 0
      %1057 = vmatprep.subr.bf16.mxu0 0
      %1058 = vmatpush2.bf16.msra.mxu0 0
      %1059 = vmatprep.mubr.bf16.mxu0 0
      %1060 = vmatmul.mubr.bf16.gmra.mxu0 %v909
      %v1061 = vpop.f32.mrf.mxu0
      %v1062 = vadd.f32 %v1013, %v1061
      %v1063 = vpop.f32.mrf.mxu0
      %v1064 = vpop.f32.mrf.mxu0
      %v1065 = vpop.f32.mrf.mxu0
      %1066 = vdwg.mxu0
      %1068 = vrot.lane.b32.xlu0 %v946, 120
      %v1069 = vpop.permute.xlu0 %1068
      %1071 = vrot.lane.b32.xlu0 %v946, 112
      %v1072 = vpop.permute.xlu0 %1071
      %1074 = vrot.lane.b32.xlu0 %v946, 104
      %v1075 = vpop.permute.xlu0 %1074
      %1078 = vrot.lane.b32.xlu0 %v1004, 120
      %v1079 = vpop.permute.xlu0 %1078
      %1081 = vrot.lane.b32.xlu0 %v1004, 112
      %v1082 = vpop.permute.xlu0 %1081
      %1084 = vrot.lane.b32.xlu0 %v1004, 104
      %v1085 = vpop.permute.xlu0 %1084
      %1088 = vrot.lane.b32.xlu0 %v1062, 120
      %v1089 = vpop.permute.xlu0 %1088
      %1091 = vrot.lane.b32.xlu0 %v1062, 112
      %v1092 = vpop.permute.xlu0 %1091
      %1094 = vrot.lane.b32.xlu0 %v1062, 104
      %v1095 = vpop.permute.xlu0 %1094
      %v1097 = vpack.c.bf16 %v946, %v946
      %v1098 = vpack.c.bf16 %v1069, %v1069
      %v1099 = vpack.c.bf16 %v1072, %v1072
      %v1100 = vpack.c.bf16 %v1075, %v1075
      %v1101 = vpack.c.bf16 %v1004, %v1004
      %v1102 = vpack.c.bf16 %v1079, %v1079
      %v1103 = vpack.c.bf16 %v1082, %v1082
      %v1104 = vpack.c.bf16 %v1085, %v1085
      %v1105 = vpack.c.bf16 %v1062, %v1062
      %v1106 = vpack.c.bf16 %v1089, %v1089
      %v1107 = vpack.c.bf16 %v1092, %v1092
      %v1108 = vpack.c.bf16 %v1095, %v1095
      %vm1109 = vcmask 64512
      %v1111 = vsel %vm1109, %v1097, 0
      %v1114 = vsel %vm1109, %v1101, 0
      %1116 = vmatprep.subr.bf16.mxu0 0
      %1117 = vmatpush1.bf16.xpose.msra.mxu0 0
      %1118 = vmatprep.subr.bf16.mxu0 0
      %1119 = vmatpush1.bf16.xpose.msra.mxu0 0
      %1120 = vmatprep.subr.bf16.mxu0 0
      %1121 = vmatpush1.bf16.xpose.msra.mxu0 0
      %1122 = vmatprep.subr.bf16.mxu0 0
      %1123 = vmatpush1.bf16.xpose.msra.mxu0 0
      %1124 = vmatprep.subr.bf16.mxu0 0
      %1125 = vmatpush1.bf16.xpose.msra.mxu0 0
      %1126 = vmatprep.subr.bf16.mxu0 0
      %1127 = vmatpush1.bf16.xpose.msra.mxu0 0
      %1128 = vmatprep.subr.bf16.mxu0 0
      %1129 = vmatpush1.bf16.xpose.msra.mxu0 0
      %1130 = vmatprep.subr.bf16.mxu0 0
      %1131 = vmatpush1.bf16.xpose.msra.mxu0 %v1114
      %1132 = vmatprep.subr.bf16.mxu0 0
      %1133 = vmatpush2.bf16.xpose.msra.mxu0 0
      %1134 = vmatprep.subr.bf16.mxu0 0
      %1135 = vmatpush2.bf16.xpose.msra.mxu0 0
      %1136 = vmatprep.subr.bf16.mxu0 0
      %1137 = vmatpush2.bf16.xpose.msra.mxu0 0
      %1138 = vmatprep.subr.bf16.mxu0 0
      %1139 = vmatpush2.bf16.xpose.msra.mxu0 0
      %1140 = vmatprep.subr.bf16.mxu0 0
      %1141 = vmatpush2.bf16.xpose.msra.mxu0 0
      %1142 = vmatprep.subr.bf16.mxu0 0
      %1143 = vmatpush2.bf16.xpose.msra.mxu0 0
      %1144 = vmatprep.subr.bf16.mxu0 0
      %1145 = vmatpush2.bf16.xpose.msra.mxu0 0
      %1146 = vmatprep.subr.bf16.mxu0 0
      %1147 = vmatpush2.bf16.xpose.msra.mxu0 0
      %1148 = vmatprep.mubr.bf16.mxu0 0
      %1149 = vmatmul.mubr.bf16.gmra.mxu0 %v1111
      %v1150 = vpop.f32.mrf.mxu0
      %v1151 = vadd.f32 0.0, %v1150
      %v1152 = vpop.f32.mrf.mxu0
      %v1153 = vpop.f32.mrf.mxu0
      %v1154 = vpop.f32.mrf.mxu0
      %1155 = vdwg.mxu0
      %v1157 = vsel %vm1109, %v1098, 0
      %v1160 = vsel %vm1109, %v1102, 0
      %1162 = vmatprep.subr.bf16.mxu0 0
      %1163 = vmatpush1.bf16.xpose.msra.mxu0 0
      %1164 = vmatprep.subr.bf16.mxu0 0
      %1165 = vmatpush1.bf16.xpose.msra.mxu0 0
      %1166 = vmatprep.subr.bf16.mxu0 0
      %1167 = vmatpush1.bf16.xpose.msra.mxu0 0
      %1168 = vmatprep.subr.bf16.mxu0 0
      %1169 = vmatpush1.bf16.xpose.msra.mxu0 0
      %1170 = vmatprep.subr.bf16.mxu0 0
      %1171 = vmatpush1.bf16.xpose.msra.mxu0 0
      %1172 = vmatprep.subr.bf16.mxu0 0
      %1173 = vmatpush1.bf16.xpose.msra.mxu0 0
      %1174 = vmatprep.subr.bf16.mxu0 0
      %1175 = vmatpush1.bf16.xpose.msra.mxu0 0
      %1176 = vmatprep.subr.bf16.mxu0 0
      %1177 = vmatpush1.bf16.xpose.msra.mxu0 %v1160
      %1178 = vmatprep.subr.bf16.mxu0 0
      %1179 = vmatpush2.bf16.xpose.msra.mxu0 0
      %1180 = vmatprep.subr.bf16.mxu0 0
      %1181 = vmatpush2.bf16.xpose.msra.mxu0 0
      %1182 = vmatprep.subr.bf16.mxu0 0
      %1183 = vmatpush2.bf16.xpose.msra.mxu0 0
      %1184 = vmatprep.subr.bf16.mxu0 0
      %1185 = vmatpush2.bf16.xpose.msra.mxu0 0
      %1186 = vmatprep.subr.bf16.mxu0 0
      %1187 = vmatpush2.bf16.xpose.msra.mxu0 0
      %1188 = vmatprep.subr.bf16.mxu0 0
      %1189 = vmatpush2.bf16.xpose.msra.mxu0 0
      %1190 = vmatprep.subr.bf16.mxu0 0
      %1191 = vmatpush2.bf16.xpose.msra.mxu0 0
      %1192 = vmatprep.subr.bf16.mxu0 0
      %1193 = vmatpush2.bf16.xpose.msra.mxu0 0
      %1194 = vmatprep.mubr.bf16.mxu0 0
      %1195 = vmatmul.mubr.bf16.gmra.mxu0 %v1157
      %v1196 = vpop.f32.mrf.mxu0
      %v1197 = vadd.f32 0.0, %v1196
      %v1198 = vpop.f32.mrf.mxu0
      %v1199 = vpop.f32.mrf.mxu0
      %v1200 = vpop.f32.mrf.mxu0
      %1201 = vdwg.mxu0
      %v1203 = vsel %vm1109, %v1099, 0
      %v1206 = vsel %vm1109, %v1103, 0
      %1208 = vmatprep.subr.bf16.mxu0 0
      %1209 = vmatpush1.bf16.xpose.msra.mxu0 0
      %1210 = vmatprep.subr.bf16.mxu0 0
      %1211 = vmatpush1.bf16.xpose.msra.mxu0 0
      %1212 = vmatprep.subr.bf16.mxu0 0
      %1213 = vmatpush1.bf16.xpose.msra.mxu0 0
      %1214 = vmatprep.subr.bf16.mxu0 0
      %1215 = vmatpush1.bf16.xpose.msra.mxu0 0
      %1216 = vmatprep.subr.bf16.mxu0 0
      %1217 = vmatpush1.bf16.xpose.msra.mxu0 0
      %1218 = vmatprep.subr.bf16.mxu0 0
      %1219 = vmatpush1.bf16.xpose.msra.mxu0 0
      %1220 = vmatprep.subr.bf16.mxu0 0
      %1221 = vmatpush1.bf16.xpose.msra.mxu0 0
      %1222 = vmatprep.subr.bf16.mxu0 0
      %1223 = vmatpush1.bf16.xpose.msra.mxu0 %v1206
      %1224 = vmatprep.subr.bf16.mxu0 0
      %1225 = vmatpush2.bf16.xpose.msra.mxu0 0
      %1226 = vmatprep.subr.bf16.mxu0 0
      %1227 = vmatpush2.bf16.xpose.msra.mxu0 0
      %1228 = vmatprep.subr.bf16.mxu0 0
      %1229 = vmatpush2.bf16.xpose.msra.mxu0 0
      %1230 = vmatprep.subr.bf16.mxu0 0
      %1231 = vmatpush2.bf16.xpose.msra.mxu0 0
      %1232 = vmatprep.subr.bf16.mxu0 0
      %1233 = vmatpush2.bf16.xpose.msra.mxu0 0
      %1234 = vmatprep.subr.bf16.mxu0 0
      %1235 = vmatpush2.bf16.xpose.msra.mxu0 0
      %1236 = vmatprep.subr.bf16.mxu0 0
      %1237 = vmatpush2.bf16.xpose.msra.mxu0 0
      %1238 = vmatprep.subr.bf16.mxu0 0
      %1239 = vmatpush2.bf16.xpose.msra.mxu0 0
      %1240 = vmatprep.mubr.bf16.mxu0 0
      %1241 = vmatmul.mubr.bf16.gmra.mxu0 %v1203
      %v1242 = vpop.f32.mrf.mxu0
      %v1243 = vadd.f32 0.0, %v1242
      %v1244 = vpop.f32.mrf.mxu0
      %v1245 = vpop.f32.mrf.mxu0
      %v1246 = vpop.f32.mrf.mxu0
      %1247 = vdwg.mxu0
      %v1249 = vsel %vm1109, %v1100, 0
      %v1252 = vsel %vm1109, %v1104, 0
      %1254 = vmatprep.subr.bf16.mxu0 0
      %1255 = vmatpush1.bf16.xpose.msra.mxu0 0
      %1256 = vmatprep.subr.bf16.mxu0 0
      %1257 = vmatpush1.bf16.xpose.msra.mxu0 0
      %1258 = vmatprep.subr.bf16.mxu0 0
      %1259 = vmatpush1.bf16.xpose.msra.mxu0 0
      %1260 = vmatprep.subr.bf16.mxu0 0
      %1261 = vmatpush1.bf16.xpose.msra.mxu0 0
      %1262 = vmatprep.subr.bf16.mxu0 0
      %1263 = vmatpush1.bf16.xpose.msra.mxu0 0
      %1264 = vmatprep.subr.bf16.mxu0 0
      %1265 = vmatpush1.bf16.xpose.msra.mxu0 0
      %1266 = vmatprep.subr.bf16.mxu0 0
      %1267 = vmatpush1.bf16.xpose.msra.mxu0 0
      %1268 = vmatprep.subr.bf16.mxu0 0
      %1269 = vmatpush1.bf16.xpose.msra.mxu0 %v1252
      %1270 = vmatprep.subr.bf16.mxu0 0
      %1271 = vmatpush2.bf16.xpose.msra.mxu0 0
      %1272 = vmatprep.subr.bf16.mxu0 0
      %1273 = vmatpush2.bf16.xpose.msra.mxu0 0
      %1274 = vmatprep.subr.bf16.mxu0 0
      %1275 = vmatpush2.bf16.xpose.msra.mxu0 0
      %1276 = vmatprep.subr.bf16.mxu0 0
      %1277 = vmatpush2.bf16.xpose.msra.mxu0 0
      %1278 = vmatprep.subr.bf16.mxu0 0
      %1279 = vmatpush2.bf16.xpose.msra.mxu0 0
      %1280 = vmatprep.subr.bf16.mxu0 0
      %1281 = vmatpush2.bf16.xpose.msra.mxu0 0
      %1282 = vmatprep.subr.bf16.mxu0 0
      %1283 = vmatpush2.bf16.xpose.msra.mxu0 0
      %1284 = vmatprep.subr.bf16.mxu0 0
      %1285 = vmatpush2.bf16.xpose.msra.mxu0 0
      %1286 = vmatprep.mubr.bf16.mxu0 0
      %1287 = vmatmul.mubr.bf16.gmra.mxu0 %v1249
      %v1288 = vpop.f32.mrf.mxu0
      %v1289 = vadd.f32 0.0, %v1288
      %v1290 = vpop.f32.mrf.mxu0
      %v1291 = vpop.f32.mrf.mxu0
      %v1292 = vpop.f32.mrf.mxu0
      %1293 = vdwg.mxu0
      %v1294 = vmul.f32 %v1151, 0.35355338
      %v1295 = vmul.f32 %v1197, 0.35355338
      %v1296 = vmul.f32 %v1243, 0.35355338
      %v1297 = vmul.f32 %v1289, 0.35355338
      %v1298 = vsel %vm867, 1, 0
      %v1299 = vlaneseq
      %v1300 = vshrl.u32 %v1299, 7
      %v1301 = vsub.s32 0, %v1300
      %v1302 = vrot.slane %v1298, %v1301
      %vm1303 = vcmp.eq.s32.totalorder %v1302, 1
      %v1304 = vsel %vm1303, %v1294, -1e+30
      %v1305 = vsel %vm1303, %v1295, -1e+30
      %v1306 = vsel %vm1303, %v1296, -1e+30
      %v1307 = vsel %vm1303, %v1297, -1e+30
      %v1308 = vsel %vm1109, %v1304, -inf
      %1309 = vmax.xlane.f32.xlu0 %v1308
      %v1310 = vpop.xlane.xlu0 %1309
      %v1311 = vsel %vm1109, %v1305, -inf
      %1312 = vmax.xlane.f32.xlu0 %v1311
      %v1313 = vpop.xlane.xlu0 %1312
      %v1314 = vsel %vm1109, %v1306, -inf
      %1315 = vmax.xlane.f32.xlu0 %v1314
      %v1316 = vpop.xlane.xlu0 %1315
      %v1317 = vsel %vm1109, %v1307, -inf
      %1318 = vmax.xlane.f32.xlu0 %v1317
      %v1319 = vpop.xlane.xlu0 %1318
      %v1320 = vsub.f32 %v1304, %v1310
      %v1321 = vsub.f32 %v1305, %v1313
      %v1322 = vsub.f32 %v1306, %v1316
      %v1323 = vsub.f32 %v1307, %v1319
      %v1324 = vmul.f32 %v1320, 1.442695
      %v1325 = vpow.pop %v1324
      %v1326 = vmul.f32 %v1321, 1.442695
      %v1327 = vpow.pop %v1326
      %v1328 = vmul.f32 %v1322, 1.442695
      %v1329 = vpow.pop %v1328
      %v1330 = vmul.f32 %v1323, 1.442695
      %v1331 = vpow.pop %v1330
      %v1332 = vsel %vm1109, %v1325, 0.0
      %1333 = vadd.xlane.f32.xlu0 %v1332
      %v1334 = vpop.xlane.xlu0 %1333
      %v1335 = vsel %vm1109, %v1327, 0.0
      %1336 = vadd.xlane.f32.xlu0 %v1335
      %v1337 = vpop.xlane.xlu0 %1336
      %v1338 = vsel %vm1109, %v1329, 0.0
      %1339 = vadd.xlane.f32.xlu0 %v1338
      %v1340 = vpop.xlane.xlu0 %1339
      %v1341 = vsel %vm1109, %v1331, 0.0
      %1342 = vadd.xlane.f32.xlu0 %v1341
      %v1343 = vpop.xlane.xlu0 %1342
      %v1344 = vrcp.pop %v1334
      %v1345 = vrcp.pop %v1337
      %v1346 = vrcp.pop %v1340
      %v1347 = vrcp.pop %v1343
      %v1348 = vmul.f32 %v1325, %v1344
      %v1349 = vmul.f32 %v1327, %v1345
      %v1350 = vmul.f32 %v1329, %v1346
      %v1351 = vmul.f32 %v1331, %v1347
      %v1352 = vpack.c.bf16 %v1348, %v1348
      %v1353 = vpack.c.bf16 %v1349, %v1349
      %v1354 = vpack.c.bf16 %v1350, %v1350
      %v1355 = vpack.c.bf16 %v1351, %v1351
      %v1357 = vsel %vm1109, %v1352, 0
      %vm1359 = vcmask 1043456
      %v1361 = vsel %vm1359, %v1105, 0
      %1363 = vmatprep.subr.bf16.mxu0 0
      %1364 = vmatpush1.bf16.msra.mxu0 0
      %1365 = vmatprep.subr.bf16.mxu0 0
      %1366 = vmatpush1.bf16.msra.mxu0 0
      %1367 = vmatprep.subr.bf16.mxu0 0
      %1368 = vmatpush1.bf16.msra.mxu0 0
      %1369 = vmatprep.subr.bf16.mxu0 0
      %1370 = vmatpush1.bf16.msra.mxu0 0
      %1371 = vmatprep.subr.bf16.mxu0 0
      %1372 = vmatpush1.bf16.msra.mxu0 0
      %1373 = vmatprep.subr.bf16.mxu0 0
      %1374 = vmatpush1.bf16.msra.mxu0 0
      %1375 = vmatprep.subr.bf16.mxu0 0
      %1376 = vmatpush1.bf16.msra.mxu0 0
      %1377 = vmatprep.subr.bf16.mxu0 0
      %1378 = vmatpush1.bf16.msra.mxu0 %v1361
      %1379 = vmatprep.subr.bf16.mxu0 0
      %1380 = vmatpush2.bf16.msra.mxu0 0
      %1381 = vmatprep.subr.bf16.mxu0 0
      %1382 = vmatpush2.bf16.msra.mxu0 0
      %1383 = vmatprep.subr.bf16.mxu0 0
      %1384 = vmatpush2.bf16.msra.mxu0 0
      %1385 = vmatprep.subr.bf16.mxu0 0
      %1386 = vmatpush2.bf16.msra.mxu0 0
      %1387 = vmatprep.subr.bf16.mxu0 0
      %1388 = vmatpush2.bf16.msra.mxu0 0
      %1389 = vmatprep.subr.bf16.mxu0 0
      %1390 = vmatpush2.bf16.msra.mxu0 0
      %1391 = vmatprep.subr.bf16.mxu0 0
      %1392 = vmatpush2.bf16.msra.mxu0 0
      %1393 = vmatprep.subr.bf16.mxu0 0
      %1394 = vmatpush2.bf16.msra.mxu0 0
      %1395 = vmatprep.mubr.bf16.mxu0 0
      %1396 = vmatmul.mubr.bf16.gmra.mxu0 %v1357
      %v1397 = vpop.f32.mrf.mxu0
      %v1398 = vadd.f32 0.0, %v1397
      %v1399 = vpop.f32.mrf.mxu0
      %v1400 = vpop.f32.mrf.mxu0
      %v1401 = vpop.f32.mrf.mxu0
      %1402 = vdwg.mxu0
      %v1404 = vsel %vm1109, %v1353, 0
      %v1407 = vsel %vm1359, %v1106, 0
      %1409 = vmatprep.subr.bf16.mxu0 0
      %1410 = vmatpush1.bf16.msra.mxu0 0
      %1411 = vmatprep.subr.bf16.mxu0 0
      %1412 = vmatpush1.bf16.msra.mxu0 0
      %1413 = vmatprep.subr.bf16.mxu0 0
      %1414 = vmatpush1.bf16.msra.mxu0 0
      %1415 = vmatprep.subr.bf16.mxu0 0
      %1416 = vmatpush1.bf16.msra.mxu0 0
      %1417 = vmatprep.subr.bf16.mxu0 0
      %1418 = vmatpush1.bf16.msra.mxu0 0
      %1419 = vmatprep.subr.bf16.mxu0 0
      %1420 = vmatpush1.bf16.msra.mxu0 0
      %1421 = vmatprep.subr.bf16.mxu0 0
      %1422 = vmatpush1.bf16.msra.mxu0 0
      %1423 = vmatprep.subr.bf16.mxu0 0
      %1424 = vmatpush1.bf16.msra.mxu0 %v1407
      %1425 = vmatprep.subr.bf16.mxu0 0
      %1426 = vmatpush2.bf16.msra.mxu0 0
      %1427 = vmatprep.subr.bf16.mxu0 0
      %1428 = vmatpush2.bf16.msra.mxu0 0
      %1429 = vmatprep.subr.bf16.mxu0 0
      %1430 = vmatpush2.bf16.msra.mxu0 0
      %1431 = vmatprep.subr.bf16.mxu0 0
      %1432 = vmatpush2.bf16.msra.mxu0 0
      %1433 = vmatprep.subr.bf16.mxu0 0
      %1434 = vmatpush2.bf16.msra.mxu0 0
      %1435 = vmatprep.subr.bf16.mxu0 0
      %1436 = vmatpush2.bf16.msra.mxu0 0
      %1437 = vmatprep.subr.bf16.mxu0 0
      %1438 = vmatpush2.bf16.msra.mxu0 0
      %1439 = vmatprep.subr.bf16.mxu0 0
      %1440 = vmatpush2.bf16.msra.mxu0 0
      %1441 = vmatprep.mubr.bf16.mxu0 0
      %1442 = vmatmul.mubr.bf16.gmra.mxu0 %v1404
      %v1443 = vpop.f32.mrf.mxu0
      %v1444 = vadd.f32 0.0, %v1443
      %v1445 = vpop.f32.mrf.mxu0
      %v1446 = vpop.f32.mrf.mxu0
      %v1447 = vpop.f32.mrf.mxu0
      %1448 = vdwg.mxu0
      %v1450 = vsel %vm1109, %v1354, 0
      %v1453 = vsel %vm1359, %v1107, 0
      %1455 = vmatprep.subr.bf16.mxu0 0
      %1456 = vmatpush1.bf16.msra.mxu0 0
      %1457 = vmatprep.subr.bf16.mxu0 0
      %1458 = vmatpush1.bf16.msra.mxu0 0
      %1459 = vmatprep.subr.bf16.mxu0 0
      %1460 = vmatpush1.bf16.msra.mxu0 0
      %1461 = vmatprep.subr.bf16.mxu0 0
      %1462 = vmatpush1.bf16.msra.mxu0 0
      %1463 = vmatprep.subr.bf16.mxu0 0
      %1464 = vmatpush1.bf16.msra.mxu0 0
      %1465 = vmatprep.subr.bf16.mxu0 0
      %1466 = vmatpush1.bf16.msra.mxu0 0
      %1467 = vmatprep.subr.bf16.mxu0 0
      %1468 = vmatpush1.bf16.msra.mxu0 0
      %1469 = vmatprep.subr.bf16.mxu0 0
      %1470 = vmatpush1.bf16.msra.mxu0 %v1453
      %1471 = vmatprep.subr.bf16.mxu0 0
      %1472 = vmatpush2.bf16.msra.mxu0 0
      %1473 = vmatprep.subr.bf16.mxu0 0
      %1474 = vmatpush2.bf16.msra.mxu0 0
      %1475 = vmatprep.subr.bf16.mxu0 0
      %1476 = vmatpush2.bf16.msra.mxu0 0
      %1477 = vmatprep.subr.bf16.mxu0 0
      %1478 = vmatpush2.bf16.msra.mxu0 0
      %1479 = vmatprep.subr.bf16.mxu0 0
      %1480 = vmatpush2.bf16.msra.mxu0 0
      %1481 = vmatprep.subr.bf16.mxu0 0
      %1482 = vmatpush2.bf16.msra.mxu0 0
      %1483 = vmatprep.subr.bf16.mxu0 0
      %1484 = vmatpush2.bf16.msra.mxu0 0
      %1485 = vmatprep.subr.bf16.mxu0 0
      %1486 = vmatpush2.bf16.msra.mxu0 0
      %1487 = vmatprep.mubr.bf16.mxu0 0
      %1488 = vmatmul.mubr.bf16.gmra.mxu0 %v1450
      %v1489 = vpop.f32.mrf.mxu0
      %v1490 = vadd.f32 0.0, %v1489
      %v1491 = vpop.f32.mrf.mxu0
      %v1492 = vpop.f32.mrf.mxu0
      %v1493 = vpop.f32.mrf.mxu0
      %1494 = vdwg.mxu0
      %v1496 = vsel %vm1109, %v1355, 0
      %v1499 = vsel %vm1359, %v1108, 0
      %1501 = vmatprep.subr.bf16.mxu0 0
      %1502 = vmatpush1.bf16.msra.mxu0 0
      %1503 = vmatprep.subr.bf16.mxu0 0
      %1504 = vmatpush1.bf16.msra.mxu0 0
      %1505 = vmatprep.subr.bf16.mxu0 0
      %1506 = vmatpush1.bf16.msra.mxu0 0
      %1507 = vmatprep.subr.bf16.mxu0 0
      %1508 = vmatpush1.bf16.msra.mxu0 0
      %1509 = vmatprep.subr.bf16.mxu0 0
      %1510 = vmatpush1.bf16.msra.mxu0 0
      %1511 = vmatprep.subr.bf16.mxu0 0
      %1512 = vmatpush1.bf16.msra.mxu0 0
      %1513 = vmatprep.subr.bf16.mxu0 0
      %1514 = vmatpush1.bf16.msra.mxu0 0
      %1515 = vmatprep.subr.bf16.mxu0 0
      %1516 = vmatpush1.bf16.msra.mxu0 %v1499
      %1517 = vmatprep.subr.bf16.mxu0 0
      %1518 = vmatpush2.bf16.msra.mxu0 0
      %1519 = vmatprep.subr.bf16.mxu0 0
      %1520 = vmatpush2.bf16.msra.mxu0 0
      %1521 = vmatprep.subr.bf16.mxu0 0
      %1522 = vmatpush2.bf16.msra.mxu0 0
      %1523 = vmatprep.subr.bf16.mxu0 0
      %1524 = vmatpush2.bf16.msra.mxu0 0
      %1525 = vmatprep.subr.bf16.mxu0 0
      %1526 = vmatpush2.bf16.msra.mxu0 0
      %1527 = vmatprep.subr.bf16.mxu0 0
      %1528 = vmatpush2.bf16.msra.mxu0 0
      %1529 = vmatprep.subr.bf16.mxu0 0
      %1530 = vmatpush2.bf16.msra.mxu0 0
      %1531 = vmatprep.subr.bf16.mxu0 0
      %1532 = vmatpush2.bf16.msra.mxu0 0
      %1533 = vmatprep.mubr.bf16.mxu0 0
      %1534 = vmatmul.mubr.bf16.gmra.mxu0 %v1496
      %v1535 = vpop.f32.mrf.mxu0
      %v1536 = vadd.f32 0.0, %v1535
      %v1537 = vpop.f32.mrf.mxu0
      %v1538 = vpop.f32.mrf.mxu0
      %v1539 = vpop.f32.mrf.mxu0
      %1540 = vdwg.mxu0
      %1542 = vrot.lane.b32.xlu0 %v1444, 8
      %v1543 = vpop.permute.xlu0 %1542
      %1546 = vrot.lane.b32.xlu0 %v1490, 16
      %v1547 = vpop.permute.xlu0 %1546
      %1550 = vrot.lane.b32.xlu0 %v1536, 24
      %v1551 = vpop.permute.xlu0 %1550
      %v1553 = vsel %vm1109, %v1398, %v1543
      %vm1554 = vcmask 130048
      %v1555 = vsel %vm1554, %v1553, %v1547
      %vm1556 = vcmask 195584
      %v1557 = vsel %vm1556, %v1555, %v1551
      %v1558 = vpack.c.bf16 %v1557, %v1557
      %v1560 = vlaneseq
      %v1561 = vshrl.u32 %v1560, 7
      %v1562 = vsub.s32 0, %v1561
      %v1563 = vrot.slane %v887, %v1562
      %v1569 = vunpack.c.l.b16 %v883
      %v1570 = vunpack.c.l.b16 %v884
      %v1571 = vunpack.c.l.b16 %v885
      %v1572 = vunpack.c.l.b16 %v886
      %v1573 = vpack.c.b16 %v1570, %v1569
      %v1574 = vpack.c.b16 %v1572, %v1571
      %v1578 = vsel %vm907, %v1558, 0
      %1580 = vmatprep.subr.bf16.mxu0 0
      %1581 = vmatpush1.bf16.msra.mxu0 0
      %1582 = vmatprep.subr.bf16.mxu0 0
      %1583 = vmatpush1.bf16.msra.mxu0 0
      %1584 = vmatprep.subr.bf16.mxu0 0
      %1585 = vmatpush1.bf16.msra.mxu0 0
      %1586 = vmatprep.subr.bf16.mxu0 0
      %1587 = vmatpush1.bf16.msra.mxu0 0
      %1588 = vmatprep.subr.bf16.mxu0 0
      %1589 = vmatpush1.bf16.msra.mxu0 0
      %1590 = vmatprep.subr.bf16.mxu0 0
      %1591 = vmatpush1.bf16.msra.mxu0 0
      %1592 = vmatprep.subr.bf16.mxu0 0
      %1593 = vmatpush1.bf16.msra.mxu0 %v1574
      %1594 = vmatprep.subr.bf16.mxu0 0
      %1595 = vmatpush1.bf16.msra.mxu0 %v1573
      %1596 = vmatprep.subr.bf16.mxu0 0
      %1597 = vmatpush2.bf16.msra.mxu0 0
      %1598 = vmatprep.subr.bf16.mxu0 0
      %1599 = vmatpush2.bf16.msra.mxu0 0
      %1600 = vmatprep.subr.bf16.mxu0 0
      %1601 = vmatpush2.bf16.msra.mxu0 0
      %1602 = vmatprep.subr.bf16.mxu0 0
      %1603 = vmatpush2.bf16.msra.mxu0 0
      %1604 = vmatprep.subr.bf16.mxu0 0
      %1605 = vmatpush2.bf16.msra.mxu0 0
      %1606 = vmatprep.subr.bf16.mxu0 0
      %1607 = vmatpush2.bf16.msra.mxu0 0
      %1608 = vmatprep.subr.bf16.mxu0 0
      %1609 = vmatpush2.bf16.msra.mxu0 0
      %1610 = vmatprep.subr.bf16.mxu0 0
      %1611 = vmatpush2.bf16.msra.mxu0 0
      %1612 = vmatprep.mubr.bf16.mxu0 0
      %1613 = vmatmul.mubr.bf16.gmra.mxu0 %v1578
      %v1614 = vpop.f32.mrf.mxu0
      %v1615 = vadd.f32 %v1563, %v1614
      %v1616 = vpop.f32.mrf.mxu0
      %v1617 = vpop.f32.mrf.mxu0
      %v1618 = vpop.f32.mrf.mxu0
      %1619 = vdwg.mxu0
      %v1620 = vadd.f32 %v865, %v1615
      %v1621 = vld [vmem:[%s827] sm:$0x1]
      %v1622 = vld [vmem:[%s830] sm:$0x1]
      %v1623 = vsel %vm907, %v1620, 0.0
      %1624 = vadd.xlane.f32.xlu0 %v1623
      %v1625 = vpop.xlane.xlu0 %1624
      %v1626 = vrcp.pop 32.0
      %v1627 = vmul.f32 %v1625, %v1626
      %v1628 = vsub.f32 %v1620, %v1627
      %v1629 = vmul.f32 %v1628, %v1628
      %v1630 = vsel %vm907, %v1629, 0.0
      %1631 = vadd.xlane.f32.xlu0 %v1630
      %v1632 = vpop.xlane.xlu0 %1631
      %v1633 = vmul.f32 %v1632, %v1626
      %v1634 = vadd.f32 %v1633, 1e-05
      %v1635 = vrsqrt.pop %v1634
      %v1636 = vmul.f32 %v1628, %v1635
      %v1638 = vlaneseq
      %v1639 = vshrl.u32 %v1638, 7
      %v1640 = vsub.s32 0, %v1639
      %v1641 = vrot.slane %v1621, %v1640
      %v1643 = vmul.f32 %v1636, %v1641
      %v1645 = vlaneseq
      %v1646 = vshrl.u32 %v1645, 7
      %v1647 = vsub.s32 0, %v1646
      %v1648 = vrot.slane %v1622, %v1647
      %v1650 = vadd.f32 %v1643, %v1648
      %v1651 = vld [vmem:[%s835] sm:$0xf]
      %v1652 = vld [vmem:[%s835 + $0x4] sm:$0xf]
      %v1653 = vld [vmem:[%s835 + $0x8] sm:$0xf]
      %v1654 = vld [vmem:[%s835 + $0xc] sm:$0xf]
      %v1655 = vld [vmem:[%s838] sm:$0x1]
      %v1656 = vld [vmem:[%s843] sm:$0xf]
      %v1657 = vld [vmem:[%s843 + $0x4] sm:$0xf]
      %v1658 = vld [vmem:[%s843 + $0x8] sm:$0xf]
      %v1659 = vld [vmem:[%s843 + $0xc] sm:$0xf]
      %v1660 = vld [vmem:[%s843 + $0x10] sm:$0xf]
      %v1661 = vld [vmem:[%s843 + $0x14] sm:$0xf]
      %v1662 = vld [vmem:[%s843 + $0x18] sm:$0xf]
      %v1663 = vld [vmem:[%s843 + $0x1c] sm:$0xf]
      %v1664 = vld [vmem:[%s846] sm:$0x1]
      %v1665 = vpack.c.bf16 %v1650, %v1650
      %v1667 = vlaneseq
      %v1668 = vshrl.u32 %v1667, 7
      %v1669 = vsub.s32 0, %v1668
      %v1670 = vrot.slane %v1655, %v1669
      %v1676 = vunpack.c.l.b16 %v1651
      %v1677 = vunpack.c.l.b16 %v1652
      %v1678 = vunpack.c.l.b16 %v1653
      %v1679 = vunpack.c.l.b16 %v1654
      %v1680 = vpack.c.b16 %v1677, %v1676
      %v1681 = vpack.c.b16 %v1679, %v1678
      %v1685 = vsel %vm907, %v1665, 0
      %1687 = vmatprep.subr.bf16.mxu0 0
      %1688 = vmatpush1.bf16.msra.mxu0 0
      %1689 = vmatprep.subr.bf16.mxu0 0
      %1690 = vmatpush1.bf16.msra.mxu0 0
      %1691 = vmatprep.subr.bf16.mxu0 0
      %1692 = vmatpush1.bf16.msra.mxu0 0
      %1693 = vmatprep.subr.bf16.mxu0 0
      %1694 = vmatpush1.bf16.msra.mxu0 0
      %1695 = vmatprep.subr.bf16.mxu0 0
      %1696 = vmatpush1.bf16.msra.mxu0 0
      %1697 = vmatprep.subr.bf16.mxu0 0
      %1698 = vmatpush1.bf16.msra.mxu0 0
      %1699 = vmatprep.subr.bf16.mxu0 0
      %1700 = vmatpush1.bf16.msra.mxu0 %v1681
      %1701 = vmatprep.subr.bf16.mxu0 0
      %1702 = vmatpush1.bf16.msra.mxu0 %v1680
      %1703 = vmatprep.subr.bf16.mxu0 0
      %1704 = vmatpush2.bf16.msra.mxu0 0
      %1705 = vmatprep.subr.bf16.mxu0 0
      %1706 = vmatpush2.bf16.msra.mxu0 0
      %1707 = vmatprep.subr.bf16.mxu0 0
      %1708 = vmatpush2.bf16.msra.mxu0 0
      %1709 = vmatprep.subr.bf16.mxu0 0
      %1710 = vmatpush2.bf16.msra.mxu0 0
      %1711 = vmatprep.subr.bf16.mxu0 0
      %1712 = vmatpush2.bf16.msra.mxu0 0
      %1713 = vmatprep.subr.bf16.mxu0 0
      %1714 = vmatpush2.bf16.msra.mxu0 0
      %1715 = vmatprep.subr.bf16.mxu0 0
      %1716 = vmatpush2.bf16.msra.mxu0 0
      %1717 = vmatprep.subr.bf16.mxu0 0
      %1718 = vmatpush2.bf16.msra.mxu0 0
      %1719 = vmatprep.mubr.bf16.mxu0 0
      %1720 = vmatmul.mubr.bf16.gmra.mxu0 %v1685
      %v1721 = vpop.f32.mrf.mxu0
      %v1722 = vadd.f32 %v1670, %v1721
      %v1723 = vpop.f32.mrf.mxu0
      %v1724 = vpop.f32.mrf.mxu0
      %v1725 = vpop.f32.mrf.mxu0
      %1726 = vdwg.mxu0
      %v1727 = vmax.f32 %v1722, 0.0
      %v1728 = vpack.c.bf16 %v1727, %v1727
      %v1730 = vlaneseq
      %v1731 = vshrl.u32 %v1730, 7
      %v1732 = vsub.s32 0, %v1731
      %v1733 = vrot.slane %v1664, %v1732
      %v1743 = vunpack.c.l.b16 %v1656
      %v1744 = vunpack.c.l.b16 %v1657
      %v1745 = vunpack.c.l.b16 %v1658
      %v1746 = vunpack.c.l.b16 %v1659
      %v1747 = vunpack.c.l.b16 %v1660
      %v1748 = vunpack.c.l.b16 %v1661
      %v1749 = vunpack.c.l.b16 %v1662
      %v1750 = vunpack.c.l.b16 %v1663
      %v1751 = vpack.c.b16 %v1744, %v1743
      %v1752 = vpack.c.b16 %v1746, %v1745
      %v1753 = vpack.c.b16 %v1748, %v1747
      %v1754 = vpack.c.b16 %v1750, %v1749
      %vm1759 = vcmask 523264
      %v1761 = vsel %vm1759, %v1728, 0
      %1763 = vmatprep.subr.bf16.mxu0 0
      %1764 = vmatpush1.bf16.msra.mxu0 0
      %1765 = vmatprep.subr.bf16.mxu0 0
      %1766 = vmatpush1.bf16.msra.mxu0 0
      %1767 = vmatprep.subr.bf16.mxu0 0
      %1768 = vmatpush1.bf16.msra.mxu0 0
      %1769 = vmatprep.subr.bf16.mxu0 0
      %1770 = vmatpush1.bf16.msra.mxu0 0
      %1771 = vmatprep.subr.bf16.mxu0 0
      %1772 = vmatpush1.bf16.msra.mxu0 %v1754
      %1773 = vmatprep.subr.bf16.mxu0 0
      %1774 = vmatpush1.bf16.msra.mxu0 %v1753
      %1775 = vmatprep.subr.bf16.mxu0 0
      %1776 = vmatpush1.bf16.msra.mxu0 %v1752
      %1777 = vmatprep.subr.bf16.mxu0 0
      %1778 = vmatpush1.bf16.msra.mxu0 %v1751
      %1779 = vmatprep.subr.bf16.mxu0 0
      %1780 = vmatpush2.bf16.msra.mxu0 0
      %1781 = vmatprep.subr.bf16.mxu0 0
      %1782 = vmatpush2.bf16.msra.mxu0 0
      %1783 = vmatprep.subr.bf16.mxu0 0
      %1784 = vmatpush2.bf16.msra.mxu0 0
      %1785 = vmatprep.subr.bf16.mxu0 0
      %1786 = vmatpush2.bf16.msra.mxu0 0
      %1787 = vmatprep.subr.bf16.mxu0 0
      %1788 = vmatpush2.bf16.msra.mxu0 0
      %1789 = vmatprep.subr.bf16.mxu0 0
      %1790 = vmatpush2.bf16.msra.mxu0 0
      %1791 = vmatprep.subr.bf16.mxu0 0
      %1792 = vmatpush2.bf16.msra.mxu0 0
      %1793 = vmatprep.subr.bf16.mxu0 0
      %1794 = vmatpush2.bf16.msra.mxu0 0
      %1795 = vmatprep.mubr.bf16.mxu0 0
      %1796 = vmatmul.mubr.bf16.gmra.mxu0 %v1761
      %v1797 = vpop.f32.mrf.mxu0
      %v1798 = vadd.f32 %v1733, %v1797
      %v1799 = vpop.f32.mrf.mxu0
      %v1800 = vpop.f32.mrf.mxu0
      %v1801 = vpop.f32.mrf.mxu0
      %1802 = vdwg.mxu0
      %v1803 = vadd.f32 %v1650, %v1798
      %v1804 = vld [vmem:[%s849] sm:$0x1]
      %v1805 = vld [vmem:[%s852] sm:$0x1]
      %v1806 = vsel %vm907, %v1803, 0.0
      %1807 = vadd.xlane.f32.xlu0 %v1806
      %v1808 = vpop.xlane.xlu0 %1807
      %v1809 = vmul.f32 %v1808, %v1626
      %v1810 = vsub.f32 %v1803, %v1809
      %v1811 = vmul.f32 %v1810, %v1810
      %v1812 = vsel %vm907, %v1811, 0.0
      %1813 = vadd.xlane.f32.xlu0 %v1812
      %v1814 = vpop.xlane.xlu0 %1813
      %v1815 = vmul.f32 %v1814, %v1626
      %v1816 = vadd.f32 %v1815, 1e-05
      %v1817 = vrsqrt.pop %v1816
      %v1818 = vmul.f32 %v1810, %v1817
      %v1820 = vlaneseq
      %v1821 = vshrl.u32 %v1820, 7
      %v1822 = vsub.s32 0, %v1821
      %v1823 = vrot.slane %v1804, %v1822
      %v1825 = vmul.f32 %v1818, %v1823
      %v1827 = vlaneseq
      %v1828 = vshrl.u32 %v1827, 7
      %v1829 = vsub.s32 0, %v1828
      %v1830 = vrot.slane %v1805, %v1829
      %v1832 = vadd.f32 %v1825, %v1830
      %1833 = vst.msk [vmem:[#allocation2] sm:$0xff] %vm907, %v1832
      %p1834 = scmp.eq.s32.totalorder %s34, 1
      // Predicated region
      $region97: #{transformer_forward.2} parent=91 // pred_check
        %p1835 = pneg %p1834
      $region98: #{transformer_forward.2} parent=91 // pred_check_branch
        %1837 = sbr.rel (%p1835) target = $region100
      $region99: #{transformer_forward.2} parent=91 // pred_region
        %1838 = vst.msk [vmem:[%s856] sm:$0xff] %vm907, %v1832
      $region100: #{transformer_forward.2} parent=91 // pred_fallthru
        _
      %p1839 = scmp.lt.s32.totalorder %s33, 1
      %s1840 = scalar_select %p1839, %s33, 1
      %s1841 = smul.addr %s1840, 8
      %s1842 = scalar_lea.vmem %s18, %s1841
      // Predicated region
      $region101: #{transformer_forward.2} parent=91 // pred_check
        %p1843 = pneg %p527
      $region102: #{transformer_forward.2} parent=91 // pred_check_branch
        %1845 = sbr.rel (%p1843) target = $region104
      $region103: #{transformer_forward.2} parent=91 // pred_region
        _
      $region104: #{transformer_forward.2} parent=91 // pred_fallthru
        _
    $region92: #{transformer_forward.2} parent=5 // pred_fallthru
      _
    %p1846 = scmp.le.s32.totalorder 2, %s24
    // Predicated region
    $region105: #{transformer_forward.2} parent=5 // pred_check
      %p1847 = pneg %p1846
    $region106: #{transformer_forward.2} parent=5 // pred_check_branch
      %1849 = sbr.rel (%p1847) target = $region108
    $region107: #{transformer_forward.2} parent=5 // pred_region
      %s1850 = ssub.s32 %s24, 2
      // Predicated region
      $region109: #{transformer_forward.2} parent=107 // pred_check
        %p1851 = pneg %p533
      $region110: #{transformer_forward.2} parent=107 // pred_check_branch
        %1853 = sbr.rel (%p1851) target = $region112
      $region111: #{transformer_forward.2} parent=107 // pred_region
        %p1854 = scmp.lt.s32.totalorder %s35, 1
        %s1855 = scalar_select %p1854, %s35, 1
        %s1856 = smul.addr %s1855, 8
        %s1857 = scalar_lea.vmem %s18, %s1856
      $region112: #{transformer_forward.2} parent=107 // pred_fallthru
        _
    $region108: #{transformer_forward.2} parent=5 // pred_fallthru
      _
  $region6: #{transformer_forward.2} parent=0 // loop_footer
    %s28 = sadd.s32 1, %s24
  $region7: #{transformer_forward.2} parent=0 // loop_footer_branch
    %23 = sbr.rel target = $region3
  $region8: #{transformer_forward.2} parent=0 // loop_exit
    _

// kernel: transformer_forward.3
$region0: #{transformer_forward.3}
  #allocation0 [shape = 'u32[]', space=smem, size = 0x4, offset = 0x4, fixed_abs, tag = 'smem constant byte address 0x4 - core index']
  #allocation1 [shape = 'u32[144,128]{1,0:T(1,128)}', space=vmem, size = 0x12000, scoped, tag = 'internal scratch']
  #allocation2 [shape = 'f32[8,32]{1,0:T(8,128)}', space=vmem, size = 0x1000, scoped, tag = 'scratch operand']
  %s0 = inlined_call_operand.smem [shape: u32[33], index: -1, kind: input, shape index: {}]
  %s1 = sld [smem:[%s0]]
  %s2 = scalar_lea.smem %s0, 1
  %s3 = sld [smem:[%s2]]
  %s4 = scalar_lea.smem %s0, 2
  %s5 = sld [smem:[%s4]]
  %s6 = scalar_lea.smem %s0, 3
  %s7 = sld [smem:[%s6]]
  %s8 = scalar_lea.smem %s0, 4
  %s9 = sld [smem:[%s8]]
  %s10 = scalar_lea.smem %s0, 5
  %s11 = sld [smem:[%s10]]
  %s12 = scalar_lea.smem %s0, 6
  %s13 = sld [smem:[%s12]]
  %s14 = scalar_lea.smem %s0, 7
  %s15 = sld [smem:[%s14]]
  %s16 = scalar_lea.smem %s0, 8
  %s17 = sld [smem:[%s16]]
  %s18 = scalar_lea.smem %s0, 9
  %s19 = sld [smem:[%s18]]
  %s20 = scalar_lea.smem %s0, 10
  %s21 = sld [smem:[%s20]]
  %s22 = scalar_lea.smem %s0, 11
  %s23 = sld [smem:[%s22]]
  %s24 = scalar_lea.smem %s0, 12
  %s25 = sld [smem:[%s24]]
  %s26 = scalar_lea.smem %s0, 13
  %s27 = sld [smem:[%s26]]
  %s28 = scalar_lea.smem %s0, 14
  %s29 = sld [smem:[%s28]]
  %s30 = scalar_lea.smem %s0, 15
  %s31 = sld [smem:[%s30]]
  %s32 = scalar_lea.smem %s0, 16
  %s33 = sld [smem:[%s32]]
  %s34 = scalar_lea.smem %s0, 17
  %s35 = sld [smem:[%s34]]
  %s36 = scalar_lea.smem %s0, 18
  %s37 = sld [smem:[%s36]]
  %s38 = scalar_lea.smem %s0, 19
  %s39 = sld [smem:[%s38]]
  %s40 = scalar_lea.smem %s0, 20
  %s41 = sld [smem:[%s40]]
  %s42 = scalar_lea.smem %s0, 21
  %s43 = sld [smem:[%s42]]
  %s44 = scalar_lea.smem %s0, 22
  %s45 = sld [smem:[%s44]]
  %s46 = scalar_lea.smem %s0, 23
  %s47 = sld [smem:[%s46]]
  %s48 = scalar_lea.smem %s0, 24
  %s49 = sld [smem:[%s48]]
  %s50 = scalar_lea.smem %s0, 25
  %s51 = sld [smem:[%s50]]
  %s52 = scalar_lea.smem %s0, 26
  %s53 = sld [smem:[%s52]]
  %s54 = scalar_lea.smem %s0, 27
  %s55 = sld [smem:[%s54]]
  %s56 = scalar_lea.smem %s0, 28
  %s57 = sld [smem:[%s56]]
  %s58 = scalar_lea.smem %s0, 29
  %s59 = sld [smem:[%s58]]
  %s60 = scalar_lea.smem %s0, 30
  %s61 = sld [smem:[%s60]]
  %s62 = scalar_lea.smem %s0, 31
  %s63 = sld [smem:[%s62]]
  %s64 = scalar_lea.smem %s0, 32
  %s65 = sld [smem:[%s64]]
  %s66 = sld [smem:[#allocation0]]
  $region181: #{transformer_forward.3} parent=0
    _
  %s68 = ssub.s32 1, %s66
  %s69 = scalar_select 0, %s68, %s66
  $region1: #{transformer_forward.3} parent=0
    #allocation3 [shape = 'u8[1024]{0}', space=vmem, size = 0x400, scoped, tag = 'input window, operand 27']
    #allocation4 [shape = 's32[2]{0}', space=sflag, size = 0x8, scoped, tag = 'scoped memory for transformer_forward.3']
    #allocation5 [shape = 's32[2]{0}', space=sflag, size = 0x8, scoped, tag = 'scoped memory for transformer_forward.3']
    #allocation6 [shape = 'u8[1024]{0}', space=vmem, size = 0x400, scoped, tag = 'input window, operand 28']
    #allocation7 [shape = 's32[2]{0}', space=sflag, size = 0x8, scoped, tag = 'scoped memory for transformer_forward.3']
    #allocation8 [shape = 'u8[1024]{0}', space=vmem, size = 0x400, scoped, tag = 'input window, operand 29']
    #allocation9 [shape = 'u8[8192]{0}', space=vmem, size = 0x2000, scoped, tag = 'output window, operand 0']
    %70 = vsyncpa [#allocation4], 0
    %s71 = scalar_lea.sflag [#allocation4], 1
    %72 = vsyncpa %s71, 0
    %73 = vsyncpa [#allocation7], 0
    %s74 = scalar_lea.sflag [#allocation7], 1
    %75 = vsyncpa %s74, 0
    %76 = vsyncpa [#allocation5], 0
    %s77 = scalar_lea.sflag [#allocation5], 1
    %78 = vsyncpa %s77, 0
    loop: start=0, step=1, limit=6
    $region2: #{transformer_forward.3} parent=1 // loop_pre_header
      _
    $region3: #{transformer_forward.3} parent=1 // loop_header
      %s80 = sphi 0, %s84
      %p81 = scmp.ge.s32.totalorder %s80, 6
      %s87 = sphi 0, %s99
      %s88 = sphi 0, %s95
      %s89 = sphi 0, %s87
      %s90 = sphi 0, %s88
      %s91 = sphi 0, %s89
      %s92 = sphi 0, %s90
      %s102 = sphi 0, %s104
      %s105 = sphi 0, %s102
      %s106 = sphi 0, %s105
      %s122 = sphi 0, %s106
      %s128 = sphi 0, %s130
      %s131 = sphi 0, %s128
      %s132 = sphi 0, %s131
      %s148 = sphi 0, %s132
      %s154 = sphi 0, %s156
      %s157 = sphi 0, %s154
      %s158 = sphi 0, %s157
      %s174 = sphi 0, %s158
      %s180 = sphi 0, %s182
      %s183 = sphi 0, %s180
      %s184 = sphi 0, %s183
      %s200 = sphi 0, %s184
      %s206 = sphi 0, %s208
      %s209 = sphi 0, %s206
      %s210 = sphi 0, %s209
      %s226 = sphi 0, %s210
      %s232 = sphi 0, %s234
      %s235 = sphi 0, %s232
      %s236 = sphi 0, %s235
      %s252 = sphi 0, %s236
      %s258 = sphi 0, %s260
      %s261 = sphi 0, %s258
      %s262 = sphi 0, %s261
      %s278 = sphi 0, %s262
      %s284 = sphi 0, %s286
      %s287 = sphi 0, %s284
      %s288 = sphi 0, %s287
      %s304 = sphi 0, %s288
      %s310 = sphi 0, %s312
      %s313 = sphi 0, %s310
      %s314 = sphi 0, %s313
      %s330 = sphi 0, %s314
      %s336 = sphi 0, %s338
      %s339 = sphi 0, %s336
      %s340 = sphi 0, %s339
      %s356 = sphi 0, %s340
      %s362 = sphi 0, %s364
      %s365 = sphi 0, %s362
      %s366 = sphi 0, %s365
      %s382 = sphi 0, %s366
      %s388 = sphi 0, %s390
      %s391 = sphi 0, %s388
      %s392 = sphi 0, %s391
      %s408 = sphi 0, %s392
      %s414 = sphi 0, %s416
      %s417 = sphi 0, %s414
      %s418 = sphi 0, %s417
      %s434 = sphi 0, %s418
      %s440 = sphi 0, %s442
      %s443 = sphi 0, %s440
      %s444 = sphi 0, %s443
      %s460 = sphi 0, %s444
      %s466 = sphi 0, %s468
      %s469 = sphi 0, %s466
      %s470 = sphi 0, %s469
      %s486 = sphi 0, %s470
      %s492 = sphi 0, %s494
      %s495 = sphi 0, %s492
      %s496 = sphi 0, %s495
      %s512 = sphi 0, %s496
      %s518 = sphi 0, %s520
      %s521 = sphi 0, %s518
      %s522 = sphi 0, %s521
      %s538 = sphi 0, %s522
      %s544 = sphi 0, %s546
      %s547 = sphi 0, %s544
      %s548 = sphi 0, %s547
      %s564 = sphi 0, %s548
      %s570 = sphi 0, %s572
      %s573 = sphi 0, %s570
      %s574 = sphi 0, %s573
      %s590 = sphi 0, %s574
      %s596 = sphi 0, %s598
      %s599 = sphi 0, %s596
      %s600 = sphi 0, %s599
      %s616 = sphi 0, %s600
      %s622 = sphi 0, %s624
      %s625 = sphi 0, %s622
      %s626 = sphi 0, %s625
      %s642 = sphi 0, %s626
      %s648 = sphi 0, %s650
      %s651 = sphi 0, %s648
      %s652 = sphi 0, %s651
      %s668 = sphi 0, %s652
      %s674 = sphi 0, %s676
      %s677 = sphi 0, %s674
      %s678 = sphi 0, %s677
      %s694 = sphi 0, %s678
      %s700 = sphi 0, %s702
      %s703 = sphi 0, %s700
      %s704 = sphi 0, %s703
      %s720 = sphi 0, %s704
      %s726 = sphi 0, %s728
      %s729 = sphi 0, %s726
      %s730 = sphi 0, %s729
      %s746 = sphi 0, %s730
      %s752 = sphi 0, %s754
      %s755 = sphi 0, %s752
      %s756 = sphi 0, %s755
      %s772 = sphi 0, %s756
      %s778 = sphi 0, %s780
      %s781 = sphi 0, %s778
      %s782 = sphi 0, %s781
      %s798 = sphi 0, %s782
      %s804 = sphi 0, %s806
      %s807 = sphi 0, %s804
      %s808 = sphi 0, %s807
      %s824 = sphi 0, %s808
      %s830 = sphi 0, %s832
      %s833 = sphi 0, %s830
      %s834 = sphi 0, %s833
      %s850 = sphi 0, %s834
      %s856 = sphi 0, %s858
      %s859 = sphi 0, %s856
      %s860 = sphi 0, %s859
      %s876 = sphi 0, %s860
      %s880 = sphi 0, %s880
      %s882 = sphi 0, %s880
      %s883 = sphi 0, %s882
      %s897 = sphi 0, %s883
      %s901 = sphi 0, %s901
      %s903 = sphi 0, %s901
      %s904 = sphi 0, %s903
      %s918 = sphi 0, %s904
      %s924 = sphi 0, %s926
      %s927 = sphi 0, %s924
      %s928 = sphi 0, %s927
      %s944 = sphi 0, %s928
    $region4: #{transformer_forward.3} parent=1 // loop_header_branch
      %83 = sbr.rel (%p81) target = $region8
    $region5: #{transformer_forward.3} parent=1 // loop_body
      %s85 = ssub.s32 %s80, 1
      %s86 = ssub.s32 %s80, 2
      %s93 = sadd.s32 1, %s88
      %p94 = scmp.ge.s32.totalorder %s93, 2
      %s95 = scalar_select %p94, 0, %s93
      %s96 = sadd.s32 1, %s87
      %s97 = scalar_select %p94, %s96, %s87
      %p98 = scmp.ge.s32.totalorder %s97, 2
      %s99 = scalar_select %p98, 0, %s97
      %s100 = ssub.s32 %s87, %s99
      %p101 = scmp.eq.s32.totalorder %s100, 0
      %s103 = sadd.s32 %s102, 1
      %s104 = scalar_select %p101, %s102, %s103
      %p107 = pneg %p101
      %p108 = scmp.eq.s32.totalorder %s80, 3
      %p109 = por %p107, %p108
      %p110 = scmp.ne.s32.totalorder %s102, %s105
      %p111 = scmp.eq.s32.totalorder %s80, 0
      %p112 = por %p110, %p111
      %p113 = scmp.ne.s32.totalorder %s102, %s105
      %p114 = scmp.eq.s32.totalorder %s85, 3
      %p115 = por %p113, %p114
      %p116 = scmp.ne.s32.totalorder %s105, %s106
      %p117 = scmp.eq.s32.totalorder %s85, 0
      %p118 = por %p116, %p117
      %p119 = scmp.ne.s32.totalorder %s105, %s106
      %p120 = scmp.eq.s32.totalorder %s86, 3
      %p121 = por %p119, %p120
      %p123 = scmp.ne.s32.totalorder %s106, %s122
      %p124 = scmp.eq.s32.totalorder %s86, 0
      %p125 = por %p123, %p124
      %s126 = ssub.s32 %s87, %s99
      %p127 = scmp.eq.s32.totalorder %s126, 0
      %s129 = sadd.s32 %s128, 1
      %s130 = scalar_select %p127, %s128, %s129
      %p133 = pneg %p127
      %p134 = scmp.eq.s32.totalorder %s80, 3
      %p135 = por %p133, %p134
      %p136 = scmp.ne.s32.totalorder %s128, %s131
      %p137 = scmp.eq.s32.totalorder %s80, 0
      %p138 = por %p136, %p137
      %p139 = scmp.ne.s32.totalorder %s128, %s131
      %p140 = scmp.eq.s32.totalorder %s85, 3
      %p141 = por %p139, %p140
      %p142 = scmp.ne.s32.totalorder %s131, %s132
      %p143 = scmp.eq.s32.totalorder %s85, 0
      %p144 = por %p142, %p143
      %p145 = scmp.ne.s32.totalorder %s131, %s132
      %p146 = scmp.eq.s32.totalorder %s86, 3
      %p147 = por %p145, %p146
      %p149 = scmp.ne.s32.totalorder %s132, %s148
      %p150 = scmp.eq.s32.totalorder %s86, 0
      %p151 = por %p149, %p150
      %s152 = ssub.s32 %s87, %s99
      %p153 = scmp.eq.s32.totalorder %s152, 0
      %s155 = sadd.s32 %s154, 1
      %s156 = scalar_select %p153, %s154, %s155
      %p159 = pneg %p153
      %p160 = scmp.eq.s32.totalorder %s80, 3
      %p161 = por %p159, %p160
      %p162 = scmp.ne.s32.totalorder %s154, %s157
      %p163 = scmp.eq.s32.totalorder %s80, 0
      %p164 = por %p162, %p163
      %p165 = scmp.ne.s32.totalorder %s154, %s157
      %p166 = scmp.eq.s32.totalorder %s85, 3
      %p167 = por %p165, %p166
      %p168 = scmp.ne.s32.totalorder %s157, %s158
      %p169 = scmp.eq.s32.totalorder %s85, 0
      %p170 = por %p168, %p169
      %p171 = scmp.ne.s32.totalorder %s157, %s158
      %p172 = scmp.eq.s32.totalorder %s86, 3
      %p173 = por %p171, %p172
      %p175 = scmp.ne.s32.totalorder %s158, %s174
      %p176 = scmp.eq.s32.totalorder %s86, 0
      %p177 = por %p175, %p176
      %s178 = ssub.s32 %s87, %s99
      %p179 = scmp.eq.s32.totalorder %s178, 0
      %s181 = sadd.s32 %s180, 1
      %s182 = scalar_select %p179, %s180, %s181
      %p185 = pneg %p179
      %p186 = scmp.eq.s32.totalorder %s80, 3
      %p187 = por %p185, %p186
      %p188 = scmp.ne.s32.totalorder %s180, %s183
      %p189 = scmp.eq.s32.totalorder %s80, 0
      %p190 = por %p188, %p189
      %p191 = scmp.ne.s32.totalorder %s180, %s183
      %p192 = scmp.eq.s32.totalorder %s85, 3
      %p193 = por %p191, %p192
      %p194 = scmp.ne.s32.totalorder %s183, %s184
      %p195 = scmp.eq.s32.totalorder %s85, 0
      %p196 = por %p194, %p195
      %p197 = scmp.ne.s32.totalorder %s183, %s184
      %p198 = scmp.eq.s32.totalorder %s86, 3
      %p199 = por %p197, %p198
      %p201 = scmp.ne.s32.totalorder %s184, %s200
      %p202 = scmp.eq.s32.totalorder %s86, 0
      %p203 = por %p201, %p202
      %s204 = ssub.s32 %s88, %s95
      %p205 = scmp.eq.s32.totalorder %s204, 0
      %s207 = sadd.s32 %s206, 1
      %s208 = scalar_select %p205, %s206, %s207
      %p211 = pneg %p205
      %p212 = scmp.eq.s32.totalorder %s80, 3
      %p213 = por %p211, %p212
      %p214 = scmp.ne.s32.totalorder %s206, %s209
      %p215 = scmp.eq.s32.totalorder %s80, 0
      %p216 = por %p214, %p215
      %p217 = scmp.ne.s32.totalorder %s206, %s209
      %p218 = scmp.eq.s32.totalorder %s85, 3
      %p219 = por %p217, %p218
      %p220 = scmp.ne.s32.totalorder %s209, %s210
      %p221 = scmp.eq.s32.totalorder %s85, 0
      %p222 = por %p220, %p221
      %p223 = scmp.ne.s32.totalorder %s209, %s210
      %p224 = scmp.eq.s32.totalorder %s86, 3
      %p225 = por %p223, %p224
      %p227 = scmp.ne.s32.totalorder %s210, %s226
      %p228 = scmp.eq.s32.totalorder %s86, 0
      %p229 = por %p227, %p228
      %s230 = ssub.s32 %s88, %s95
      %p231 = scmp.eq.s32.totalorder %s230, 0
      %s233 = sadd.s32 %s232, 1
      %s234 = scalar_select %p231, %s232, %s233
      %p237 = pneg %p231
      %p238 = scmp.eq.s32.totalorder %s80, 3
      %p239 = por %p237, %p238
      %p240 = scmp.ne.s32.totalorder %s232, %s235
      %p241 = scmp.eq.s32.totalorder %s80, 0
      %p242 = por %p240, %p241
      %p243 = scmp.ne.s32.totalorder %s232, %s235
      %p244 = scmp.eq.s32.totalorder %s85, 3
      %p245 = por %p243, %p244
      %p246 = scmp.ne.s32.totalorder %s235, %s236
      %p247 = scmp.eq.s32.totalorder %s85, 0
      %p248 = por %p246, %p247
      %p249 = scmp.ne.s32.totalorder %s235, %s236
      %p250 = scmp.eq.s32.totalorder %s86, 3
      %p251 = por %p249, %p250
      %p253 = scmp.ne.s32.totalorder %s236, %s252
      %p254 = scmp.eq.s32.totalorder %s86, 0
      %p255 = por %p253, %p254
      %s256 = ssub.s32 %s88, %s95
      %p257 = scmp.eq.s32.totalorder %s256, 0
      %s259 = sadd.s32 %s258, 1
      %s260 = scalar_select %p257, %s258, %s259
      %p263 = pneg %p257
      %p264 = scmp.eq.s32.totalorder %s80, 3
      %p265 = por %p263, %p264
      %p266 = scmp.ne.s32.totalorder %s258, %s261
      %p267 = scmp.eq.s32.totalorder %s80, 0
      %p268 = por %p266, %p267
      %p269 = scmp.ne.s32.totalorder %s258, %s261
      %p270 = scmp.eq.s32.totalorder %s85, 3
      %p271 = por %p269, %p270
      %p272 = scmp.ne.s32.totalorder %s261, %s262
      %p273 = scmp.eq.s32.totalorder %s85, 0
      %p274 = por %p272, %p273
      %p275 = scmp.ne.s32.totalorder %s261, %s262
      %p276 = scmp.eq.s32.totalorder %s86, 3
      %p277 = por %p275, %p276
      %p279 = scmp.ne.s32.totalorder %s262, %s278
      %p280 = scmp.eq.s32.totalorder %s86, 0
      %p281 = por %p279, %p280
      %s282 = ssub.s32 %s88, %s95
      %p283 = scmp.eq.s32.totalorder %s282, 0
      %s285 = sadd.s32 %s284, 1
      %s286 = scalar_select %p283, %s284, %s285
      %p289 = pneg %p283
      %p290 = scmp.eq.s32.totalorder %s80, 3
      %p291 = por %p289, %p290
      %p292 = scmp.ne.s32.totalorder %s284, %s287
      %p293 = scmp.eq.s32.totalorder %s80, 0
      %p294 = por %p292, %p293
      %p295 = scmp.ne.s32.totalorder %s284, %s287
      %p296 = scmp.eq.s32.totalorder %s85, 3
      %p297 = por %p295, %p296
      %p298 = scmp.ne.s32.totalorder %s287, %s288
      %p299 = scmp.eq.s32.totalorder %s85, 0
      %p300 = por %p298, %p299
      %p301 = scmp.ne.s32.totalorder %s287, %s288
      %p302 = scmp.eq.s32.totalorder %s86, 3
      %p303 = por %p301, %p302
      %p305 = scmp.ne.s32.totalorder %s288, %s304
      %p306 = scmp.eq.s32.totalorder %s86, 0
      %p307 = por %p305, %p306
      %s308 = ssub.s32 %s88, %s95
      %p309 = scmp.eq.s32.totalorder %s308, 0
      %s311 = sadd.s32 %s310, 1
      %s312 = scalar_select %p309, %s310, %s311
      %p315 = pneg %p309
      %p316 = scmp.eq.s32.totalorder %s80, 3
      %p317 = por %p315, %p316
      %p318 = scmp.ne.s32.totalorder %s310, %s313
      %p319 = scmp.eq.s32.totalorder %s80, 0
      %p320 = por %p318, %p319
      %p321 = scmp.ne.s32.totalorder %s310, %s313
      %p322 = scmp.eq.s32.totalorder %s85, 3
      %p323 = por %p321, %p322
      %p324 = scmp.ne.s32.totalorder %s313, %s314
      %p325 = scmp.eq.s32.totalorder %s85, 0
      %p326 = por %p324, %p325
      %p327 = scmp.ne.s32.totalorder %s313, %s314
      %p328 = scmp.eq.s32.totalorder %s86, 3
      %p329 = por %p327, %p328
      %p331 = scmp.ne.s32.totalorder %s314, %s330
      %p332 = scmp.eq.s32.totalorder %s86, 0
      %p333 = por %p331, %p332
      %s334 = ssub.s32 %s88, %s95
      %p335 = scmp.eq.s32.totalorder %s334, 0
      %s337 = sadd.s32 %s336, 1
      %s338 = scalar_select %p335, %s336, %s337
      %p341 = pneg %p335
      %p342 = scmp.eq.s32.totalorder %s80, 3
      %p343 = por %p341, %p342
      %p344 = scmp.ne.s32.totalorder %s336, %s339
      %p345 = scmp.eq.s32.totalorder %s80, 0
      %p346 = por %p344, %p345
      %p347 = scmp.ne.s32.totalorder %s336, %s339
      %p348 = scmp.eq.s32.totalorder %s85, 3
      %p349 = por %p347, %p348
      %p350 = scmp.ne.s32.totalorder %s339, %s340
      %p351 = scmp.eq.s32.totalorder %s85, 0
      %p352 = por %p350, %p351
      %p353 = scmp.ne.s32.totalorder %s339, %s340
      %p354 = scmp.eq.s32.totalorder %s86, 3
      %p355 = por %p353, %p354
      %p357 = scmp.ne.s32.totalorder %s340, %s356
      %p358 = scmp.eq.s32.totalorder %s86, 0
      %p359 = por %p357, %p358
      %s360 = ssub.s32 %s88, %s95
      %p361 = scmp.eq.s32.totalorder %s360, 0
      %s363 = sadd.s32 %s362, 1
      %s364 = scalar_select %p361, %s362, %s363
      %p367 = pneg %p361
      %p368 = scmp.eq.s32.totalorder %s80, 3
      %p369 = por %p367, %p368
      %p370 = scmp.ne.s32.totalorder %s362, %s365
      %p371 = scmp.eq.s32.totalorder %s80, 0
      %p372 = por %p370, %p371
      %p373 = scmp.ne.s32.totalorder %s362, %s365
      %p374 = scmp.eq.s32.totalorder %s85, 3
      %p375 = por %p373, %p374
      %p376 = scmp.ne.s32.totalorder %s365, %s366
      %p377 = scmp.eq.s32.totalorder %s85, 0
      %p378 = por %p376, %p377
      %p379 = scmp.ne.s32.totalorder %s365, %s366
      %p380 = scmp.eq.s32.totalorder %s86, 3
      %p381 = por %p379, %p380
      %p383 = scmp.ne.s32.totalorder %s366, %s382
      %p384 = scmp.eq.s32.totalorder %s86, 0
      %p385 = por %p383, %p384
      %s386 = ssub.s32 %s88, %s95
      %p387 = scmp.eq.s32.totalorder %s386, 0
      %s389 = sadd.s32 %s388, 1
      %s390 = scalar_select %p387, %s388, %s389
      %p393 = pneg %p387
      %p394 = scmp.eq.s32.totalorder %s80, 3
      %p395 = por %p393, %p394
      %p396 = scmp.ne.s32.totalorder %s388, %s391
      %p397 = scmp.eq.s32.totalorder %s80, 0
      %p398 = por %p396, %p397
      %p399 = scmp.ne.s32.totalorder %s388, %s391
      %p400 = scmp.eq.s32.totalorder %s85, 3
      %p401 = por %p399, %p400
      %p402 = scmp.ne.s32.totalorder %s391, %s392
      %p403 = scmp.eq.s32.totalorder %s85, 0
      %p404 = por %p402, %p403
      %p405 = scmp.ne.s32.totalorder %s391, %s392
      %p406 = scmp.eq.s32.totalorder %s86, 3
      %p407 = por %p405, %p406
      %p409 = scmp.ne.s32.totalorder %s392, %s408
      %p410 = scmp.eq.s32.totalorder %s86, 0
      %p411 = por %p409, %p410
      %s412 = ssub.s32 %s88, %s95
      %p413 = scmp.eq.s32.totalorder %s412, 0
      %s415 = sadd.s32 %s414, 1
      %s416 = scalar_select %p413, %s414, %s415
      %p419 = pneg %p413
      %p420 = scmp.eq.s32.totalorder %s80, 3
      %p421 = por %p419, %p420
      %p422 = scmp.ne.s32.totalorder %s414, %s417
      %p423 = scmp.eq.s32.totalorder %s80, 0
      %p424 = por %p422, %p423
      %p425 = scmp.ne.s32.totalorder %s414, %s417
      %p426 = scmp.eq.s32.totalorder %s85, 3
      %p427 = por %p425, %p426
      %p428 = scmp.ne.s32.totalorder %s417, %s418
      %p429 = scmp.eq.s32.totalorder %s85, 0
      %p430 = por %p428, %p429
      %p431 = scmp.ne.s32.totalorder %s417, %s418
      %p432 = scmp.eq.s32.totalorder %s86, 3
      %p433 = por %p431, %p432
      %p435 = scmp.ne.s32.totalorder %s418, %s434
      %p436 = scmp.eq.s32.totalorder %s86, 0
      %p437 = por %p435, %p436
      %s438 = ssub.s32 %s88, %s95
      %p439 = scmp.eq.s32.totalorder %s438, 0
      %s441 = sadd.s32 %s440, 1
      %s442 = scalar_select %p439, %s440, %s441
      %p445 = pneg %p439
      %p446 = scmp.eq.s32.totalorder %s80, 3
      %p447 = por %p445, %p446
      %p448 = scmp.ne.s32.totalorder %s440, %s443
      %p449 = scmp.eq.s32.totalorder %s80, 0
      %p450 = por %p448, %p449
      %p451 = scmp.ne.s32.totalorder %s440, %s443
      %p452 = scmp.eq.s32.totalorder %s85, 3
      %p453 = por %p451, %p452
      %p454 = scmp.ne.s32.totalorder %s443, %s444
      %p455 = scmp.eq.s32.totalorder %s85, 0
      %p456 = por %p454, %p455
      %p457 = scmp.ne.s32.totalorder %s443, %s444
      %p458 = scmp.eq.s32.totalorder %s86, 3
      %p459 = por %p457, %p458
      %p461 = scmp.ne.s32.totalorder %s444, %s460
      %p462 = scmp.eq.s32.totalorder %s86, 0
      %p463 = por %p461, %p462
      %s464 = ssub.s32 %s88, %s95
      %p465 = scmp.eq.s32.totalorder %s464, 0
      %s467 = sadd.s32 %s466, 1
      %s468 = scalar_select %p465, %s466, %s467
      %p471 = pneg %p465
      %p472 = scmp.eq.s32.totalorder %s80, 3
      %p473 = por %p471, %p472
      %p474 = scmp.ne.s32.totalorder %s466, %s469
      %p475 = scmp.eq.s32.totalorder %s80, 0
      %p476 = por %p474, %p475
      %p477 = scmp.ne.s32.totalorder %s466, %s469
      %p478 = scmp.eq.s32.totalorder %s85, 3
      %p479 = por %p477, %p478
      %p480 = scmp.ne.s32.totalorder %s469, %s470
      %p481 = scmp.eq.s32.totalorder %s85, 0
      %p482 = por %p480, %p481
      %p483 = scmp.ne.s32.totalorder %s469, %s470
      %p484 = scmp.eq.s32.totalorder %s86, 3
      %p485 = por %p483, %p484
      %p487 = scmp.ne.s32.totalorder %s470, %s486
      %p488 = scmp.eq.s32.totalorder %s86, 0
      %p489 = por %p487, %p488
      %s490 = ssub.s32 %s88, %s95
      %p491 = scmp.eq.s32.totalorder %s490, 0
      %s493 = sadd.s32 %s492, 1
      %s494 = scalar_select %p491, %s492, %s493
      %p497 = pneg %p491
      %p498 = scmp.eq.s32.totalorder %s80, 3
      %p499 = por %p497, %p498
      %p500 = scmp.ne.s32.totalorder %s492, %s495
      %p501 = scmp.eq.s32.totalorder %s80, 0
      %p502 = por %p500, %p501
      %p503 = scmp.ne.s32.totalorder %s492, %s495
      %p504 = scmp.eq.s32.totalorder %s85, 3
      %p505 = por %p503, %p504
      %p506 = scmp.ne.s32.totalorder %s495, %s496
      %p507 = scmp.eq.s32.totalorder %s85, 0
      %p508 = por %p506, %p507
      %p509 = scmp.ne.s32.totalorder %s495, %s496
      %p510 = scmp.eq.s32.totalorder %s86, 3
      %p511 = por %p509, %p510
      %p513 = scmp.ne.s32.totalorder %s496, %s512
      %p514 = scmp.eq.s32.totalorder %s86, 0
      %p515 = por %p513, %p514
      %s516 = ssub.s32 %s88, %s95
      %p517 = scmp.eq.s32.totalorder %s516, 0
      %s519 = sadd.s32 %s518, 1
      %s520 = scalar_select %p517, %s518, %s519
      %p523 = pneg %p517
      %p524 = scmp.eq.s32.totalorder %s80, 3
      %p525 = por %p523, %p524
      %p526 = scmp.ne.s32.totalorder %s518, %s521
      %p527 = scmp.eq.s32.totalorder %s80, 0
      %p528 = por %p526, %p527
      %p529 = scmp.ne.s32.totalorder %s518, %s521
      %p530 = scmp.eq.s32.totalorder %s85, 3
      %p531 = por %p529, %p530
      %p532 = scmp.ne.s32.totalorder %s521, %s522
      %p533 = scmp.eq.s32.totalorder %s85, 0
      %p534 = por %p532, %p533
      %p535 = scmp.ne.s32.totalorder %s521, %s522
      %p536 = scmp.eq.s32.totalorder %s86, 3
      %p537 = por %p535, %p536
      %p539 = scmp.ne.s32.totalorder %s522, %s538
      %p540 = scmp.eq.s32.totalorder %s86, 0
      %p541 = por %p539, %p540
      %s542 = ssub.s32 %s88, %s95
      %p543 = scmp.eq.s32.totalorder %s542, 0
      %s545 = sadd.s32 %s544, 1
      %s546 = scalar_select %p543, %s544, %s545
      %p549 = pneg %p543
      %p550 = scmp.eq.s32.totalorder %s80, 3
      %p551 = por %p549, %p550
      %p552 = scmp.ne.s32.totalorder %s544, %s547
      %p553 = scmp.eq.s32.totalorder %s80, 0
      %p554 = por %p552, %p553
      %p555 = scmp.ne.s32.totalorder %s544, %s547
      %p556 = scmp.eq.s32.totalorder %s85, 3
      %p557 = por %p555, %p556
      %p558 = scmp.ne.s32.totalorder %s547, %s548
      %p559 = scmp.eq.s32.totalorder %s85, 0
      %p560 = por %p558, %p559
      %p561 = scmp.ne.s32.totalorder %s547, %s548
      %p562 = scmp.eq.s32.totalorder %s86, 3
      %p563 = por %p561, %p562
      %p565 = scmp.ne.s32.totalorder %s548, %s564
      %p566 = scmp.eq.s32.totalorder %s86, 0
      %p567 = por %p565, %p566
      %s568 = ssub.s32 %s88, %s95
      %p569 = scmp.eq.s32.totalorder %s568, 0
      %s571 = sadd.s32 %s570, 1
      %s572 = scalar_select %p569, %s570, %s571
      %p575 = pneg %p569
      %p576 = scmp.eq.s32.totalorder %s80, 3
      %p577 = por %p575, %p576
      %p578 = scmp.ne.s32.totalorder %s570, %s573
      %p579 = scmp.eq.s32.totalorder %s80, 0
      %p580 = por %p578, %p579
      %p581 = scmp.ne.s32.totalorder %s570, %s573
      %p582 = scmp.eq.s32.totalorder %s85, 3
      %p583 = por %p581, %p582
      %p584 = scmp.ne.s32.totalorder %s573, %s574
      %p585 = scmp.eq.s32.totalorder %s85, 0
      %p586 = por %p584, %p585
      %p587 = scmp.ne.s32.totalorder %s573, %s574
      %p588 = scmp.eq.s32.totalorder %s86, 3
      %p589 = por %p587, %p588
      %p591 = scmp.ne.s32.totalorder %s574, %s590
      %p592 = scmp.eq.s32.totalorder %s86, 0
      %p593 = por %p591, %p592
      %s594 = ssub.s32 %s88, %s95
      %p595 = scmp.eq.s32.totalorder %s594, 0
      %s597 = sadd.s32 %s596, 1
      %s598 = scalar_select %p595, %s596, %s597
      %p601 = pneg %p595
      %p602 = scmp.eq.s32.totalorder %s80, 3
      %p603 = por %p601, %p602
      %p604 = scmp.ne.s32.totalorder %s596, %s599
      %p605 = scmp.eq.s32.totalorder %s80, 0
      %p606 = por %p604, %p605
      %p607 = scmp.ne.s32.totalorder %s596, %s599
      %p608 = scmp.eq.s32.totalorder %s85, 3
      %p609 = por %p607, %p608
      %p610 = scmp.ne.s32.totalorder %s599, %s600
      %p611 = scmp.eq.s32.totalorder %s85, 0
      %p612 = por %p610, %p611
      %p613 = scmp.ne.s32.totalorder %s599, %s600
      %p614 = scmp.eq.s32.totalorder %s86, 3
      %p615 = por %p613, %p614
      %p617 = scmp.ne.s32.totalorder %s600, %s616
      %p618 = scmp.eq.s32.totalorder %s86, 0
      %p619 = por %p617, %p618
      %s620 = ssub.s32 %s88, %s95
      %p621 = scmp.eq.s32.totalorder %s620, 0
      %s623 = sadd.s32 %s622, 1
      %s624 = scalar_select %p621, %s622, %s623
      %p627 = pneg %p621
      %p628 = scmp.eq.s32.totalorder %s80, 3
      %p629 = por %p627, %p628
      %p630 = scmp.ne.s32.totalorder %s622, %s625
      %p631 = scmp.eq.s32.totalorder %s80, 0
      %p632 = por %p630, %p631
      %p633 = scmp.ne.s32.totalorder %s622, %s625
      %p634 = scmp.eq.s32.totalorder %s85, 3
      %p635 = por %p633, %p634
      %p636 = scmp.ne.s32.totalorder %s625, %s626
      %p637 = scmp.eq.s32.totalorder %s85, 0
      %p638 = por %p636, %p637
      %p639 = scmp.ne.s32.totalorder %s625, %s626
      %p640 = scmp.eq.s32.totalorder %s86, 3
      %p641 = por %p639, %p640
      %p643 = scmp.ne.s32.totalorder %s626, %s642
      %p644 = scmp.eq.s32.totalorder %s86, 0
      %p645 = por %p643, %p644
      %s646 = ssub.s32 %s88, %s95
      %p647 = scmp.eq.s32.totalorder %s646, 0
      %s649 = sadd.s32 %s648, 1
      %s650 = scalar_select %p647, %s648, %s649
      %p653 = pneg %p647
      %p654 = scmp.eq.s32.totalorder %s80, 3
      %p655 = por %p653, %p654
      %p656 = scmp.ne.s32.totalorder %s648, %s651
      %p657 = scmp.eq.s32.totalorder %s80, 0
      %p658 = por %p656, %p657
      %p659 = scmp.ne.s32.totalorder %s648, %s651
      %p660 = scmp.eq.s32.totalorder %s85, 3
      %p661 = por %p659, %p660
      %p662 = scmp.ne.s32.totalorder %s651, %s652
      %p663 = scmp.eq.s32.totalorder %s85, 0
      %p664 = por %p662, %p663
      %p665 = scmp.ne.s32.totalorder %s651, %s652
      %p666 = scmp.eq.s32.totalorder %s86, 3
      %p667 = por %p665, %p666
      %p669 = scmp.ne.s32.totalorder %s652, %s668
      %p670 = scmp.eq.s32.totalorder %s86, 0
      %p671 = por %p669, %p670
      %s672 = ssub.s32 %s88, %s95
      %p673 = scmp.eq.s32.totalorder %s672, 0
      %s675 = sadd.s32 %s674, 1
      %s676 = scalar_select %p673, %s674, %s675
      %p679 = pneg %p673
      %p680 = scmp.eq.s32.totalorder %s80, 3
      %p681 = por %p679, %p680
      %p682 = scmp.ne.s32.totalorder %s674, %s677
      %p683 = scmp.eq.s32.totalorder %s80, 0
      %p684 = por %p682, %p683
      %p685 = scmp.ne.s32.totalorder %s674, %s677
      %p686 = scmp.eq.s32.totalorder %s85, 3
      %p687 = por %p685, %p686
      %p688 = scmp.ne.s32.totalorder %s677, %s678
      %p689 = scmp.eq.s32.totalorder %s85, 0
      %p690 = por %p688, %p689
      %p691 = scmp.ne.s32.totalorder %s677, %s678
      %p692 = scmp.eq.s32.totalorder %s86, 3
      %p693 = por %p691, %p692
      %p695 = scmp.ne.s32.totalorder %s678, %s694
      %p696 = scmp.eq.s32.totalorder %s86, 0
      %p697 = por %p695, %p696
      %s698 = ssub.s32 %s88, %s95
      %p699 = scmp.eq.s32.totalorder %s698, 0
      %s701 = sadd.s32 %s700, 1
      %s702 = scalar_select %p699, %s700, %s701
      %p705 = pneg %p699
      %p706 = scmp.eq.s32.totalorder %s80, 3
      %p707 = por %p705, %p706
      %p708 = scmp.ne.s32.totalorder %s700, %s703
      %p709 = scmp.eq.s32.totalorder %s80, 0
      %p710 = por %p708, %p709
      %p711 = scmp.ne.s32.totalorder %s700, %s703
      %p712 = scmp.eq.s32.totalorder %s85, 3
      %p713 = por %p711, %p712
      %p714 = scmp.ne.s32.totalorder %s703, %s704
      %p715 = scmp.eq.s32.totalorder %s85, 0
      %p716 = por %p714, %p715
      %p717 = scmp.ne.s32.totalorder %s703, %s704
      %p718 = scmp.eq.s32.totalorder %s86, 3
      %p719 = por %p717, %p718
      %p721 = scmp.ne.s32.totalorder %s704, %s720
      %p722 = scmp.eq.s32.totalorder %s86, 0
      %p723 = por %p721, %p722
      %s724 = ssub.s32 %s88, %s95
      %p725 = scmp.eq.s32.totalorder %s724, 0
      %s727 = sadd.s32 %s726, 1
      %s728 = scalar_select %p725, %s726, %s727
      %p731 = pneg %p725
      %p732 = scmp.eq.s32.totalorder %s80, 3
      %p733 = por %p731, %p732
      %p734 = scmp.ne.s32.totalorder %s726, %s729
      %p735 = scmp.eq.s32.totalorder %s80, 0
      %p736 = por %p734, %p735
      %p737 = scmp.ne.s32.totalorder %s726, %s729
      %p738 = scmp.eq.s32.totalorder %s85, 3
      %p739 = por %p737, %p738
      %p740 = scmp.ne.s32.totalorder %s729, %s730
      %p741 = scmp.eq.s32.totalorder %s85, 0
      %p742 = por %p740, %p741
      %p743 = scmp.ne.s32.totalorder %s729, %s730
      %p744 = scmp.eq.s32.totalorder %s86, 3
      %p745 = por %p743, %p744
      %p747 = scmp.ne.s32.totalorder %s730, %s746
      %p748 = scmp.eq.s32.totalorder %s86, 0
      %p749 = por %p747, %p748
      %s750 = ssub.s32 %s88, %s95
      %p751 = scmp.eq.s32.totalorder %s750, 0
      %s753 = sadd.s32 %s752, 1
      %s754 = scalar_select %p751, %s752, %s753
      %p757 = pneg %p751
      %p758 = scmp.eq.s32.totalorder %s80, 3
      %p759 = por %p757, %p758
      %p760 = scmp.ne.s32.totalorder %s752, %s755
      %p761 = scmp.eq.s32.totalorder %s80, 0
      %p762 = por %p760, %p761
      %p763 = scmp.ne.s32.totalorder %s752, %s755
      %p764 = scmp.eq.s32.totalorder %s85, 3
      %p765 = por %p763, %p764
      %p766 = scmp.ne.s32.totalorder %s755, %s756
      %p767 = scmp.eq.s32.totalorder %s85, 0
      %p768 = por %p766, %p767
      %p769 = scmp.ne.s32.totalorder %s755, %s756
      %p770 = scmp.eq.s32.totalorder %s86, 3
      %p771 = por %p769, %p770
      %p773 = scmp.ne.s32.totalorder %s756, %s772
      %p774 = scmp.eq.s32.totalorder %s86, 0
      %p775 = por %p773, %p774
      %s776 = ssub.s32 %s88, %s95
      %p777 = scmp.eq.s32.totalorder %s776, 0
      %s779 = sadd.s32 %s778, 1
      %s780 = scalar_select %p777, %s778, %s779
      %p783 = pneg %p777
      %p784 = scmp.eq.s32.totalorder %s80, 3
      %p785 = por %p783, %p784
      %p786 = scmp.ne.s32.totalorder %s778, %s781
      %p787 = scmp.eq.s32.totalorder %s80, 0
      %p788 = por %p786, %p787
      %p789 = scmp.ne.s32.totalorder %s778, %s781
      %p790 = scmp.eq.s32.totalorder %s85, 3
      %p791 = por %p789, %p790
      %p792 = scmp.ne.s32.totalorder %s781, %s782
      %p793 = scmp.eq.s32.totalorder %s85, 0
      %p794 = por %p792, %p793
      %p795 = scmp.ne.s32.totalorder %s781, %s782
      %p796 = scmp.eq.s32.totalorder %s86, 3
      %p797 = por %p795, %p796
      %p799 = scmp.ne.s32.totalorder %s782, %s798
      %p800 = scmp.eq.s32.totalorder %s86, 0
      %p801 = por %p799, %p800
      %s802 = ssub.s32 %s88, %s95
      %p803 = scmp.eq.s32.totalorder %s802, 0
      %s805 = sadd.s32 %s804, 1
      %s806 = scalar_select %p803, %s804, %s805
      %p809 = pneg %p803
      %p810 = scmp.eq.s32.totalorder %s80, 3
      %p811 = por %p809, %p810
      %p812 = scmp.ne.s32.totalorder %s804, %s807
      %p813 = scmp.eq.s32.totalorder %s80, 0
      %p814 = por %p812, %p813
      %p815 = scmp.ne.s32.totalorder %s804, %s807
      %p816 = scmp.eq.s32.totalorder %s85, 3
      %p817 = por %p815, %p816
      %p818 = scmp.ne.s32.totalorder %s807, %s808
      %p819 = scmp.eq.s32.totalorder %s85, 0
      %p820 = por %p818, %p819
      %p821 = scmp.ne.s32.totalorder %s807, %s808
      %p822 = scmp.eq.s32.totalorder %s86, 3
      %p823 = por %p821, %p822
      %p825 = scmp.ne.s32.totalorder %s808, %s824
      %p826 = scmp.eq.s32.totalorder %s86, 0
      %p827 = por %p825, %p826
      %s828 = ssub.s32 %s88, %s95
      %p829 = scmp.eq.s32.totalorder %s828, 0
      %s831 = sadd.s32 %s830, 1
      %s832 = scalar_select %p829, %s830, %s831
      %p835 = pneg %p829
      %p836 = scmp.eq.s32.totalorder %s80, 3
      %p837 = por %p835, %p836
      %p838 = scmp.ne.s32.totalorder %s830, %s833
      %p839 = scmp.eq.s32.totalorder %s80, 0
      %p840 = por %p838, %p839
      %p841 = scmp.ne.s32.totalorder %s830, %s833
      %p842 = scmp.eq.s32.totalorder %s85, 3
      %p843 = por %p841, %p842
      %p844 = scmp.ne.s32.totalorder %s833, %s834
      %p845 = scmp.eq.s32.totalorder %s85, 0
      %p846 = por %p844, %p845
      %p847 = scmp.ne.s32.totalorder %s833, %s834
      %p848 = scmp.eq.s32.totalorder %s86, 3
      %p849 = por %p847, %p848
      %p851 = scmp.ne.s32.totalorder %s834, %s850
      %p852 = scmp.eq.s32.totalorder %s86, 0
      %p853 = por %p851, %p852
      %s854 = ssub.s32 %s88, %s95
      %p855 = scmp.eq.s32.totalorder %s854, 0
      %s857 = sadd.s32 %s856, 1
      %s858 = scalar_select %p855, %s856, %s857
      %p861 = pneg %p855
      %p862 = scmp.eq.s32.totalorder %s80, 3
      %p863 = por %p861, %p862
      %p864 = scmp.ne.s32.totalorder %s856, %s859
      %p865 = scmp.eq.s32.totalorder %s80, 0
      %p866 = por %p864, %p865
      %p867 = scmp.ne.s32.totalorder %s856, %s859
      %p868 = scmp.eq.s32.totalorder %s85, 3
      %p869 = por %p867, %p868
      %p870 = scmp.ne.s32.totalorder %s859, %s860
      %p871 = scmp.eq.s32.totalorder %s85, 0
      %p872 = por %p870, %p871
      %p873 = scmp.ne.s32.totalorder %s859, %s860
      %p874 = scmp.eq.s32.totalorder %s86, 3
      %p875 = por %p873, %p874
      %p877 = scmp.ne.s32.totalorder %s860, %s876
      %p878 = scmp.eq.s32.totalorder %s86, 0
      %p879 = por %p877, %p878
      %s881 = sadd.s32 %s880, 1
      %p884 = scmp.eq.s32.totalorder %s80, 3
      %p885 = scmp.ne.s32.totalorder %s880, %s882
      %p886 = scmp.eq.s32.totalorder %s80, 0
      %p887 = por %p885, %p886
      %p888 = scmp.ne.s32.totalorder %s880, %s882
      %p889 = scmp.eq.s32.totalorder %s85, 3
      %p890 = por %p888, %p889
      %p891 = scmp.ne.s32.totalorder %s882, %s883
      %p892 = scmp.eq.s32.totalorder %s85, 0
      %p893 = por %p891, %p892
      %p894 = scmp.ne.s32.totalorder %s882, %s883
      %p895 = scmp.eq.s32.totalorder %s86, 3
      %p896 = por %p894, %p895
      %p898 = scmp.ne.s32.totalorder %s883, %s897
      %p899 = scmp.eq.s32.totalorder %s86, 0
      %p900 = por %p898, %p899
      %s902 = sadd.s32 %s901, 1
      %p905 = scmp.eq.s32.totalorder %s80, 3
      %p906 = scmp.ne.s32.totalorder %s901, %s903
      %p907 = scmp.eq.s32.totalorder %s80, 0
      %p908 = por %p906, %p907
      %p909 = scmp.ne.s32.totalorder %s901, %s903
      %p910 = scmp.eq.s32.totalorder %s85, 3
      %p911 = por %p909, %p910
      %p912 = scmp.ne.s32.totalorder %s903, %s904
      %p913 = scmp.eq.s32.totalorder %s85, 0
      %p914 = por %p912, %p913
      %p915 = scmp.ne.s32.totalorder %s903, %s904
      %p916 = scmp.eq.s32.totalorder %s86, 3
      %p917 = por %p915, %p916
      %p919 = scmp.ne.s32.totalorder %s904, %s918
      %p920 = scmp.eq.s32.totalorder %s86, 0
      %p921 = por %p919, %p920
      %s922 = ssub.s32 %s87, %s99
      %p923 = scmp.eq.s32.totalorder %s922, 0
      %s925 = sadd.s32 %s924, 1
      %s926 = scalar_select %p923, %s924, %s925
      %p929 = pneg %p923
      %p930 = scmp.eq.s32.totalorder %s80, 3
      %p931 = por %p929, %p930
      %p932 = scmp.ne.s32.totalorder %s924, %s927
      %p933 = scmp.eq.s32.totalorder %s80, 0
      %p934 = por %p932, %p933
      %p935 = scmp.ne.s32.totalorder %s924, %s927
      %p936 = scmp.eq.s32.totalorder %s85, 3
      %p937 = por %p935, %p936
      %p938 = scmp.ne.s32.totalorder %s927, %s928
      %p939 = scmp.eq.s32.totalorder %s85, 0
      %p940 = por %p938, %p939
      %p941 = scmp.ne.s32.totalorder %s927, %s928
      %p942 = scmp.eq.s32.totalorder %s86, 3
      %p943 = por %p941, %p942
      %p945 = scmp.ne.s32.totalorder %s928, %s944
      %p946 = scmp.eq.s32.totalorder %s86, 0
      %p947 = por %p945, %p946
      %p948 = scmp.le.s32.totalorder 1, %s80
      %p949 = scmp.lt.s32.totalorder %s80, 5
      %p950 = pnand %p948, %p949
      %p951 = pneg %p950
      // Predicated region
      $region9: #{transformer_forward.3} parent=5 // pred_check
        _
      $region10: #{transformer_forward.3} parent=5 // pred_check_branch
        %953 = sbr.rel (%p950) target = $region12
      $region11: #{transformer_forward.3} parent=5 // pred_region
        %s954 = ssub.s32 %s80, 1
        // Predicated region
        $region13: #{transformer_forward.3} parent=11 // pred_check
          %p955 = pneg %p893
        $region14: #{transformer_forward.3} parent=11 // pred_check_branch
          %957 = sbr.rel (%p955) target = $region16
        $region15: #{transformer_forward.3} parent=11 // pred_region
          _
        $region16: #{transformer_forward.3} parent=11 // pred_fallthru
          _
        // Predicated region
        $region17: #{transformer_forward.3} parent=11 // pred_check
          %p958 = pneg %p914
        $region18: #{transformer_forward.3} parent=11 // pred_check_branch
          %960 = sbr.rel (%p958) target = $region20
        $region19: #{transformer_forward.3} parent=11 // pred_region
          _
        $region20: #{transformer_forward.3} parent=11 // pred_fallthru
          _
      $region12: #{transformer_forward.3} parent=5 // pred_fallthru
        _
      %p961 = scmp.lt.s32.totalorder %s80, 4
      // Predicated region
      $region21: #{transformer_forward.3} parent=5 // pred_check
        %p962 = pneg %p961
      $region22: #{transformer_forward.3} parent=5 // pred_check_branch
        %964 = sbr.rel (%p962) target = $region24
      $region23: #{transformer_forward.3} parent=5 // pred_region
        // Predicated region
        $region25: #{transformer_forward.3} parent=23 // pred_check
          %p965 = pneg %p112
        $region26: #{transformer_forward.3} parent=23 // pred_check_branch
          %967 = sbr.rel (%p965) target = $region28
        $region27: #{transformer_forward.3} parent=23 // pred_region
          %p968 = scmp.lt.s32.totalorder %s87, 1
          %s969 = scalar_select %p968, %s87, 1
          %s970 = scalar_lea.vmem %s1, %s969
        $region28: #{transformer_forward.3} parent=23 // pred_fallthru
          _
        // Predicated region
        $region29: #{transformer_forward.3} parent=23 // pred_check
          %p971 = pneg %p138
        $region30: #{transformer_forward.3} parent=23 // pred_check_branch
          %973 = sbr.rel (%p971) target = $region32
        $region31: #{transformer_forward.3} parent=23 // pred_region
          %p974 = scmp.lt.s32.totalorder %s87, 1
          %s975 = scalar_select %p974, %s87, 1
          %s976 = scalar_lea.vmem %s3, %s975
        $region32: #{transformer_forward.3} parent=23 // pred_fallthru
          _
        // Predicated region
        $region33: #{transformer_forward.3} parent=23 // pred_check
          %p977 = pneg %p164
        $region34: #{transformer_forward.3} parent=23 // pred_check_branch
          %979 = sbr.rel (%p977) target = $region36
        $region35: #{transformer_forward.3} parent=23 // pred_region
          %p980 = scmp.lt.s32.totalorder %s87, 1
          %s981 = scalar_select %p980, %s87, 1
          %s982 = smul.addr %s981, 8
          %s983 = scalar_lea.vmem %s5, %s982
        $region36: #{transformer_forward.3} parent=23 // pred_fallthru
          _
        // Predicated region
        $region37: #{transformer_forward.3} parent=23 // pred_check
          %p984 = pneg %p190
        $region38: #{transformer_forward.3} parent=23 // pred_check_branch
          %986 = sbr.rel (%p984) target = $region40
        $region39: #{transformer_forward.3} parent=23 // pred_region
          %p987 = scmp.lt.s32.totalorder %s87, 1
          %s988 = scalar_select %p987, %s87, 1
          %s989 = smul.addr %s988, 8
          %s990 = scalar_lea.vmem %s7, %s989
        $region40: #{transformer_forward.3} parent=23 // pred_fallthru
          _
        // Predicated region
        $region41: #{transformer_forward.3} parent=23 // pred_check
          %p991 = pneg %p216
        $region42: #{transformer_forward.3} parent=23 // pred_check_branch
          %993 = sbr.rel (%p991) target = $region44
        $region43: #{transformer_forward.3} parent=23 // pred_region
          %p994 = scmp.lt.s32.totalorder %s88, 1
          %s995 = scalar_select %p994, %s88, 1
          %s996 = smul.addr %s995, 4
          %s997 = smul.addr %s996, 4
          %s998 = scalar_lea.vmem %s9, %s997
        $region44: #{transformer_forward.3} parent=23 // pred_fallthru
          _
        // Predicated region
        $region45: #{transformer_forward.3} parent=23 // pred_check
          %p999 = pneg %p242
        $region46: #{transformer_forward.3} parent=23 // pred_check_branch
          %1001 = sbr.rel (%p999) target = $region48
        $region47: #{transformer_forward.3} parent=23 // pred_region
          %p1002 = scmp.lt.s32.totalorder %s88, 1
          %s1003 = scalar_select %p1002, %s88, 1
          %s1004 = scalar_lea.vmem %s11, %s1003
        $region48: #{transformer_forward.3} parent=23 // pred_fallthru
          _
        // Predicated region
        $region49: #{transformer_forward.3} parent=23 // pred_check
          %p1005 = pneg %p268
        $region50: #{transformer_forward.3} parent=23 // pred_check_branch
          %1007 = sbr.rel (%p1005) target = $region52
        $region51: #{transformer_forward.3} parent=23 // pred_region
          %p1008 = scmp.lt.s32.totalorder %s88, 1
          %s1009 = scalar_select %p1008, %s88, 1
          %s1010 = smul.addr %s1009, 4
          %s1011 = smul.addr %s1010, 4
          %s1012 = scalar_lea.vmem %s13, %s1011
        $region52: #{transformer_forward.3} parent=23 // pred_fallthru
          _
        // Predicated region
        $region53: #{transformer_forward.3} parent=23 // pred_check
          %p1013 = pneg %p294
        $region54: #{transformer_forward.3} parent=23 // pred_check_branch
          %1015 = sbr.rel (%p1013) target = $region56
        $region55: #{transformer_forward.3} parent=23 // pred_region
          %p1016 = scmp.lt.s32.totalorder %s88, 1
          %s1017 = scalar_select %p1016, %s88, 1
          %s1018 = scalar_lea.vmem %s15, %s1017
        $region56: #{transformer_forward.3} parent=23 // pred_fallthru
          _
        // Predicated region
        $region57: #{transformer_forward.3} parent=23 // pred_check
          %p1019 = pneg %p320
        $region58: #{transformer_forward.3} parent=23 // pred_check_branch
          %1021 = sbr.rel (%p1019) target = $region60
        $region59: #{transformer_forward.3} parent=23 // pred_region
          %p1022 = scmp.lt.s32.totalorder %s88, 1
          %s1023 = scalar_select %p1022, %s88, 1
          %s1024 = smul.addr %s1023, 4
          %s1025 = smul.addr %s1024, 4
          %s1026 = scalar_lea.vmem %s17, %s1025
        $region60: #{transformer_forward.3} parent=23 // pred_fallthru
          _
        // Predicated region
        $region61: #{transformer_forward.3} parent=23 // pred_check
          %p1027 = pneg %p346
        $region62: #{transformer_forward.3} parent=23 // pred_check_branch
          %1029 = sbr.rel (%p1027) target = $region64
        $region63: #{transformer_forward.3} parent=23 // pred_region
          %p1030 = scmp.lt.s32.totalorder %s88, 1
          %s1031 = scalar_select %p1030, %s88, 1
          %s1032 = scalar_lea.vmem %s19, %s1031
        $region64: #{transformer_forward.3} parent=23 // pred_fallthru
          _
        // Predicated region
        $region65: #{transformer_forward.3} parent=23 // pred_check
          %p1033 = pneg %p372
        $region66: #{transformer_forward.3} parent=23 // pred_check_branch
          %1035 = sbr.rel (%p1033) target = $region68
        $region67: #{transformer_forward.3} parent=23 // pred_region
          %p1036 = scmp.lt.s32.totalorder %s88, 1
          %s1037 = scalar_select %p1036, %s88, 1
          %s1038 = smul.addr %s1037, 4
          %s1039 = smul.addr %s1038, 4
          %s1040 = scalar_lea.vmem %s21, %s1039
        $region68: #{transformer_forward.3} parent=23 // pred_fallthru
          _
        // Predicated region
        $region69: #{transformer_forward.3} parent=23 // pred_check
          %p1041 = pneg %p398
        $region70: #{transformer_forward.3} parent=23 // pred_check_branch
          %1043 = sbr.rel (%p1041) target = $region72
        $region71: #{transformer_forward.3} parent=23 // pred_region
          %p1044 = scmp.lt.s32.totalorder %s88, 1
          %s1045 = scalar_select %p1044, %s88, 1
          %s1046 = scalar_lea.vmem %s23, %s1045
        $region72: #{transformer_forward.3} parent=23 // pred_fallthru
          _
        // Predicated region
        $region73: #{transformer_forward.3} parent=23 // pred_check
          %p1047 = pneg %p424
        $region74: #{transformer_forward.3} parent=23 // pred_check_branch
          %1049 = sbr.rel (%p1047) target = $region76
        $region75: #{transformer_forward.3} parent=23 // pred_region
          %p1050 = scmp.lt.s32.totalorder %s88, 1
          %s1051 = scalar_select %p1050, %s88, 1
          %s1052 = scalar_lea.vmem %s25, %s1051
        $region76: #{transformer_forward.3} parent=23 // pred_fallthru
          _
        // Predicated region
        $region77: #{transformer_forward.3} parent=23 // pred_check
          %p1053 = pneg %p450
        $region78: #{transformer_forward.3} parent=23 // pred_check_branch
          %1055 = sbr.rel (%p1053) target = $region80
        $region79: #{transformer_forward.3} parent=23 // pred_region
          %p1056 = scmp.lt.s32.totalorder %s88, 1
          %s1057 = scalar_select %p1056, %s88, 1
          %s1058 = scalar_lea.vmem %s27, %s1057
        $region80: #{transformer_forward.3} parent=23 // pred_fallthru
          _
        // Predicated region
        $region81: #{transformer_forward.3} parent=23 // pred_check
          %p1059 = pneg %p476
        $region82: #{transformer_forward.3} parent=23 // pred_check_branch
          %1061 = sbr.rel (%p1059) target = $region84
        $region83: #{transformer_forward.3} parent=23 // pred_region
          %p1062 = scmp.lt.s32.totalorder %s88, 1
          %s1063 = scalar_select %p1062, %s88, 1
          %s1064 = smul.addr %s1063, 4
          %s1065 = smul.addr %s1064, 4
          %s1066 = scalar_lea.vmem %s29, %s1065
        $region84: #{transformer_forward.3} parent=23 // pred_fallthru
          _
        // Predicated region
        $region85: #{transformer_forward.3} parent=23 // pred_check
          %p1067 = pneg %p502
        $region86: #{transformer_forward.3} parent=23 // pred_check_branch
          %1069 = sbr.rel (%p1067) target = $region88
        $region87: #{transformer_forward.3} parent=23 // pred_region
          %p1070 = scmp.lt.s32.totalorder %s88, 1
          %s1071 = scalar_select %p1070, %s88, 1
          %s1072 = scalar_lea.vmem %s31, %s1071
        $region88: #{transformer_forward.3} parent=23 // pred_fallthru
          _
        // Predicated region
        $region89: #{transformer_forward.3} parent=23 // pred_check
          %p1073 = pneg %p528
        $region90: #{transformer_forward.3} parent=23 // pred_check_branch
          %1075 = sbr.rel (%p1073) target = $region92
        $region91: #{transformer_forward.3} parent=23 // pred_region
          %p1076 = scmp.lt.s32.totalorder %s88, 1
          %s1077 = scalar_select %p1076, %s88, 1
          %s1078 = smul.addr %s1077, 4
          %s1079 = smul.addr %s1078, 4
          %s1080 = scalar_lea.vmem %s33, %s1079
        $region92: #{transformer_forward.3} parent=23 // pred_fallthru
          _
        // Predicated region
        $region93: #{transformer_forward.3} parent=23 // pred_check
          %p1081 = pneg %p554
        $region94: #{transformer_forward.3} parent=23 // pred_check_branch
          %1083 = sbr.rel (%p1081) target = $region96
        $region95: #{transformer_forward.3} parent=23 // pred_region
          %p1084 = scmp.lt.s32.totalorder %s88, 1
          %s1085 = scalar_select %p1084, %s88, 1
          %s1086 = scalar_lea.vmem %s35, %s1085
        $region96: #{transformer_forward.3} parent=23 // pred_fallthru
          _
        // Predicated region
        $region97: #{transformer_forward.3} parent=23 // pred_check
          %p1087 = pneg %p580
        $region98: #{transformer_forward.3} parent=23 // pred_check_branch
          %1089 = sbr.rel (%p1087) target = $region100
        $region99: #{transformer_forward.3} parent=23 // pred_region
          %p1090 = scmp.lt.s32.totalorder %s88, 1
          %s1091 = scalar_select %p1090, %s88, 1
          %s1092 = smul.addr %s1091, 4
          %s1093 = smul.addr %s1092, 4
          %s1094 = scalar_lea.vmem %s37, %s1093
        $region100: #{transformer_forward.3} parent=23 // pred_fallthru
          _
        // Predicated region
        $region101: #{transformer_forward.3} parent=23 // pred_check
          %p1095 = pneg %p606
        $region102: #{transformer_forward.3} parent=23 // pred_check_branch
          %1097 = sbr.rel (%p1095) target = $region104
        $region103: #{transformer_forward.3} parent=23 // pred_region
          %p1098 = scmp.lt.s32.totalorder %s88, 1
          %s1099 = scalar_select %p1098, %s88, 1
          %s1100 = scalar_lea.vmem %s39, %s1099
        $region104: #{transformer_forward.3} parent=23 // pred_fallthru
          _
        // Predicated region
        $region105: #{transformer_forward.3} parent=23 // pred_check
          %p1101 = pneg %p632
        $region106: #{transformer_forward.3} parent=23 // pred_check_branch
          %1103 = sbr.rel (%p1101) target = $region108
        $region107: #{transformer_forward.3} parent=23 // pred_region
          %p1104 = scmp.lt.s32.totalorder %s88, 1
          %s1105 = scalar_select %p1104, %s88, 1
          %s1106 = smul.addr %s1105, 4
          %s1107 = smul.addr %s1106, 4
          %s1108 = scalar_lea.vmem %s41, %s1107
        $region108: #{transformer_forward.3} parent=23 // pred_fallthru
          _
        // Predicated region
        $region109: #{transformer_forward.3} parent=23 // pred_check
          %p1109 = pneg %p658
        $region110: #{transformer_forward.3} parent=23 // pred_check_branch
          %1111 = sbr.rel (%p1109) target = $region112
        $region111: #{transformer_forward.3} parent=23 // pred_region
          %p1112 = scmp.lt.s32.totalorder %s88, 1
          %s1113 = scalar_select %p1112, %s88, 1
          %s1114 = scalar_lea.vmem %s43, %s1113
        $region112: #{transformer_forward.3} parent=23 // pred_fallthru
          _
        // Predicated region
        $region113: #{transformer_forward.3} parent=23 // pred_check
          %p1115 = pneg %p684
        $region114: #{transformer_forward.3} parent=23 // pred_check_branch
          %1117 = sbr.rel (%p1115) target = $region116
        $region115: #{transformer_forward.3} parent=23 // pred_region
          %p1118 = scmp.lt.s32.totalorder %s88, 1
          %s1119 = scalar_select %p1118, %s88, 1
          %s1120 = scalar_lea.vmem %s45, %s1119
        $region116: #{transformer_forward.3} parent=23 // pred_fallthru
          _
        // Predicated region
        $region117: #{transformer_forward.3} parent=23 // pred_check
          %p1121 = pneg %p710
        $region118: #{transformer_forward.3} parent=23 // pred_check_branch
          %1123 = sbr.rel (%p1121) target = $region120
        $region119: #{transformer_forward.3} parent=23 // pred_region
          %p1124 = scmp.lt.s32.totalorder %s88, 1
          %s1125 = scalar_select %p1124, %s88, 1
          %s1126 = scalar_lea.vmem %s47, %s1125
        $region120: #{transformer_forward.3} parent=23 // pred_fallthru
          _
        // Predicated region
        $region121: #{transformer_forward.3} parent=23 // pred_check
          %p1127 = pneg %p736
        $region122: #{transformer_forward.3} parent=23 // pred_check_branch
          %1129 = sbr.rel (%p1127) target = $region124
        $region123: #{transformer_forward.3} parent=23 // pred_region
          %p1130 = scmp.lt.s32.totalorder %s88, 1
          %s1131 = scalar_select %p1130, %s88, 1
          %s1132 = smul.addr %s1131, 4
          %s1133 = smul.addr %s1132, 4
          %s1134 = scalar_lea.vmem %s49, %s1133
        $region124: #{transformer_forward.3} parent=23 // pred_fallthru
          _
        // Predicated region
        $region125: #{transformer_forward.3} parent=23 // pred_check
          %p1135 = pneg %p762
        $region126: #{transformer_forward.3} parent=23 // pred_check_branch
          %1137 = sbr.rel (%p1135) target = $region128
        $region127: #{transformer_forward.3} parent=23 // pred_region
          %p1138 = scmp.lt.s32.totalorder %s88, 1
          %s1139 = scalar_select %p1138, %s88, 1
          %s1140 = scalar_lea.vmem %s51, %s1139
        $region128: #{transformer_forward.3} parent=23 // pred_fallthru
          _
        // Predicated region
        $region129: #{transformer_forward.3} parent=23 // pred_check
          %p1141 = pneg %p788
        $region130: #{transformer_forward.3} parent=23 // pred_check_branch
          %1143 = sbr.rel (%p1141) target = $region132
        $region131: #{transformer_forward.3} parent=23 // pred_region
          %p1144 = scmp.lt.s32.totalorder %s88, 1
          %s1145 = scalar_select %p1144, %s88, 1
          %s1146 = smul.addr %s1145, 8
          %s1147 = smul.addr %s1146, 4
          %s1148 = scalar_lea.vmem %s53, %s1147
        $region132: #{transformer_forward.3} parent=23 // pred_fallthru
          _
        // Predicated region
        $region133: #{transformer_forward.3} parent=23 // pred_check
          %p1149 = pneg %p814
        $region134: #{transformer_forward.3} parent=23 // pred_check_branch
          %1151 = sbr.rel (%p1149) target = $region136
        $region135: #{transformer_forward.3} parent=23 // pred_region
          %s1152 = sand.u32 %s804, 1
          %s1153 = scalar_lea.sflag [#allocation4], %s1152
          %s1154 = sand.u32 %s804, 1
          %s1155 = scalar_lea.vmem [#allocation3], %s1154
          %s1157 = ssub.s32 16, 16
          %1158 = vsyncadd %s1153, %s1157
          %s1159 = smul.addr %s88, 16
          %s1160 = scalar_lea.hbm %s55, %s1159
          %s1162 = sshll.u32 %s1155, 4
          %s1163 = int_to_ptr.vmem [resolvable:$true] %s1162
          %1165 = dma.hbm_to_vmem [thread:$0]  %s1160, 16, %s1163, %s1153
        $region136: #{transformer_forward.3} parent=23 // pred_fallthru
          _
        // Predicated region
        $region137: #{transformer_forward.3} parent=23 // pred_check
          %p1166 = pneg %p840
        $region138: #{transformer_forward.3} parent=23 // pred_check_branch
          %1168 = sbr.rel (%p1166) target = $region140
        $region139: #{transformer_forward.3} parent=23 // pred_region
          %s1169 = sand.u32 %s80, 1
          %s1170 = scalar_lea.sflag [#allocation7], %s1169
          %s1171 = sand.u32 %s830, 1
          %s1172 = scalar_lea.vmem [#allocation6], %s1171
          %s1174 = ssub.s32 16, 16
          %1175 = vsyncadd %s1170, %s1174
          %s1176 = smul.addr %s88, 16
          %s1177 = scalar_lea.hbm %s57, %s1176
          %s1179 = sshll.u32 %s1172, 4
          %s1180 = int_to_ptr.vmem [resolvable:$true] %s1179
          %1182 = dma.hbm_to_vmem [thread:$0]  %s1177, 16, %s1180, %s1170
        $region140: #{transformer_forward.3} parent=23 // pred_fallthru
          _
        // Predicated region
        $region141: #{transformer_forward.3} parent=23 // pred_check
          %p1183 = pneg %p866
        $region142: #{transformer_forward.3} parent=23 // pred_check_branch
          %1185 = sbr.rel (%p1183) target = $region144
        $region143: #{transformer_forward.3} parent=23 // pred_region
          %s1186 = sand.u32 %s80, 1
          %s1187 = scalar_lea.sflag [#allocation7], %s1186
          %s1188 = sand.u32 %s856, 1
          %s1189 = scalar_lea.vmem [#allocation8], %s1188
          %s1191 = ssub.s32 16, 16
          %1192 = vsyncadd %s1187, %s1191
          %s1193 = smul.addr %s88, 16
          %s1194 = scalar_lea.hbm %s59, %s1193
          %s1196 = sshll.u32 %s1189, 4
          %s1197 = int_to_ptr.vmem [resolvable:$true] %s1196
          %1199 = dma.hbm_to_vmem [thread:$0]  %s1194, 16, %s1197, %s1187
        $region144: #{transformer_forward.3} parent=23 // pred_fallthru
          _
      $region24: #{transformer_forward.3} parent=5 // pred_fallthru
        _
      %p1200 = scmp.le.s32.totalorder 1, %s80
      %p1201 = scmp.lt.s32.totalorder %s80, 5
      %p1202 = pnand %p1200, %p1201
      %p1203 = pneg %p1202
      // Predicated region
      $region145: #{transformer_forward.3} parent=5 // pred_check
        _
      $region146: #{transformer_forward.3} parent=5 // pred_check_branch
        %1205 = sbr.rel (%p1202) target = $region148
      $region147: #{transformer_forward.3} parent=5 // pred_region
        %s1206 = ssub.s32 %s80, 1
        %s1207 = sand.u32 %s807, 1
        %s1208 = scalar_lea.sflag [#allocation4], %s1207
        %s1209 = sand.u32 %s807, 1
        %s1210 = scalar_lea.vmem [#allocation3], %s1209
        // Predicated region
        $region149: #{transformer_forward.3} parent=147 // pred_check
          %p1211 = pneg %p820
        $region150: #{transformer_forward.3} parent=147 // pred_check_branch
          %1213 = sbr.rel (%p1211) target = $region152
        $region151: #{transformer_forward.3} parent=147 // pred_region
          %1214 = dma.done %s1208, 16
        $region152: #{transformer_forward.3} parent=147 // pred_fallthru
          _
        %s1215 = sand.u32 %s85, 1
        %s1216 = scalar_lea.sflag [#allocation7], %s1215
        %s1217 = sand.u32 %s833, 1
        %s1218 = scalar_lea.vmem [#allocation6], %s1217
        // Predicated region
        $region153: #{transformer_forward.3} parent=147 // pred_check
          %p1219 = pneg %p846
        $region154: #{transformer_forward.3} parent=147 // pred_check_branch
          %1221 = sbr.rel (%p1219) target = $region156
        $region155: #{transformer_forward.3} parent=147 // pred_region
          %1222 = dma.done %s1216, 16
        $region156: #{transformer_forward.3} parent=147 // pred_fallthru
          _
        %s1223 = sand.u32 %s85, 1
        %s1224 = scalar_lea.sflag [#allocation7], %s1223
        %s1225 = sand.u32 %s859, 1
        %s1226 = scalar_lea.vmem [#allocation8], %s1225
        // Predicated region
        $region157: #{transformer_forward.3} parent=147 // pred_check
          %p1227 = pneg %p872
        $region158: #{transformer_forward.3} parent=147 // pred_check_branch
          %1229 = sbr.rel (%p1227) target = $region160
        $region159: #{transformer_forward.3} parent=147 // pred_region
          %1230 = dma.done %s1224, 16
        $region160: #{transformer_forward.3} parent=147 // pred_fallthru
          _
        %p1231 = scmp.lt.s32.totalorder %s89, 1
        %s1232 = scalar_select %p1231, %s89, 1
        %s1233 = scalar_lea.vmem %s1, %s1232
        %p1234 = pneg %p118
        %p1235 = pneg %p115
        %p1236 = scmp.lt.s32.totalorder %s89, 1
        %s1237 = scalar_select %p1236, %s89, 1
        %s1238 = scalar_lea.vmem %s3, %s1237
        %p1239 = pneg %p144
        %p1240 = pneg %p141
        %p1241 = scmp.lt.s32.totalorder %s89, 1
        %s1242 = scalar_select %p1241, %s89, 1
        %s1243 = smul.addr %s1242, 8
        %s1244 = scalar_lea.vmem %s5, %s1243
        %p1245 = pneg %p170
        %p1246 = pneg %p167
        %p1247 = scmp.lt.s32.totalorder %s89, 1
        %s1248 = scalar_select %p1247, %s89, 1
        %s1249 = smul.addr %s1248, 8
        %s1250 = scalar_lea.vmem %s7, %s1249
        %p1251 = pneg %p196
        %p1252 = pneg %p193
        %p1253 = scmp.lt.s32.totalorder %s90, 1
        %s1254 = scalar_select %p1253, %s90, 1
        %s1255 = smul.addr %s1254, 4
        %s1256 = smul.addr %s1255, 4
        %s1257 = scalar_lea.vmem %s9, %s1256
        %p1258 = pneg %p222
        %p1259 = pneg %p219
        %p1260 = scmp.lt.s32.totalorder %s90, 1
        %s1261 = scalar_select %p1260, %s90, 1
        %s1262 = scalar_lea.vmem %s11, %s1261
        %p1263 = pneg %p248
        %p1264 = pneg %p245
        %p1265 = scmp.lt.s32.totalorder %s90, 1
        %s1266 = scalar_select %p1265, %s90, 1
        %s1267 = smul.addr %s1266, 4
        %s1268 = smul.addr %s1267, 4
        %s1269 = scalar_lea.vmem %s13, %s1268
        %p1270 = pneg %p274
        %p1271 = pneg %p271
        %p1272 = scmp.lt.s32.totalorder %s90, 1
        %s1273 = scalar_select %p1272, %s90, 1
        %s1274 = scalar_lea.vmem %s15, %s1273
        %p1275 = pneg %p300
        %p1276 = pneg %p297
        %p1277 = scmp.lt.s32.totalorder %s90, 1
        %s1278 = scalar_select %p1277, %s90, 1
        %s1279 = smul.addr %s1278, 4
        %s1280 = smul.addr %s1279, 4
        %s1281 = scalar_lea.vmem %s17, %s1280
        %p1282 = pneg %p326
        %p1283 = pneg %p323
        %p1284 = scmp.lt.s32.totalorder %s90, 1
        %s1285 = scalar_select %p1284, %s90, 1
        %s1286 = scalar_lea.vmem %s19, %s1285
        %p1287 = pneg %p352
        %p1288 = pneg %p349
        %p1289 = scmp.lt.s32.totalorder %s90, 1
        %s1290 = scalar_select %p1289, %s90, 1
        %s1291 = smul.addr %s1290, 4
        %s1292 = smul.addr %s1291, 4
        %s1293 = scalar_lea.vmem %s21, %s1292
        %p1294 = pneg %p378
        %p1295 = pneg %p375
        %p1296 = scmp.lt.s32.totalorder %s90, 1
        %s1297 = scalar_select %p1296, %s90, 1
        %s1298 = scalar_lea.vmem %s23, %s1297
        %p1299 = pneg %p404
        %p1300 = pneg %p401
        %p1301 = scmp.lt.s32.totalorder %s90, 1
        %s1302 = scalar_select %p1301, %s90, 1
        %s1303 = scalar_lea.vmem %s25, %s1302
        %p1304 = pneg %p430
        %p1305 = pneg %p427
        %p1306 = scmp.lt.s32.totalorder %s90, 1
        %s1307 = scalar_select %p1306, %s90, 1
        %s1308 = scalar_lea.vmem %s27, %s1307
        %p1309 = pneg %p456
        %p1310 = pneg %p453
        %p1311 = scmp.lt.s32.totalorder %s90, 1
        %s1312 = scalar_select %p1311, %s90, 1
        %s1313 = smul.addr %s1312, 4
        %s1314 = smul.addr %s1313, 4
        %s1315 = scalar_lea.vmem %s29, %s1314
        %p1316 = pneg %p482
        %p1317 = pneg %p479
        %p1318 = scmp.lt.s32.totalorder %s90, 1
        %s1319 = scalar_select %p1318, %s90, 1
        %s1320 = scalar_lea.vmem %s31, %s1319
        %p1321 = pneg %p508
        %p1322 = pneg %p505
        %p1323 = scmp.lt.s32.totalorder %s90, 1
        %s1324 = scalar_select %p1323, %s90, 1
        %s1325 = smul.addr %s1324, 4
        %s1326 = smul.addr %s1325, 4
        %s1327 = scalar_lea.vmem %s33, %s1326
        %p1328 = pneg %p534
        %p1329 = pneg %p531
        %p1330 = scmp.lt.s32.totalorder %s90, 1
        %s1331 = scalar_select %p1330, %s90, 1
        %s1332 = scalar_lea.vmem %s35, %s1331
        %p1333 = pneg %p560
        %p1334 = pneg %p557
        %p1335 = scmp.lt.s32.totalorder %s90, 1
        %s1336 = scalar_select %p1335, %s90, 1
        %s1337 = smul.addr %s1336, 4
        %s1338 = smul.addr %s1337, 4
        %s1339 = scalar_lea.vmem %s37, %s1338
        %p1340 = pneg %p586
        %p1341 = pneg %p583
        %p1342 = scmp.lt.s32.totalorder %s90, 1
        %s1343 = scalar_select %p1342, %s90, 1
        %s1344 = scalar_lea.vmem %s39, %s1343
        %p1345 = pneg %p612
        %p1346 = pneg %p609
        %p1347 = scmp.lt.s32.totalorder %s90, 1
        %s1348 = scalar_select %p1347, %s90, 1
        %s1349 = smul.addr %s1348, 4
        %s1350 = smul.addr %s1349, 4
        %s1351 = scalar_lea.vmem %s41, %s1350
        %p1352 = pneg %p638
        %p1353 = pneg %p635
        %p1354 = scmp.lt.s32.totalorder %s90, 1
        %s1355 = scalar_select %p1354, %s90, 1
        %s1356 = scalar_lea.vmem %s43, %s1355
        %p1357 = pneg %p664
        %p1358 = pneg %p661
        %p1359 = scmp.lt.s32.totalorder %s90, 1
        %s1360 = scalar_select %p1359, %s90, 1
        %s1361 = scalar_lea.vmem %s45, %s1360
        %p1362 = pneg %p690
        %p1363 = pneg %p687
        %p1364 = scmp.lt.s32.totalorder %s90, 1
        %s1365 = scalar_select %p1364, %s90, 1
        %s1366 = scalar_lea.vmem %s47, %s1365
        %p1367 = pneg %p716
        %p1368 = pneg %p713
        %p1369 = scmp.lt.s32.totalorder %s90, 1
        %s1370 = scalar_select %p1369, %s90, 1
        %s1371 = smul.addr %s1370, 4
        %s1372 = smul.addr %s1371, 4
        %s1373 = scalar_lea.vmem %s49, %s1372
        %p1374 = pneg %p742
        %p1375 = pneg %p739
        %p1376 = scmp.lt.s32.totalorder %s90, 1
        %s1377 = scalar_select %p1376, %s90, 1
        %s1378 = scalar_lea.vmem %s51, %s1377
        %p1379 = pneg %p768
        %p1380 = pneg %p765
        %p1381 = scmp.lt.s32.totalorder %s90, 1
        %s1382 = scalar_select %p1381, %s90, 1
        %s1383 = smul.addr %s1382, 8
        %s1384 = smul.addr %s1383, 4
        %s1385 = scalar_lea.vmem %s53, %s1384
        %p1386 = pneg %p794
        %p1387 = pneg %p791
        %s1388 = sand.u32 %s807, 1
        %s1389 = scalar_lea.sflag [#allocation4], %s1388
        %s1390 = sand.u32 %s807, 1
        %s1391 = scalar_lea.vmem [#allocation3], %s1390
        %p1392 = pneg %p820
        %p1393 = pneg %p817
        %s1394 = sand.u32 %s85, 1
        %s1395 = scalar_lea.sflag [#allocation7], %s1394
        %s1396 = sand.u32 %s833, 1
        %s1397 = scalar_lea.vmem [#allocation6], %s1396
        %p1398 = pneg %p846
        %p1399 = pneg %p843
        %s1400 = sand.u32 %s85, 1
        %s1401 = scalar_lea.sflag [#allocation7], %s1400
        %s1402 = sand.u32 %s859, 1
        %s1403 = scalar_lea.vmem [#allocation8], %s1402
        %p1404 = pneg %p872
        %p1405 = pneg %p869
        %p1406 = pneg %p893
        %p1407 = pneg %p890
        %p1408 = pneg %p914
        %p1409 = pneg %p911
        %p1410 = pneg %p940
        %p1411 = pneg %p937
        %s1412 = sand.u32 %s927, 1
        %s1413 = scalar_lea.sflag [#allocation5], %s1412
        %s1414 = sand.u32 %s927, 1
        %s1415 = smul.addr %s1414, 8
        %s1416 = scalar_lea.vmem [#allocation9], %s1415
        %p1417 = scmp.lt.s32.totalorder %s89, 1
        %s1418 = scalar_select %p1417, %s89, 1
        %s1419 = scalar_lea.vmem %s1, %s1418
        %p1420 = scmp.lt.s32.totalorder %s89, 1
        %s1421 = scalar_select %p1420, %s89, 1
        %s1422 = scalar_lea.vmem %s3, %s1421
        %p1423 = scmp.lt.s32.totalorder %s89, 1
        %s1424 = scalar_select %p1423, %s89, 1
        %s1425 = smul.addr %s1424, 8
        %s1426 = scalar_lea.vmem %s5, %s1425
        %p1427 = scmp.lt.s32.totalorder %s89, 1
        %s1428 = scalar_select %p1427, %s89, 1
        %s1429 = smul.addr %s1428, 8
        %s1430 = scalar_lea.vmem %s7, %s1429
        %p1431 = scmp.lt.s32.totalorder %s90, 1
        %s1432 = scalar_select %p1431, %s90, 1
        %s1433 = smul.addr %s1432, 4
        %s1434 = smul.addr %s1433, 4
        %s1435 = scalar_lea.vmem %s9, %s1434
        %p1436 = scmp.lt.s32.totalorder %s90, 1
        %s1437 = scalar_select %p1436, %s90, 1
        %s1438 = scalar_lea.vmem %s11, %s1437
        %p1439 = scmp.lt.s32.totalorder %s90, 1
        %s1440 = scalar_select %p1439, %s90, 1
        %s1441 = smul.addr %s1440, 4
        %s1442 = smul.addr %s1441, 4
        %s1443 = scalar_lea.vmem %s13, %s1442
        %p1444 = scmp.lt.s32.totalorder %s90, 1
        %s1445 = scalar_select %p1444, %s90, 1
        %s1446 = scalar_lea.vmem %s15, %s1445
        %p1447 = scmp.lt.s32.totalorder %s90, 1
        %s1448 = scalar_select %p1447, %s90, 1
        %s1449 = smul.addr %s1448, 4
        %s1450 = smul.addr %s1449, 4
        %s1451 = scalar_lea.vmem %s17, %s1450
        %p1452 = scmp.lt.s32.totalorder %s90, 1
        %s1453 = scalar_select %p1452, %s90, 1
        %s1454 = scalar_lea.vmem %s19, %s1453
        %p1455 = scmp.lt.s32.totalorder %s90, 1
        %s1456 = scalar_select %p1455, %s90, 1
        %s1457 = smul.addr %s1456, 4
        %s1458 = smul.addr %s1457, 4
        %s1459 = scalar_lea.vmem %s21, %s1458
        %p1460 = scmp.lt.s32.totalorder %s90, 1
        %s1461 = scalar_select %p1460, %s90, 1
        %s1462 = scalar_lea.vmem %s23, %s1461
        %p1463 = scmp.lt.s32.totalorder %s90, 1
        %s1464 = scalar_select %p1463, %s90, 1
        %s1465 = scalar_lea.vmem %s25, %s1464
        %p1466 = scmp.lt.s32.totalorder %s90, 1
        %s1467 = scalar_select %p1466, %s90, 1
        %s1468 = scalar_lea.vmem %s27, %s1467
        %p1469 = scmp.lt.s32.totalorder %s90, 1
        %s1470 = scalar_select %p1469, %s90, 1
        %s1471 = smul.addr %s1470, 4
        %s1472 = smul.addr %s1471, 4
        %s1473 = scalar_lea.vmem %s29, %s1472
        %p1474 = scmp.lt.s32.totalorder %s90, 1
        %s1475 = scalar_select %p1474, %s90, 1
        %s1476 = scalar_lea.vmem %s31, %s1475
        %p1477 = scmp.lt.s32.totalorder %s90, 1
        %s1478 = scalar_select %p1477, %s90, 1
        %s1479 = smul.addr %s1478, 4
        %s1480 = smul.addr %s1479, 4
        %s1481 = scalar_lea.vmem %s33, %s1480
        %p1482 = scmp.lt.s32.totalorder %s90, 1
        %s1483 = scalar_select %p1482, %s90, 1
        %s1484 = scalar_lea.vmem %s35, %s1483
        %p1485 = scmp.lt.s32.totalorder %s90, 1
        %s1486 = scalar_select %p1485, %s90, 1
        %s1487 = smul.addr %s1486, 4
        %s1488 = smul.addr %s1487, 4
        %s1489 = scalar_lea.vmem %s37, %s1488
        %p1490 = scmp.lt.s32.totalorder %s90, 1
        %s1491 = scalar_select %p1490, %s90, 1
        %s1492 = scalar_lea.vmem %s39, %s1491
        %p1493 = scmp.lt.s32.totalorder %s90, 1
        %s1494 = scalar_select %p1493, %s90, 1
        %s1495 = smul.addr %s1494, 4
        %s1496 = smul.addr %s1495, 4
        %s1497 = scalar_lea.vmem %s41, %s1496
        %p1498 = scmp.lt.s32.totalorder %s90, 1
        %s1499 = scalar_select %p1498, %s90, 1
        %s1500 = scalar_lea.vmem %s43, %s1499
        %p1501 = scmp.lt.s32.totalorder %s90, 1
        %s1502 = scalar_select %p1501, %s90, 1
        %s1503 = scalar_lea.vmem %s45, %s1502
        %p1504 = scmp.lt.s32.totalorder %s90, 1
        %s1505 = scalar_select %p1504, %s90, 1
        %s1506 = scalar_lea.vmem %s47, %s1505
        %p1507 = scmp.lt.s32.totalorder %s90, 1
        %s1508 = scalar_select %p1507, %s90, 1
        %s1509 = smul.addr %s1508, 4
        %s1510 = smul.addr %s1509, 4
        %s1511 = scalar_lea.vmem %s49, %s1510
        %p1512 = scmp.lt.s32.totalorder %s90, 1
        %s1513 = scalar_select %p1512, %s90, 1
        %s1514 = scalar_lea.vmem %s51, %s1513
        %p1515 = scmp.lt.s32.totalorder %s90, 1
        %s1516 = scalar_select %p1515, %s90, 1
        %s1517 = smul.addr %s1516, 8
        %s1518 = smul.addr %s1517, 4
        %s1519 = scalar_lea.vmem %s53, %s1518
        %p1521 = scmp.eq.s32.totalorder %s90, 0
        // Predicated region
        $region161: #{transformer_forward.3} parent=147 // pred_check
          %p1522 = pneg %p1521
        $region162: #{transformer_forward.3} parent=147 // pred_check_branch
          %1524 = sbr.rel (%p1522) target = $region164
        $region163: #{transformer_forward.3} parent=147 // pred_region
          %v1525 = vld [vmem:[%s1426] sm:$0xff]
          %vm1526 = vcmask 261120
          %1527 = vst.msk [vmem:[#allocation2] sm:$0xff] %vm1526, %v1525
        $region164: #{transformer_forward.3} parent=147 // pred_fallthru
          _
        %v1528 = vld [vmem:[#allocation2] sm:$0xff]
        %v1529 = vld [vmem:[%s1430] sm:$0xff]
        %v1530 = vlaneseq
        %v1531 = vshrl.u32 %v1530, 7
        %v1532 = vlaneseq
        %v1533 = vand.u32 %v1532, 127
        %vm1534 = vcmp.ge.s32.totalorder %v1531, %v1533
        %v1535 = vld [vmem:[%s1419] sm:$0x1]
        %vm1536 = vcmp.gt.f32.partialorder %v1535, 0.0
        %v1537 = vsel %vm1536, 1, 0
        %v1538 = vlaneseq
        %v1539 = vshrl.u32 %v1538, 7
        %v1540 = vsub.s32 0, %v1539
        %v1541 = vrot.slane %v1537, %v1540
        %vm1542 = vcmp.eq.s32.totalorder %v1541, 1
        %vm1543 = vmand %vm1534, %vm1542
        %v1544 = vld [vmem:[%s1422] sm:$0x1]
        %vm1545 = vcmp.gt.f32.partialorder %v1544, 0.0
        %v1546 = vld [vmem:[%s1435] sm:$0xf]
        %v1547 = vld [vmem:[%s1435 + $0x4] sm:$0xf]
        %v1548 = vld [vmem:[%s1435 + $0x8] sm:$0xf]
        %v1549 = vld [vmem:[%s1435 + $0xc] sm:$0xf]
        %v1550 = vld [vmem:[%s1438] sm:$0x1]
        %v1551 = vld [vmem:[%s1443] sm:$0xf]
        %v1552 = vld [vmem:[%s1443 + $0x4] sm:$0xf]
        %v1553 = vld [vmem:[%s1443 + $0x8] sm:$0xf]
        %v1554 = vld [vmem:[%s1443 + $0xc] sm:$0xf]
        %v1555 = vld [vmem:[%s1446] sm:$0x1]
        %v1556 = vld [vmem:[%s1451] sm:$0xf]
        %v1557 = vld [vmem:[%s1451 + $0x4] sm:$0xf]
        %v1558 = vld [vmem:[%s1451 + $0x8] sm:$0xf]
        %v1559 = vld [vmem:[%s1451 + $0xc] sm:$0xf]
        %v1560 = vld [vmem:[%s1454] sm:$0x1]
        %v1561 = vld [vmem:[%s1459] sm:$0xf]
        %v1562 = vld [vmem:[%s1459 + $0x4] sm:$0xf]
        %v1563 = vld [vmem:[%s1459 + $0x8] sm:$0xf]
        %v1564 = vld [vmem:[%s1459 + $0xc] sm:$0xf]
        %v1565 = vld [vmem:[%s1462] sm:$0x1]
        %v1566 = vpack.c.bf16 %v1528, %v1528
        %v1568 = vlaneseq
        %v1569 = vshrl.u32 %v1568, 7
        %v1570 = vsub.s32 0, %v1569
        %v1571 = vrot.slane %v1550, %v1570
        %v1577 = vunpack.c.l.b16 %v1546
        %v1578 = vunpack.c.l.b16 %v1547
        %v1579 = vunpack.c.l.b16 %v1548
        %v1580 = vunpack.c.l.b16 %v1549
        %v1581 = vpack.c.b16 %v1578, %v1577
        %v1582 = vpack.c.b16 %v1580, %v1579
        %vm1585 = vcmask 261120
        %v1587 = vsel %vm1585, %v1566, 0
        %1589 = vmatprep.subr.bf16.mxu0 0
        %1590 = vmatpush1.bf16.msra.mxu0 0
        %1591 = vmatprep.subr.bf16.mxu0 0
        %1592 = vmatpush1.bf16.msra.mxu0 0
        %1593 = vmatprep.subr.bf16.mxu0 0
        %1594 = vmatpush1.bf16.msra.mxu0 0
        %1595 = vmatprep.subr.bf16.mxu0 0
        %1596 = vmatpush1.bf16.msra.mxu0 0
        %1597 = vmatprep.subr.bf16.mxu0 0
        %1598 = vmatpush1.bf16.msra.mxu0 0
        %1599 = vmatprep.subr.bf16.mxu0 0
        %1600 = vmatpush1.bf16.msra.mxu0 0
        %1601 = vmatprep.subr.bf16.mxu0 0
        %1602 = vmatpush1.bf16.msra.mxu0 %v1582
        %1603 = vmatprep.subr.bf16.mxu0 0
        %1604 = vmatpush1.bf16.msra.mxu0 %v1581
        %1605 = vmatprep.subr.bf16.mxu0 0
        %1606 = vmatpush2.bf16.msra.mxu0 0
        %1607 = vmatprep.subr.bf16.mxu0 0
        %1608 = vmatpush2.bf16.msra.mxu0 0
        %1609 = vmatprep.subr.bf16.mxu0 0
        %1610 = vmatpush2.bf16.msra.mxu0 0
        %1611 = vmatprep.subr.bf16.mxu0 0
        %1612 = vmatpush2.bf16.msra.mxu0 0
        %1613 = vmatprep.subr.bf16.mxu0 0
        %1614 = vmatpush2.bf16.msra.mxu0 0
        %1615 = vmatprep.subr.bf16.mxu0 0
        %1616 = vmatpush2.bf16.msra.mxu0 0
        %1617 = vmatprep.subr.bf16.mxu0 0
        %1618 = vmatpush2.bf16.msra.mxu0 0
        %1619 = vmatprep.subr.bf16.mxu0 0
        %1620 = vmatpush2.bf16.msra.mxu0 0
        %1621 = vmatprep.mubr.bf16.mxu0 0
        %1622 = vmatmul.mubr.bf16.gmra.mxu0 %v1587
        %v1623 = vpop.f32.mrf.mxu0
        %v1624 = vadd.f32 %v1571, %v1623
        %v1625 = vpop.f32.mrf.mxu0
        %v1626 = vpop.f32.mrf.mxu0
        %v1627 = vpop.f32.mrf.mxu0
        %1628 = vdwg.mxu0
        %v1630 = vlaneseq
        %v1631 = vshrl.u32 %v1630, 7
        %v1632 = vsub.s32 0, %v1631
        %v1633 = vrot.slane %v1555, %v1632
        %v1639 = vunpack.c.l.b16 %v1551
        %v1640 = vunpack.c.l.b16 %v1552
        %v1641 = vunpack.c.l.b16 %v1553
        %v1642 = vunpack.c.l.b16 %v1554
        %v1643 = vpack.c.b16 %v1640, %v1639
        %v1644 = vpack.c.b16 %v1642, %v1641
        %1647 = vmatprep.subr.bf16.mxu0 0
        %1648 = vmatpush1.bf16.msra.mxu0 0
        %1649 = vmatprep.subr.bf16.mxu0 0
        %1650 = vmatpush1.bf16.msra.mxu0 0
        %1651 = vmatprep.subr.bf16.mxu0 0
        %1652 = vmatpush1.bf16.msra.mxu0 0
        %1653 = vmatprep.subr.bf16.mxu0 0
        %1654 = vmatpush1.bf16.msra.mxu0 0
        %1655 = vmatprep.subr.bf16.mxu0 0
        %1656 = vmatpush1.bf16.msra.mxu0 0
        %1657 = vmatprep.subr.bf16.mxu0 0
        %1658 = vmatpush1.bf16.msra.mxu0 0
        %1659 = vmatprep.subr.bf16.mxu0 0
        %1660 = vmatpush1.bf16.msra.mxu0 %v1644
        %1661 = vmatprep.subr.bf16.mxu0 0
        %1662 = vmatpush1.bf16.msra.mxu0 %v1643
        %1663 = vmatprep.subr.bf16.mxu0 0
        %1664 = vmatpush2.bf16.msra.mxu0 0
        %1665 = vmatprep.subr.bf16.mxu0 0
        %1666 = vmatpush2.bf16.msra.mxu0 0
        %1667 = vmatprep.subr.bf16.mxu0 0
        %1668 = vmatpush2.bf16.msra.mxu0 0
        %1669 = vmatprep.subr.bf16.mxu0 0
        %1670 = vmatpush2.bf16.msra.mxu0 0
        %1671 = vmatprep.subr.bf16.mxu0 0
        %1672 = vmatpush2.bf16.msra.mxu0 0
        %1673 = vmatprep.subr.bf16.mxu0 0
        %1674 = vmatpush2.bf16.msra.mxu0 0
        %1675 = vmatprep.subr.bf16.mxu0 0
        %1676 = vmatpush2.bf16.msra.mxu0 0
        %1677 = vmatprep.subr.bf16.mxu0 0
        %1678 = vmatpush2.bf16.msra.mxu0 0
        %1679 = vmatprep.mubr.bf16.mxu0 0
        %1680 = vmatmul.mubr.bf16.gmra.mxu0 %v1587
        %v1681 = vpop.f32.mrf.mxu0
        %v1682 = vadd.f32 %v1633, %v1681
        %v1683 = vpop.f32.mrf.mxu0
        %v1684 = vpop.f32.mrf.mxu0
        %v1685 = vpop.f32.mrf.mxu0
        %1686 = vdwg.mxu0
        %v1688 = vlaneseq
        %v1689 = vshrl.u32 %v1688, 7
        %v1690 = vsub.s32 0, %v1689
        %v1691 = vrot.slane %v1560, %v1690
        %v1697 = vunpack.c.l.b16 %v1556
        %v1698 = vunpack.c.l.b16 %v1557
        %v1699 = vunpack.c.l.b16 %v1558
        %v1700 = vunpack.c.l.b16 %v1559
        %v1701 = vpack.c.b16 %v1698, %v1697
        %v1702 = vpack.c.b16 %v1700, %v1699
        %1705 = vmatprep.subr.bf16.mxu0 0
        %1706 = vmatpush1.bf16.msra.mxu0 0
        %1707 = vmatprep.subr.bf16.mxu0 0
        %1708 = vmatpush1.bf16.msra.mxu0 0
        %1709 = vmatprep.subr.bf16.mxu0 0
        %1710 = vmatpush1.bf16.msra.mxu0 0
        %1711 = vmatprep.subr.bf16.mxu0 0
        %1712 = vmatpush1.bf16.msra.mxu0 0
        %1713 = vmatprep.subr.bf16.mxu0 0
        %1714 = vmatpush1.bf16.msra.mxu0 0
        %1715 = vmatprep.subr.bf16.mxu0 0
        %1716 = vmatpush1.bf16.msra.mxu0 0
        %1717 = vmatprep.subr.bf16.mxu0 0
        %1718 = vmatpush1.bf16.msra.mxu0 %v1702
        %1719 = vmatprep.subr.bf16.mxu0 0
        %1720 = vmatpush1.bf16.msra.mxu0 %v1701
        %1721 = vmatprep.subr.bf16.mxu0 0
        %1722 = vmatpush2.bf16.msra.mxu0 0
        %1723 = vmatprep.subr.bf16.mxu0 0
        %1724 = vmatpush2.bf16.msra.mxu0 0
        %1725 = vmatprep.subr.bf16.mxu0 0
        %1726 = vmatpush2.bf16.msra.mxu0 0
        %1727 = vmatprep.subr.bf16.mxu0 0
        %1728 = vmatpush2.bf16.msra.mxu0 0
        %1729 = vmatprep.subr.bf16.mxu0 0
        %1730 = vmatpush2.bf16.msra.mxu0 0
        %1731 = vmatprep.subr.bf16.mxu0 0
        %1732 = vmatpush2.bf16.msra.mxu0 0
        %1733 = vmatprep.subr.bf16.mxu0 0
        %1734 = vmatpush2.bf16.msra.mxu0 0
        %1735 = vmatprep.subr.bf16.mxu0 0
        %1736 = vmatpush2.bf16.msra.mxu0 0
        %1737 = vmatprep.mubr.bf16.mxu0 0
        %1738 = vmatmul.mubr.bf16.gmra.mxu0 %v1587
        %v1739 = vpop.f32.mrf.mxu0
        %v1740 = vadd.f32 %v1691, %v1739
        %v1741 = vpop.f32.mrf.mxu0
        %v1742 = vpop.f32.mrf.mxu0
        %v1743 = vpop.f32.mrf.mxu0
        %1744 = vdwg.mxu0
        %1746 = vrot.lane.b32.xlu0 %v1624, 120
        %v1747 = vpop.permute.xlu0 %1746
        %1749 = vrot.lane.b32.xlu0 %v1624, 112
        %v1750 = vpop.permute.xlu0 %1749
        %1752 = vrot.lane.b32.xlu0 %v1624, 104
        %v1753 = vpop.permute.xlu0 %1752
        %1756 = vrot.lane.b32.xlu0 %v1682, 120
        %v1757 = vpop.permute.xlu0 %1756
        %1759 = vrot.lane.b32.xlu0 %v1682, 112
        %v1760 = vpop.permute.xlu0 %1759
        %1762 = vrot.lane.b32.xlu0 %v1682, 104
        %v1763 = vpop.permute.xlu0 %1762
        %1766 = vrot.lane.b32.xlu0 %v1740, 120
        %v1767 = vpop.permute.xlu0 %1766
        %1769 = vrot.lane.b32.xlu0 %v1740, 112
        %v1770 = vpop.permute.xlu0 %1769
        %1772 = vrot.lane.b32.xlu0 %v1740, 104
        %v1773 = vpop.permute.xlu0 %1772
        %v1775 = vpack.c.bf16 %v1624, %v1624
        %v1776 = vpack.c.bf16 %v1747, %v1747
        %v1777 = vpack.c.bf16 %v1750, %v1750
        %v1778 = vpack.c.bf16 %v1753, %v1753
        %v1779 = vpack.c.bf16 %v1682, %v1682
        %v1780 = vpack.c.bf16 %v1757, %v1757
        %v1781 = vpack.c.bf16 %v1760, %v1760
        %v1782 = vpack.c.bf16 %v1763, %v1763
        %v1783 = vpack.c.bf16 %v1740, %v1740
        %v1784 = vpack.c.bf16 %v1767, %v1767
        %v1785 = vpack.c.bf16 %v1770, %v1770
        %v1786 = vpack.c.bf16 %v1773, %v1773
        %vm1787 = vcmask 64512
        %v1789 = vsel %vm1787, %v1775, 0
        %v1792 = vsel %vm1787, %v1779, 0
        %1794 = vmatprep.subr.bf16.mxu0 0
        %1795 = vmatpush1.bf16.xpose.msra.mxu0 0
        %1796 = vmatprep.subr.bf16.mxu0 0
        %1797 = vmatpush1.bf16.xpose.msra.mxu0 0
        %1798 = vmatprep.subr.bf16.mxu0 0
        %1799 = vmatpush1.bf16.xpose.msra.mxu0 0
        %1800 = vmatprep.subr.bf16.mxu0 0
        %1801 = vmatpush1.bf16.xpose.msra.mxu0 0
        %1802 = vmatprep.subr.bf16.mxu0 0
        %1803 = vmatpush1.bf16.xpose.msra.mxu0 0
        %1804 = vmatprep.subr.bf16.mxu0 0
        %1805 = vmatpush1.bf16.xpose.msra.mxu0 0
        %1806 = vmatprep.subr.bf16.mxu0 0
        %1807 = vmatpush1.bf16.xpose.msra.mxu0 0
        %1808 = vmatprep.subr.bf16.mxu0 0
        %1809 = vmatpush1.bf16.xpose.msra.mxu0 %v1792
        %1810 = vmatprep.subr.bf16.mxu0 0
        %1811 = vmatpush2.bf16.xpose.msra.mxu0 0
        %1812 = vmatprep.subr.bf16.mxu0 0
        %1813 = vmatpush2.bf16.xpose.msra.mxu0 0
        %1814 = vmatprep.subr.bf16.mxu0 0
        %1815 = vmatpush2.bf16.xpose.msra.mxu0 0
        %1816 = vmatprep.subr.bf16.mxu0 0
        %1817 = vmatpush2.bf16.xpose.msra.mxu0 0
        %1818 = vmatprep.subr.bf16.mxu0 0
        %1819 = vmatpush2.bf16.xpose.msra.mxu0 0
        %1820 = vmatprep.subr.bf16.mxu0 0
        %1821 = vmatpush2.bf16.xpose.msra.mxu0 0
        %1822 = vmatprep.subr.bf16.mxu0 0
        %1823 = vmatpush2.bf16.xpose.msra.mxu0 0
        %1824 = vmatprep.subr.bf16.mxu0 0
        %1825 = vmatpush2.bf16.xpose.msra.mxu0 0
        %1826 = vmatprep.mubr.bf16.mxu0 0
        %1827 = vmatmul.mubr.bf16.gmra.mxu0 %v1789
        %v1828 = vpop.f32.mrf.mxu0
        %v1829 = vadd.f32 0.0, %v1828
        %v1830 = vpop.f32.mrf.mxu0
        %v1831 = vpop.f32.mrf.mxu0
        %v1832 = vpop.f32.mrf.mxu0
        %1833 = vdwg.mxu0
        %v1835 = vsel %vm1787, %v1776, 0
        %v1838 = vsel %vm1787, %v1780, 0
        %1840 = vmatprep.subr.bf16.mxu0 0
        %1841 = vmatpush1.bf16.xpose.msra.mxu0 0
        %1842 = vmatprep.subr.bf16.mxu0 0
        %1843 = vmatpush1.bf16.xpose.msra.mxu0 0
        %1844 = vmatprep.subr.bf16.mxu0 0
        %1845 = vmatpush1.bf16.xpose.msra.mxu0 0
        %1846 = vmatprep.subr.bf16.mxu0 0
        %1847 = vmatpush1.bf16.xpose.msra.mxu0 0
        %1848 = vmatprep.subr.bf16.mxu0 0
        %1849 = vmatpush1.bf16.xpose.msra.mxu0 0
        %1850 = vmatprep.subr.bf16.mxu0 0
        %1851 = vmatpush1.bf16.xpose.msra.mxu0 0
        %1852 = vmatprep.subr.bf16.mxu0 0
        %1853 = vmatpush1.bf16.xpose.msra.mxu0 0
        %1854 = vmatprep.subr.bf16.mxu0 0
        %1855 = vmatpush1.bf16.xpose.msra.mxu0 %v1838
        %1856 = vmatprep.subr.bf16.mxu0 0
        %1857 = vmatpush2.bf16.xpose.msra.mxu0 0
        %1858 = vmatprep.subr.bf16.mxu0 0
        %1859 = vmatpush2.bf16.xpose.msra.mxu0 0
        %1860 = vmatprep.subr.bf16.mxu0 0
        %1861 = vmatpush2.bf16.xpose.msra.mxu0 0
        %1862 = vmatprep.subr.bf16.mxu0 0
        %1863 = vmatpush2.bf16.xpose.msra.mxu0 0
        %1864 = vmatprep.subr.bf16.mxu0 0
        %1865 = vmatpush2.bf16.xpose.msra.mxu0 0
        %1866 = vmatprep.subr.bf16.mxu0 0
        %1867 = vmatpush2.bf16.xpose.msra.mxu0 0
        %1868 = vmatprep.subr.bf16.mxu0 0
        %1869 = vmatpush2.bf16.xpose.msra.mxu0 0
        %1870 = vmatprep.subr.bf16.mxu0 0
        %1871 = vmatpush2.bf16.xpose.msra.mxu0 0
        %1872 = vmatprep.mubr.bf16.mxu0 0
        %1873 = vmatmul.mubr.bf16.gmra.mxu0 %v1835
        %v1874 = vpop.f32.mrf.mxu0
        %v1875 = vadd.f32 0.0, %v1874
        %v1876 = vpop.f32.mrf.mxu0
        %v1877 = vpop.f32.mrf.mxu0
        %v1878 = vpop.f32.mrf.mxu0
        %1879 = vdwg.mxu0
        %v1881 = vsel %vm1787, %v1777, 0
        %v1884 = vsel %vm1787, %v1781, 0
        %1886 = vmatprep.subr.bf16.mxu0 0
        %1887 = vmatpush1.bf16.xpose.msra.mxu0 0
        %1888 = vmatprep.subr.bf16.mxu0 0
        %1889 = vmatpush1.bf16.xpose.msra.mxu0 0
        %1890 = vmatprep.subr.bf16.mxu0 0
        %1891 = vmatpush1.bf16.xpose.msra.mxu0 0
        %1892 = vmatprep.subr.bf16.mxu0 0
        %1893 = vmatpush1.bf16.xpose.msra.mxu0 0
        %1894 = vmatprep.subr.bf16.mxu0 0
        %1895 = vmatpush1.bf16.xpose.msra.mxu0 0
        %1896 = vmatprep.subr.bf16.mxu0 0
        %1897 = vmatpush1.bf16.xpose.msra.mxu0 0
        %1898 = vmatprep.subr.bf16.mxu0 0
        %1899 = vmatpush1.bf16.xpose.msra.mxu0 0
        %1900 = vmatprep.subr.bf16.mxu0 0
        %1901 = vmatpush1.bf16.xpose.msra.mxu0 %v1884
        %1902 = vmatprep.subr.bf16.mxu0 0
        %1903 = vmatpush2.bf16.xpose.msra.mxu0 0
        %1904 = vmatprep.subr.bf16.mxu0 0
        %1905 = vmatpush2.bf16.xpose.msra.mxu0 0
        %1906 = vmatprep.subr.bf16.mxu0 0
        %1907 = vmatpush2.bf16.xpose.msra.mxu0 0
        %1908 = vmatprep.subr.bf16.mxu0 0
        %1909 = vmatpush2.bf16.xpose.msra.mxu0 0
        %1910 = vmatprep.subr.bf16.mxu0 0
        %1911 = vmatpush2.bf16.xpose.msra.mxu0 0
        %1912 = vmatprep.subr.bf16.mxu0 0
        %1913 = vmatpush2.bf16.xpose.msra.mxu0 0
        %1914 = vmatprep.subr.bf16.mxu0 0
        %1915 = vmatpush2.bf16.xpose.msra.mxu0 0
        %1916 = vmatprep.subr.bf16.mxu0 0
        %1917 = vmatpush2.bf16.xpose.msra.mxu0 0
        %1918 = vmatprep.mubr.bf16.mxu0 0
        %1919 = vmatmul.mubr.bf16.gmra.mxu0 %v1881
        %v1920 = vpop.f32.mrf.mxu0
        %v1921 = vadd.f32 0.0, %v1920
        %v1922 = vpop.f32.mrf.mxu0
        %v1923 = vpop.f32.mrf.mxu0
        %v1924 = vpop.f32.mrf.mxu0
        %1925 = vdwg.mxu0
        %v1927 = vsel %vm1787, %v1778, 0
        %v1930 = vsel %vm1787, %v1782, 0
        %1932 = vmatprep.subr.bf16.mxu0 0
        %1933 = vmatpush1.bf16.xpose.msra.mxu0 0
        %1934 = vmatprep.subr.bf16.mxu0 0
        %1935 = vmatpush1.bf16.xpose.msra.mxu0 0
        %1936 = vmatprep.subr.bf16.mxu0 0
        %1937 = vmatpush1.bf16.xpose.msra.mxu0 0
        %1938 = vmatprep.subr.bf16.mxu0 0
        %1939 = vmatpush1.bf16.xpose.msra.mxu0 0
        %1940 = vmatprep.subr.bf16.mxu0 0
        %1941 = vmatpush1.bf16.xpose.msra.mxu0 0
        %1942 = vmatprep.subr.bf16.mxu0 0
        %1943 = vmatpush1.bf16.xpose.msra.mxu0 0
        %1944 = vmatprep.subr.bf16.mxu0 0
        %1945 = vmatpush1.bf16.xpose.msra.mxu0 0
        %1946 = vmatprep.subr.bf16.mxu0 0
        %1947 = vmatpush1.bf16.xpose.msra.mxu0 %v1930
        %1948 = vmatprep.subr.bf16.mxu0 0
        %1949 = vmatpush2.bf16.xpose.msra.mxu0 0
        %1950 = vmatprep.subr.bf16.mxu0 0
        %1951 = vmatpush2.bf16.xpose.msra.mxu0 0
        %1952 = vmatprep.subr.bf16.mxu0 0
        %1953 = vmatpush2.bf16.xpose.msra.mxu0 0
        %1954 = vmatprep.subr.bf16.mxu0 0
        %1955 = vmatpush2.bf16.xpose.msra.mxu0 0
        %1956 = vmatprep.subr.bf16.mxu0 0
        %1957 = vmatpush2.bf16.xpose.msra.mxu0 0
        %1958 = vmatprep.subr.bf16.mxu0 0
        %1959 = vmatpush2.bf16.xpose.msra.mxu0 0
        %1960 = vmatprep.subr.bf16.mxu0 0
        %1961 = vmatpush2.bf16.xpose.msra.mxu0 0
        %1962 = vmatprep.subr.bf16.mxu0 0
        %1963 = vmatpush2.bf16.xpose.msra.mxu0 0
        %1964 = vmatprep.mubr.bf16.mxu0 0
        %1965 = vmatmul.mubr.bf16.gmra.mxu0 %v1927
        %v1966 = vpop.f32.mrf.mxu0
        %v1967 = vadd.f32 0.0, %v1966
        %v1968 = vpop.f32.mrf.mxu0
        %v1969 = vpop.f32.mrf.mxu0
        %v1970 = vpop.f32.mrf.mxu0
        %1971 = vdwg.mxu0
        %v1972 = vmul.f32 %v1829, 0.35355338
        %v1973 = vmul.f32 %v1875, 0.35355338
        %v1974 = vmul.f32 %v1921, 0.35355338
        %v1975 = vmul.f32 %v1967, 0.35355338
        %v1976 = vsel %vm1543, 1, 0
        %vm1977 = vcmp.eq.s32.totalorder %v1976, 1
        %v1978 = vsel %vm1977, %v1972, -1e+30
        %v1979 = vsel %vm1977, %v1973, -1e+30
        %v1980 = vsel %vm1977, %v1974, -1e+30
        %v1981 = vsel %vm1977, %v1975, -1e+30
        %v1982 = vsel %vm1787, %v1978, -inf
        %1983 = vmax.xlane.f32.xlu0 %v1982
        %v1984 = vpop.xlane.xlu0 %1983
        %v1985 = vsel %vm1787, %v1979, -inf
        %1986 = vmax.xlane.f32.xlu0 %v1985
        %v1987 = vpop.xlane.xlu0 %1986
        %v1988 = vsel %vm1787, %v1980, -inf
        %1989 = vmax.xlane.f32.xlu0 %v1988
        %v1990 = vpop.xlane.xlu0 %1989
        %v1991 = vsel %vm1787, %v1981, -inf
        %1992 = vmax.xlane.f32.xlu0 %v1991
        %v1993 = vpop.xlane.xlu0 %1992
        %v1994 = vsub.f32 %v1978, %v1984
        %v1995 = vsub.f32 %v1979, %v1987
        %v1996 = vsub.f32 %v1980, %v1990
        %v1997 = vsub.f32 %v1981, %v1993
        %v1998 = vmul.f32 %v1994, 1.442695
        %v1999 = vpow.pop %v1998
        %v2000 = vmul.f32 %v1995, 1.442695
        %v2001 = vpow.pop %v2000
        %v2002 = vmul.f32 %v1996, 1.442695
        %v2003 = vpow.pop %v2002
        %v2004 = vmul.f32 %v1997, 1.442695
        %v2005 = vpow.pop %v2004
        %v2006 = vsel %vm1787, %v1999, 0.0
        %2007 = vadd.xlane.f32.xlu0 %v2006
        %v2008 = vpop.xlane.xlu0 %2007
        %v2009 = vsel %vm1787, %v2001, 0.0
        %2010 = vadd.xlane.f32.xlu0 %v2009
        %v2011 = vpop.xlane.xlu0 %2010
        %v2012 = vsel %vm1787, %v2003, 0.0
        %2013 = vadd.xlane.f32.xlu0 %v2012
        %v2014 = vpop.xlane.xlu0 %2013
        %v2015 = vsel %vm1787, %v2005, 0.0
        %2016 = vadd.xlane.f32.xlu0 %v2015
        %v2017 = vpop.xlane.xlu0 %2016
        %v2018 = vrcp.pop %v2008
        %v2019 = vrcp.pop %v2011
        %v2020 = vrcp.pop %v2014
        %v2021 = vrcp.pop %v2017
        %v2022 = vmul.f32 %v1999, %v2018
        %v2023 = vmul.f32 %v2001, %v2019
        %v2024 = vmul.f32 %v2003, %v2020
        %v2025 = vmul.f32 %v2005, %v2021
        %v2026 = vpack.c.bf16 %v2022, %v2022
        %v2027 = vpack.c.bf16 %v2023, %v2023
        %v2028 = vpack.c.bf16 %v2024, %v2024
        %v2029 = vpack.c.bf16 %v2025, %v2025
        %v2031 = vsel %vm1787, %v2026, 0
        %vm2033 = vcmask 1043456
        %v2035 = vsel %vm2033, %v1783, 0
        %2037 = vmatprep.subr.bf16.mxu0 0
        %2038 = vmatpush1.bf16.msra.mxu0 0
        %2039 = vmatprep.subr.bf16.mxu0 0
        %2040 = vmatpush1.bf16.msra.mxu0 0
        %2041 = vmatprep.subr.bf16.mxu0 0
        %2042 = vmatpush1.bf16.msra.mxu0 0
        %2043 = vmatprep.subr.bf16.mxu0 0
        %2044 = vmatpush1.bf16.msra.mxu0 0
        %2045 = vmatprep.subr.bf16.mxu0 0
        %2046 = vmatpush1.bf16.msra.mxu0 0
        %2047 = vmatprep.subr.bf16.mxu0 0
        %2048 = vmatpush1.bf16.msra.mxu0 0
        %2049 = vmatprep.subr.bf16.mxu0 0
        %2050 = vmatpush1.bf16.msra.mxu0 0
        %2051 = vmatprep.subr.bf16.mxu0 0
        %2052 = vmatpush1.bf16.msra.mxu0 %v2035
        %2053 = vmatprep.subr.bf16.mxu0 0
        %2054 = vmatpush2.bf16.msra.mxu0 0
        %2055 = vmatprep.subr.bf16.mxu0 0
        %2056 = vmatpush2.bf16.msra.mxu0 0
        %2057 = vmatprep.subr.bf16.mxu0 0
        %2058 = vmatpush2.bf16.msra.mxu0 0
        %2059 = vmatprep.subr.bf16.mxu0 0
        %2060 = vmatpush2.bf16.msra.mxu0 0
        %2061 = vmatprep.subr.bf16.mxu0 0
        %2062 = vmatpush2.bf16.msra.mxu0 0
        %2063 = vmatprep.subr.bf16.mxu0 0
        %2064 = vmatpush2.bf16.msra.mxu0 0
        %2065 = vmatprep.subr.bf16.mxu0 0
        %2066 = vmatpush2.bf16.msra.mxu0 0
        %2067 = vmatprep.subr.bf16.mxu0 0
        %2068 = vmatpush2.bf16.msra.mxu0 0
        %2069 = vmatprep.mubr.bf16.mxu0 0
        %2070 = vmatmul.mubr.bf16.gmra.mxu0 %v2031
        %v2071 = vpop.f32.mrf.mxu0
        %v2072 = vadd.f32 0.0, %v2071
        %v2073 = vpop.f32.mrf.mxu0
        %v2074 = vpop.f32.mrf.mxu0
        %v2075 = vpop.f32.mrf.mxu0
        %2076 = vdwg.mxu0
        %v2078 = vsel %vm1787, %v2027, 0
        %v2081 = vsel %vm2033, %v1784, 0
        %2083 = vmatprep.subr.bf16.mxu0 0
        %2084 = vmatpush1.bf16.msra.mxu0 0
        %2085 = vmatprep.subr.bf16.mxu0 0
        %2086 = vmatpush1.bf16.msra.mxu0 0
        %2087 = vmatprep.subr.bf16.mxu0 0
        %2088 = vmatpush1.bf16.msra.mxu0 0
        %2089 = vmatprep.subr.bf16.mxu0 0
        %2090 = vmatpush1.bf16.msra.mxu0 0
        %2091 = vmatprep.subr.bf16.mxu0 0
        %2092 = vmatpush1.bf16.msra.mxu0 0
        %2093 = vmatprep.subr.bf16.mxu0 0
        %2094 = vmatpush1.bf16.msra.mxu0 0
        %2095 = vmatprep.subr.bf16.mxu0 0
        %2096 = vmatpush1.bf16.msra.mxu0 0
        %2097 = vmatprep.subr.bf16.mxu0 0
        %2098 = vmatpush1.bf16.msra.mxu0 %v2081
        %2099 = vmatprep.subr.bf16.mxu0 0
        %2100 = vmatpush2.bf16.msra.mxu0 0
        %2101 = vmatprep.subr.bf16.mxu0 0
        %2102 = vmatpush2.bf16.msra.mxu0 0
        %2103 = vmatprep.subr.bf16.mxu0 0
        %2104 = vmatpush2.bf16.msra.mxu0 0
        %2105 = vmatprep.subr.bf16.mxu0 0
        %2106 = vmatpush2.bf16.msra.mxu0 0
        %2107 = vmatprep.subr.bf16.mxu0 0
        %2108 = vmatpush2.bf16.msra.mxu0 0
        %2109 = vmatprep.subr.bf16.mxu0 0
        %2110 = vmatpush2.bf16.msra.mxu0 0
        %2111 = vmatprep.subr.bf16.mxu0 0
        %2112 = vmatpush2.bf16.msra.mxu0 0
        %2113 = vmatprep.subr.bf16.mxu0 0
        %2114 = vmatpush2.bf16.msra.mxu0 0
        %2115 = vmatprep.mubr.bf16.mxu0 0
        %2116 = vmatmul.mubr.bf16.gmra.mxu0 %v2078
        %v2117 = vpop.f32.mrf.mxu0
        %v2118 = vadd.f32 0.0, %v2117
        %v2119 = vpop.f32.mrf.mxu0
        %v2120 = vpop.f32.mrf.mxu0
        %v2121 = vpop.f32.mrf.mxu0
        %2122 = vdwg.mxu0
        %v2124 = vsel %vm1787, %v2028, 0
        %v2127 = vsel %vm2033, %v1785, 0
        %2129 = vmatprep.subr.bf16.mxu0 0
        %2130 = vmatpush1.bf16.msra.mxu0 0
        %2131 = vmatprep.subr.bf16.mxu0 0
        %2132 = vmatpush1.bf16.msra.mxu0 0
        %2133 = vmatprep.subr.bf16.mxu0 0
        %2134 = vmatpush1.bf16.msra.mxu0 0
        %2135 = vmatprep.subr.bf16.mxu0 0
        %2136 = vmatpush1.bf16.msra.mxu0 0
        %2137 = vmatprep.subr.bf16.mxu0 0
        %2138 = vmatpush1.bf16.msra.mxu0 0
        %2139 = vmatprep.subr.bf16.mxu0 0
        %2140 = vmatpush1.bf16.msra.mxu0 0
        %2141 = vmatprep.subr.bf16.mxu0 0
        %2142 = vmatpush1.bf16.msra.mxu0 0
        %2143 = vmatprep.subr.bf16.mxu0 0
        %2144 = vmatpush1.bf16.msra.mxu0 %v2127
        %2145 = vmatprep.subr.bf16.mxu0 0
        %2146 = vmatpush2.bf16.msra.mxu0 0
        %2147 = vmatprep.subr.bf16.mxu0 0
        %2148 = vmatpush2.bf16.msra.mxu0 0
        %2149 = vmatprep.subr.bf16.mxu0 0
        %2150 = vmatpush2.bf16.msra.mxu0 0
        %2151 = vmatprep.subr.bf16.mxu0 0
        %2152 = vmatpush2.bf16.msra.mxu0 0
        %2153 = vmatprep.subr.bf16.mxu0 0
        %2154 = vmatpush2.bf16.msra.mxu0 0
        %2155 = vmatprep.subr.bf16.mxu0 0
        %2156 = vmatpush2.bf16.msra.mxu0 0
        %2157 = vmatprep.subr.bf16.mxu0 0
        %2158 = vmatpush2.bf16.msra.mxu0 0
        %2159 = vmatprep.subr.bf16.mxu0 0
        %2160 = vmatpush2.bf16.msra.mxu0 0
        %2161 = vmatprep.mubr.bf16.mxu0 0
        %2162 = vmatmul.mubr.bf16.gmra.mxu0 %v2124
        %v2163 = vpop.f32.mrf.mxu0
        %v2164 = vadd.f32 0.0, %v2163
        %v2165 = vpop.f32.mrf.mxu0
        %v2166 = vpop.f32.mrf.mxu0
        %v2167 = vpop.f32.mrf.mxu0
        %2168 = vdwg.mxu0
        %v2170 = vsel %vm1787, %v2029, 0
        %v2173 = vsel %vm2033, %v1786, 0
        %2175 = vmatprep.subr.bf16.mxu0 0
        %2176 = vmatpush1.bf16.msra.mxu0 0
        %2177 = vmatprep.subr.bf16.mxu0 0
        %2178 = vmatpush1.bf16.msra.mxu0 0
        %2179 = vmatprep.subr.bf16.mxu0 0
        %2180 = vmatpush1.bf16.msra.mxu0 0
        %2181 = vmatprep.subr.bf16.mxu0 0
        %2182 = vmatpush1.bf16.msra.mxu0 0
        %2183 = vmatprep.subr.bf16.mxu0 0
        %2184 = vmatpush1.bf16.msra.mxu0 0
        %2185 = vmatprep.subr.bf16.mxu0 0
        %2186 = vmatpush1.bf16.msra.mxu0 0
        %2187 = vmatprep.subr.bf16.mxu0 0
        %2188 = vmatpush1.bf16.msra.mxu0 0
        %2189 = vmatprep.subr.bf16.mxu0 0
        %2190 = vmatpush1.bf16.msra.mxu0 %v2173
        %2191 = vmatprep.subr.bf16.mxu0 0
        %2192 = vmatpush2.bf16.msra.mxu0 0
        %2193 = vmatprep.subr.bf16.mxu0 0
        %2194 = vmatpush2.bf16.msra.mxu0 0
        %2195 = vmatprep.subr.bf16.mxu0 0
        %2196 = vmatpush2.bf16.msra.mxu0 0
        %2197 = vmatprep.subr.bf16.mxu0 0
        %2198 = vmatpush2.bf16.msra.mxu0 0
        %2199 = vmatprep.subr.bf16.mxu0 0
        %2200 = vmatpush2.bf16.msra.mxu0 0
        %2201 = vmatprep.subr.bf16.mxu0 0
        %2202 = vmatpush2.bf16.msra.mxu0 0
        %2203 = vmatprep.subr.bf16.mxu0 0
        %2204 = vmatpush2.bf16.msra.mxu0 0
        %2205 = vmatprep.subr.bf16.mxu0 0
        %2206 = vmatpush2.bf16.msra.mxu0 0
        %2207 = vmatprep.mubr.bf16.mxu0 0
        %2208 = vmatmul.mubr.bf16.gmra.mxu0 %v2170
        %v2209 = vpop.f32.mrf.mxu0
        %v2210 = vadd.f32 0.0, %v2209
        %v2211 = vpop.f32.mrf.mxu0
        %v2212 = vpop.f32.mrf.mxu0
        %v2213 = vpop.f32.mrf.mxu0
        %2214 = vdwg.mxu0
        %2216 = vrot.lane.b32.xlu0 %v2118, 8
        %v2217 = vpop.permute.xlu0 %2216
        %2220 = vrot.lane.b32.xlu0 %v2164, 16
        %v2221 = vpop.permute.xlu0 %2220
        %2224 = vrot.lane.b32.xlu0 %v2210, 24
        %v2225 = vpop.permute.xlu0 %2224
        %v2227 = vsel %vm1787, %v2072, %v2217
        %vm2228 = vcmask 130048
        %v2229 = vsel %vm2228, %v2227, %v2221
        %vm2230 = vcmask 195584
        %v2231 = vsel %vm2230, %v2229, %v2225
        %v2232 = vpack.c.bf16 %v2231, %v2231
        %v2234 = vlaneseq
        %v2235 = vshrl.u32 %v2234, 7
        %v2236 = vsub.s32 0, %v2235
        %v2237 = vrot.slane %v1565, %v2236
        %v2243 = vunpack.c.l.b16 %v1561
        %v2244 = vunpack.c.l.b16 %v1562
        %v2245 = vunpack.c.l.b16 %v1563
        %v2246 = vunpack.c.l.b16 %v1564
        %v2247 = vpack.c.b16 %v2244, %v2243
        %v2248 = vpack.c.b16 %v2246, %v2245
        %v2252 = vsel %vm1585, %v2232, 0
        %2254 = vmatprep.subr.bf16.mxu0 0
        %2255 = vmatpush1.bf16.msra.mxu0 0
        %2256 = vmatprep.subr.bf16.mxu0 0
        %2257 = vmatpush1.bf16.msra.mxu0 0
        %2258 = vmatprep.subr.bf16.mxu0 0
        %2259 = vmatpush1.bf16.msra.mxu0 0
        %2260 = vmatprep.subr.bf16.mxu0 0
        %2261 = vmatpush1.bf16.msra.mxu0 0
        %2262 = vmatprep.subr.bf16.mxu0 0
        %2263 = vmatpush1.bf16.msra.mxu0 0
        %2264 = vmatprep.subr.bf16.mxu0 0
        %2265 = vmatpush1.bf16.msra.mxu0 0
        %2266 = vmatprep.subr.bf16.mxu0 0
        %2267 = vmatpush1.bf16.msra.mxu0 %v2248
        %2268 = vmatprep.subr.bf16.mxu0 0
        %2269 = vmatpush1.bf16.msra.mxu0 %v2247
        %2270 = vmatprep.subr.bf16.mxu0 0
        %2271 = vmatpush2.bf16.msra.mxu0 0
        %2272 = vmatprep.subr.bf16.mxu0 0
        %2273 = vmatpush2.bf16.msra.mxu0 0
        %2274 = vmatprep.subr.bf16.mxu0 0
        %2275 = vmatpush2.bf16.msra.mxu0 0
        %2276 = vmatprep.subr.bf16.mxu0 0
        %2277 = vmatpush2.bf16.msra.mxu0 0
        %2278 = vmatprep.subr.bf16.mxu0 0
        %2279 = vmatpush2.bf16.msra.mxu0 0
        %2280 = vmatprep.subr.bf16.mxu0 0
        %2281 = vmatpush2.bf16.msra.mxu0 0
        %2282 = vmatprep.subr.bf16.mxu0 0
        %2283 = vmatpush2.bf16.msra.mxu0 0
        %2284 = vmatprep.subr.bf16.mxu0 0
        %2285 = vmatpush2.bf16.msra.mxu0 0
        %2286 = vmatprep.mubr.bf16.mxu0 0
        %2287 = vmatmul.mubr.bf16.gmra.mxu0 %v2252
        %v2288 = vpop.f32.mrf.mxu0
        %v2289 = vadd.f32 %v2237, %v2288
        %v2290 = vpop.f32.mrf.mxu0
        %v2291 = vpop.f32.mrf.mxu0
        %v2292 = vpop.f32.mrf.mxu0
        %2293 = vdwg.mxu0
        %v2294 = vadd.f32 %v1528, %v2289
        %v2295 = vld [vmem:[%s1465] sm:$0x1]
        %v2296 = vld [vmem:[%s1468] sm:$0x1]
        %v2297 = vsel %vm1585, %v2294, 0.0
        %2298 = vadd.xlane.f32.xlu0 %v2297
        %v2299 = vpop.xlane.xlu0 %2298
        %v2300 = vrcp.pop 32.0
        %v2301 = vmul.f32 %v2299, %v2300
        %v2302 = vsub.f32 %v2294, %v2301
        %v2303 = vmul.f32 %v2302, %v2302
        %v2304 = vsel %vm1585, %v2303, 0.0
        %2305 = vadd.xlane.f32.xlu0 %v2304
        %v2306 = vpop.xlane.xlu0 %2305
        %v2307 = vmul.f32 %v2306, %v2300
        %v2308 = vadd.f32 %v2307, 1e-05
        %v2309 = vrsqrt.pop %v2308
        %v2310 = vmul.f32 %v2302, %v2309
        %v2312 = vlaneseq
        %v2313 = vshrl.u32 %v2312, 7
        %v2314 = vsub.s32 0, %v2313
        %v2315 = vrot.slane %v2295, %v2314
        %v2317 = vmul.f32 %v2310, %v2315
        %v2319 = vlaneseq
        %v2320 = vshrl.u32 %v2319, 7
        %v2321 = vsub.s32 0, %v2320
        %v2322 = vrot.slane %v2296, %v2321
        %v2324 = vadd.f32 %v2317, %v2322
        %v2325 = vld [vmem:[%s1473] sm:$0xf]
        %v2326 = vld [vmem:[%s1473 + $0x4] sm:$0xf]
        %v2327 = vld [vmem:[%s1473 + $0x8] sm:$0xf]
        %v2328 = vld [vmem:[%s1473 + $0xc] sm:$0xf]
        %v2329 = vld [vmem:[%s1476] sm:$0x1]
        %v2330 = vld [vmem:[%s1481] sm:$0xf]
        %v2331 = vld [vmem:[%s1481 + $0x4] sm:$0xf]
        %v2332 = vld [vmem:[%s1481 + $0x8] sm:$0xf]
        %v2333 = vld [vmem:[%s1481 + $0xc] sm:$0xf]
        %v2334 = vld [vmem:[%s1484] sm:$0x1]
        %v2335 = vld [vmem:[%s1489] sm:$0xf]
        %v2336 = vld [vmem:[%s1489 + $0x4] sm:$0xf]
        %v2337 = vld [vmem:[%s1489 + $0x8] sm:$0xf]
        %v2338 = vld [vmem:[%s1489 + $0xc] sm:$0xf]
        %v2339 = vld [vmem:[%s1492] sm:$0x1]
        %v2340 = vld [vmem:[%s1497] sm:$0xf]
        %v2341 = vld [vmem:[%s1497 + $0x4] sm:$0xf]
        %v2342 = vld [vmem:[%s1497 + $0x8] sm:$0xf]
        %v2343 = vld [vmem:[%s1497 + $0xc] sm:$0xf]
        %v2344 = vld [vmem:[%s1500] sm:$0x1]
        %v2345 = vpack.c.bf16 %v2324, %v2324
        %v2347 = vlaneseq
        %v2348 = vshrl.u32 %v2347, 7
        %v2349 = vsub.s32 0, %v2348
        %v2350 = vrot.slane %v2329, %v2349
        %v2356 = vunpack.c.l.b16 %v2325
        %v2357 = vunpack.c.l.b16 %v2326
        %v2358 = vunpack.c.l.b16 %v2327
        %v2359 = vunpack.c.l.b16 %v2328
        %v2360 = vpack.c.b16 %v2357, %v2356
        %v2361 = vpack.c.b16 %v2359, %v2358
        %v2365 = vsel %vm1585, %v2345, 0
        %2367 = vmatprep.subr.bf16.mxu0 0
        %2368 = vmatpush1.bf16.msra.mxu0 0
        %2369 = vmatprep.subr.bf16.mxu0 0
        %2370 = vmatpush1.bf16.msra.mxu0 0
        %2371 = vmatprep.subr.bf16.mxu0 0
        %2372 = vmatpush1.bf16.msra.mxu0 0
        %2373 = vmatprep.subr.bf16.mxu0 0
        %2374 = vmatpush1.bf16.msra.mxu0 0
        %2375 = vmatprep.subr.bf16.mxu0 0
        %2376 = vmatpush1.bf16.msra.mxu0 0
        %2377 = vmatprep.subr.bf16.mxu0 0
        %2378 = vmatpush1.bf16.msra.mxu0 0
        %2379 = vmatprep.subr.bf16.mxu0 0
        %2380 = vmatpush1.bf16.msra.mxu0 %v2361
        %2381 = vmatprep.subr.bf16.mxu0 0
        %2382 = vmatpush1.bf16.msra.mxu0 %v2360
        %2383 = vmatprep.subr.bf16.mxu0 0
        %2384 = vmatpush2.bf16.msra.mxu0 0
        %2385 = vmatprep.subr.bf16.mxu0 0
        %2386 = vmatpush2.bf16.msra.mxu0 0
        %2387 = vmatprep.subr.bf16.mxu0 0
        %2388 = vmatpush2.bf16.msra.mxu0 0
        %2389 = vmatprep.subr.bf16.mxu0 0
        %2390 = vmatpush2.bf16.msra.mxu0 0
        %2391 = vmatprep.subr.bf16.mxu0 0
        %2392 = vmatpush2.bf16.msra.mxu0 0
        %2393 = vmatprep.subr.bf16.mxu0 0
        %2394 = vmatpush2.bf16.msra.mxu0 0
        %2395 = vmatprep.subr.bf16.mxu0 0
        %2396 = vmatpush2.bf16.msra.mxu0 0
        %2397 = vmatprep.subr.bf16.mxu0 0
        %2398 = vmatpush2.bf16.msra.mxu0 0
        %2399 = vmatprep.mubr.bf16.mxu0 0
        %2400 = vmatmul.mubr.bf16.gmra.mxu0 %v2365
        %v2401 = vpop.f32.mrf.mxu0
        %v2402 = vadd.f32 %v2350, %v2401
        %v2403 = vpop.f32.mrf.mxu0
        %v2404 = vpop.f32.mrf.mxu0
        %v2405 = vpop.f32.mrf.mxu0
        %2406 = vdwg.mxu0
        %v2407 = vpack.c.bf16 %v1529, %v1529
        %v2409 = vlaneseq
        %v2410 = vshrl.u32 %v2409, 7
        %v2411 = vsub.s32 0, %v2410
        %v2412 = vrot.slane %v2334, %v2411
        %v2418 = vunpack.c.l.b16 %v2330
        %v2419 = vunpack.c.l.b16 %v2331
        %v2420 = vunpack.c.l.b16 %v2332
        %v2421 = vunpack.c.l.b16 %v2333
        %v2422 = vpack.c.b16 %v2419, %v2418
        %v2423 = vpack.c.b16 %v2421, %v2420
        %v2427 = vsel %vm1585, %v2407, 0
        %2429 = vmatprep.subr.bf16.mxu0 0
        %2430 = vmatpush1.bf16.msra.mxu0 0
        %2431 = vmatprep.subr.bf16.mxu0 0
        %2432 = vmatpush1.bf16.msra.mxu0 0
        %2433 = vmatprep.subr.bf16.mxu0 0
        %2434 = vmatpush1.bf16.msra.mxu0 0
        %2435 = vmatprep.subr.bf16.mxu0 0
        %2436 = vmatpush1.bf16.msra.mxu0 0
        %2437 = vmatprep.subr.bf16.mxu0 0
        %2438 = vmatpush1.bf16.msra.mxu0 0
        %2439 = vmatprep.subr.bf16.mxu0 0
        %2440 = vmatpush1.bf16.msra.mxu0 0
        %2441 = vmatprep.subr.bf16.mxu0 0
        %2442 = vmatpush1.bf16.msra.mxu0 %v2423
        %2443 = vmatprep.subr.bf16.mxu0 0
        %2444 = vmatpush1.bf16.msra.mxu0 %v2422
        %2445 = vmatprep.subr.bf16.mxu0 0
        %2446 = vmatpush2.bf16.msra.mxu0 0
        %2447 = vmatprep.subr.bf16.mxu0 0
        %2448 = vmatpush2.bf16.msra.mxu0 0
        %2449 = vmatprep.subr.bf16.mxu0 0
        %2450 = vmatpush2.bf16.msra.mxu0 0
        %2451 = vmatprep.subr.bf16.mxu0 0
        %2452 = vmatpush2.bf16.msra.mxu0 0
        %2453 = vmatprep.subr.bf16.mxu0 0
        %2454 = vmatpush2.bf16.msra.mxu0 0
        %2455 = vmatprep.subr.bf16.mxu0 0
        %2456 = vmatpush2.bf16.msra.mxu0 0
        %2457 = vmatprep.subr.bf16.mxu0 0
        %2458 = vmatpush2.bf16.msra.mxu0 0
        %2459 = vmatprep.subr.bf16.mxu0 0
        %2460 = vmatpush2.bf16.msra.mxu0 0
        %2461 = vmatprep.mubr.bf16.mxu0 0
        %2462 = vmatmul.mubr.bf16.gmra.mxu0 %v2427
        %v2463 = vpop.f32.mrf.mxu0
        %v2464 = vadd.f32 %v2412, %v2463
        %v2465 = vpop.f32.mrf.mxu0
        %v2466 = vpop.f32.mrf.mxu0
        %v2467 = vpop.f32.mrf.mxu0
        %2468 = vdwg.mxu0
        %v2470 = vlaneseq
        %v2471 = vshrl.u32 %v2470, 7
        %v2472 = vsub.s32 0, %v2471
        %v2473 = vrot.slane %v2339, %v2472
        %v2479 = vunpack.c.l.b16 %v2335
        %v2480 = vunpack.c.l.b16 %v2336
        %v2481 = vunpack.c.l.b16 %v2337
        %v2482 = vunpack.c.l.b16 %v2338
        %v2483 = vpack.c.b16 %v2480, %v2479
        %v2484 = vpack.c.b16 %v2482, %v2481
        %2487 = vmatprep.subr.bf16.mxu0 0
        %2488 = vmatpush1.bf16.msra.mxu0 0
        %2489 = vmatprep.subr.bf16.mxu0 0
        %2490 = vmatpush1.bf16.msra.mxu0 0
        %2491 = vmatprep.subr.bf16.mxu0 0
        %2492 = vmatpush1.bf16.msra.mxu0 0
        %2493 = vmatprep.subr.bf16.mxu0 0
        %2494 = vmatpush1.bf16.msra.mxu0 0
        %2495 = vmatprep.subr.bf16.mxu0 0
        %2496 = vmatpush1.bf16.msra.mxu0 0
        %2497 = vmatprep.subr.bf16.mxu0 0
        %2498 = vmatpush1.bf16.msra.mxu0 0
        %2499 = vmatprep.subr.bf16.mxu0 0
        %2500 = vmatpush1.bf16.msra.mxu0 %v2484
        %2501 = vmatprep.subr.bf16.mxu0 0
        %2502 = vmatpush1.bf16.msra.mxu0 %v2483
        %2503 = vmatprep.subr.bf16.mxu0 0
        %2504 = vmatpush2.bf16.msra.mxu0 0
        %2505 = vmatprep.subr.bf16.mxu0 0
        %2506 = vmatpush2.bf16.msra.mxu0 0
        %2507 = vmatprep.subr.bf16.mxu0 0
        %2508 = vmatpush2.bf16.msra.mxu0 0
        %2509 = vmatprep.subr.bf16.mxu0 0
        %2510 = vmatpush2.bf16.msra.mxu0 0
        %2511 = vmatprep.subr.bf16.mxu0 0
        %2512 = vmatpush2.bf16.msra.mxu0 0
        %2513 = vmatprep.subr.bf16.mxu0 0
        %2514 = vmatpush2.bf16.msra.mxu0 0
        %2515 = vmatprep.subr.bf16.mxu0 0
        %2516 = vmatpush2.bf16.msra.mxu0 0
        %2517 = vmatprep.subr.bf16.mxu0 0
        %2518 = vmatpush2.bf16.msra.mxu0 0
        %2519 = vmatprep.mubr.bf16.mxu0 0
        %2520 = vmatmul.mubr.bf16.gmra.mxu0 %v2427
        %v2521 = vpop.f32.mrf.mxu0
        %v2522 = vadd.f32 %v2473, %v2521
        %v2523 = vpop.f32.mrf.mxu0
        %v2524 = vpop.f32.mrf.mxu0
        %v2525 = vpop.f32.mrf.mxu0
        %2526 = vdwg.mxu0
        %2528 = vrot.lane.b32.xlu0 %v2402, 120
        %v2529 = vpop.permute.xlu0 %2528
        %2531 = vrot.lane.b32.xlu0 %v2402, 112
        %v2532 = vpop.permute.xlu0 %2531
        %2534 = vrot.lane.b32.xlu0 %v2402, 104
        %v2535 = vpop.permute.xlu0 %2534
        %2538 = vrot.lane.b32.xlu0 %v2464, 120
        %v2539 = vpop.permute.xlu0 %2538
        %2541 = vrot.lane.b32.xlu0 %v2464, 112
        %v2542 = vpop.permute.xlu0 %2541
        %2544 = vrot.lane.b32.xlu0 %v2464, 104
        %v2545 = vpop.permute.xlu0 %2544
        %2548 = vrot.lane.b32.xlu0 %v2522, 120
        %v2549 = vpop.permute.xlu0 %2548
        %2551 = vrot.lane.b32.xlu0 %v2522, 112
        %v2552 = vpop.permute.xlu0 %2551
        %2554 = vrot.lane.b32.xlu0 %v2522, 104
        %v2555 = vpop.permute.xlu0 %2554
        %v2557 = vpack.c.bf16 %v2402, %v2402
        %v2558 = vpack.c.bf16 %v2529, %v2529
        %v2559 = vpack.c.bf16 %v2532, %v2532
        %v2560 = vpack.c.bf16 %v2535, %v2535
        %v2561 = vpack.c.bf16 %v2464, %v2464
        %v2562 = vpack.c.bf16 %v2539, %v2539
        %v2563 = vpack.c.bf16 %v2542, %v2542
        %v2564 = vpack.c.bf16 %v2545, %v2545
        %v2565 = vpack.c.bf16 %v2522, %v2522
        %v2566 = vpack.c.bf16 %v2549, %v2549
        %v2567 = vpack.c.bf16 %v2552, %v2552
        %v2568 = vpack.c.bf16 %v2555, %v2555
        %v2570 = vsel %vm1787, %v2557, 0
        %v2573 = vsel %vm1787, %v2561, 0
        %2575 = vmatprep.subr.bf16.mxu0 0
        %2576 = vmatpush1.bf16.xpose.msra.mxu0 0
        %2577 = vmatprep.subr.bf16.mxu0 0
        %2578 = vmatpush1.bf16.xpose.msra.mxu0 0
        %2579 = vmatprep.subr.bf16.mxu0 0
        %2580 = vmatpush1.bf16.xpose.msra.mxu0 0
        %2581 = vmatprep.subr.bf16.mxu0 0
        %2582 = vmatpush1.bf16.xpose.msra.mxu0 0
        %2583 = vmatprep.subr.bf16.mxu0 0
        %2584 = vmatpush1.bf16.xpose.msra.mxu0 0
        %2585 = vmatprep.subr.bf16.mxu0 0
        %2586 = vmatpush1.bf16.xpose.msra.mxu0 0
        %2587 = vmatprep.subr.bf16.mxu0 0
        %2588 = vmatpush1.bf16.xpose.msra.mxu0 0
        %2589 = vmatprep.subr.bf16.mxu0 0
        %2590 = vmatpush1.bf16.xpose.msra.mxu0 %v2573
        %2591 = vmatprep.subr.bf16.mxu0 0
        %2592 = vmatpush2.bf16.xpose.msra.mxu0 0
        %2593 = vmatprep.subr.bf16.mxu0 0
        %2594 = vmatpush2.bf16.xpose.msra.mxu0 0
        %2595 = vmatprep.subr.bf16.mxu0 0
        %2596 = vmatpush2.bf16.xpose.msra.mxu0 0
        %2597 = vmatprep.subr.bf16.mxu0 0
        %2598 = vmatpush2.bf16.xpose.msra.mxu0 0
        %2599 = vmatprep.subr.bf16.mxu0 0
        %2600 = vmatpush2.bf16.xpose.msra.mxu0 0
        %2601 = vmatprep.subr.bf16.mxu0 0
        %2602 = vmatpush2.bf16.xpose.msra.mxu0 0
        %2603 = vmatprep.subr.bf16.mxu0 0
        %2604 = vmatpush2.bf16.xpose.msra.mxu0 0
        %2605 = vmatprep.subr.bf16.mxu0 0
        %2606 = vmatpush2.bf16.xpose.msra.mxu0 0
        %2607 = vmatprep.mubr.bf16.mxu0 0
        %2608 = vmatmul.mubr.bf16.gmra.mxu0 %v2570
        %v2609 = vpop.f32.mrf.mxu0
        %v2610 = vadd.f32 0.0, %v2609
        %v2611 = vpop.f32.mrf.mxu0
        %v2612 = vpop.f32.mrf.mxu0
        %v2613 = vpop.f32.mrf.mxu0
        %2614 = vdwg.mxu0
        %v2616 = vsel %vm1787, %v2558, 0
        %v2619 = vsel %vm1787, %v2562, 0
        %2621 = vmatprep.subr.bf16.mxu0 0
        %2622 = vmatpush1.bf16.xpose.msra.mxu0 0
        %2623 = vmatprep.subr.bf16.mxu0 0
        %2624 = vmatpush1.bf16.xpose.msra.mxu0 0
        %2625 = vmatprep.subr.bf16.mxu0 0
        %2626 = vmatpush1.bf16.xpose.msra.mxu0 0
        %2627 = vmatprep.subr.bf16.mxu0 0
        %2628 = vmatpush1.bf16.xpose.msra.mxu0 0
        %2629 = vmatprep.subr.bf16.mxu0 0
        %2630 = vmatpush1.bf16.xpose.msra.mxu0 0
        %2631 = vmatprep.subr.bf16.mxu0 0
        %2632 = vmatpush1.bf16.xpose.msra.mxu0 0
        %2633 = vmatprep.subr.bf16.mxu0 0
        %2634 = vmatpush1.bf16.xpose.msra.mxu0 0
        %2635 = vmatprep.subr.bf16.mxu0 0
        %2636 = vmatpush1.bf16.xpose.msra.mxu0 %v2619
        %2637 = vmatprep.subr.bf16.mxu0 0
        %2638 = vmatpush2.bf16.xpose.msra.mxu0 0
        %2639 = vmatprep.subr.bf16.mxu0 0
        %2640 = vmatpush2.bf16.xpose.msra.mxu0 0
        %2641 = vmatprep.subr.bf16.mxu0 0
        %2642 = vmatpush2.bf16.xpose.msra.mxu0 0
        %2643 = vmatprep.subr.bf16.mxu0 0
        %2644 = vmatpush2.bf16.xpose.msra.mxu0 0
        %2645 = vmatprep.subr.bf16.mxu0 0
        %2646 = vmatpush2.bf16.xpose.msra.mxu0 0
        %2647 = vmatprep.subr.bf16.mxu0 0
        %2648 = vmatpush2.bf16.xpose.msra.mxu0 0
        %2649 = vmatprep.subr.bf16.mxu0 0
        %2650 = vmatpush2.bf16.xpose.msra.mxu0 0
        %2651 = vmatprep.subr.bf16.mxu0 0
        %2652 = vmatpush2.bf16.xpose.msra.mxu0 0
        %2653 = vmatprep.mubr.bf16.mxu0 0
        %2654 = vmatmul.mubr.bf16.gmra.mxu0 %v2616
        %v2655 = vpop.f32.mrf.mxu0
        %v2656 = vadd.f32 0.0, %v2655
        %v2657 = vpop.f32.mrf.mxu0
        %v2658 = vpop.f32.mrf.mxu0
        %v2659 = vpop.f32.mrf.mxu0
        %2660 = vdwg.mxu0
        %v2662 = vsel %vm1787, %v2559, 0
        %v2665 = vsel %vm1787, %v2563, 0
        %2667 = vmatprep.subr.bf16.mxu0 0
        %2668 = vmatpush1.bf16.xpose.msra.mxu0 0
        %2669 = vmatprep.subr.bf16.mxu0 0
        %2670 = vmatpush1.bf16.xpose.msra.mxu0 0
        %2671 = vmatprep.subr.bf16.mxu0 0
        %2672 = vmatpush1.bf16.xpose.msra.mxu0 0
        %2673 = vmatprep.subr.bf16.mxu0 0
        %2674 = vmatpush1.bf16.xpose.msra.mxu0 0
        %2675 = vmatprep.subr.bf16.mxu0 0
        %2676 = vmatpush1.bf16.xpose.msra.mxu0 0
        %2677 = vmatprep.subr.bf16.mxu0 0
        %2678 = vmatpush1.bf16.xpose.msra.mxu0 0
        %2679 = vmatprep.subr.bf16.mxu0 0
        %2680 = vmatpush1.bf16.xpose.msra.mxu0 0
        %2681 = vmatprep.subr.bf16.mxu0 0
        %2682 = vmatpush1.bf16.xpose.msra.mxu0 %v2665
        %2683 = vmatprep.subr.bf16.mxu0 0
        %2684 = vmatpush2.bf16.xpose.msra.mxu0 0
        %2685 = vmatprep.subr.bf16.mxu0 0
        %2686 = vmatpush2.bf16.xpose.msra.mxu0 0
        %2687 = vmatprep.subr.bf16.mxu0 0
        %2688 = vmatpush2.bf16.xpose.msra.mxu0 0
        %2689 = vmatprep.subr.bf16.mxu0 0
        %2690 = vmatpush2.bf16.xpose.msra.mxu0 0
        %2691 = vmatprep.subr.bf16.mxu0 0
        %2692 = vmatpush2.bf16.xpose.msra.mxu0 0
        %2693 = vmatprep.subr.bf16.mxu0 0
        %2694 = vmatpush2.bf16.xpose.msra.mxu0 0
        %2695 = vmatprep.subr.bf16.mxu0 0
        %2696 = vmatpush2.bf16.xpose.msra.mxu0 0
        %2697 = vmatprep.subr.bf16.mxu0 0
        %2698 = vmatpush2.bf16.xpose.msra.mxu0 0
        %2699 = vmatprep.mubr.bf16.mxu0 0
        %2700 = vmatmul.mubr.bf16.gmra.mxu0 %v2662
        %v2701 = vpop.f32.mrf.mxu0
        %v2702 = vadd.f32 0.0, %v2701
        %v2703 = vpop.f32.mrf.mxu0
        %v2704 = vpop.f32.mrf.mxu0
        %v2705 = vpop.f32.mrf.mxu0
        %2706 = vdwg.mxu0
        %v2708 = vsel %vm1787, %v2560, 0
        %v2711 = vsel %vm1787, %v2564, 0
        %2713 = vmatprep.subr.bf16.mxu0 0
        %2714 = vmatpush1.bf16.xpose.msra.mxu0 0
        %2715 = vmatprep.subr.bf16.mxu0 0
        %2716 = vmatpush1.bf16.xpose.msra.mxu0 0
        %2717 = vmatprep.subr.bf16.mxu0 0
        %2718 = vmatpush1.bf16.xpose.msra.mxu0 0
        %2719 = vmatprep.subr.bf16.mxu0 0
        %2720 = vmatpush1.bf16.xpose.msra.mxu0 0
        %2721 = vmatprep.subr.bf16.mxu0 0
        %2722 = vmatpush1.bf16.xpose.msra.mxu0 0
        %2723 = vmatprep.subr.bf16.mxu0 0
        %2724 = vmatpush1.bf16.xpose.msra.mxu0 0
        %2725 = vmatprep.subr.bf16.mxu0 0
        %2726 = vmatpush1.bf16.xpose.msra.mxu0 0
        %2727 = vmatprep.subr.bf16.mxu0 0
        %2728 = vmatpush1.bf16.xpose.msra.mxu0 %v2711
        %2729 = vmatprep.subr.bf16.mxu0 0
        %2730 = vmatpush2.bf16.xpose.msra.mxu0 0
        %2731 = vmatprep.subr.bf16.mxu0 0
        %2732 = vmatpush2.bf16.xpose.msra.mxu0 0
        %2733 = vmatprep.subr.bf16.mxu0 0
        %2734 = vmatpush2.bf16.xpose.msra.mxu0 0
        %2735 = vmatprep.subr.bf16.mxu0 0
        %2736 = vmatpush2.bf16.xpose.msra.mxu0 0
        %2737 = vmatprep.subr.bf16.mxu0 0
        %2738 = vmatpush2.bf16.xpose.msra.mxu0 0
        %2739 = vmatprep.subr.bf16.mxu0 0
        %2740 = vmatpush2.bf16.xpose.msra.mxu0 0
        %2741 = vmatprep.subr.bf16.mxu0 0
        %2742 = vmatpush2.bf16.xpose.msra.mxu0 0
        %2743 = vmatprep.subr.bf16.mxu0 0
        %2744 = vmatpush2.bf16.xpose.msra.mxu0 0
        %2745 = vmatprep.mubr.bf16.mxu0 0
        %2746 = vmatmul.mubr.bf16.gmra.mxu0 %v2708
        %v2747 = vpop.f32.mrf.mxu0
        %v2748 = vadd.f32 0.0, %v2747
        %v2749 = vpop.f32.mrf.mxu0
        %v2750 = vpop.f32.mrf.mxu0
        %v2751 = vpop.f32.mrf.mxu0
        %2752 = vdwg.mxu0
        %v2753 = vmul.f32 %v2610, 0.35355338
        %v2754 = vmul.f32 %v2656, 0.35355338
        %v2755 = vmul.f32 %v2702, 0.35355338
        %v2756 = vmul.f32 %v2748, 0.35355338
        %v2757 = vsel %vm1545, 1, 0
        %v2758 = vlaneseq
        %v2759 = vshrl.u32 %v2758, 7
        %v2760 = vsub.s32 0, %v2759
        %v2761 = vrot.slane %v2757, %v2760
        %vm2762 = vcmp.eq.s32.totalorder %v2761, 1
        %v2763 = vsel %vm2762, %v2753, -1e+30
        %v2764 = vsel %vm2762, %v2754, -1e+30
        %v2765 = vsel %vm2762, %v2755, -1e+30
        %v2766 = vsel %vm2762, %v2756, -1e+30
        %v2767 = vsel %vm1787, %v2763, -inf
        %2768 = vmax.xlane.f32.xlu0 %v2767
        %v2769 = vpop.xlane.xlu0 %2768
        %v2770 = vsel %vm1787, %v2764, -inf
        %2771 = vmax.xlane.f32.xlu0 %v2770
        %v2772 = vpop.xlane.xlu0 %2771
        %v2773 = vsel %vm1787, %v2765, -inf
        %2774 = vmax.xlane.f32.xlu0 %v2773
        %v2775 = vpop.xlane.xlu0 %2774
        %v2776 = vsel %vm1787, %v2766, -inf
        %2777 = vmax.xlane.f32.xlu0 %v2776
        %v2778 = vpop.xlane.xlu0 %2777
        %v2779 = vsub.f32 %v2763, %v2769
        %v2780 = vsub.f32 %v2764, %v2772
        %v2781 = vsub.f32 %v2765, %v2775
        %v2782 = vsub.f32 %v2766, %v2778
        %v2783 = vmul.f32 %v2779, 1.442695
        %v2784 = vpow.pop %v2783
        %v2785 = vmul.f32 %v2780, 1.442695
        %v2786 = vpow.pop %v2785
        %v2787 = vmul.f32 %v2781, 1.442695
        %v2788 = vpow.pop %v2787
        %v2789 = vmul.f32 %v2782, 1.442695
        %v2790 = vpow.pop %v2789
        %v2791 = vsel %vm1787, %v2784, 0.0
        %2792 = vadd.xlane.f32.xlu0 %v2791
        %v2793 = vpop.xlane.xlu0 %2792
        %v2794 = vsel %vm1787, %v2786, 0.0
        %2795 = vadd.xlane.f32.xlu0 %v2794
        %v2796 = vpop.xlane.xlu0 %2795
        %v2797 = vsel %vm1787, %v2788, 0.0
        %2798 = vadd.xlane.f32.xlu0 %v2797
        %v2799 = vpop.xlane.xlu0 %2798
        %v2800 = vsel %vm1787, %v2790, 0.0
        %2801 = vadd.xlane.f32.xlu0 %v2800
        %v2802 = vpop.xlane.xlu0 %2801
        %v2803 = vrcp.pop %v2793
        %v2804 = vrcp.pop %v2796
        %v2805 = vrcp.pop %v2799
        %v2806 = vrcp.pop %v2802
        %v2807 = vmul.f32 %v2784, %v2803
        %v2808 = vmul.f32 %v2786, %v2804
        %v2809 = vmul.f32 %v2788, %v2805
        %v2810 = vmul.f32 %v2790, %v2806
        %v2811 = vpack.c.bf16 %v2807, %v2807
        %v2812 = vpack.c.bf16 %v2808, %v2808
        %v2813 = vpack.c.bf16 %v2809, %v2809
        %v2814 = vpack.c.bf16 %v2810, %v2810
        %v2816 = vsel %vm1787, %v2811, 0
        %v2819 = vsel %vm2033, %v2565, 0
        %2821 = vmatprep.subr.bf16.mxu0 0
        %2822 = vmatpush1.bf16.msra.mxu0 0
        %2823 = vmatprep.subr.bf16.mxu0 0
        %2824 = vmatpush1.bf16.msra.mxu0 0
        %2825 = vmatprep.subr.bf16.mxu0 0
        %2826 = vmatpush1.bf16.msra.mxu0 0
        %2827 = vmatprep.subr.bf16.mxu0 0
        %2828 = vmatpush1.bf16.msra.mxu0 0
        %2829 = vmatprep.subr.bf16.mxu0 0
        %2830 = vmatpush1.bf16.msra.mxu0 0
        %2831 = vmatprep.subr.bf16.mxu0 0
        %2832 = vmatpush1.bf16.msra.mxu0 0
        %2833 = vmatprep.subr.bf16.mxu0 0
        %2834 = vmatpush1.bf16.msra.mxu0 0
        %2835 = vmatprep.subr.bf16.mxu0 0
        %2836 = vmatpush1.bf16.msra.mxu0 %v2819
        %2837 = vmatprep.subr.bf16.mxu0 0
        %2838 = vmatpush2.bf16.msra.mxu0 0
        %2839 = vmatprep.subr.bf16.mxu0 0
        %2840 = vmatpush2.bf16.msra.mxu0 0
        %2841 = vmatprep.subr.bf16.mxu0 0
        %2842 = vmatpush2.bf16.msra.mxu0 0
        %2843 = vmatprep.subr.bf16.mxu0 0
        %2844 = vmatpush2.bf16.msra.mxu0 0
        %2845 = vmatprep.subr.bf16.mxu0 0
        %2846 = vmatpush2.bf16.msra.mxu0 0
        %2847 = vmatprep.subr.bf16.mxu0 0
        %2848 = vmatpush2.bf16.msra.mxu0 0
        %2849 = vmatprep.subr.bf16.mxu0 0
        %2850 = vmatpush2.bf16.msra.mxu0 0
        %2851 = vmatprep.subr.bf16.mxu0 0
        %2852 = vmatpush2.bf16.msra.mxu0 0
        %2853 = vmatprep.mubr.bf16.mxu0 0
        %2854 = vmatmul.mubr.bf16.gmra.mxu0 %v2816
        %v2855 = vpop.f32.mrf.mxu0
        %v2856 = vadd.f32 0.0, %v2855
        %v2857 = vpop.f32.mrf.mxu0
        %v2858 = vpop.f32.mrf.mxu0
        %v2859 = vpop.f32.mrf.mxu0
        %2860 = vdwg.mxu0
        %v2862 = vsel %vm1787, %v2812, 0
        %v2865 = vsel %vm2033, %v2566, 0
        %2867 = vmatprep.subr.bf16.mxu0 0
        %2868 = vmatpush1.bf16.msra.mxu0 0
        %2869 = vmatprep.subr.bf16.mxu0 0
        %2870 = vmatpush1.bf16.msra.mxu0 0
        %2871 = vmatprep.subr.bf16.mxu0 0
        %2872 = vmatpush1.bf16.msra.mxu0 0
        %2873 = vmatprep.subr.bf16.mxu0 0
        %2874 = vmatpush1.bf16.msra.mxu0 0
        %2875 = vmatprep.subr.bf16.mxu0 0
        %2876 = vmatpush1.bf16.msra.mxu0 0
        %2877 = vmatprep.subr.bf16.mxu0 0
        %2878 = vmatpush1.bf16.msra.mxu0 0
        %2879 = vmatprep.subr.bf16.mxu0 0
        %2880 = vmatpush1.bf16.msra.mxu0 0
        %2881 = vmatprep.subr.bf16.mxu0 0
        %2882 = vmatpush1.bf16.msra.mxu0 %v2865
        %2883 = vmatprep.subr.bf16.mxu0 0
        %2884 = vmatpush2.bf16.msra.mxu0 0
        %2885 = vmatprep.subr.bf16.mxu0 0
        %2886 = vmatpush2.bf16.msra.mxu0 0
        %2887 = vmatprep.subr.bf16.mxu0 0
        %2888 = vmatpush2.bf16.msra.mxu0 0
        %2889 = vmatprep.subr.bf16.mxu0 0
        %2890 = vmatpush2.bf16.msra.mxu0 0
        %2891 = vmatprep.subr.bf16.mxu0 0
        %2892 = vmatpush2.bf16.msra.mxu0 0
        %2893 = vmatprep.subr.bf16.mxu0 0
        %2894 = vmatpush2.bf16.msra.mxu0 0
        %2895 = vmatprep.subr.bf16.mxu0 0
        %2896 = vmatpush2.bf16.msra.mxu0 0
        %2897 = vmatprep.subr.bf16.mxu0 0
        %2898 = vmatpush2.bf16.msra.mxu0 0
        %2899 = vmatprep.mubr.bf16.mxu0 0
        %2900 = vmatmul.mubr.bf16.gmra.mxu0 %v2862
        %v2901 = vpop.f32.mrf.mxu0
        %v2902 = vadd.f32 0.0, %v2901
        %v2903 = vpop.f32.mrf.mxu0
        %v2904 = vpop.f32.mrf.mxu0
        %v2905 = vpop.f32.mrf.mxu0
        %2906 = vdwg.mxu0
        %v2908 = vsel %vm1787, %v2813, 0
        %v2911 = vsel %vm2033, %v2567, 0
        %2913 = vmatprep.subr.bf16.mxu0 0
        %2914 = vmatpush1.bf16.msra.mxu0 0
        %2915 = vmatprep.subr.bf16.mxu0 0
        %2916 = vmatpush1.bf16.msra.mxu0 0
        %2917 = vmatprep.subr.bf16.mxu0 0
        %2918 = vmatpush1.bf16.msra.mxu0 0
        %2919 = vmatprep.subr.bf16.mxu0 0
        %2920 = vmatpush1.bf16.msra.mxu0 0
        %2921 = vmatprep.subr.bf16.mxu0 0
        %2922 = vmatpush1.bf16.msra.mxu0 0
        %2923 = vmatprep.subr.bf16.mxu0 0
        %2924 = vmatpush1.bf16.msra.mxu0 0
        %2925 = vmatprep.subr.bf16.mxu0 0
        %2926 = vmatpush1.bf16.msra.mxu0 0
        %2927 = vmatprep.subr.bf16.mxu0 0
        %2928 = vmatpush1.bf16.msra.mxu0 %v2911
        %2929 = vmatprep.subr.bf16.mxu0 0
        %2930 = vmatpush2.bf16.msra.mxu0 0
        %2931 = vmatprep.subr.bf16.mxu0 0
        %2932 = vmatpush2.bf16.msra.mxu0 0
        %2933 = vmatprep.subr.bf16.mxu0 0
        %2934 = vmatpush2.bf16.msra.mxu0 0
        %2935 = vmatprep.subr.bf16.mxu0 0
        %2936 = vmatpush2.bf16.msra.mxu0 0
        %2937 = vmatprep.subr.bf16.mxu0 0
        %2938 = vmatpush2.bf16.msra.mxu0 0
        %2939 = vmatprep.subr.bf16.mxu0 0
        %2940 = vmatpush2.bf16.msra.mxu0 0
        %2941 = vmatprep.subr.bf16.mxu0 0
        %2942 = vmatpush2.bf16.msra.mxu0 0
        %2943 = vmatprep.subr.bf16.mxu0 0
        %2944 = vmatpush2.bf16.msra.mxu0 0
        %2945 = vmatprep.mubr.bf16.mxu0 0
        %2946 = vmatmul.mubr.bf16.gmra.mxu0 %v2908
        %v2947 = vpop.f32.mrf.mxu0
        %v2948 = vadd.f32 0.0, %v2947
        %v2949 = vpop.f32.mrf.mxu0
        %v2950 = vpop.f32.mrf.mxu0
        %v2951 = vpop.f32.mrf.mxu0
        %2952 = vdwg.mxu0
        %v2954 = vsel %vm1787, %v2814, 0
        %v2957 = vsel %vm2033, %v2568, 0
        %2959 = vmatprep.subr.bf16.mxu0 0
        %2960 = vmatpush1.bf16.msra.mxu0 0
        %2961 = vmatprep.subr.bf16.mxu0 0
        %2962 = vmatpush1.bf16.msra.mxu0 0
        %2963 = vmatprep.subr.bf16.mxu0 0
        %2964 = vmatpush1.bf16.msra.mxu0 0
        %2965 = vmatprep.subr.bf16.mxu0 0
        %2966 = vmatpush1.bf16.msra.mxu0 0
        %2967 = vmatprep.subr.bf16.mxu0 0
        %2968 = vmatpush1.bf16.msra.mxu0 0
        %2969 = vmatprep.subr.bf16.mxu0 0
        %2970 = vmatpush1.bf16.msra.mxu0 0
        %2971 = vmatprep.subr.bf16.mxu0 0
        %2972 = vmatpush1.bf16.msra.mxu0 0
        %2973 = vmatprep.subr.bf16.mxu0 0
        %2974 = vmatpush1.bf16.msra.mxu0 %v2957
        %2975 = vmatprep.subr.bf16.mxu0 0
        %2976 = vmatpush2.bf16.msra.mxu0 0
        %2977 = vmatprep.subr.bf16.mxu0 0
        %2978 = vmatpush2.bf16.msra.mxu0 0
        %2979 = vmatprep.subr.bf16.mxu0 0
        %2980 = vmatpush2.bf16.msra.mxu0 0
        %2981 = vmatprep.subr.bf16.mxu0 0
        %2982 = vmatpush2.bf16.msra.mxu0 0
        %2983 = vmatprep.subr.bf16.mxu0 0
        %2984 = vmatpush2.bf16.msra.mxu0 0
        %2985 = vmatprep.subr.bf16.mxu0 0
        %2986 = vmatpush2.bf16.msra.mxu0 0
        %2987 = vmatprep.subr.bf16.mxu0 0
        %2988 = vmatpush2.bf16.msra.mxu0 0
        %2989 = vmatprep.subr.bf16.mxu0 0
        %2990 = vmatpush2.bf16.msra.mxu0 0
        %2991 = vmatprep.mubr.bf16.mxu0 0
        %2992 = vmatmul.mubr.bf16.gmra.mxu0 %v2954
        %v2993 = vpop.f32.mrf.mxu0
        %v2994 = vadd.f32 0.0, %v2993
        %v2995 = vpop.f32.mrf.mxu0
        %v2996 = vpop.f32.mrf.mxu0
        %v2997 = vpop.f32.mrf.mxu0
        %2998 = vdwg.mxu0
        %3000 = vrot.lane.b32.xlu0 %v2902, 8
        %v3001 = vpop.permute.xlu0 %3000
        %3004 = vrot.lane.b32.xlu0 %v2948, 16
        %v3005 = vpop.permute.xlu0 %3004
        %3008 = vrot.lane.b32.xlu0 %v2994, 24
        %v3009 = vpop.permute.xlu0 %3008
        %v3011 = vsel %vm1787, %v2856, %v3001
        %v3012 = vsel %vm2228, %v3011, %v3005
        %v3013 = vsel %vm2230, %v3012, %v3009
        %v3014 = vpack.c.bf16 %v3013, %v3013
        %v3016 = vlaneseq
        %v3017 = vshrl.u32 %v3016, 7
        %v3018 = vsub.s32 0, %v3017
        %v3019 = vrot.slane %v2344, %v3018
        %v3025 = vunpack.c.l.b16 %v2340
        %v3026 = vunpack.c.l.b16 %v2341
        %v3027 = vunpack.c.l.b16 %v2342
        %v3028 = vunpack.c.l.b16 %v2343
        %v3029 = vpack.c.b16 %v3026, %v3025
        %v3030 = vpack.c.b16 %v3028, %v3027
        %v3034 = vsel %vm1585, %v3014, 0
        %3036 = vmatprep.subr.bf16.mxu0 0
        %3037 = vmatpush1.bf16.msra.mxu0 0
        %3038 = vmatprep.subr.bf16.mxu0 0
        %3039 = vmatpush1.bf16.msra.mxu0 0
        %3040 = vmatprep.subr.bf16.mxu0 0
        %3041 = vmatpush1.bf16.msra.mxu0 0
        %3042 = vmatprep.subr.bf16.mxu0 0
        %3043 = vmatpush1.bf16.msra.mxu0 0
        %3044 = vmatprep.subr.bf16.mxu0 0
        %3045 = vmatpush1.bf16.msra.mxu0 0
        %3046 = vmatprep.subr.bf16.mxu0 0
        %3047 = vmatpush1.bf16.msra.mxu0 0
        %3048 = vmatprep.subr.bf16.mxu0 0
        %3049 = vmatpush1.bf16.msra.mxu0 %v3030
        %3050 = vmatprep.subr.bf16.mxu0 0
        %3051 = vmatpush1.bf16.msra.mxu0 %v3029
        %3052 = vmatprep.subr.bf16.mxu0 0
        %3053 = vmatpush2.bf16.msra.mxu0 0
        %3054 = vmatprep.subr.bf16.mxu0 0
        %3055 = vmatpush2.bf16.msra.mxu0 0
        %3056 = vmatprep.subr.bf16.mxu0 0
        %3057 = vmatpush2.bf16.msra.mxu0 0
        %3058 = vmatprep.subr.bf16.mxu0 0
        %3059 = vmatpush2.bf16.msra.mxu0 0
        %3060 = vmatprep.subr.bf16.mxu0 0
        %3061 = vmatpush2.bf16.msra.mxu0 0
        %3062 = vmatprep.subr.bf16.mxu0 0
        %3063 = vmatpush2.bf16.msra.mxu0 0
        %3064 = vmatprep.subr.bf16.mxu0 0
        %3065 = vmatpush2.bf16.msra.mxu0 0
        %3066 = vmatprep.subr.bf16.mxu0 0
        %3067 = vmatpush2.bf16.msra.mxu0 0
        %3068 = vmatprep.mubr.bf16.mxu0 0
        %3069 = vmatmul.mubr.bf16.gmra.mxu0 %v3034
        %v3070 = vpop.f32.mrf.mxu0
        %v3071 = vadd.f32 %v3019, %v3070
        %v3072 = vpop.f32.mrf.mxu0
        %v3073 = vpop.f32.mrf.mxu0
        %v3074 = vpop.f32.mrf.mxu0
        %3075 = vdwg.mxu0
        %v3076 = vadd.f32 %v2324, %v3071
        %v3077 = vld [vmem:[%s1503] sm:$0x1]
        %v3078 = vld [vmem:[%s1506] sm:$0x1]
        %v3079 = vsel %vm1585, %v3076, 0.0
        %3080 = vadd.xlane.f32.xlu0 %v3079
        %v3081 = vpop.xlane.xlu0 %3080
        %v3082 = vmul.f32 %v3081, %v2300
        %v3083 = vsub.f32 %v3076, %v3082
        %v3084 = vmul.f32 %v3083, %v3083
        %v3085 = vsel %vm1585, %v3084, 0.0
        %3086 = vadd.xlane.f32.xlu0 %v3085
        %v3087 = vpop.xlane.xlu0 %3086
        %v3088 = vmul.f32 %v3087, %v2300
        %v3089 = vadd.f32 %v3088, 1e-05
        %v3090 = vrsqrt.pop %v3089
        %v3091 = vmul.f32 %v3083, %v3090
        %v3093 = vlaneseq
        %v3094 = vshrl.u32 %v3093, 7
        %v3095 = vsub.s32 0, %v3094
        %v3096 = vrot.slane %v3077, %v3095
        %v3098 = vmul.f32 %v3091, %v3096
        %v3100 = vlaneseq
        %v3101 = vshrl.u32 %v3100, 7
        %v3102 = vsub.s32 0, %v3101
        %v3103 = vrot.slane %v3078, %v3102
        %v3105 = vadd.f32 %v3098, %v3103
        %v3106 = vld [vmem:[%s1511] sm:$0xf]
        %v3107 = vld [vmem:[%s1511 + $0x4] sm:$0xf]
        %v3108 = vld [vmem:[%s1511 + $0x8] sm:$0xf]
        %v3109 = vld [vmem:[%s1511 + $0xc] sm:$0xf]
        %v3110 = vld [vmem:[%s1514] sm:$0x1]
        %v3111 = vld [vmem:[%s1519] sm:$0xf]
        %v3112 = vld [vmem:[%s1519 + $0x4] sm:$0xf]
        %v3113 = vld [vmem:[%s1519 + $0x8] sm:$0xf]
        %v3114 = vld [vmem:[%s1519 + $0xc] sm:$0xf]
        %v3115 = vld [vmem:[%s1519 + $0x10] sm:$0xf]
        %v3116 = vld [vmem:[%s1519 + $0x14] sm:$0xf]
        %v3117 = vld [vmem:[%s1519 + $0x18] sm:$0xf]
        %v3118 = vld [vmem:[%s1519 + $0x1c] sm:$0xf]
        %v3119 = vld [vmem:[%s1210] sm:$0x1]
        %v3120 = vpack.c.bf16 %v3105, %v3105
        %v3122 = vlaneseq
        %v3123 = vshrl.u32 %v3122, 7
        %v3124 = vsub.s32 0, %v3123
        %v3125 = vrot.slane %v3110, %v3124
        %v3131 = vunpack.c.l.b16 %v3106
        %v3132 = vunpack.c.l.b16 %v3107
        %v3133 = vunpack.c.l.b16 %v3108
        %v3134 = vunpack.c.l.b16 %v3109
        %v3135 = vpack.c.b16 %v3132, %v3131
        %v3136 = vpack.c.b16 %v3134, %v3133
        %v3140 = vsel %vm1585, %v3120, 0
        %3142 = vmatprep.subr.bf16.mxu0 0
        %3143 = vmatpush1.bf16.msra.mxu0 0
        %3144 = vmatprep.subr.bf16.mxu0 0
        %3145 = vmatpush1.bf16.msra.mxu0 0
        %3146 = vmatprep.subr.bf16.mxu0 0
        %3147 = vmatpush1.bf16.msra.mxu0 0
        %3148 = vmatprep.subr.bf16.mxu0 0
        %3149 = vmatpush1.bf16.msra.mxu0 0
        %3150 = vmatprep.subr.bf16.mxu0 0
        %3151 = vmatpush1.bf16.msra.mxu0 0
        %3152 = vmatprep.subr.bf16.mxu0 0
        %3153 = vmatpush1.bf16.msra.mxu0 0
        %3154 = vmatprep.subr.bf16.mxu0 0
        %3155 = vmatpush1.bf16.msra.mxu0 %v3136
        %3156 = vmatprep.subr.bf16.mxu0 0
        %3157 = vmatpush1.bf16.msra.mxu0 %v3135
        %3158 = vmatprep.subr.bf16.mxu0 0
        %3159 = vmatpush2.bf16.msra.mxu0 0
        %3160 = vmatprep.subr.bf16.mxu0 0
        %3161 = vmatpush2.bf16.msra.mxu0 0
        %3162 = vmatprep.subr.bf16.mxu0 0
        %3163 = vmatpush2.bf16.msra.mxu0 0
        %3164 = vmatprep.subr.bf16.mxu0 0
        %3165 = vmatpush2.bf16.msra.mxu0 0
        %3166 = vmatprep.subr.bf16.mxu0 0
        %3167 = vmatpush2.bf16.msra.mxu0 0
        %3168 = vmatprep.subr.bf16.mxu0 0
        %3169 = vmatpush2.bf16.msra.mxu0 0
        %3170 = vmatprep.subr.bf16.mxu0 0
        %3171 = vmatpush2.bf16.msra.mxu0 0
        %3172 = vmatprep.subr.bf16.mxu0 0
        %3173 = vmatpush2.bf16.msra.mxu0 0
        %3174 = vmatprep.mubr.bf16.mxu0 0
        %3175 = vmatmul.mubr.bf16.gmra.mxu0 %v3140
        %v3176 = vpop.f32.mrf.mxu0
        %v3177 = vadd.f32 %v3125, %v3176
        %v3178 = vpop.f32.mrf.mxu0
        %v3179 = vpop.f32.mrf.mxu0
        %v3180 = vpop.f32.mrf.mxu0
        %3181 = vdwg.mxu0
        %v3182 = vmax.f32 %v3177, 0.0
        %v3183 = vpack.c.bf16 %v3182, %v3182
        %v3185 = vlaneseq
        %v3186 = vshrl.u32 %v3185, 7
        %v3187 = vsub.s32 0, %v3186
        %v3188 = vrot.slane %v3119, %v3187
        %v3198 = vunpack.c.l.b16 %v3111
        %v3199 = vunpack.c.l.b16 %v3112
        %v3200 = vunpack.c.l.b16 %v3113
        %v3201 = vunpack.c.l.b16 %v3114
        %v3202 = vunpack.c.l.b16 %v3115
        %v3203 = vunpack.c.l.b16 %v3116
        %v3204 = vunpack.c.l.b16 %v3117
        %v3205 = vunpack.c.l.b16 %v3118
        %v3206 = vpack.c.b16 %v3199, %v3198
        %v3207 = vpack.c.b16 %v3201, %v3200
        %v3208 = vpack.c.b16 %v3203, %v3202
        %v3209 = vpack.c.b16 %v3205, %v3204
        %vm3214 = vcmask 523264
        %v3216 = vsel %vm3214, %v3183, 0
        %3218 = vmatprep.subr.bf16.mxu0 0
        %3219 = vmatpush1.bf16.msra.mxu0 0
        %3220 = vmatprep.subr.bf16.mxu0 0
        %3221 = vmatpush1.bf16.msra.mxu0 0
        %3222 = vmatprep.subr.bf16.mxu0 0
        %3223 = vmatpush1.bf16.msra.mxu0 0
        %3224 = vmatprep.subr.bf16.mxu0 0
        %3225 = vmatpush1.bf16.msra.mxu0 0
        %3226 = vmatprep.subr.bf16.mxu0 0
        %3227 = vmatpush1.bf16.msra.mxu0 %v3209
        %3228 = vmatprep.subr.bf16.mxu0 0
        %3229 = vmatpush1.bf16.msra.mxu0 %v3208
        %3230 = vmatprep.subr.bf16.mxu0 0
        %3231 = vmatpush1.bf16.msra.mxu0 %v3207
        %3232 = vmatprep.subr.bf16.mxu0 0
        %3233 = vmatpush1.bf16.msra.mxu0 %v3206
        %3234 = vmatprep.subr.bf16.mxu0 0
        %3235 = vmatpush2.bf16.msra.mxu0 0
        %3236 = vmatprep.subr.bf16.mxu0 0
        %3237 = vmatpush2.bf16.msra.mxu0 0
        %3238 = vmatprep.subr.bf16.mxu0 0
        %3239 = vmatpush2.bf16.msra.mxu0 0
        %3240 = vmatprep.subr.bf16.mxu0 0
        %3241 = vmatpush2.bf16.msra.mxu0 0
        %3242 = vmatprep.subr.bf16.mxu0 0
        %3243 = vmatpush2.bf16.msra.mxu0 0
        %3244 = vmatprep.subr.bf16.mxu0 0
        %3245 = vmatpush2.bf16.msra.mxu0 0
        %3246 = vmatprep.subr.bf16.mxu0 0
        %3247 = vmatpush2.bf16.msra.mxu0 0
        %3248 = vmatprep.subr.bf16.mxu0 0
        %3249 = vmatpush2.bf16.msra.mxu0 0
        %3250 = vmatprep.mubr.bf16.mxu0 0
        %3251 = vmatmul.mubr.bf16.gmra.mxu0 %v3216
        %v3252 = vpop.f32.mrf.mxu0
        %v3253 = vadd.f32 %v3188, %v3252
        %v3254 = vpop.f32.mrf.mxu0
        %v3255 = vpop.f32.mrf.mxu0
        %v3256 = vpop.f32.mrf.mxu0
        %3257 = vdwg.mxu0
        %v3258 = vadd.f32 %v3105, %v3253
        %v3259 = vld [vmem:[%s1218] sm:$0x1]
        %v3260 = vld [vmem:[%s1226] sm:$0x1]
        %v3261 = vsel %vm1585, %v3258, 0.0
        %3262 = vadd.xlane.f32.xlu0 %v3261
        %v3263 = vpop.xlane.xlu0 %3262
        %v3264 = vmul.f32 %v3263, %v2300
        %v3265 = vsub.f32 %v3258, %v3264
        %v3266 = vmul.f32 %v3265, %v3265
        %v3267 = vsel %vm1585, %v3266, 0.0
        %3268 = vadd.xlane.f32.xlu0 %v3267
        %v3269 = vpop.xlane.xlu0 %3268
        %v3270 = vmul.f32 %v3269, %v2300
        %v3271 = vadd.f32 %v3270, 1e-05
        %v3272 = vrsqrt.pop %v3271
        %v3273 = vmul.f32 %v3265, %v3272
        %v3275 = vlaneseq
        %v3276 = vshrl.u32 %v3275, 7
        %v3277 = vsub.s32 0, %v3276
        %v3278 = vrot.slane %v3259, %v3277
        %v3280 = vmul.f32 %v3273, %v3278
        %v3282 = vlaneseq
        %v3283 = vshrl.u32 %v3282, 7
        %v3284 = vsub.s32 0, %v3283
        %v3285 = vrot.slane %v3260, %v3284
        %v3287 = vadd.f32 %v3280, %v3285
        %3288 = vst.msk [vmem:[#allocation2] sm:$0xff] %vm1585, %v3287
        %p3289 = scmp.eq.s32.totalorder %s90, 1
        // Predicated region
        $region165: #{transformer_forward.3} parent=147 // pred_check
          %p3290 = pneg %p3289
        $region166: #{transformer_forward.3} parent=147 // pred_check_branch
          %3292 = sbr.rel (%p3290) target = $region168
        $region167: #{transformer_forward.3} parent=147 // pred_region
          %v3293 = vpack.c.bf16 %v3287, %v3287
          %v3294 = vld [vmem:[%s61] sm:$0xf]
          %v3295 = vld [vmem:[%s61 + $0x4] sm:$0xf]
          %v3296 = vld [vmem:[%s61 + $0x8] sm:$0xf]
          %v3297 = vld [vmem:[%s61 + $0xc] sm:$0xf]
          %v3298 = vld [vmem:[%s63] sm:$0x1]
          %v3300 = vlaneseq
          %v3301 = vshrl.u32 %v3300, 7
          %v3302 = vsub.s32 0, %v3301
          %v3303 = vrot.slane %v3298, %v3302
          %v3309 = vunpack.c.l.b16 %v3294
          %v3310 = vunpack.c.l.b16 %v3295
          %v3311 = vunpack.c.l.b16 %v3296
          %v3312 = vunpack.c.l.b16 %v3297
          %v3313 = vpack.c.b16 %v3310, %v3309
          %v3314 = vpack.c.b16 %v3312, %v3311
          %v3318 = vsel %vm1585, %v3293, 0
          %3320 = vmatprep.subr.bf16.mxu0 0
          %3321 = vmatpush1.bf16.msra.mxu0 0
          %3322 = vmatprep.subr.bf16.mxu0 0
          %3323 = vmatpush1.bf16.msra.mxu0 0
          %3324 = vmatprep.subr.bf16.mxu0 0
          %3325 = vmatpush1.bf16.msra.mxu0 0
          %3326 = vmatprep.subr.bf16.mxu0 0
          %3327 = vmatpush1.bf16.msra.mxu0 0
          %3328 = vmatprep.subr.bf16.mxu0 0
          %3329 = vmatpush1.bf16.msra.mxu0 0
          %3330 = vmatprep.subr.bf16.mxu0 0
          %3331 = vmatpush1.bf16.msra.mxu0 0
          %3332 = vmatprep.subr.bf16.mxu0 0
          %3333 = vmatpush1.bf16.msra.mxu0 %v3314
          %3334 = vmatprep.subr.bf16.mxu0 0
          %3335 = vmatpush1.bf16.msra.mxu0 %v3313
          %3336 = vmatprep.subr.bf16.mxu0 0
          %3337 = vmatpush2.bf16.msra.mxu0 0
          %3338 = vmatprep.subr.bf16.mxu0 0
          %3339 = vmatpush2.bf16.msra.mxu0 0
          %3340 = vmatprep.subr.bf16.mxu0 0
          %3341 = vmatpush2.bf16.msra.mxu0 0
          %3342 = vmatprep.subr.bf16.mxu0 0
          %3343 = vmatpush2.bf16.msra.mxu0 0
          %3344 = vmatprep.subr.bf16.mxu0 0
          %3345 = vmatpush2.bf16.msra.mxu0 0
          %3346 = vmatprep.subr.bf16.mxu0 0
          %3347 = vmatpush2.bf16.msra.mxu0 0
          %3348 = vmatprep.subr.bf16.mxu0 0
          %3349 = vmatpush2.bf16.msra.mxu0 0
          %3350 = vmatprep.subr.bf16.mxu0 0
          %3351 = vmatpush2.bf16.msra.mxu0 0
          %3352 = vmatprep.mubr.bf16.mxu0 0
          %3353 = vmatmul.mubr.bf16.gmra.mxu0 %v3318
          %v3354 = vpop.f32.mrf.mxu0
          %v3355 = vadd.f32 %v3303, %v3354
          %v3356 = vpop.f32.mrf.mxu0
          %v3357 = vpop.f32.mrf.mxu0
          %v3358 = vpop.f32.mrf.mxu0
          %3359 = vdwg.mxu0
          %3360 = vst [vmem:[%s1416] sm:$0xff] %v3355
        $region168: #{transformer_forward.3} parent=147 // pred_fallthru
          _
        %s3361 = sand.u32 %s927, 1
        %s3362 = scalar_lea.sflag [#allocation5], %s3361
        %s3363 = sand.u32 %s927, 1
        %s3364 = smul.addr %s3363, 8
        %s3365 = scalar_lea.vmem [#allocation9], %s3364
        // Predicated region
        $region169: #{transformer_forward.3} parent=147 // pred_check
          %p3366 = pneg %p937
        $region170: #{transformer_forward.3} parent=147 // pred_check_branch
          %3368 = sbr.rel (%p3366) target = $region172
        $region171: #{transformer_forward.3} parent=147 // pred_region
          %s3370 = ssub.s32 128, 128
          %3371 = vsyncadd %s3362, %s3370
          %s3372 = smul.addr %s89, 128
          %s3373 = scalar_lea.hbm %s65, %s3372
          %s3375 = sshll.u32 %s3365, 4
          %s3376 = int_to_ptr.vmem [resolvable:$true] %s3375
          %3378 = dma.vmem_to_hbm [thread:$0]  %s3376, 128, %s3373, %s3362
        $region172: #{transformer_forward.3} parent=147 // pred_fallthru
          _
      $region148: #{transformer_forward.3} parent=5 // pred_fallthru
        _
      %p3379 = scmp.le.s32.totalorder 2, %s80
      // Predicated region
      $region173: #{transformer_forward.3} parent=5 // pred_check
        %p3380 = pneg %p3379
      $region174: #{transformer_forward.3} parent=5 // pred_check_branch
        %3382 = sbr.rel (%p3380) target = $region176
      $region175: #{transformer_forward.3} parent=5 // pred_region
        %s3383 = ssub.s32 %s80, 2
        // Predicated region
        $region177: #{transformer_forward.3} parent=175 // pred_check
          %p3384 = pneg %p943
        $region178: #{transformer_forward.3} parent=175 // pred_check_branch
          %3386 = sbr.rel (%p3384) target = $region180
        $region179: #{transformer_forward.3} parent=175 // pred_region
          %s3387 = sand.u32 %s928, 1
          %s3388 = scalar_lea.sflag [#allocation5], %s3387
          %s3389 = sand.u32 %s928, 1
          %s3390 = smul.addr %s3389, 8
          %s3391 = scalar_lea.vmem [#allocation9], %s3390
          %3392 = dma.done %s3388, 128
        $region180: #{transformer_forward.3} parent=175 // pred_fallthru
          _
      $region176: #{transformer_forward.3} parent=5 // pred_fallthru
        _
    $region6: #{transformer_forward.3} parent=1 // loop_footer
      %s84 = sadd.s32 1, %s80
    $region7: #{transformer_forward.3} parent=1 // loop_footer_branch
      %79 = sbr.rel target = $region3
    $region8: #{transformer_forward.3} parent=1 // loop_exit
      _
    %3393 = vsyncpa [#allocation4], 1
    %s3394 = scalar_lea.sflag [#allocation4], 1
    %3395 = vsyncpa %s3394, 1
    %3396 = vsyncpa [#allocation7], 1
    %s3397 = scalar_lea.sflag [#allocation7], 1
    %3398 = vsyncpa %s3397, 1
    %3399 = vsyncpa [#allocation5], 1
    %s3400 = scalar_lea.sflag [#allocation5], 1
    %3401 = vsyncpa %s3400, 1

</llo_original>
